<compile_context>
chip_gen: v6e
topology: v6e:2x2x1
jax: 0.10.0
libtpu: 0.0.40
codegen_flags: <defaults>
</compile_context>

<pallas_src>
import jax
import jax.numpy as jnp
from jax.experimental import pallas as pl
from jax.experimental.pallas import tpu as pltpu


def _ceil_to(x, m):
    return ((x + m - 1) // m) * m


# ----------------------------------------------------------------------------
# Kernel 1: conv-as-matmul   out = relu(A @ W + b)
#   M is tiled; K and N are full blocks -> single dot per grid step, no
#   accumulator scratch, bias applied exactly once per output tile.
# ----------------------------------------------------------------------------
def _matmul_bias_relu_kernel(a_ref, w_ref, b_ref, o_ref):
    o_ref[...] = jnp.maximum(
        jnp.dot(a_ref[...], w_ref[...], preferred_element_type=jnp.float32)
        + b_ref[...],
        0.0,
    ).astype(o_ref.dtype)


def matmul_bias_relu(a, w, b_row, *, tm=128):
    """relu(a @ w + b).

    a:     (M, K)  f32 activation (im2col columns).
    w:     (Kp, N) f32 weight, pre-transposed and K-padded at init (Kp >= K,
           Kp a multiple of 128, padded rows are zero).
    b_row: (1, N)  f32 bias row.
    Only M (and the activation's K, to match Kp) are padded per call.
    """
    M, K = a.shape
    Kp, N = w.shape
    assert Kp >= K
    mp = _ceil_to(M, tm)
    if mp != M or Kp != K:
        a = jnp.pad(a, ((0, mp - M), (0, Kp - K)))

    out = pl.pallas_call(
        _matmul_bias_relu_kernel,
        out_shape=jax.ShapeDtypeStruct((mp, N), jnp.float32),
        grid=(mp // tm,),
        in_specs=[
            pl.BlockSpec((tm, Kp), lambda i: (i, 0)),
            pl.BlockSpec((Kp, N), lambda i: (0, 0)),
            pl.BlockSpec((1, N), lambda i: (0, 0)),
        ],
        out_specs=pl.BlockSpec((tm, N), lambda i: (i, 0)),
        compiler_params=pltpu.CompilerParams(
            dimension_semantics=("parallel",),
            vmem_limit_bytes=32 << 20,
        ),
    )(a, w, b_row)
    return out[:M] if mp != M else out


# ----------------------------------------------------------------------------
# Conv2d (NHWC, no padding) as im2col + Pallas matmul.  Output stays NHWC.
# ----------------------------------------------------------------------------
def conv2d_relu_nhwc(x, w_mat, b_row, *, kh, kw, stride):
    """x: (B, H, W, C).  w_mat: (ceil(kh*kw*C, 128), O) with rows in
    (kh, kw, C) order (prepared at init).  Returns relu(conv(x)) NHWC."""
    B, H, W, C = x.shape
    oh = (H - kh) // stride + 1
    ow = (W - kw) // stride + 1
    patches = []
    for i in range(kh):
        for j in range(kw):
            patches.append(
                x[:, i : i + stride * oh : stride, j : j + stride * ow : stride, :]
            )  # (B, oh, ow, C)
    cols = jnp.concatenate(patches, axis=-1).reshape(B * oh * ow, kh * kw * C)
    y = matmul_bias_relu(cols, w_mat, b_row)          # (B*oh*ow, O)
    return y.reshape(B, oh, ow, w_mat.shape[1])       # NHWC, no transpose


# ----------------------------------------------------------------------------
# Kernel 2: fused MLP tail  (fc1 -> "concat" -> fc2 -> fc3 -> fc4, all ReLU)
#   Single pallas_call, no grid: every weight and every intermediate
#   activation lives in VMEM for the whole computation.
# ----------------------------------------------------------------------------
def _mlp_tail_kernel(xc_ref, act_ref, w1_ref, b1_ref, w2a_ref, w2b_ref, b2_ref,
                     w3_ref, b3_ref, w4_ref, b4_ref, o_ref):
    a1 = jnp.maximum(
        jnp.dot(act_ref[...], w1_ref[...], preferred_element_type=jnp.float32)
        + b1_ref[...], 0.0)                                   # (B, 128)
    # torch's cat([x, a]) @ fc2_w.T  ==  x @ W2a + a @ W2b
    h2 = (jnp.dot(xc_ref[...], w2a_ref[...], preferred_element_type=jnp.float32)
          + jnp.dot(a1, w2b_ref[...], preferred_element_type=jnp.float32)
          + b2_ref[...])
    h2 = jnp.maximum(h2, 0.0)                                 # (B, 512)
    h3 = jnp.maximum(
        jnp.dot(h2, w3_ref[...], preferred_element_type=jnp.float32)
        + b3_ref[...], 0.0)                                   # (B, 256)
    # NOTE: the PyTorch reference applies F.relu after fc4 as well.
    h4 = jnp.maximum(
        jnp.dot(h3, w4_ref[...], preferred_element_type=jnp.float32)
        + b4_ref[...], 0.0)                                   # (B, 128); col 0 real
    o_ref[...] = h4.astype(o_ref.dtype)


def mlp_tail(x_flat, action, p):
    B = x_flat.shape[0]
    # pad the 3-wide action to the (pre-padded) 128-wide fc1 contraction dim
    act_p = jnp.pad(action, ((0, 0), (0, p["fc1_w"].shape[0] - action.shape[1])))
    out = pl.pallas_call(
        _mlp_tail_kernel,
        out_shape=jax.ShapeDtypeStruct((B, p["fc4_w"].shape[1]), jnp.float32),
        compiler_params=pltpu.CompilerParams(vmem_limit_bytes=32 << 20),
    )(x_flat, act_p,
      p["fc1_w"], p["fc1_b"], p["fc2a_w"], p["fc2b_w"], p["fc2_b"],
      p["fc3_w"], p["fc3_b"], p["fc4_w"], p["fc4_b"])
    return out[:, :1]                                          # real fc4 column


# ----------------------------------------------------------------------------
# Parameters: torch-layout init + one-time kernel-layout preparation
# ----------------------------------------------------------------------------
def init_params(key):
    def nrm(k, shape, scale):
        return jax.random.normal(k, shape, jnp.float32) * scale

    ks = jax.random.split(key, 14)
    p = {}
    p["conv1_w"] = nrm(ks[0], (32, 12, 8, 8), 0.02)
    p["conv1_b"] = nrm(ks[1], (32,), 0.02)
    p["conv2_w"] = nrm(ks[2], (64, 32, 4, 4), 0.02)
    p["conv2_b"] = nrm(ks[3], (64,), 0.02)
    p["conv3_w"] = nrm(ks[4], (64, 64, 3, 3), 0.02)
    p["conv3_b"] = nrm(ks[5], (64,), 0.02)
    p["fc1_w"] = nrm(ks[6], (128, 3), 0.05)
    p["fc1_b"] = nrm(ks[7], (128,), 0.05)
    p["fc2_w"] = nrm(ks[8], (512, 8 * 8 * 64 + 128), 0.01)
    p["fc2_b"] = nrm(ks[9], (512,), 0.01)
    p["fc3_w"] = nrm(ks[10], (256, 512), 0.02)
    p["fc3_b"] = nrm(ks[11], (256,), 0.02)
    p["fc4_w"] = nrm(ks[12], (1, 256), 0.02)
    p["fc4_b"] = nrm(ks[13], (1,), 0.02)
    return p


CONV_OUT = (8, 8, 64)   # final conv activation (H, W, C)


def prepare_params(raw):
    """One-time, out-of-hot-path weight preparation (review item #1/#7/#3):
       * conv weights -> (kh*kw*C, O) matmul layout, rows in (kh,kw,C) order,
         K zero-padded to a multiple of 128.
       * fc weights   -> transposed to (in, out).
       * fc2 conv-input rows permuted from torch (C,H,W)-flatten to NHWC
         flatten (so no per-call activation transpose is needed).
       * fc1 contraction dim / fc4 output dim zero-padded to 128 lanes.
       * biases       -> (1, N) rows.
    """
    p = {}
    for name in ("conv1", "conv2", "conv3"):
        w = raw[f"{name}_w"]                                   # (O, C, kh, kw)
        O, C, kh, kw = w.shape
        w_mat = jnp.transpose(w, (2, 3, 1, 0)).reshape(kh * kw * C, O)
        kp = _ceil_to(kh * kw * C, 128)
        p[f"{name}_w"] = jnp.pad(w_mat, ((0, kp - kh * kw * C), (0, 0)))
        p[f"{name}_b"] = raw[f"{name}_b"].reshape(1, O)

    # fc1: (128, 3) -> (3, 128) -> pad contraction dim to 128
    w1t = raw["fc1_w"].T
    p["fc1_w"] = jnp.pad(w1t, ((0, 128 - w1t.shape[0]), (0, 0)))   # (128, 128)
    p["fc1_b"] = raw["fc1_b"].reshape(1, -1)

    # fc2: split conv / action inputs; permute conv columns so the kernel can
    # consume the NHWC flatten directly.
    Hc, Wc, Cc = CONV_OUT
    n_conv = Hc * Wc * Cc
    perm = jnp.arange(n_conv).reshape(Cc, Hc, Wc).transpose(1, 2, 0).reshape(-1)
    w2 = raw["fc2_w"]                                           # (512, 4224)
    p["fc2a_w"] = w2[:, :n_conv][:, perm].T                     # (4096, 512)
    p["fc2b_w"] = w2[:, n_conv:].T                              # (128, 512)
    p["fc2_b"] = raw["fc2_b"].reshape(1, -1)

    p["fc3_w"] = raw["fc3_w"].T                                 # (512, 256)
    p["fc3_b"] = raw["fc3_b"].reshape(1, -1)

    # fc4: (1, 256) -> (256, 1) -> pad output lanes to 128 (column 0 is real)
    w4t = raw["fc4_w"].T
    p["fc4_w"] = jnp.pad(w4t, ((0, 0), (0, 128 - w4t.shape[1])))  # (256, 128)
    p["fc4_b"] = jnp.pad(raw["fc4_b"].reshape(1, -1), ((0, 0), (0, 127)))
    return p


# ----------------------------------------------------------------------------
# Forward pass mirroring AIRLReward.forward
# ----------------------------------------------------------------------------
@jax.jit
def airl_reward_forward(p, state, action):
    B = state.shape[0]
    # state.view(B, -1, 96, 96) (NCHW) -> NHWC once; everything stays NHWC.
    x = state.reshape(B, -1, 96, 96).transpose(0, 2, 3, 1)      # (B, 96, 96, 12)
    x = conv2d_relu_nhwc(x, p["conv1_w"], p["conv1_b"], kh=8, kw=8, stride=4)  # (B,23,23,32)
    x = conv2d_relu_nhwc(x, p["conv2_w"], p["conv2_b"], kh=4, kw=4, stride=2)  # (B,10,10,64)
    x = conv2d_relu_nhwc(x, p["conv3_w"], p["conv3_b"], kh=3, kw=3, stride=1)  # (B, 8, 8,64)
    x_flat = x.reshape(B, -1)          # NHWC flatten; fc2a_w rows permuted to match
    return mlp_tail(x_flat, action, p)                          # (B, 1)


if __name__ == "__main__":
    key = jax.random.PRNGKey(0)
    kp, ks, ka = jax.random.split(key, 3)

    params = prepare_params(init_params(kp))

    B = 2
    # state: NCHW (B, 12, 96, 96); action: (B, 3) — shapes implied by the module
    state = jax.random.normal(ks, (B, 12, 96, 96), jnp.float32)
    action = jax.random.normal(ka, (B, 3), jnp.float32)

    out = airl_reward_forward(params, state, action)
    out = jax.block_until_ready(out)
    assert out.shape == (B, 1), out.shape
    assert bool(jnp.all(jnp.isfinite(out)))
    print("KERNEL_OK")
</pallas_src>

<mosaic_0001>
module attributes {stable_mosaic.version = 11 : i64} {
  func.func @_matmul_bias_relu_kernel(%arg0: i32, %arg1: memref<128x768xf32, #tpu.memory_space<vmem>>, %arg2: memref<768x32xf32, #tpu.memory_space<vmem>>, %arg3: memref<1x32xf32, #tpu.memory_space<vmem>>, %arg4: memref<128x32xf32, #tpu.memory_space<vmem>>) attributes {dimension_semantics = [#tpu.dimension_semantics<parallel>], iteration_bounds = array<i64: 9>, scalar_prefetch = 0 : i64, scratch_operands = 0 : i64, tpu.core_type = #tpu.core_type<tc>, window_params = [{transform_indices = @transform_0, window_bounds = array<i64: 128, 768>}, {pipeline_mode = #tpu.pipeline_mode<synchronous>, transform_indices = @transform_1, window_bounds = array<i64: 768, 32>}, {pipeline_mode = #tpu.pipeline_mode<synchronous>, transform_indices = @transform_2, window_bounds = array<i64: 1, 32>}, {transform_indices = @transform_3, window_bounds = array<i64: 128, 32>}]} {
    %c0 = arith.constant 0 : index
    %c0_0 = arith.constant 0 : index
    %0 = vector.load %arg1[%c0, %c0_0] : memref<128x768xf32, #tpu.memory_space<vmem>>, vector<128x768xf32>
    %c0_1 = arith.constant 0 : index
    %c0_2 = arith.constant 0 : index
    %1 = vector.load %arg2[%c0_1, %c0_2] : memref<768x32xf32, #tpu.memory_space<vmem>>, vector<768x32xf32>
    %cst = arith.constant dense<0.000000e+00> : vector<128x32xf32>
    %2 = tpu.matmul %0, %1, %cst {dimension_numbers = #tpu.dot_dimension_numbers<[1], [0], [0], [1], [0, 0, 1, 1], [], []>} : vector<128x768xf32>, vector<768x32xf32>, vector<128x32xf32> -> vector<128x32xf32>
    %c0_3 = arith.constant 0 : index
    %c0_4 = arith.constant 0 : index
    %3 = vector.load %arg3[%c0_3, %c0_4] : memref<1x32xf32, #tpu.memory_space<vmem>>, vector<1x32xf32>
    %4 = vector.broadcast %3 : vector<1x32xf32> to vector<128x32xf32>
    %5 = arith.addf %2, %4 : vector<128x32xf32>
    %cst_5 = arith.constant 0.000000e+00 : f32
    %6 = vector.broadcast %cst_5 : f32 to vector<128x32xf32>
    %7 = arith.maximumf %5, %6 : vector<128x32xf32>
    %c0_6 = arith.constant 0 : index
    %c0_7 = arith.constant 0 : index
    %8 = vector.load %arg4[%c0_6, %c0_7] : memref<128x32xf32, #tpu.memory_space<vmem>>, vector<128x32xf32>
    tpu.vector_store %arg4[%c0_6, %c0_7], %7 {strides = array<i32>} : memref<128x32xf32, #tpu.memory_space<vmem>>, vector<128x32xf32>,
    return
  }
  func.func @transform_0(%arg0: i32) -> (i32, i32) {
    %c0_i32 = arith.constant 0 : i32
    %c0_i32_0 = arith.constant 0 : i32
    return %arg0, %c0_i32 : i32, i32
  }
  func.func @transform_1(%arg0: i32) -> (i32, i32) {
    %c0_i32 = arith.constant 0 : i32
    %c0_i32_0 = arith.constant 0 : i32
    %c0_i32_1 = arith.constant 0 : i32
    return %c0_i32, %c0_i32_0 : i32, i32
  }
  func.func @transform_2(%arg0: i32) -> (i32, i32) {
    %c0_i32 = arith.constant 0 : i32
    %c0_i32_0 = arith.constant 0 : i32
    %c0_i32_1 = arith.constant 0 : i32
    return %c0_i32, %c0_i32_0 : i32, i32
  }
  func.func @transform_3(%arg0: i32) -> (i32, i32) {
    %c0_i32 = arith.constant 0 : i32
    %c0_i32_0 = arith.constant 0 : i32
    return %arg0, %c0_i32 : i32, i32
  }
}

module attributes {stable_mosaic.version = 11 : i64} {
  func.func @_matmul_bias_relu_kernel(%arg0: i32, %arg1: memref<128x512xf32, #tpu.memory_space<vmem>>, %arg2: memref<512x64xf32, #tpu.memory_space<vmem>>, %arg3: memref<1x64xf32, #tpu.memory_space<vmem>>, %arg4: memref<128x64xf32, #tpu.memory_space<vmem>>) attributes {dimension_semantics = [#tpu.dimension_semantics<parallel>], iteration_bounds = array<i64: 2>, scalar_prefetch = 0 : i64, scratch_operands = 0 : i64, tpu.core_type = #tpu.core_type<tc>, window_params = [{transform_indices = @transform_0, window_bounds = array<i64: 128, 512>}, {pipeline_mode = #tpu.pipeline_mode<synchronous>, transform_indices = @transform_1, window_bounds = array<i64: 512, 64>}, {pipeline_mode = #tpu.pipeline_mode<synchronous>, transform_indices = @transform_2, window_bounds = array<i64: 1, 64>}, {transform_indices = @transform_3, window_bounds = array<i64: 128, 64>}]} {
    %c0 = arith.constant 0 : index
    %c0_0 = arith.constant 0 : index
    %0 = vector.load %arg1[%c0, %c0_0] : memref<128x512xf32, #tpu.memory_space<vmem>>, vector<128x512xf32>
    %c0_1 = arith.constant 0 : index
    %c0_2 = arith.constant 0 : index
    %1 = vector.load %arg2[%c0_1, %c0_2] : memref<512x64xf32, #tpu.memory_space<vmem>>, vector<512x64xf32>
    %cst = arith.constant dense<0.000000e+00> : vector<128x64xf32>
    %2 = tpu.matmul %0, %1, %cst {dimension_numbers = #tpu.dot_dimension_numbers<[1], [0], [0], [1], [0, 0, 1, 1], [], []>} : vector<128x512xf32>, vector<512x64xf32>, vector<128x64xf32> -> vector<128x64xf32>
    %c0_3 = arith.constant 0 : index
    %c0_4 = arith.constant 0 : index
    %3 = vector.load %arg3[%c0_3, %c0_4] : memref<1x64xf32, #tpu.memory_space<vmem>>, vector<1x64xf32>
    %4 = vector.broadcast %3 : vector<1x64xf32> to vector<128x64xf32>
    %5 = arith.addf %2, %4 : vector<128x64xf32>
    %cst_5 = arith.constant 0.000000e+00 : f32
    %6 = vector.broadcast %cst_5 : f32 to vector<128x64xf32>
    %7 = arith.maximumf %5, %6 : vector<128x64xf32>
    %c0_6 = arith.constant 0 : index
    %c0_7 = arith.constant 0 : index
    %8 = vector.load %arg4[%c0_6, %c0_7] : memref<128x64xf32, #tpu.memory_space<vmem>>, vector<128x64xf32>
    tpu.vector_store %arg4[%c0_6, %c0_7], %7 {strides = array<i32>} : memref<128x64xf32, #tpu.memory_space<vmem>>, vector<128x64xf32>,
    return
  }
  func.func @transform_0(%arg0: i32) -> (i32, i32) {
    %c0_i32 = arith.constant 0 : i32
    %c0_i32_0 = arith.constant 0 : i32
    return %arg0, %c0_i32 : i32, i32
  }
  func.func @transform_1(%arg0: i32) -> (i32, i32) {
    %c0_i32 = arith.constant 0 : i32
    %c0_i32_0 = arith.constant 0 : i32
    %c0_i32_1 = arith.constant 0 : i32
    return %c0_i32, %c0_i32_0 : i32, i32
  }
  func.func @transform_2(%arg0: i32) -> (i32, i32) {
    %c0_i32 = arith.constant 0 : i32
    %c0_i32_0 = arith.constant 0 : i32
    %c0_i32_1 = arith.constant 0 : i32
    return %c0_i32, %c0_i32_0 : i32, i32
  }
  func.func @transform_3(%arg0: i32) -> (i32, i32) {
    %c0_i32 = arith.constant 0 : i32
    %c0_i32_0 = arith.constant 0 : i32
    return %arg0, %c0_i32 : i32, i32
  }
}

module attributes {stable_mosaic.version = 11 : i64} {
  func.func @_matmul_bias_relu_kernel(%arg0: i32, %arg1: memref<128x640xf32, #tpu.memory_space<vmem>>, %arg2: memref<640x64xf32, #tpu.memory_space<vmem>>, %arg3: memref<1x64xf32, #tpu.memory_space<vmem>>, %arg4: memref<128x64xf32, #tpu.memory_space<vmem>>) attributes {dimension_semantics = [#tpu.dimension_semantics<parallel>], iteration_bounds = array<i64: 1>, scalar_prefetch = 0 : i64, scratch_operands = 0 : i64, tpu.core_type = #tpu.core_type<tc>, window_params = [{transform_indices = @transform_0, window_bounds = array<i64: 128, 640>}, {pipeline_mode = #tpu.pipeline_mode<synchronous>, transform_indices = @transform_1, window_bounds = array<i64: 640, 64>}, {pipeline_mode = #tpu.pipeline_mode<synchronous>, transform_indices = @transform_2, window_bounds = array<i64: 1, 64>}, {transform_indices = @transform_3, window_bounds = array<i64: 128, 64>}]} {
    %c0 = arith.constant 0 : index
    %c0_0 = arith.constant 0 : index
    %0 = vector.load %arg1[%c0, %c0_0] : memref<128x640xf32, #tpu.memory_space<vmem>>, vector<128x640xf32>
    %c0_1 = arith.constant 0 : index
    %c0_2 = arith.constant 0 : index
    %1 = vector.load %arg2[%c0_1, %c0_2] : memref<640x64xf32, #tpu.memory_space<vmem>>, vector<640x64xf32>
    %cst = arith.constant dense<0.000000e+00> : vector<128x64xf32>
    %2 = tpu.matmul %0, %1, %cst {dimension_numbers = #tpu.dot_dimension_numbers<[1], [0], [0], [1], [0, 0, 1, 1], [], []>} : vector<128x640xf32>, vector<640x64xf32>, vector<128x64xf32> -> vector<128x64xf32>
    %c0_3 = arith.constant 0 : index
    %c0_4 = arith.constant 0 : index
    %3 = vector.load %arg3[%c0_3, %c0_4] : memref<1x64xf32, #tpu.memory_space<vmem>>, vector<1x64xf32>
    %4 = vector.broadcast %3 : vector<1x64xf32> to vector<128x64xf32>
    %5 = arith.addf %2, %4 : vector<128x64xf32>
    %cst_5 = arith.constant 0.000000e+00 : f32
    %6 = vector.broadcast %cst_5 : f32 to vector<128x64xf32>
    %7 = arith.maximumf %5, %6 : vector<128x64xf32>
    %c0_6 = arith.constant 0 : index
    %c0_7 = arith.constant 0 : index
    %8 = vector.load %arg4[%c0_6, %c0_7] : memref<128x64xf32, #tpu.memory_space<vmem>>, vector<128x64xf32>
    tpu.vector_store %arg4[%c0_6, %c0_7], %7 {strides = array<i32>} : memref<128x64xf32, #tpu.memory_space<vmem>>, vector<128x64xf32>,
    return
  }
  func.func @transform_0(%arg0: i32) -> (i32, i32) {
    %c0_i32 = arith.constant 0 : i32
    %c0_i32_0 = arith.constant 0 : i32
    return %arg0, %c0_i32 : i32, i32
  }
  func.func @transform_1(%arg0: i32) -> (i32, i32) {
    %c0_i32 = arith.constant 0 : i32
    %c0_i32_0 = arith.constant 0 : i32
    %c0_i32_1 = arith.constant 0 : i32
    return %c0_i32, %c0_i32_0 : i32, i32
  }
  func.func @transform_2(%arg0: i32) -> (i32, i32) {
    %c0_i32 = arith.constant 0 : i32
    %c0_i32_0 = arith.constant 0 : i32
    %c0_i32_1 = arith.constant 0 : i32
    return %c0_i32, %c0_i32_0 : i32, i32
  }
  func.func @transform_3(%arg0: i32) -> (i32, i32) {
    %c0_i32 = arith.constant 0 : i32
    %c0_i32_0 = arith.constant 0 : i32
    return %arg0, %c0_i32 : i32, i32
  }
}

module attributes {stable_mosaic.version = 11 : i64} {
  func.func @_mlp_tail_kernel(%arg0: memref<2x4096xf32, #tpu.memory_space<vmem>>, %arg1: memref<2x128xf32, #tpu.memory_space<vmem>>, %arg2: memref<128x128xf32, #tpu.memory_space<vmem>>, %arg3: memref<1x128xf32, #tpu.memory_space<vmem>>, %arg4: memref<4096x512xf32, #tpu.memory_space<vmem>>, %arg5: memref<128x512xf32, #tpu.memory_space<vmem>>, %arg6: memref<1x512xf32, #tpu.memory_space<vmem>>, %arg7: memref<512x256xf32, #tpu.memory_space<vmem>>, %arg8: memref<1x256xf32, #tpu.memory_space<vmem>>, %arg9: memref<256x128xf32, #tpu.memory_space<vmem>>, %arg10: memref<1x128xf32, #tpu.memory_space<vmem>>, %arg11: memref<2x128xf32, #tpu.memory_space<vmem>>) attributes {dimension_semantics = [], scalar_prefetch = 0 : i64, scratch_operands = 0 : i64, tpu.core_type = #tpu.core_type<tc>} {
    %c0 = arith.constant 0 : index
    %c0_0 = arith.constant 0 : index
    %0 = vector.load %arg1[%c0, %c0_0] : memref<2x128xf32, #tpu.memory_space<vmem>>, vector<2x128xf32>
    %c0_1 = arith.constant 0 : index
    %c0_2 = arith.constant 0 : index
    %1 = vector.load %arg2[%c0_1, %c0_2] : memref<128x128xf32, #tpu.memory_space<vmem>>, vector<128x128xf32>
    %cst = arith.constant dense<0.000000e+00> : vector<2x128xf32>
    %2 = tpu.matmul %0, %1, %cst {dimension_numbers = #tpu.dot_dimension_numbers<[1], [0], [0], [1], [0, 0, 1, 1], [], []>} : vector<2x128xf32>, vector<128x128xf32>, vector<2x128xf32> -> vector<2x128xf32>
    %c0_3 = arith.constant 0 : index
    %c0_4 = arith.constant 0 : index
    %3 = vector.load %arg3[%c0_3, %c0_4] : memref<1x128xf32, #tpu.memory_space<vmem>>, vector<1x128xf32>
    %4 = vector.broadcast %3 : vector<1x128xf32> to vector<2x128xf32>
    %5 = arith.addf %2, %4 : vector<2x128xf32>
    %cst_5 = arith.constant 0.000000e+00 : f32
    %6 = vector.broadcast %cst_5 : f32 to vector<2x128xf32>
    %7 = arith.maximumf %5, %6 : vector<2x128xf32>
    %c0_6 = arith.constant 0 : index
    %c0_7 = arith.constant 0 : index
    %8 = vector.load %arg0[%c0_6, %c0_7] : memref<2x4096xf32, #tpu.memory_space<vmem>>, vector<2x4096xf32>
    %c0_8 = arith.constant 0 : index
    %c0_9 = arith.constant 0 : index
    %9 = vector.load %arg4[%c0_8, %c0_9] : memref<4096x512xf32, #tpu.memory_space<vmem>>, vector<4096x512xf32>
    %cst_10 = arith.constant dense<0.000000e+00> : vector<2x512xf32>
    %10 = tpu.matmul %8, %9, %cst_10 {dimension_numbers = #tpu.dot_dimension_numbers<[1], [0], [0], [1], [0, 0, 1, 1], [], []>} : vector<2x4096xf32>, vector<4096x512xf32>, vector<2x512xf32> -> vector<2x512xf32>
    %c0_11 = arith.constant 0 : index
    %c0_12 = arith.constant 0 : index
    %11 = vector.load %arg5[%c0_11, %c0_12] : memref<128x512xf32, #tpu.memory_space<vmem>>, vector<128x512xf32>
    %cst_13 = arith.constant dense<0.000000e+00> : vector<2x512xf32>
    %12 = tpu.matmul %7, %11, %cst_13 {dimension_numbers = #tpu.dot_dimension_numbers<[1], [0], [0], [1], [0, 0, 1, 1], [], []>} : vector<2x128xf32>, vector<128x512xf32>, vector<2x512xf32> -> vector<2x512xf32>
    %13 = arith.addf %10, %12 : vector<2x512xf32>
    %c0_14 = arith.constant 0 : index
    %c0_15 = arith.constant 0 : index
    %14 = vector.load %arg6[%c0_14, %c0_15] : memref<1x512xf32, #tpu.memory_space<vmem>>, vector<1x512xf32>
    %15 = vector.broadcast %14 : vector<1x512xf32> to vector<2x512xf32>
    %16 = arith.addf %13, %15 : vector<2x512xf32>
    %cst_16 = arith.constant 0.000000e+00 : f32
    %17 = vector.broadcast %cst_16 : f32 to vector<2x512xf32>
    %18 = arith.maximumf %16, %17 : vector<2x512xf32>
    %c0_17 = arith.constant 0 : index
    %c0_18 = arith.constant 0 : index
    %19 = vector.load %arg7[%c0_17, %c0_18] : memref<512x256xf32, #tpu.memory_space<vmem>>, vector<512x256xf32>
    %cst_19 = arith.constant dense<0.000000e+00> : vector<2x256xf32>
    %20 = tpu.matmul %18, %19, %cst_19 {dimension_numbers = #tpu.dot_dimension_numbers<[1], [0], [0], [1], [0, 0, 1, 1], [], []>} : vector<2x512xf32>, vector<512x256xf32>, vector<2x256xf32> -> vector<2x256xf32>
    %c0_20 = arith.constant 0 : index
    %c0_21 = arith.constant 0 : index
    %21 = vector.load %arg8[%c0_20, %c0_21] : memref<1x256xf32, #tpu.memory_space<vmem>>, vector<1x256xf32>
    %22 = vector.broadcast %21 : vector<1x256xf32> to vector<2x256xf32>
    %23 = arith.addf %20, %22 : vector<2x256xf32>
    %cst_22 = arith.constant 0.000000e+00 : f32
    %24 = vector.broadcast %cst_22 : f32 to vector<2x256xf32>
    %25 = arith.maximumf %23, %24 : vector<2x256xf32>
    %c0_23 = arith.constant 0 : index
    %c0_24 = arith.constant 0 : index
    %26 = vector.load %arg9[%c0_23, %c0_24] : memref<256x128xf32, #tpu.memory_space<vmem>>, vector<256x128xf32>
    %cst_25 = arith.constant dense<0.000000e+00> : vector<2x128xf32>
    %27 = tpu.matmul %25, %26, %cst_25 {dimension_numbers = #tpu.dot_dimension_numbers<[1], [0], [0], [1], [0, 0, 1, 1], [], []>} : vector<2x256xf32>, vector<256x128xf32>, vector<2x128xf32> -> vector<2x128xf32>
    %c0_26 = arith.constant 0 : index
    %c0_27 = arith.constant 0 : index
    %28 = vector.load %arg10[%c0_26, %c0_27] : memref<1x128xf32, #tpu.memory_space<vmem>>, vector<1x128xf32>
    %29 = vector.broadcast %28 : vector<1x128xf32> to vector<2x128xf32>
    %30 = arith.addf %27, %29 : vector<2x128xf32>
    %cst_28 = arith.constant 0.000000e+00 : f32
    %31 = vector.broadcast %cst_28 : f32 to vector<2x128xf32>
    %32 = arith.maximumf %30, %31 : vector<2x128xf32>
    %c0_29 = arith.constant 0 : index
    %c0_30 = arith.constant 0 : index
    %33 = vector.load %arg11[%c0_29, %c0_30] : memref<2x128xf32, #tpu.memory_space<vmem>>, vector<2x128xf32>
    tpu.vector_store %arg11[%c0_29, %c0_30], %32 {strides = array<i32>} : memref<2x128xf32, #tpu.memory_space<vmem>>, vector<2x128xf32>,
    return
  }
}

</mosaic_0001>

<llo_original>
// kernel: airl_reward_forward.4
$region0: #{airl_reward_forward.4}
  #allocation0 [shape = 'u32[]', space=smem, size = 0x4, offset = 0x4, fixed_abs, tag = 'smem constant byte address 0x4 - core index']
  #allocation1 [shape = 'u32[144,128]{1,0:T(1,128)}', space=vmem, size = 0x12000, scoped, tag = 'internal scratch']
  %s0 = inlined_call_operand.vmem [shape: f32[1152,768], index: 0, kind: input, shape index: {}]
  %s1 = inlined_call_operand.vmem [shape: f32[768,32], index: 1, kind: input, shape index: {}]
  %s2 = inlined_call_operand.vmem [shape: f32[1,32], index: 2, kind: input, shape index: {}]
  %s3 = inlined_call_operand.vmem [shape: f32[1152,32], index: 3, kind: output, shape index: {}]
  %s4 = sld [smem:[#allocation0]]
  $region45: #{airl_reward_forward.4} parent=0
    _
  %s6 = ssub.s32 1, %s4
  %s7 = scalar_select 0, %s6, %s4
  loop: start=0, step=1, limit=11
  $region2: #{airl_reward_forward.4} parent=0 // loop_pre_header
    _
  $region3: #{airl_reward_forward.4} parent=0 // loop_header
    %s9 = sphi 0, %s13
    %p10 = scmp.ge.s32.totalorder %s9, 11
    %s19 = sphi 0, %s21
    %s22 = sphi 0, %s19
    %s23 = sphi 0, %s22
    %s39 = sphi 0, %s23
    %s43 = sphi 0, %s43
    %s45 = sphi 0, %s43
    %s46 = sphi 0, %s45
    %s60 = sphi 0, %s46
    %s64 = sphi 0, %s64
    %s66 = sphi 0, %s64
    %s67 = sphi 0, %s66
    %s81 = sphi 0, %s67
    %s87 = sphi 0, %s89
    %s90 = sphi 0, %s87
    %s91 = sphi 0, %s90
    %s107 = sphi 0, %s91
  $region4: #{airl_reward_forward.4} parent=0 // loop_header_branch
    %12 = sbr.rel (%p10) target = $region8
  $region5: #{airl_reward_forward.4} parent=0 // loop_body
    %s14 = ssub.s32 %s9, 1
    %s15 = ssub.s32 %s9, 2
    %s16 = sadd.s32 %s9, 1
    %s17 = ssub.s32 %s9, %s16
    %p18 = scmp.eq.s32.totalorder %s17, 0
    %s20 = sadd.s32 %s19, 1
    %s21 = scalar_select %p18, %s19, %s20
    %p24 = pneg %p18
    %p25 = scmp.eq.s32.totalorder %s9, 8
    %p26 = por %p24, %p25
    %p27 = scmp.ne.s32.totalorder %s19, %s22
    %p28 = scmp.eq.s32.totalorder %s9, 0
    %p29 = por %p27, %p28
    %p30 = scmp.ne.s32.totalorder %s19, %s22
    %p31 = scmp.eq.s32.totalorder %s14, 8
    %p32 = por %p30, %p31
    %p33 = scmp.ne.s32.totalorder %s22, %s23
    %p34 = scmp.eq.s32.totalorder %s14, 0
    %p35 = por %p33, %p34
    %p36 = scmp.ne.s32.totalorder %s22, %s23
    %p37 = scmp.eq.s32.totalorder %s15, 8
    %p38 = por %p36, %p37
    %p40 = scmp.ne.s32.totalorder %s23, %s39
    %p41 = scmp.eq.s32.totalorder %s15, 0
    %p42 = por %p40, %p41
    %s44 = sadd.s32 %s43, 1
    %p47 = scmp.eq.s32.totalorder %s9, 8
    %p48 = scmp.ne.s32.totalorder %s43, %s45
    %p49 = scmp.eq.s32.totalorder %s9, 0
    %p50 = por %p48, %p49
    %p51 = scmp.ne.s32.totalorder %s43, %s45
    %p52 = scmp.eq.s32.totalorder %s14, 8
    %p53 = por %p51, %p52
    %p54 = scmp.ne.s32.totalorder %s45, %s46
    %p55 = scmp.eq.s32.totalorder %s14, 0
    %p56 = por %p54, %p55
    %p57 = scmp.ne.s32.totalorder %s45, %s46
    %p58 = scmp.eq.s32.totalorder %s15, 8
    %p59 = por %p57, %p58
    %p61 = scmp.ne.s32.totalorder %s46, %s60
    %p62 = scmp.eq.s32.totalorder %s15, 0
    %p63 = por %p61, %p62
    %s65 = sadd.s32 %s64, 1
    %p68 = scmp.eq.s32.totalorder %s9, 8
    %p69 = scmp.ne.s32.totalorder %s64, %s66
    %p70 = scmp.eq.s32.totalorder %s9, 0
    %p71 = por %p69, %p70
    %p72 = scmp.ne.s32.totalorder %s64, %s66
    %p73 = scmp.eq.s32.totalorder %s14, 8
    %p74 = por %p72, %p73
    %p75 = scmp.ne.s32.totalorder %s66, %s67
    %p76 = scmp.eq.s32.totalorder %s14, 0
    %p77 = por %p75, %p76
    %p78 = scmp.ne.s32.totalorder %s66, %s67
    %p79 = scmp.eq.s32.totalorder %s15, 8
    %p80 = por %p78, %p79
    %p82 = scmp.ne.s32.totalorder %s67, %s81
    %p83 = scmp.eq.s32.totalorder %s15, 0
    %p84 = por %p82, %p83
    %s85 = ssub.s32 %s9, %s16
    %p86 = scmp.eq.s32.totalorder %s85, 0
    %s88 = sadd.s32 %s87, 1
    %s89 = scalar_select %p86, %s87, %s88
    %p92 = pneg %p86
    %p93 = scmp.eq.s32.totalorder %s9, 8
    %p94 = por %p92, %p93
    %p95 = scmp.ne.s32.totalorder %s87, %s90
    %p96 = scmp.eq.s32.totalorder %s9, 0
    %p97 = por %p95, %p96
    %p98 = scmp.ne.s32.totalorder %s87, %s90
    %p99 = scmp.eq.s32.totalorder %s14, 8
    %p100 = por %p98, %p99
    %p101 = scmp.ne.s32.totalorder %s90, %s91
    %p102 = scmp.eq.s32.totalorder %s14, 0
    %p103 = por %p101, %p102
    %p104 = scmp.ne.s32.totalorder %s90, %s91
    %p105 = scmp.eq.s32.totalorder %s15, 8
    %p106 = por %p104, %p105
    %p108 = scmp.ne.s32.totalorder %s91, %s107
    %p109 = scmp.eq.s32.totalorder %s15, 0
    %p110 = por %p108, %p109
    %p111 = scmp.le.s32.totalorder 1, %s9
    %p112 = scmp.lt.s32.totalorder %s9, 10
    %p113 = pnand %p111, %p112
    %p114 = pneg %p113
    // Predicated region
    $region9: #{airl_reward_forward.4} parent=5 // pred_check
      _
    $region10: #{airl_reward_forward.4} parent=5 // pred_check_branch
      %116 = sbr.rel (%p113) target = $region12
    $region11: #{airl_reward_forward.4} parent=5 // pred_region
      %s117 = ssub.s32 %s9, 1
      // Predicated region
      $region13: #{airl_reward_forward.4} parent=11 // pred_check
        %p118 = pneg %p56
      $region14: #{airl_reward_forward.4} parent=11 // pred_check_branch
        %120 = sbr.rel (%p118) target = $region16
      $region15: #{airl_reward_forward.4} parent=11 // pred_region
        _
      $region16: #{airl_reward_forward.4} parent=11 // pred_fallthru
        _
      // Predicated region
      $region17: #{airl_reward_forward.4} parent=11 // pred_check
        %p121 = pneg %p77
      $region18: #{airl_reward_forward.4} parent=11 // pred_check_branch
        %123 = sbr.rel (%p121) target = $region20
      $region19: #{airl_reward_forward.4} parent=11 // pred_region
        _
      $region20: #{airl_reward_forward.4} parent=11 // pred_fallthru
        _
    $region12: #{airl_reward_forward.4} parent=5 // pred_fallthru
      _
    %p124 = scmp.lt.s32.totalorder %s9, 9
    // Predicated region
    $region21: #{airl_reward_forward.4} parent=5 // pred_check
      %p125 = pneg %p124
    $region22: #{airl_reward_forward.4} parent=5 // pred_check_branch
      %127 = sbr.rel (%p125) target = $region24
    $region23: #{airl_reward_forward.4} parent=5 // pred_region
      // Predicated region
      $region25: #{airl_reward_forward.4} parent=23 // pred_check
        %p128 = pneg %p29
      $region26: #{airl_reward_forward.4} parent=23 // pred_check_branch
        %130 = sbr.rel (%p128) target = $region28
      $region27: #{airl_reward_forward.4} parent=23 // pred_region
        %s131 = smul.u32 16, %s9
        %p132 = scmp.lt.s32.totalorder %s131, 143
        %s133 = scalar_select %p132, %s131, 143
        %s134 = smul.addr %s133, 6
        %s135 = smul.addr %s134, 8
        %s136 = scalar_lea.vmem %s0, %s135
        %s137 = smul.u32 16, %s9
      $region28: #{airl_reward_forward.4} parent=23 // pred_fallthru
        _
    $region24: #{airl_reward_forward.4} parent=5 // pred_fallthru
      _
    %p138 = scmp.le.s32.totalorder 1, %s9
    %p139 = scmp.lt.s32.totalorder %s9, 10
    %p140 = pnand %p138, %p139
    %p141 = pneg %p140
    // Predicated region
    $region29: #{airl_reward_forward.4} parent=5 // pred_check
      _
    $region30: #{airl_reward_forward.4} parent=5 // pred_check_branch
      %143 = sbr.rel (%p140) target = $region32
    $region31: #{airl_reward_forward.4} parent=5 // pred_region
      %s144 = ssub.s32 %s9, 1
      %s145 = smul.u32 16, %s14
      %p146 = scmp.lt.s32.totalorder %s145, 143
      %s147 = scalar_select %p146, %s145, 143
      %s148 = smul.addr %s147, 6
      %s149 = smul.addr %s148, 8
      %s150 = scalar_lea.vmem %s0, %s149
      %p151 = pneg %p35
      %p152 = pneg %p32
      %p153 = pneg %p56
      %p154 = pneg %p53
      %p155 = pneg %p77
      %p156 = pneg %p74
      %p157 = pneg %p103
      %p158 = pneg %p100
      %s159 = smul.u32 16, %s14
      %p160 = scmp.lt.s32.totalorder %s159, 143
      %s161 = scalar_select %p160, %s159, 143
      %s162 = smul.addr %s161, 8
      %s163 = scalar_lea.vmem %s3, %s162
      %s164 = smul.u32 16, %s14
      %p165 = scmp.lt.s32.totalorder %s164, 143
      %s166 = scalar_select %p165, %s164, 143
      %s167 = smul.addr %s166, 6
      %s168 = smul.addr %s167, 8
      %s169 = scalar_lea.vmem %s0, %s168
      %s170 = smul.u32 16, %s14
      %s171 = smul.u32 16, %s14
      %p172 = scmp.lt.s32.totalorder %s171, 143
      %s173 = scalar_select %p172, %s171, 143
      %s174 = smul.addr %s173, 8
      %s175 = scalar_lea.vmem %s3, %s174
      %s176 = smul.u32 16, %s14
      %v177 = vld [vmem:[%s169] sm:$0xff]
      %v178 = vld [vmem:[%s169 + $0x8] sm:$0xff]
      %v179 = vld [vmem:[%s169 + $0x10] sm:$0xff]
      %v180 = vld [vmem:[%s169 + $0x18] sm:$0xff]
      %v181 = vld [vmem:[%s169 + $0x20] sm:$0xff]
      %v182 = vld [vmem:[%s169 + $0x28] sm:$0xff]
      %v183 = vld [vmem:[%s169 + $0x30] sm:$0xff]
      %v184 = vld [vmem:[%s169 + $0x38] sm:$0xff]
      %v185 = vld [vmem:[%s169 + $0x40] sm:$0xff]
      %v186 = vld [vmem:[%s169 + $0x48] sm:$0xff]
      %v187 = vld [vmem:[%s169 + $0x50] sm:$0xff]
      %v188 = vld [vmem:[%s169 + $0x58] sm:$0xff]
      %v189 = vld [vmem:[%s169 + $0x60] sm:$0xff]
      %v190 = vld [vmem:[%s169 + $0x68] sm:$0xff]
      %v191 = vld [vmem:[%s169 + $0x70] sm:$0xff]
      %v192 = vld [vmem:[%s169 + $0x78] sm:$0xff]
      %v193 = vld [vmem:[%s169 + $0x80] sm:$0xff]
      %v194 = vld [vmem:[%s169 + $0x88] sm:$0xff]
      %v195 = vld [vmem:[%s169 + $0x90] sm:$0xff]
      %v196 = vld [vmem:[%s169 + $0x98] sm:$0xff]
      %v197 = vld [vmem:[%s169 + $0xa0] sm:$0xff]
      %v198 = vld [vmem:[%s169 + $0xa8] sm:$0xff]
      %v199 = vld [vmem:[%s169 + $0xb0] sm:$0xff]
      %v200 = vld [vmem:[%s169 + $0xb8] sm:$0xff]
      %v201 = vld [vmem:[%s169 + $0xc0] sm:$0xff]
      %v202 = vld [vmem:[%s169 + $0xc8] sm:$0xff]
      %v203 = vld [vmem:[%s169 + $0xd0] sm:$0xff]
      %v204 = vld [vmem:[%s169 + $0xd8] sm:$0xff]
      %v205 = vld [vmem:[%s169 + $0xe0] sm:$0xff]
      %v206 = vld [vmem:[%s169 + $0xe8] sm:$0xff]
      %v207 = vld [vmem:[%s169 + $0xf0] sm:$0xff]
      %v208 = vld [vmem:[%s169 + $0xf8] sm:$0xff]
      %v209 = vld [vmem:[%s169 + $0x100] sm:$0xff]
      %v210 = vld [vmem:[%s169 + $0x108] sm:$0xff]
      %v211 = vld [vmem:[%s169 + $0x110] sm:$0xff]
      %v212 = vld [vmem:[%s169 + $0x118] sm:$0xff]
      %v213 = vld [vmem:[%s169 + $0x120] sm:$0xff]
      %v214 = vld [vmem:[%s169 + $0x128] sm:$0xff]
      %v215 = vld [vmem:[%s169 + $0x130] sm:$0xff]
      %v216 = vld [vmem:[%s169 + $0x138] sm:$0xff]
      %v217 = vld [vmem:[%s169 + $0x140] sm:$0xff]
      %v218 = vld [vmem:[%s169 + $0x148] sm:$0xff]
      %v219 = vld [vmem:[%s169 + $0x150] sm:$0xff]
      %v220 = vld [vmem:[%s169 + $0x158] sm:$0xff]
      %v221 = vld [vmem:[%s169 + $0x160] sm:$0xff]
      %v222 = vld [vmem:[%s169 + $0x168] sm:$0xff]
      %v223 = vld [vmem:[%s169 + $0x170] sm:$0xff]
      %v224 = vld [vmem:[%s169 + $0x178] sm:$0xff]
      %v225 = vld [vmem:[%s169 + $0x180] sm:$0xff]
      %v226 = vld [vmem:[%s169 + $0x188] sm:$0xff]
      %v227 = vld [vmem:[%s169 + $0x190] sm:$0xff]
      %v228 = vld [vmem:[%s169 + $0x198] sm:$0xff]
      %v229 = vld [vmem:[%s169 + $0x1a0] sm:$0xff]
      %v230 = vld [vmem:[%s169 + $0x1a8] sm:$0xff]
      %v231 = vld [vmem:[%s169 + $0x1b0] sm:$0xff]
      %v232 = vld [vmem:[%s169 + $0x1b8] sm:$0xff]
      %v233 = vld [vmem:[%s169 + $0x1c0] sm:$0xff]
      %v234 = vld [vmem:[%s169 + $0x1c8] sm:$0xff]
      %v235 = vld [vmem:[%s169 + $0x1d0] sm:$0xff]
      %v236 = vld [vmem:[%s169 + $0x1d8] sm:$0xff]
      %v237 = vld [vmem:[%s169 + $0x1e0] sm:$0xff]
      %v238 = vld [vmem:[%s169 + $0x1e8] sm:$0xff]
      %v239 = vld [vmem:[%s169 + $0x1f0] sm:$0xff]
      %v240 = vld [vmem:[%s169 + $0x1f8] sm:$0xff]
      %v241 = vld [vmem:[%s169 + $0x200] sm:$0xff]
      %v242 = vld [vmem:[%s169 + $0x208] sm:$0xff]
      %v243 = vld [vmem:[%s169 + $0x210] sm:$0xff]
      %v244 = vld [vmem:[%s169 + $0x218] sm:$0xff]
      %v245 = vld [vmem:[%s169 + $0x220] sm:$0xff]
      %v246 = vld [vmem:[%s169 + $0x228] sm:$0xff]
      %v247 = vld [vmem:[%s169 + $0x230] sm:$0xff]
      %v248 = vld [vmem:[%s169 + $0x238] sm:$0xff]
      %v249 = vld [vmem:[%s169 + $0x240] sm:$0xff]
      %v250 = vld [vmem:[%s169 + $0x248] sm:$0xff]
      %v251 = vld [vmem:[%s169 + $0x250] sm:$0xff]
      %v252 = vld [vmem:[%s169 + $0x258] sm:$0xff]
      %v253 = vld [vmem:[%s169 + $0x260] sm:$0xff]
      %v254 = vld [vmem:[%s169 + $0x268] sm:$0xff]
      %v255 = vld [vmem:[%s169 + $0x270] sm:$0xff]
      %v256 = vld [vmem:[%s169 + $0x278] sm:$0xff]
      %v257 = vld [vmem:[%s169 + $0x280] sm:$0xff]
      %v258 = vld [vmem:[%s169 + $0x288] sm:$0xff]
      %v259 = vld [vmem:[%s169 + $0x290] sm:$0xff]
      %v260 = vld [vmem:[%s169 + $0x298] sm:$0xff]
      %v261 = vld [vmem:[%s169 + $0x2a0] sm:$0xff]
      %v262 = vld [vmem:[%s169 + $0x2a8] sm:$0xff]
      %v263 = vld [vmem:[%s169 + $0x2b0] sm:$0xff]
      %v264 = vld [vmem:[%s169 + $0x2b8] sm:$0xff]
      %v265 = vld [vmem:[%s169 + $0x2c0] sm:$0xff]
      %v266 = vld [vmem:[%s169 + $0x2c8] sm:$0xff]
      %v267 = vld [vmem:[%s169 + $0x2d0] sm:$0xff]
      %v268 = vld [vmem:[%s169 + $0x2d8] sm:$0xff]
      %v269 = vld [vmem:[%s169 + $0x2e0] sm:$0xff]
      %v270 = vld [vmem:[%s169 + $0x2e8] sm:$0xff]
      %v271 = vld [vmem:[%s169 + $0x2f0] sm:$0xff]
      %v272 = vld [vmem:[%s169 + $0x2f8] sm:$0xff]
      %v273 = vld [vmem:[%s1] sm:$0xff]
      %v274 = vld [vmem:[%s1 + $0x8] sm:$0xff]
      %v275 = vld [vmem:[%s1 + $0x10] sm:$0xff]
      %v276 = vld [vmem:[%s1 + $0x18] sm:$0xff]
      %v277 = vld [vmem:[%s1 + $0x20] sm:$0xff]
      %v278 = vld [vmem:[%s1 + $0x28] sm:$0xff]
      %v279 = vld [vmem:[%s1 + $0x30] sm:$0xff]
      %v280 = vld [vmem:[%s1 + $0x38] sm:$0xff]
      %v281 = vld [vmem:[%s1 + $0x40] sm:$0xff]
      %v282 = vld [vmem:[%s1 + $0x48] sm:$0xff]
      %v283 = vld [vmem:[%s1 + $0x50] sm:$0xff]
      %v284 = vld [vmem:[%s1 + $0x58] sm:$0xff]
      %v285 = vld [vmem:[%s1 + $0x60] sm:$0xff]
      %v286 = vld [vmem:[%s1 + $0x68] sm:$0xff]
      %v287 = vld [vmem:[%s1 + $0x70] sm:$0xff]
      %v288 = vld [vmem:[%s1 + $0x78] sm:$0xff]
      %v289 = vld [vmem:[%s1 + $0x80] sm:$0xff]
      %v290 = vld [vmem:[%s1 + $0x88] sm:$0xff]
      %v291 = vld [vmem:[%s1 + $0x90] sm:$0xff]
      %v292 = vld [vmem:[%s1 + $0x98] sm:$0xff]
      %v293 = vld [vmem:[%s1 + $0xa0] sm:$0xff]
      %v294 = vld [vmem:[%s1 + $0xa8] sm:$0xff]
      %v295 = vld [vmem:[%s1 + $0xb0] sm:$0xff]
      %v296 = vld [vmem:[%s1 + $0xb8] sm:$0xff]
      %v297 = vld [vmem:[%s1 + $0xc0] sm:$0xff]
      %v298 = vld [vmem:[%s1 + $0xc8] sm:$0xff]
      %v299 = vld [vmem:[%s1 + $0xd0] sm:$0xff]
      %v300 = vld [vmem:[%s1 + $0xd8] sm:$0xff]
      %v301 = vld [vmem:[%s1 + $0xe0] sm:$0xff]
      %v302 = vld [vmem:[%s1 + $0xe8] sm:$0xff]
      %v303 = vld [vmem:[%s1 + $0xf0] sm:$0xff]
      %v304 = vld [vmem:[%s1 + $0xf8] sm:$0xff]
      %v305 = vld [vmem:[%s1 + $0x100] sm:$0xff]
      %v306 = vld [vmem:[%s1 + $0x108] sm:$0xff]
      %v307 = vld [vmem:[%s1 + $0x110] sm:$0xff]
      %v308 = vld [vmem:[%s1 + $0x118] sm:$0xff]
      %v309 = vld [vmem:[%s1 + $0x120] sm:$0xff]
      %v310 = vld [vmem:[%s1 + $0x128] sm:$0xff]
      %v311 = vld [vmem:[%s1 + $0x130] sm:$0xff]
      %v312 = vld [vmem:[%s1 + $0x138] sm:$0xff]
      %v313 = vld [vmem:[%s1 + $0x140] sm:$0xff]
      %v314 = vld [vmem:[%s1 + $0x148] sm:$0xff]
      %v315 = vld [vmem:[%s1 + $0x150] sm:$0xff]
      %v316 = vld [vmem:[%s1 + $0x158] sm:$0xff]
      %v317 = vld [vmem:[%s1 + $0x160] sm:$0xff]
      %v318 = vld [vmem:[%s1 + $0x168] sm:$0xff]
      %v319 = vld [vmem:[%s1 + $0x170] sm:$0xff]
      %v320 = vld [vmem:[%s1 + $0x178] sm:$0xff]
      %v321 = vld [vmem:[%s1 + $0x180] sm:$0xff]
      %v322 = vld [vmem:[%s1 + $0x188] sm:$0xff]
      %v323 = vld [vmem:[%s1 + $0x190] sm:$0xff]
      %v324 = vld [vmem:[%s1 + $0x198] sm:$0xff]
      %v325 = vld [vmem:[%s1 + $0x1a0] sm:$0xff]
      %v326 = vld [vmem:[%s1 + $0x1a8] sm:$0xff]
      %v327 = vld [vmem:[%s1 + $0x1b0] sm:$0xff]
      %v328 = vld [vmem:[%s1 + $0x1b8] sm:$0xff]
      %v329 = vld [vmem:[%s1 + $0x1c0] sm:$0xff]
      %v330 = vld [vmem:[%s1 + $0x1c8] sm:$0xff]
      %v331 = vld [vmem:[%s1 + $0x1d0] sm:$0xff]
      %v332 = vld [vmem:[%s1 + $0x1d8] sm:$0xff]
      %v333 = vld [vmem:[%s1 + $0x1e0] sm:$0xff]
      %v334 = vld [vmem:[%s1 + $0x1e8] sm:$0xff]
      %v335 = vld [vmem:[%s1 + $0x1f0] sm:$0xff]
      %v336 = vld [vmem:[%s1 + $0x1f8] sm:$0xff]
      %v337 = vld [vmem:[%s1 + $0x200] sm:$0xff]
      %v338 = vld [vmem:[%s1 + $0x208] sm:$0xff]
      %v339 = vld [vmem:[%s1 + $0x210] sm:$0xff]
      %v340 = vld [vmem:[%s1 + $0x218] sm:$0xff]
      %v341 = vld [vmem:[%s1 + $0x220] sm:$0xff]
      %v342 = vld [vmem:[%s1 + $0x228] sm:$0xff]
      %v343 = vld [vmem:[%s1 + $0x230] sm:$0xff]
      %v344 = vld [vmem:[%s1 + $0x238] sm:$0xff]
      %v345 = vld [vmem:[%s1 + $0x240] sm:$0xff]
      %v346 = vld [vmem:[%s1 + $0x248] sm:$0xff]
      %v347 = vld [vmem:[%s1 + $0x250] sm:$0xff]
      %v348 = vld [vmem:[%s1 + $0x258] sm:$0xff]
      %v349 = vld [vmem:[%s1 + $0x260] sm:$0xff]
      %v350 = vld [vmem:[%s1 + $0x268] sm:$0xff]
      %v351 = vld [vmem:[%s1 + $0x270] sm:$0xff]
      %v352 = vld [vmem:[%s1 + $0x278] sm:$0xff]
      %v353 = vld [vmem:[%s1 + $0x280] sm:$0xff]
      %v354 = vld [vmem:[%s1 + $0x288] sm:$0xff]
      %v355 = vld [vmem:[%s1 + $0x290] sm:$0xff]
      %v356 = vld [vmem:[%s1 + $0x298] sm:$0xff]
      %v357 = vld [vmem:[%s1 + $0x2a0] sm:$0xff]
      %v358 = vld [vmem:[%s1 + $0x2a8] sm:$0xff]
      %v359 = vld [vmem:[%s1 + $0x2b0] sm:$0xff]
      %v360 = vld [vmem:[%s1 + $0x2b8] sm:$0xff]
      %v361 = vld [vmem:[%s1 + $0x2c0] sm:$0xff]
      %v362 = vld [vmem:[%s1 + $0x2c8] sm:$0xff]
      %v363 = vld [vmem:[%s1 + $0x2d0] sm:$0xff]
      %v364 = vld [vmem:[%s1 + $0x2d8] sm:$0xff]
      %v365 = vld [vmem:[%s1 + $0x2e0] sm:$0xff]
      %v366 = vld [vmem:[%s1 + $0x2e8] sm:$0xff]
      %v367 = vld [vmem:[%s1 + $0x2f0] sm:$0xff]
      %v368 = vld [vmem:[%s1 + $0x2f8] sm:$0xff]
      %v369 = vld [vmem:[%s2] sm:$0x1]
      %v371 = vlaneseq
      %v372 = vshrl.u32 %v371, 7
      %v373 = vsub.s32 0, %v372
      %v374 = vrot.slane %v369, %v373
      %376 = vmatprep.subr.mxu0 0.0
      %377 = vmatpush1.msra.mxu0 %v288
      %378 = vmatprep.subr.mxu0 0.0
      %379 = vmatpush1.msra.mxu0 %v287
      %380 = vmatprep.subr.mxu0 0.0
      %381 = vmatpush1.msra.mxu0 %v286
      %382 = vmatprep.subr.mxu0 0.0
      %383 = vmatpush1.msra.mxu0 %v285
      %384 = vmatprep.subr.mxu0 0.0
      %385 = vmatpush1.msra.mxu0 %v284
      %386 = vmatprep.subr.mxu0 0.0
      %387 = vmatpush1.msra.mxu0 %v283
      %388 = vmatprep.subr.mxu0 0.0
      %389 = vmatpush1.msra.mxu0 %v282
      %390 = vmatprep.subr.mxu0 0.0
      %391 = vmatpush1.msra.mxu0 %v281
      %392 = vmatprep.subr.mxu0 0.0
      %393 = vmatpush1.msra.mxu0 %v280
      %394 = vmatprep.subr.mxu0 0.0
      %395 = vmatpush1.msra.mxu0 %v279
      %396 = vmatprep.subr.mxu0 0.0
      %397 = vmatpush1.msra.mxu0 %v278
      %398 = vmatprep.subr.mxu0 0.0
      %399 = vmatpush1.msra.mxu0 %v277
      %400 = vmatprep.subr.mxu0 0.0
      %401 = vmatpush1.msra.mxu0 %v276
      %402 = vmatprep.subr.mxu0 0.0
      %403 = vmatpush1.msra.mxu0 %v275
      %404 = vmatprep.subr.mxu0 0.0
      %405 = vmatpush1.msra.mxu0 %v274
      %406 = vmatprep.subr.mxu0 0.0
      %407 = vmatpush1.msra.mxu0 %v273
      %408 = vmatprep.subr.mxu0 0.0
      %409 = vmatpush2.msra.mxu0 %v304
      %410 = vmatprep.subr.mxu0 0.0
      %411 = vmatpush2.msra.mxu0 %v303
      %412 = vmatprep.subr.mxu0 0.0
      %413 = vmatpush2.msra.mxu0 %v302
      %414 = vmatprep.subr.mxu0 0.0
      %415 = vmatpush2.msra.mxu0 %v301
      %416 = vmatprep.subr.mxu0 0.0
      %417 = vmatpush2.msra.mxu0 %v300
      %418 = vmatprep.subr.mxu0 0.0
      %419 = vmatpush2.msra.mxu0 %v299
      %420 = vmatprep.subr.mxu0 0.0
      %421 = vmatpush2.msra.mxu0 %v298
      %422 = vmatprep.subr.mxu0 0.0
      %423 = vmatpush2.msra.mxu0 %v297
      %424 = vmatprep.subr.mxu0 0.0
      %425 = vmatpush2.msra.mxu0 %v296
      %426 = vmatprep.subr.mxu0 0.0
      %427 = vmatpush2.msra.mxu0 %v295
      %428 = vmatprep.subr.mxu0 0.0
      %429 = vmatpush2.msra.mxu0 %v294
      %430 = vmatprep.subr.mxu0 0.0
      %431 = vmatpush2.msra.mxu0 %v293
      %432 = vmatprep.subr.mxu0 0.0
      %433 = vmatpush2.msra.mxu0 %v292
      %434 = vmatprep.subr.mxu0 0.0
      %435 = vmatpush2.msra.mxu0 %v291
      %436 = vmatprep.subr.mxu0 0.0
      %437 = vmatpush2.msra.mxu0 %v290
      %438 = vmatprep.subr.mxu0 0.0
      %439 = vmatpush2.msra.mxu0 %v289
      %440 = vmatprep.mubr.f32.mxu0 %v178
      %441 = vmatmul.mubr.f32.gmra.mxu0 %v177
      %v442 = vpop.f32.mrf.mxu0
      %v443 = vadd.f32 %v374, %v442
      %v444 = vpop.f32.mrf.mxu0
      %445 = vmatprep.mubr.f32.mxu0 %v184
      %446 = vmatmul.mubr.f32.gmra.mxu0 %v183
      %v447 = vpop.f32.mrf.mxu0
      %v448 = vadd.f32 %v374, %v447
      %v449 = vpop.f32.mrf.mxu0
      %450 = vmatprep.mubr.f32.mxu0 %v190
      %451 = vmatmul.mubr.f32.gmra.mxu0 %v189
      %v452 = vpop.f32.mrf.mxu0
      %v453 = vadd.f32 %v374, %v452
      %v454 = vpop.f32.mrf.mxu0
      %455 = vmatprep.mubr.f32.mxu0 %v196
      %456 = vmatmul.mubr.f32.gmra.mxu0 %v195
      %v457 = vpop.f32.mrf.mxu0
      %v458 = vadd.f32 %v374, %v457
      %v459 = vpop.f32.mrf.mxu0
      %460 = vmatprep.mubr.f32.mxu0 %v202
      %461 = vmatmul.mubr.f32.gmra.mxu0 %v201
      %v462 = vpop.f32.mrf.mxu0
      %v463 = vadd.f32 %v374, %v462
      %v464 = vpop.f32.mrf.mxu0
      %465 = vmatprep.mubr.f32.mxu0 %v208
      %466 = vmatmul.mubr.f32.gmra.mxu0 %v207
      %v467 = vpop.f32.mrf.mxu0
      %v468 = vadd.f32 %v374, %v467
      %v469 = vpop.f32.mrf.mxu0
      %470 = vmatprep.mubr.f32.mxu0 %v214
      %471 = vmatmul.mubr.f32.gmra.mxu0 %v213
      %v472 = vpop.f32.mrf.mxu0
      %v473 = vadd.f32 %v374, %v472
      %v474 = vpop.f32.mrf.mxu0
      %475 = vmatprep.mubr.f32.mxu0 %v220
      %476 = vmatmul.mubr.f32.gmra.mxu0 %v219
      %v477 = vpop.f32.mrf.mxu0
      %v478 = vadd.f32 %v374, %v477
      %v479 = vpop.f32.mrf.mxu0
      %480 = vmatprep.mubr.f32.mxu0 %v226
      %481 = vmatmul.mubr.f32.gmra.mxu0 %v225
      %v482 = vpop.f32.mrf.mxu0
      %v483 = vadd.f32 %v374, %v482
      %v484 = vpop.f32.mrf.mxu0
      %485 = vmatprep.mubr.f32.mxu0 %v232
      %486 = vmatmul.mubr.f32.gmra.mxu0 %v231
      %v487 = vpop.f32.mrf.mxu0
      %v488 = vadd.f32 %v374, %v487
      %v489 = vpop.f32.mrf.mxu0
      %490 = vmatprep.mubr.f32.mxu0 %v238
      %491 = vmatmul.mubr.f32.gmra.mxu0 %v237
      %v492 = vpop.f32.mrf.mxu0
      %v493 = vadd.f32 %v374, %v492
      %v494 = vpop.f32.mrf.mxu0
      %495 = vmatprep.mubr.f32.mxu0 %v244
      %496 = vmatmul.mubr.f32.gmra.mxu0 %v243
      %v497 = vpop.f32.mrf.mxu0
      %v498 = vadd.f32 %v374, %v497
      %v499 = vpop.f32.mrf.mxu0
      %500 = vmatprep.mubr.f32.mxu0 %v250
      %501 = vmatmul.mubr.f32.gmra.mxu0 %v249
      %v502 = vpop.f32.mrf.mxu0
      %v503 = vadd.f32 %v374, %v502
      %v504 = vpop.f32.mrf.mxu0
      %505 = vmatprep.mubr.f32.mxu0 %v256
      %506 = vmatmul.mubr.f32.gmra.mxu0 %v255
      %v507 = vpop.f32.mrf.mxu0
      %v508 = vadd.f32 %v374, %v507
      %v509 = vpop.f32.mrf.mxu0
      %510 = vmatprep.mubr.f32.mxu0 %v262
      %511 = vmatmul.mubr.f32.gmra.mxu0 %v261
      %v512 = vpop.f32.mrf.mxu0
      %v513 = vadd.f32 %v374, %v512
      %v514 = vpop.f32.mrf.mxu0
      %515 = vmatprep.mubr.f32.mxu0 %v268
      %516 = vmatmul.mubr.f32.gmra.mxu0 %v267
      %v517 = vpop.f32.mrf.mxu0
      %v518 = vadd.f32 %v374, %v517
      %v519 = vpop.f32.mrf.mxu0
      %520 = vdwg.mxu0
      %521 = vmatprep.subr.mxu0 0.0
      %522 = vmatpush1.msra.mxu0 %v320
      %523 = vmatprep.subr.mxu0 0.0
      %524 = vmatpush1.msra.mxu0 %v319
      %525 = vmatprep.subr.mxu0 0.0
      %526 = vmatpush1.msra.mxu0 %v318
      %527 = vmatprep.subr.mxu0 0.0
      %528 = vmatpush1.msra.mxu0 %v317
      %529 = vmatprep.subr.mxu0 0.0
      %530 = vmatpush1.msra.mxu0 %v316
      %531 = vmatprep.subr.mxu0 0.0
      %532 = vmatpush1.msra.mxu0 %v315
      %533 = vmatprep.subr.mxu0 0.0
      %534 = vmatpush1.msra.mxu0 %v314
      %535 = vmatprep.subr.mxu0 0.0
      %536 = vmatpush1.msra.mxu0 %v313
      %537 = vmatprep.subr.mxu0 0.0
      %538 = vmatpush1.msra.mxu0 %v312
      %539 = vmatprep.subr.mxu0 0.0
      %540 = vmatpush1.msra.mxu0 %v311
      %541 = vmatprep.subr.mxu0 0.0
      %542 = vmatpush1.msra.mxu0 %v310
      %543 = vmatprep.subr.mxu0 0.0
      %544 = vmatpush1.msra.mxu0 %v309
      %545 = vmatprep.subr.mxu0 0.0
      %546 = vmatpush1.msra.mxu0 %v308
      %547 = vmatprep.subr.mxu0 0.0
      %548 = vmatpush1.msra.mxu0 %v307
      %549 = vmatprep.subr.mxu0 0.0
      %550 = vmatpush1.msra.mxu0 %v306
      %551 = vmatprep.subr.mxu0 0.0
      %552 = vmatpush1.msra.mxu0 %v305
      %553 = vmatprep.subr.mxu0 0.0
      %554 = vmatpush2.msra.mxu0 %v336
      %555 = vmatprep.subr.mxu0 0.0
      %556 = vmatpush2.msra.mxu0 %v335
      %557 = vmatprep.subr.mxu0 0.0
      %558 = vmatpush2.msra.mxu0 %v334
      %559 = vmatprep.subr.mxu0 0.0
      %560 = vmatpush2.msra.mxu0 %v333
      %561 = vmatprep.subr.mxu0 0.0
      %562 = vmatpush2.msra.mxu0 %v332
      %563 = vmatprep.subr.mxu0 0.0
      %564 = vmatpush2.msra.mxu0 %v331
      %565 = vmatprep.subr.mxu0 0.0
      %566 = vmatpush2.msra.mxu0 %v330
      %567 = vmatprep.subr.mxu0 0.0
      %568 = vmatpush2.msra.mxu0 %v329
      %569 = vmatprep.subr.mxu0 0.0
      %570 = vmatpush2.msra.mxu0 %v328
      %571 = vmatprep.subr.mxu0 0.0
      %572 = vmatpush2.msra.mxu0 %v327
      %573 = vmatprep.subr.mxu0 0.0
      %574 = vmatpush2.msra.mxu0 %v326
      %575 = vmatprep.subr.mxu0 0.0
      %576 = vmatpush2.msra.mxu0 %v325
      %577 = vmatprep.subr.mxu0 0.0
      %578 = vmatpush2.msra.mxu0 %v324
      %579 = vmatprep.subr.mxu0 0.0
      %580 = vmatpush2.msra.mxu0 %v323
      %581 = vmatprep.subr.mxu0 0.0
      %582 = vmatpush2.msra.mxu0 %v322
      %583 = vmatprep.subr.mxu0 0.0
      %584 = vmatpush2.msra.mxu0 %v321
      %585 = vmatprep.mubr.f32.mxu0 %v180
      %586 = vmatmul.mubr.f32.gmra.mxu0 %v179
      %v587 = vpop.f32.mrf.mxu0
      %v588 = vadd.f32 %v443, %v587
      %v589 = vpop.f32.mrf.mxu0
      %590 = vmatprep.mubr.f32.mxu0 %v186
      %591 = vmatmul.mubr.f32.gmra.mxu0 %v185
      %v592 = vpop.f32.mrf.mxu0
      %v593 = vadd.f32 %v448, %v592
      %v594 = vpop.f32.mrf.mxu0
      %595 = vmatprep.mubr.f32.mxu0 %v192
      %596 = vmatmul.mubr.f32.gmra.mxu0 %v191
      %v597 = vpop.f32.mrf.mxu0
      %v598 = vadd.f32 %v453, %v597
      %v599 = vpop.f32.mrf.mxu0
      %600 = vmatprep.mubr.f32.mxu0 %v198
      %601 = vmatmul.mubr.f32.gmra.mxu0 %v197
      %v602 = vpop.f32.mrf.mxu0
      %v603 = vadd.f32 %v458, %v602
      %v604 = vpop.f32.mrf.mxu0
      %605 = vmatprep.mubr.f32.mxu0 %v204
      %606 = vmatmul.mubr.f32.gmra.mxu0 %v203
      %v607 = vpop.f32.mrf.mxu0
      %v608 = vadd.f32 %v463, %v607
      %v609 = vpop.f32.mrf.mxu0
      %610 = vmatprep.mubr.f32.mxu0 %v210
      %611 = vmatmul.mubr.f32.gmra.mxu0 %v209
      %v612 = vpop.f32.mrf.mxu0
      %v613 = vadd.f32 %v468, %v612
      %v614 = vpop.f32.mrf.mxu0
      %615 = vmatprep.mubr.f32.mxu0 %v216
      %616 = vmatmul.mubr.f32.gmra.mxu0 %v215
      %v617 = vpop.f32.mrf.mxu0
      %v618 = vadd.f32 %v473, %v617
      %v619 = vpop.f32.mrf.mxu0
      %620 = vmatprep.mubr.f32.mxu0 %v222
      %621 = vmatmul.mubr.f32.gmra.mxu0 %v221
      %v622 = vpop.f32.mrf.mxu0
      %v623 = vadd.f32 %v478, %v622
      %v624 = vpop.f32.mrf.mxu0
      %625 = vmatprep.mubr.f32.mxu0 %v228
      %626 = vmatmul.mubr.f32.gmra.mxu0 %v227
      %v627 = vpop.f32.mrf.mxu0
      %v628 = vadd.f32 %v483, %v627
      %v629 = vpop.f32.mrf.mxu0
      %630 = vmatprep.mubr.f32.mxu0 %v234
      %631 = vmatmul.mubr.f32.gmra.mxu0 %v233
      %v632 = vpop.f32.mrf.mxu0
      %v633 = vadd.f32 %v488, %v632
      %v634 = vpop.f32.mrf.mxu0
      %635 = vmatprep.mubr.f32.mxu0 %v240
      %636 = vmatmul.mubr.f32.gmra.mxu0 %v239
      %v637 = vpop.f32.mrf.mxu0
      %v638 = vadd.f32 %v493, %v637
      %v639 = vpop.f32.mrf.mxu0
      %640 = vmatprep.mubr.f32.mxu0 %v246
      %641 = vmatmul.mubr.f32.gmra.mxu0 %v245
      %v642 = vpop.f32.mrf.mxu0
      %v643 = vadd.f32 %v498, %v642
      %v644 = vpop.f32.mrf.mxu0
      %645 = vmatprep.mubr.f32.mxu0 %v252
      %646 = vmatmul.mubr.f32.gmra.mxu0 %v251
      %v647 = vpop.f32.mrf.mxu0
      %v648 = vadd.f32 %v503, %v647
      %v649 = vpop.f32.mrf.mxu0
      %650 = vmatprep.mubr.f32.mxu0 %v258
      %651 = vmatmul.mubr.f32.gmra.mxu0 %v257
      %v652 = vpop.f32.mrf.mxu0
      %v653 = vadd.f32 %v508, %v652
      %v654 = vpop.f32.mrf.mxu0
      %655 = vmatprep.mubr.f32.mxu0 %v264
      %656 = vmatmul.mubr.f32.gmra.mxu0 %v263
      %v657 = vpop.f32.mrf.mxu0
      %v658 = vadd.f32 %v513, %v657
      %v659 = vpop.f32.mrf.mxu0
      %660 = vmatprep.mubr.f32.mxu0 %v270
      %661 = vmatmul.mubr.f32.gmra.mxu0 %v269
      %v662 = vpop.f32.mrf.mxu0
      %v663 = vadd.f32 %v518, %v662
      %v664 = vpop.f32.mrf.mxu0
      %665 = vdwg.mxu0
      %666 = vmatprep.subr.mxu0 0.0
      %667 = vmatpush1.msra.mxu0 %v352
      %668 = vmatprep.subr.mxu0 0.0
      %669 = vmatpush1.msra.mxu0 %v351
      %670 = vmatprep.subr.mxu0 0.0
      %671 = vmatpush1.msra.mxu0 %v350
      %672 = vmatprep.subr.mxu0 0.0
      %673 = vmatpush1.msra.mxu0 %v349
      %674 = vmatprep.subr.mxu0 0.0
      %675 = vmatpush1.msra.mxu0 %v348
      %676 = vmatprep.subr.mxu0 0.0
      %677 = vmatpush1.msra.mxu0 %v347
      %678 = vmatprep.subr.mxu0 0.0
      %679 = vmatpush1.msra.mxu0 %v346
      %680 = vmatprep.subr.mxu0 0.0
      %681 = vmatpush1.msra.mxu0 %v345
      %682 = vmatprep.subr.mxu0 0.0
      %683 = vmatpush1.msra.mxu0 %v344
      %684 = vmatprep.subr.mxu0 0.0
      %685 = vmatpush1.msra.mxu0 %v343
      %686 = vmatprep.subr.mxu0 0.0
      %687 = vmatpush1.msra.mxu0 %v342
      %688 = vmatprep.subr.mxu0 0.0
      %689 = vmatpush1.msra.mxu0 %v341
      %690 = vmatprep.subr.mxu0 0.0
      %691 = vmatpush1.msra.mxu0 %v340
      %692 = vmatprep.subr.mxu0 0.0
      %693 = vmatpush1.msra.mxu0 %v339
      %694 = vmatprep.subr.mxu0 0.0
      %695 = vmatpush1.msra.mxu0 %v338
      %696 = vmatprep.subr.mxu0 0.0
      %697 = vmatpush1.msra.mxu0 %v337
      %698 = vmatprep.subr.mxu0 0.0
      %699 = vmatpush2.msra.mxu0 %v368
      %700 = vmatprep.subr.mxu0 0.0
      %701 = vmatpush2.msra.mxu0 %v367
      %702 = vmatprep.subr.mxu0 0.0
      %703 = vmatpush2.msra.mxu0 %v366
      %704 = vmatprep.subr.mxu0 0.0
      %705 = vmatpush2.msra.mxu0 %v365
      %706 = vmatprep.subr.mxu0 0.0
      %707 = vmatpush2.msra.mxu0 %v364
      %708 = vmatprep.subr.mxu0 0.0
      %709 = vmatpush2.msra.mxu0 %v363
      %710 = vmatprep.subr.mxu0 0.0
      %711 = vmatpush2.msra.mxu0 %v362
      %712 = vmatprep.subr.mxu0 0.0
      %713 = vmatpush2.msra.mxu0 %v361
      %714 = vmatprep.subr.mxu0 0.0
      %715 = vmatpush2.msra.mxu0 %v360
      %716 = vmatprep.subr.mxu0 0.0
      %717 = vmatpush2.msra.mxu0 %v359
      %718 = vmatprep.subr.mxu0 0.0
      %719 = vmatpush2.msra.mxu0 %v358
      %720 = vmatprep.subr.mxu0 0.0
      %721 = vmatpush2.msra.mxu0 %v357
      %722 = vmatprep.subr.mxu0 0.0
      %723 = vmatpush2.msra.mxu0 %v356
      %724 = vmatprep.subr.mxu0 0.0
      %725 = vmatpush2.msra.mxu0 %v355
      %726 = vmatprep.subr.mxu0 0.0
      %727 = vmatpush2.msra.mxu0 %v354
      %728 = vmatprep.subr.mxu0 0.0
      %729 = vmatpush2.msra.mxu0 %v353
      %730 = vmatprep.mubr.f32.mxu0 %v182
      %731 = vmatmul.mubr.f32.gmra.mxu0 %v181
      %v732 = vpop.f32.mrf.mxu0
      %v733 = vadd.f32 %v588, %v732
      %v734 = vpop.f32.mrf.mxu0
      %735 = vmatprep.mubr.f32.mxu0 %v188
      %736 = vmatmul.mubr.f32.gmra.mxu0 %v187
      %v737 = vpop.f32.mrf.mxu0
      %v738 = vadd.f32 %v593, %v737
      %v739 = vpop.f32.mrf.mxu0
      %740 = vmatprep.mubr.f32.mxu0 %v194
      %741 = vmatmul.mubr.f32.gmra.mxu0 %v193
      %v742 = vpop.f32.mrf.mxu0
      %v743 = vadd.f32 %v598, %v742
      %v744 = vpop.f32.mrf.mxu0
      %745 = vmatprep.mubr.f32.mxu0 %v200
      %746 = vmatmul.mubr.f32.gmra.mxu0 %v199
      %v747 = vpop.f32.mrf.mxu0
      %v748 = vadd.f32 %v603, %v747
      %v749 = vpop.f32.mrf.mxu0
      %750 = vmatprep.mubr.f32.mxu0 %v206
      %751 = vmatmul.mubr.f32.gmra.mxu0 %v205
      %v752 = vpop.f32.mrf.mxu0
      %v753 = vadd.f32 %v608, %v752
      %v754 = vpop.f32.mrf.mxu0
      %755 = vmatprep.mubr.f32.mxu0 %v212
      %756 = vmatmul.mubr.f32.gmra.mxu0 %v211
      %v757 = vpop.f32.mrf.mxu0
      %v758 = vadd.f32 %v613, %v757
      %v759 = vpop.f32.mrf.mxu0
      %760 = vmatprep.mubr.f32.mxu0 %v218
      %761 = vmatmul.mubr.f32.gmra.mxu0 %v217
      %v762 = vpop.f32.mrf.mxu0
      %v763 = vadd.f32 %v618, %v762
      %v764 = vpop.f32.mrf.mxu0
      %765 = vmatprep.mubr.f32.mxu0 %v224
      %766 = vmatmul.mubr.f32.gmra.mxu0 %v223
      %v767 = vpop.f32.mrf.mxu0
      %v768 = vadd.f32 %v623, %v767
      %v769 = vpop.f32.mrf.mxu0
      %770 = vmatprep.mubr.f32.mxu0 %v230
      %771 = vmatmul.mubr.f32.gmra.mxu0 %v229
      %v772 = vpop.f32.mrf.mxu0
      %v773 = vadd.f32 %v628, %v772
      %v774 = vpop.f32.mrf.mxu0
      %775 = vmatprep.mubr.f32.mxu0 %v236
      %776 = vmatmul.mubr.f32.gmra.mxu0 %v235
      %v777 = vpop.f32.mrf.mxu0
      %v778 = vadd.f32 %v633, %v777
      %v779 = vpop.f32.mrf.mxu0
      %780 = vmatprep.mubr.f32.mxu0 %v242
      %781 = vmatmul.mubr.f32.gmra.mxu0 %v241
      %v782 = vpop.f32.mrf.mxu0
      %v783 = vadd.f32 %v638, %v782
      %v784 = vpop.f32.mrf.mxu0
      %785 = vmatprep.mubr.f32.mxu0 %v248
      %786 = vmatmul.mubr.f32.gmra.mxu0 %v247
      %v787 = vpop.f32.mrf.mxu0
      %v788 = vadd.f32 %v643, %v787
      %v789 = vpop.f32.mrf.mxu0
      %790 = vmatprep.mubr.f32.mxu0 %v254
      %791 = vmatmul.mubr.f32.gmra.mxu0 %v253
      %v792 = vpop.f32.mrf.mxu0
      %v793 = vadd.f32 %v648, %v792
      %v794 = vpop.f32.mrf.mxu0
      %795 = vmatprep.mubr.f32.mxu0 %v260
      %796 = vmatmul.mubr.f32.gmra.mxu0 %v259
      %v797 = vpop.f32.mrf.mxu0
      %v798 = vadd.f32 %v653, %v797
      %v799 = vpop.f32.mrf.mxu0
      %800 = vmatprep.mubr.f32.mxu0 %v266
      %801 = vmatmul.mubr.f32.gmra.mxu0 %v265
      %v802 = vpop.f32.mrf.mxu0
      %v803 = vadd.f32 %v658, %v802
      %v804 = vpop.f32.mrf.mxu0
      %805 = vmatprep.mubr.f32.mxu0 %v272
      %806 = vmatmul.mubr.f32.gmra.mxu0 %v271
      %v807 = vpop.f32.mrf.mxu0
      %v808 = vadd.f32 %v663, %v807
      %v809 = vpop.f32.mrf.mxu0
      %810 = vdwg.mxu0
      %v811 = vmax.f32 %v733, 0.0
      %v812 = vmax.f32 %v738, 0.0
      %v813 = vmax.f32 %v743, 0.0
      %v814 = vmax.f32 %v748, 0.0
      %v815 = vmax.f32 %v753, 0.0
      %v816 = vmax.f32 %v758, 0.0
      %v817 = vmax.f32 %v763, 0.0
      %v818 = vmax.f32 %v768, 0.0
      %v819 = vmax.f32 %v773, 0.0
      %v820 = vmax.f32 %v778, 0.0
      %v821 = vmax.f32 %v783, 0.0
      %v822 = vmax.f32 %v788, 0.0
      %v823 = vmax.f32 %v793, 0.0
      %v824 = vmax.f32 %v798, 0.0
      %v825 = vmax.f32 %v803, 0.0
      %v826 = vmax.f32 %v808, 0.0
      %vm827 = vcmask 261120
      %828 = vst.msk [vmem:[%s175] sm:$0xff] %vm827, %v811
      %829 = vst.msk [vmem:[%s175 + $0x8] sm:$0xff] %vm827, %v812
      %830 = vst.msk [vmem:[%s175 + $0x10] sm:$0xff] %vm827, %v813
      %831 = vst.msk [vmem:[%s175 + $0x18] sm:$0xff] %vm827, %v814
      %832 = vst.msk [vmem:[%s175 + $0x20] sm:$0xff] %vm827, %v815
      %833 = vst.msk [vmem:[%s175 + $0x28] sm:$0xff] %vm827, %v816
      %834 = vst.msk [vmem:[%s175 + $0x30] sm:$0xff] %vm827, %v817
      %835 = vst.msk [vmem:[%s175 + $0x38] sm:$0xff] %vm827, %v818
      %836 = vst.msk [vmem:[%s175 + $0x40] sm:$0xff] %vm827, %v819
      %837 = vst.msk [vmem:[%s175 + $0x48] sm:$0xff] %vm827, %v820
      %838 = vst.msk [vmem:[%s175 + $0x50] sm:$0xff] %vm827, %v821
      %839 = vst.msk [vmem:[%s175 + $0x58] sm:$0xff] %vm827, %v822
      %840 = vst.msk [vmem:[%s175 + $0x60] sm:$0xff] %vm827, %v823
      %841 = vst.msk [vmem:[%s175 + $0x68] sm:$0xff] %vm827, %v824
      %842 = vst.msk [vmem:[%s175 + $0x70] sm:$0xff] %vm827, %v825
      %843 = vst.msk [vmem:[%s175 + $0x78] sm:$0xff] %vm827, %v826
      %s844 = smul.u32 16, %s14
      %p845 = scmp.lt.s32.totalorder %s844, 143
      %s846 = scalar_select %p845, %s844, 143
      %s847 = smul.addr %s846, 8
      %s848 = scalar_lea.vmem %s3, %s847
      // Predicated region
      $region33: #{airl_reward_forward.4} parent=31 // pred_check
        %p849 = pneg %p100
      $region34: #{airl_reward_forward.4} parent=31 // pred_check_branch
        %851 = sbr.rel (%p849) target = $region36
      $region35: #{airl_reward_forward.4} parent=31 // pred_region
        %s852 = smul.u32 16, %s14
      $region36: #{airl_reward_forward.4} parent=31 // pred_fallthru
        _
    $region32: #{airl_reward_forward.4} parent=5 // pred_fallthru
      _
    %p853 = scmp.le.s32.totalorder 2, %s9
    // Predicated region
    $region37: #{airl_reward_forward.4} parent=5 // pred_check
      %p854 = pneg %p853
    $region38: #{airl_reward_forward.4} parent=5 // pred_check_branch
      %856 = sbr.rel (%p854) target = $region40
    $region39: #{airl_reward_forward.4} parent=5 // pred_region
      %s857 = ssub.s32 %s9, 2
      // Predicated region
      $region41: #{airl_reward_forward.4} parent=39 // pred_check
        %p858 = pneg %p106
      $region42: #{airl_reward_forward.4} parent=39 // pred_check_branch
        %860 = sbr.rel (%p858) target = $region44
      $region43: #{airl_reward_forward.4} parent=39 // pred_region
        %s861 = smul.u32 16, %s15
        %p862 = scmp.lt.s32.totalorder %s861, 143
        %s863 = scalar_select %p862, %s861, 143
        %s864 = smul.addr %s863, 8
        %s865 = scalar_lea.vmem %s3, %s864
      $region44: #{airl_reward_forward.4} parent=39 // pred_fallthru
        _
    $region40: #{airl_reward_forward.4} parent=5 // pred_fallthru
      _
  $region6: #{airl_reward_forward.4} parent=0 // loop_footer
    %s13 = sadd.s32 1, %s9
  $region7: #{airl_reward_forward.4} parent=0 // loop_footer_branch
    %8 = sbr.rel target = $region3
  $region8: #{airl_reward_forward.4} parent=0 // loop_exit
    _

// kernel: airl_reward_forward.5
$region0: #{airl_reward_forward.5}
  #allocation0 [shape = 'u32[]', space=smem, size = 0x4, offset = 0x4, fixed_abs, tag = 'smem constant byte address 0x4 - core index']
  #allocation1 [shape = 'u32[144,128]{1,0:T(1,128)}', space=vmem, size = 0x12000, scoped, tag = 'internal scratch']
  %s0 = inlined_call_operand.vmem [shape: f32[256,512], index: 0, kind: input, shape index: {}]
  %s1 = inlined_call_operand.vmem [shape: f32[512,64], index: 1, kind: input, shape index: {}]
  %s2 = inlined_call_operand.vmem [shape: f32[1,64], index: 2, kind: input, shape index: {}]
  %s3 = inlined_call_operand.vmem [shape: f32[256,64], index: 3, kind: output, shape index: {}]
  %s4 = sld [smem:[#allocation0]]
  $region45: #{airl_reward_forward.5} parent=0
    _
  %s6 = ssub.s32 1, %s4
  %s7 = scalar_select 0, %s6, %s4
  loop: start=0, step=1, limit=4
  $region2: #{airl_reward_forward.5} parent=0 // loop_pre_header
    _
  $region3: #{airl_reward_forward.5} parent=0 // loop_header
    %s9 = sphi 0, %s13
    %p10 = scmp.ge.s32.totalorder %s9, 4
    %s19 = sphi 0, %s21
    %s22 = sphi 0, %s19
    %s23 = sphi 0, %s22
    %s39 = sphi 0, %s23
    %s43 = sphi 0, %s43
    %s45 = sphi 0, %s43
    %s46 = sphi 0, %s45
    %s60 = sphi 0, %s46
    %s64 = sphi 0, %s64
    %s66 = sphi 0, %s64
    %s67 = sphi 0, %s66
    %s81 = sphi 0, %s67
    %s87 = sphi 0, %s89
    %s90 = sphi 0, %s87
    %s91 = sphi 0, %s90
    %s107 = sphi 0, %s91
  $region4: #{airl_reward_forward.5} parent=0 // loop_header_branch
    %12 = sbr.rel (%p10) target = $region8
  $region5: #{airl_reward_forward.5} parent=0 // loop_body
    %s14 = ssub.s32 %s9, 1
    %s15 = ssub.s32 %s9, 2
    %s16 = sadd.s32 %s9, 1
    %s17 = ssub.s32 %s9, %s16
    %p18 = scmp.eq.s32.totalorder %s17, 0
    %s20 = sadd.s32 %s19, 1
    %s21 = scalar_select %p18, %s19, %s20
    %p24 = pneg %p18
    %p25 = scmp.eq.s32.totalorder %s9, 1
    %p26 = por %p24, %p25
    %p27 = scmp.ne.s32.totalorder %s19, %s22
    %p28 = scmp.eq.s32.totalorder %s9, 0
    %p29 = por %p27, %p28
    %p30 = scmp.ne.s32.totalorder %s19, %s22
    %p31 = scmp.eq.s32.totalorder %s14, 1
    %p32 = por %p30, %p31
    %p33 = scmp.ne.s32.totalorder %s22, %s23
    %p34 = scmp.eq.s32.totalorder %s14, 0
    %p35 = por %p33, %p34
    %p36 = scmp.ne.s32.totalorder %s22, %s23
    %p37 = scmp.eq.s32.totalorder %s15, 1
    %p38 = por %p36, %p37
    %p40 = scmp.ne.s32.totalorder %s23, %s39
    %p41 = scmp.eq.s32.totalorder %s15, 0
    %p42 = por %p40, %p41
    %s44 = sadd.s32 %s43, 1
    %p47 = scmp.eq.s32.totalorder %s9, 1
    %p48 = scmp.ne.s32.totalorder %s43, %s45
    %p49 = scmp.eq.s32.totalorder %s9, 0
    %p50 = por %p48, %p49
    %p51 = scmp.ne.s32.totalorder %s43, %s45
    %p52 = scmp.eq.s32.totalorder %s14, 1
    %p53 = por %p51, %p52
    %p54 = scmp.ne.s32.totalorder %s45, %s46
    %p55 = scmp.eq.s32.totalorder %s14, 0
    %p56 = por %p54, %p55
    %p57 = scmp.ne.s32.totalorder %s45, %s46
    %p58 = scmp.eq.s32.totalorder %s15, 1
    %p59 = por %p57, %p58
    %p61 = scmp.ne.s32.totalorder %s46, %s60
    %p62 = scmp.eq.s32.totalorder %s15, 0
    %p63 = por %p61, %p62
    %s65 = sadd.s32 %s64, 1
    %p68 = scmp.eq.s32.totalorder %s9, 1
    %p69 = scmp.ne.s32.totalorder %s64, %s66
    %p70 = scmp.eq.s32.totalorder %s9, 0
    %p71 = por %p69, %p70
    %p72 = scmp.ne.s32.totalorder %s64, %s66
    %p73 = scmp.eq.s32.totalorder %s14, 1
    %p74 = por %p72, %p73
    %p75 = scmp.ne.s32.totalorder %s66, %s67
    %p76 = scmp.eq.s32.totalorder %s14, 0
    %p77 = por %p75, %p76
    %p78 = scmp.ne.s32.totalorder %s66, %s67
    %p79 = scmp.eq.s32.totalorder %s15, 1
    %p80 = por %p78, %p79
    %p82 = scmp.ne.s32.totalorder %s67, %s81
    %p83 = scmp.eq.s32.totalorder %s15, 0
    %p84 = por %p82, %p83
    %s85 = ssub.s32 %s9, %s16
    %p86 = scmp.eq.s32.totalorder %s85, 0
    %s88 = sadd.s32 %s87, 1
    %s89 = scalar_select %p86, %s87, %s88
    %p92 = pneg %p86
    %p93 = scmp.eq.s32.totalorder %s9, 1
    %p94 = por %p92, %p93
    %p95 = scmp.ne.s32.totalorder %s87, %s90
    %p96 = scmp.eq.s32.totalorder %s9, 0
    %p97 = por %p95, %p96
    %p98 = scmp.ne.s32.totalorder %s87, %s90
    %p99 = scmp.eq.s32.totalorder %s14, 1
    %p100 = por %p98, %p99
    %p101 = scmp.ne.s32.totalorder %s90, %s91
    %p102 = scmp.eq.s32.totalorder %s14, 0
    %p103 = por %p101, %p102
    %p104 = scmp.ne.s32.totalorder %s90, %s91
    %p105 = scmp.eq.s32.totalorder %s15, 1
    %p106 = por %p104, %p105
    %p108 = scmp.ne.s32.totalorder %s91, %s107
    %p109 = scmp.eq.s32.totalorder %s15, 0
    %p110 = por %p108, %p109
    %p111 = scmp.le.s32.totalorder 1, %s9
    %p112 = scmp.lt.s32.totalorder %s9, 3
    %p113 = pnand %p111, %p112
    %p114 = pneg %p113
    // Predicated region
    $region9: #{airl_reward_forward.5} parent=5 // pred_check
      _
    $region10: #{airl_reward_forward.5} parent=5 // pred_check_branch
      %116 = sbr.rel (%p113) target = $region12
    $region11: #{airl_reward_forward.5} parent=5 // pred_region
      %s117 = ssub.s32 %s9, 1
      // Predicated region
      $region13: #{airl_reward_forward.5} parent=11 // pred_check
        %p118 = pneg %p56
      $region14: #{airl_reward_forward.5} parent=11 // pred_check_branch
        %120 = sbr.rel (%p118) target = $region16
      $region15: #{airl_reward_forward.5} parent=11 // pred_region
        _
      $region16: #{airl_reward_forward.5} parent=11 // pred_fallthru
        _
      // Predicated region
      $region17: #{airl_reward_forward.5} parent=11 // pred_check
        %p121 = pneg %p77
      $region18: #{airl_reward_forward.5} parent=11 // pred_check_branch
        %123 = sbr.rel (%p121) target = $region20
      $region19: #{airl_reward_forward.5} parent=11 // pred_region
        _
      $region20: #{airl_reward_forward.5} parent=11 // pred_fallthru
        _
    $region12: #{airl_reward_forward.5} parent=5 // pred_fallthru
      _
    %p124 = scmp.lt.s32.totalorder %s9, 2
    // Predicated region
    $region21: #{airl_reward_forward.5} parent=5 // pred_check
      %p125 = pneg %p124
    $region22: #{airl_reward_forward.5} parent=5 // pred_check_branch
      %127 = sbr.rel (%p125) target = $region24
    $region23: #{airl_reward_forward.5} parent=5 // pred_region
      // Predicated region
      $region25: #{airl_reward_forward.5} parent=23 // pred_check
        %p128 = pneg %p29
      $region26: #{airl_reward_forward.5} parent=23 // pred_check_branch
        %130 = sbr.rel (%p128) target = $region28
      $region27: #{airl_reward_forward.5} parent=23 // pred_region
        %s131 = smul.u32 16, %s9
        %p132 = scmp.lt.s32.totalorder %s131, 31
        %s133 = scalar_select %p132, %s131, 31
        %s134 = smul.addr %s133, 4
        %s135 = smul.addr %s134, 8
        %s136 = scalar_lea.vmem %s0, %s135
        %s137 = smul.u32 16, %s9
      $region28: #{airl_reward_forward.5} parent=23 // pred_fallthru
        _
    $region24: #{airl_reward_forward.5} parent=5 // pred_fallthru
      _
    %p138 = scmp.le.s32.totalorder 1, %s9
    %p139 = scmp.lt.s32.totalorder %s9, 3
    %p140 = pnand %p138, %p139
    %p141 = pneg %p140
    // Predicated region
    $region29: #{airl_reward_forward.5} parent=5 // pred_check
      _
    $region30: #{airl_reward_forward.5} parent=5 // pred_check_branch
      %143 = sbr.rel (%p140) target = $region32
    $region31: #{airl_reward_forward.5} parent=5 // pred_region
      %s144 = ssub.s32 %s9, 1
      %s145 = smul.u32 16, %s14
      %p146 = scmp.lt.s32.totalorder %s145, 31
      %s147 = scalar_select %p146, %s145, 31
      %s148 = smul.addr %s147, 4
      %s149 = smul.addr %s148, 8
      %s150 = scalar_lea.vmem %s0, %s149
      %p151 = pneg %p35
      %p152 = pneg %p32
      %p153 = pneg %p56
      %p154 = pneg %p53
      %p155 = pneg %p77
      %p156 = pneg %p74
      %p157 = pneg %p103
      %p158 = pneg %p100
      %s159 = smul.u32 16, %s14
      %p160 = scmp.lt.s32.totalorder %s159, 31
      %s161 = scalar_select %p160, %s159, 31
      %s162 = smul.addr %s161, 8
      %s163 = scalar_lea.vmem %s3, %s162
      %s164 = smul.u32 16, %s14
      %p165 = scmp.lt.s32.totalorder %s164, 31
      %s166 = scalar_select %p165, %s164, 31
      %s167 = smul.addr %s166, 4
      %s168 = smul.addr %s167, 8
      %s169 = scalar_lea.vmem %s0, %s168
      %s170 = smul.u32 16, %s14
      %s171 = smul.u32 16, %s14
      %p172 = scmp.lt.s32.totalorder %s171, 31
      %s173 = scalar_select %p172, %s171, 31
      %s174 = smul.addr %s173, 8
      %s175 = scalar_lea.vmem %s3, %s174
      %s176 = smul.u32 16, %s14
      %v177 = vld [vmem:[%s169] sm:$0xff]
      %v178 = vld [vmem:[%s169 + $0x8] sm:$0xff]
      %v179 = vld [vmem:[%s169 + $0x10] sm:$0xff]
      %v180 = vld [vmem:[%s169 + $0x18] sm:$0xff]
      %v181 = vld [vmem:[%s169 + $0x20] sm:$0xff]
      %v182 = vld [vmem:[%s169 + $0x28] sm:$0xff]
      %v183 = vld [vmem:[%s169 + $0x30] sm:$0xff]
      %v184 = vld [vmem:[%s169 + $0x38] sm:$0xff]
      %v185 = vld [vmem:[%s169 + $0x40] sm:$0xff]
      %v186 = vld [vmem:[%s169 + $0x48] sm:$0xff]
      %v187 = vld [vmem:[%s169 + $0x50] sm:$0xff]
      %v188 = vld [vmem:[%s169 + $0x58] sm:$0xff]
      %v189 = vld [vmem:[%s169 + $0x60] sm:$0xff]
      %v190 = vld [vmem:[%s169 + $0x68] sm:$0xff]
      %v191 = vld [vmem:[%s169 + $0x70] sm:$0xff]
      %v192 = vld [vmem:[%s169 + $0x78] sm:$0xff]
      %v193 = vld [vmem:[%s169 + $0x80] sm:$0xff]
      %v194 = vld [vmem:[%s169 + $0x88] sm:$0xff]
      %v195 = vld [vmem:[%s169 + $0x90] sm:$0xff]
      %v196 = vld [vmem:[%s169 + $0x98] sm:$0xff]
      %v197 = vld [vmem:[%s169 + $0xa0] sm:$0xff]
      %v198 = vld [vmem:[%s169 + $0xa8] sm:$0xff]
      %v199 = vld [vmem:[%s169 + $0xb0] sm:$0xff]
      %v200 = vld [vmem:[%s169 + $0xb8] sm:$0xff]
      %v201 = vld [vmem:[%s169 + $0xc0] sm:$0xff]
      %v202 = vld [vmem:[%s169 + $0xc8] sm:$0xff]
      %v203 = vld [vmem:[%s169 + $0xd0] sm:$0xff]
      %v204 = vld [vmem:[%s169 + $0xd8] sm:$0xff]
      %v205 = vld [vmem:[%s169 + $0xe0] sm:$0xff]
      %v206 = vld [vmem:[%s169 + $0xe8] sm:$0xff]
      %v207 = vld [vmem:[%s169 + $0xf0] sm:$0xff]
      %v208 = vld [vmem:[%s169 + $0xf8] sm:$0xff]
      %v209 = vld [vmem:[%s169 + $0x100] sm:$0xff]
      %v210 = vld [vmem:[%s169 + $0x108] sm:$0xff]
      %v211 = vld [vmem:[%s169 + $0x110] sm:$0xff]
      %v212 = vld [vmem:[%s169 + $0x118] sm:$0xff]
      %v213 = vld [vmem:[%s169 + $0x120] sm:$0xff]
      %v214 = vld [vmem:[%s169 + $0x128] sm:$0xff]
      %v215 = vld [vmem:[%s169 + $0x130] sm:$0xff]
      %v216 = vld [vmem:[%s169 + $0x138] sm:$0xff]
      %v217 = vld [vmem:[%s169 + $0x140] sm:$0xff]
      %v218 = vld [vmem:[%s169 + $0x148] sm:$0xff]
      %v219 = vld [vmem:[%s169 + $0x150] sm:$0xff]
      %v220 = vld [vmem:[%s169 + $0x158] sm:$0xff]
      %v221 = vld [vmem:[%s169 + $0x160] sm:$0xff]
      %v222 = vld [vmem:[%s169 + $0x168] sm:$0xff]
      %v223 = vld [vmem:[%s169 + $0x170] sm:$0xff]
      %v224 = vld [vmem:[%s169 + $0x178] sm:$0xff]
      %v225 = vld [vmem:[%s169 + $0x180] sm:$0xff]
      %v226 = vld [vmem:[%s169 + $0x188] sm:$0xff]
      %v227 = vld [vmem:[%s169 + $0x190] sm:$0xff]
      %v228 = vld [vmem:[%s169 + $0x198] sm:$0xff]
      %v229 = vld [vmem:[%s169 + $0x1a0] sm:$0xff]
      %v230 = vld [vmem:[%s169 + $0x1a8] sm:$0xff]
      %v231 = vld [vmem:[%s169 + $0x1b0] sm:$0xff]
      %v232 = vld [vmem:[%s169 + $0x1b8] sm:$0xff]
      %v233 = vld [vmem:[%s169 + $0x1c0] sm:$0xff]
      %v234 = vld [vmem:[%s169 + $0x1c8] sm:$0xff]
      %v235 = vld [vmem:[%s169 + $0x1d0] sm:$0xff]
      %v236 = vld [vmem:[%s169 + $0x1d8] sm:$0xff]
      %v237 = vld [vmem:[%s169 + $0x1e0] sm:$0xff]
      %v238 = vld [vmem:[%s169 + $0x1e8] sm:$0xff]
      %v239 = vld [vmem:[%s169 + $0x1f0] sm:$0xff]
      %v240 = vld [vmem:[%s169 + $0x1f8] sm:$0xff]
      %v241 = vld [vmem:[%s1] sm:$0xff]
      %v242 = vld [vmem:[%s1 + $0x8] sm:$0xff]
      %v243 = vld [vmem:[%s1 + $0x10] sm:$0xff]
      %v244 = vld [vmem:[%s1 + $0x18] sm:$0xff]
      %v245 = vld [vmem:[%s1 + $0x20] sm:$0xff]
      %v246 = vld [vmem:[%s1 + $0x28] sm:$0xff]
      %v247 = vld [vmem:[%s1 + $0x30] sm:$0xff]
      %v248 = vld [vmem:[%s1 + $0x38] sm:$0xff]
      %v249 = vld [vmem:[%s1 + $0x40] sm:$0xff]
      %v250 = vld [vmem:[%s1 + $0x48] sm:$0xff]
      %v251 = vld [vmem:[%s1 + $0x50] sm:$0xff]
      %v252 = vld [vmem:[%s1 + $0x58] sm:$0xff]
      %v253 = vld [vmem:[%s1 + $0x60] sm:$0xff]
      %v254 = vld [vmem:[%s1 + $0x68] sm:$0xff]
      %v255 = vld [vmem:[%s1 + $0x70] sm:$0xff]
      %v256 = vld [vmem:[%s1 + $0x78] sm:$0xff]
      %v257 = vld [vmem:[%s1 + $0x80] sm:$0xff]
      %v258 = vld [vmem:[%s1 + $0x88] sm:$0xff]
      %v259 = vld [vmem:[%s1 + $0x90] sm:$0xff]
      %v260 = vld [vmem:[%s1 + $0x98] sm:$0xff]
      %v261 = vld [vmem:[%s1 + $0xa0] sm:$0xff]
      %v262 = vld [vmem:[%s1 + $0xa8] sm:$0xff]
      %v263 = vld [vmem:[%s1 + $0xb0] sm:$0xff]
      %v264 = vld [vmem:[%s1 + $0xb8] sm:$0xff]
      %v265 = vld [vmem:[%s1 + $0xc0] sm:$0xff]
      %v266 = vld [vmem:[%s1 + $0xc8] sm:$0xff]
      %v267 = vld [vmem:[%s1 + $0xd0] sm:$0xff]
      %v268 = vld [vmem:[%s1 + $0xd8] sm:$0xff]
      %v269 = vld [vmem:[%s1 + $0xe0] sm:$0xff]
      %v270 = vld [vmem:[%s1 + $0xe8] sm:$0xff]
      %v271 = vld [vmem:[%s1 + $0xf0] sm:$0xff]
      %v272 = vld [vmem:[%s1 + $0xf8] sm:$0xff]
      %v273 = vld [vmem:[%s1 + $0x100] sm:$0xff]
      %v274 = vld [vmem:[%s1 + $0x108] sm:$0xff]
      %v275 = vld [vmem:[%s1 + $0x110] sm:$0xff]
      %v276 = vld [vmem:[%s1 + $0x118] sm:$0xff]
      %v277 = vld [vmem:[%s1 + $0x120] sm:$0xff]
      %v278 = vld [vmem:[%s1 + $0x128] sm:$0xff]
      %v279 = vld [vmem:[%s1 + $0x130] sm:$0xff]
      %v280 = vld [vmem:[%s1 + $0x138] sm:$0xff]
      %v281 = vld [vmem:[%s1 + $0x140] sm:$0xff]
      %v282 = vld [vmem:[%s1 + $0x148] sm:$0xff]
      %v283 = vld [vmem:[%s1 + $0x150] sm:$0xff]
      %v284 = vld [vmem:[%s1 + $0x158] sm:$0xff]
      %v285 = vld [vmem:[%s1 + $0x160] sm:$0xff]
      %v286 = vld [vmem:[%s1 + $0x168] sm:$0xff]
      %v287 = vld [vmem:[%s1 + $0x170] sm:$0xff]
      %v288 = vld [vmem:[%s1 + $0x178] sm:$0xff]
      %v289 = vld [vmem:[%s1 + $0x180] sm:$0xff]
      %v290 = vld [vmem:[%s1 + $0x188] sm:$0xff]
      %v291 = vld [vmem:[%s1 + $0x190] sm:$0xff]
      %v292 = vld [vmem:[%s1 + $0x198] sm:$0xff]
      %v293 = vld [vmem:[%s1 + $0x1a0] sm:$0xff]
      %v294 = vld [vmem:[%s1 + $0x1a8] sm:$0xff]
      %v295 = vld [vmem:[%s1 + $0x1b0] sm:$0xff]
      %v296 = vld [vmem:[%s1 + $0x1b8] sm:$0xff]
      %v297 = vld [vmem:[%s1 + $0x1c0] sm:$0xff]
      %v298 = vld [vmem:[%s1 + $0x1c8] sm:$0xff]
      %v299 = vld [vmem:[%s1 + $0x1d0] sm:$0xff]
      %v300 = vld [vmem:[%s1 + $0x1d8] sm:$0xff]
      %v301 = vld [vmem:[%s1 + $0x1e0] sm:$0xff]
      %v302 = vld [vmem:[%s1 + $0x1e8] sm:$0xff]
      %v303 = vld [vmem:[%s1 + $0x1f0] sm:$0xff]
      %v304 = vld [vmem:[%s1 + $0x1f8] sm:$0xff]
      %v305 = vld [vmem:[%s2] sm:$0x1]
      %v307 = vlaneseq
      %v308 = vshrl.u32 %v307, 7
      %v309 = vsub.s32 0, %v308
      %v310 = vrot.slane %v305, %v309
      %312 = vmatprep.subr.mxu0 0.0
      %313 = vmatpush1.msra.mxu0 %v256
      %314 = vmatprep.subr.mxu0 0.0
      %315 = vmatpush1.msra.mxu0 %v255
      %316 = vmatprep.subr.mxu0 0.0
      %317 = vmatpush1.msra.mxu0 %v254
      %318 = vmatprep.subr.mxu0 0.0
      %319 = vmatpush1.msra.mxu0 %v253
      %320 = vmatprep.subr.mxu0 0.0
      %321 = vmatpush1.msra.mxu0 %v252
      %322 = vmatprep.subr.mxu0 0.0
      %323 = vmatpush1.msra.mxu0 %v251
      %324 = vmatprep.subr.mxu0 0.0
      %325 = vmatpush1.msra.mxu0 %v250
      %326 = vmatprep.subr.mxu0 0.0
      %327 = vmatpush1.msra.mxu0 %v249
      %328 = vmatprep.subr.mxu0 0.0
      %329 = vmatpush1.msra.mxu0 %v248
      %330 = vmatprep.subr.mxu0 0.0
      %331 = vmatpush1.msra.mxu0 %v247
      %332 = vmatprep.subr.mxu0 0.0
      %333 = vmatpush1.msra.mxu0 %v246
      %334 = vmatprep.subr.mxu0 0.0
      %335 = vmatpush1.msra.mxu0 %v245
      %336 = vmatprep.subr.mxu0 0.0
      %337 = vmatpush1.msra.mxu0 %v244
      %338 = vmatprep.subr.mxu0 0.0
      %339 = vmatpush1.msra.mxu0 %v243
      %340 = vmatprep.subr.mxu0 0.0
      %341 = vmatpush1.msra.mxu0 %v242
      %342 = vmatprep.subr.mxu0 0.0
      %343 = vmatpush1.msra.mxu0 %v241
      %344 = vmatprep.subr.mxu0 0.0
      %345 = vmatpush2.msra.mxu0 %v272
      %346 = vmatprep.subr.mxu0 0.0
      %347 = vmatpush2.msra.mxu0 %v271
      %348 = vmatprep.subr.mxu0 0.0
      %349 = vmatpush2.msra.mxu0 %v270
      %350 = vmatprep.subr.mxu0 0.0
      %351 = vmatpush2.msra.mxu0 %v269
      %352 = vmatprep.subr.mxu0 0.0
      %353 = vmatpush2.msra.mxu0 %v268
      %354 = vmatprep.subr.mxu0 0.0
      %355 = vmatpush2.msra.mxu0 %v267
      %356 = vmatprep.subr.mxu0 0.0
      %357 = vmatpush2.msra.mxu0 %v266
      %358 = vmatprep.subr.mxu0 0.0
      %359 = vmatpush2.msra.mxu0 %v265
      %360 = vmatprep.subr.mxu0 0.0
      %361 = vmatpush2.msra.mxu0 %v264
      %362 = vmatprep.subr.mxu0 0.0
      %363 = vmatpush2.msra.mxu0 %v263
      %364 = vmatprep.subr.mxu0 0.0
      %365 = vmatpush2.msra.mxu0 %v262
      %366 = vmatprep.subr.mxu0 0.0
      %367 = vmatpush2.msra.mxu0 %v261
      %368 = vmatprep.subr.mxu0 0.0
      %369 = vmatpush2.msra.mxu0 %v260
      %370 = vmatprep.subr.mxu0 0.0
      %371 = vmatpush2.msra.mxu0 %v259
      %372 = vmatprep.subr.mxu0 0.0
      %373 = vmatpush2.msra.mxu0 %v258
      %374 = vmatprep.subr.mxu0 0.0
      %375 = vmatpush2.msra.mxu0 %v257
      %376 = vmatprep.mubr.f32.mxu0 %v178
      %377 = vmatmul.mubr.f32.gmra.mxu0 %v177
      %v378 = vpop.f32.mrf.mxu0
      %v379 = vadd.f32 %v310, %v378
      %v380 = vpop.f32.mrf.mxu0
      %381 = vmatprep.mubr.f32.mxu0 %v182
      %382 = vmatmul.mubr.f32.gmra.mxu0 %v181
      %v383 = vpop.f32.mrf.mxu0
      %v384 = vadd.f32 %v310, %v383
      %v385 = vpop.f32.mrf.mxu0
      %386 = vmatprep.mubr.f32.mxu0 %v186
      %387 = vmatmul.mubr.f32.gmra.mxu0 %v185
      %v388 = vpop.f32.mrf.mxu0
      %v389 = vadd.f32 %v310, %v388
      %v390 = vpop.f32.mrf.mxu0
      %391 = vmatprep.mubr.f32.mxu0 %v190
      %392 = vmatmul.mubr.f32.gmra.mxu0 %v189
      %v393 = vpop.f32.mrf.mxu0
      %v394 = vadd.f32 %v310, %v393
      %v395 = vpop.f32.mrf.mxu0
      %396 = vmatprep.mubr.f32.mxu0 %v194
      %397 = vmatmul.mubr.f32.gmra.mxu0 %v193
      %v398 = vpop.f32.mrf.mxu0
      %v399 = vadd.f32 %v310, %v398
      %v400 = vpop.f32.mrf.mxu0
      %401 = vmatprep.mubr.f32.mxu0 %v198
      %402 = vmatmul.mubr.f32.gmra.mxu0 %v197
      %v403 = vpop.f32.mrf.mxu0
      %v404 = vadd.f32 %v310, %v403
      %v405 = vpop.f32.mrf.mxu0
      %406 = vmatprep.mubr.f32.mxu0 %v202
      %407 = vmatmul.mubr.f32.gmra.mxu0 %v201
      %v408 = vpop.f32.mrf.mxu0
      %v409 = vadd.f32 %v310, %v408
      %v410 = vpop.f32.mrf.mxu0
      %411 = vmatprep.mubr.f32.mxu0 %v206
      %412 = vmatmul.mubr.f32.gmra.mxu0 %v205
      %v413 = vpop.f32.mrf.mxu0
      %v414 = vadd.f32 %v310, %v413
      %v415 = vpop.f32.mrf.mxu0
      %416 = vmatprep.mubr.f32.mxu0 %v210
      %417 = vmatmul.mubr.f32.gmra.mxu0 %v209
      %v418 = vpop.f32.mrf.mxu0
      %v419 = vadd.f32 %v310, %v418
      %v420 = vpop.f32.mrf.mxu0
      %421 = vmatprep.mubr.f32.mxu0 %v214
      %422 = vmatmul.mubr.f32.gmra.mxu0 %v213
      %v423 = vpop.f32.mrf.mxu0
      %v424 = vadd.f32 %v310, %v423
      %v425 = vpop.f32.mrf.mxu0
      %426 = vmatprep.mubr.f32.mxu0 %v218
      %427 = vmatmul.mubr.f32.gmra.mxu0 %v217
      %v428 = vpop.f32.mrf.mxu0
      %v429 = vadd.f32 %v310, %v428
      %v430 = vpop.f32.mrf.mxu0
      %431 = vmatprep.mubr.f32.mxu0 %v222
      %432 = vmatmul.mubr.f32.gmra.mxu0 %v221
      %v433 = vpop.f32.mrf.mxu0
      %v434 = vadd.f32 %v310, %v433
      %v435 = vpop.f32.mrf.mxu0
      %436 = vmatprep.mubr.f32.mxu0 %v226
      %437 = vmatmul.mubr.f32.gmra.mxu0 %v225
      %v438 = vpop.f32.mrf.mxu0
      %v439 = vadd.f32 %v310, %v438
      %v440 = vpop.f32.mrf.mxu0
      %441 = vmatprep.mubr.f32.mxu0 %v230
      %442 = vmatmul.mubr.f32.gmra.mxu0 %v229
      %v443 = vpop.f32.mrf.mxu0
      %v444 = vadd.f32 %v310, %v443
      %v445 = vpop.f32.mrf.mxu0
      %446 = vmatprep.mubr.f32.mxu0 %v234
      %447 = vmatmul.mubr.f32.gmra.mxu0 %v233
      %v448 = vpop.f32.mrf.mxu0
      %v449 = vadd.f32 %v310, %v448
      %v450 = vpop.f32.mrf.mxu0
      %451 = vmatprep.mubr.f32.mxu0 %v238
      %452 = vmatmul.mubr.f32.gmra.mxu0 %v237
      %v453 = vpop.f32.mrf.mxu0
      %v454 = vadd.f32 %v310, %v453
      %v455 = vpop.f32.mrf.mxu0
      %456 = vdwg.mxu0
      %457 = vmatprep.subr.mxu0 0.0
      %458 = vmatpush1.msra.mxu0 %v288
      %459 = vmatprep.subr.mxu0 0.0
      %460 = vmatpush1.msra.mxu0 %v287
      %461 = vmatprep.subr.mxu0 0.0
      %462 = vmatpush1.msra.mxu0 %v286
      %463 = vmatprep.subr.mxu0 0.0
      %464 = vmatpush1.msra.mxu0 %v285
      %465 = vmatprep.subr.mxu0 0.0
      %466 = vmatpush1.msra.mxu0 %v284
      %467 = vmatprep.subr.mxu0 0.0
      %468 = vmatpush1.msra.mxu0 %v283
      %469 = vmatprep.subr.mxu0 0.0
      %470 = vmatpush1.msra.mxu0 %v282
      %471 = vmatprep.subr.mxu0 0.0
      %472 = vmatpush1.msra.mxu0 %v281
      %473 = vmatprep.subr.mxu0 0.0
      %474 = vmatpush1.msra.mxu0 %v280
      %475 = vmatprep.subr.mxu0 0.0
      %476 = vmatpush1.msra.mxu0 %v279
      %477 = vmatprep.subr.mxu0 0.0
      %478 = vmatpush1.msra.mxu0 %v278
      %479 = vmatprep.subr.mxu0 0.0
      %480 = vmatpush1.msra.mxu0 %v277
      %481 = vmatprep.subr.mxu0 0.0
      %482 = vmatpush1.msra.mxu0 %v276
      %483 = vmatprep.subr.mxu0 0.0
      %484 = vmatpush1.msra.mxu0 %v275
      %485 = vmatprep.subr.mxu0 0.0
      %486 = vmatpush1.msra.mxu0 %v274
      %487 = vmatprep.subr.mxu0 0.0
      %488 = vmatpush1.msra.mxu0 %v273
      %489 = vmatprep.subr.mxu0 0.0
      %490 = vmatpush2.msra.mxu0 %v304
      %491 = vmatprep.subr.mxu0 0.0
      %492 = vmatpush2.msra.mxu0 %v303
      %493 = vmatprep.subr.mxu0 0.0
      %494 = vmatpush2.msra.mxu0 %v302
      %495 = vmatprep.subr.mxu0 0.0
      %496 = vmatpush2.msra.mxu0 %v301
      %497 = vmatprep.subr.mxu0 0.0
      %498 = vmatpush2.msra.mxu0 %v300
      %499 = vmatprep.subr.mxu0 0.0
      %500 = vmatpush2.msra.mxu0 %v299
      %501 = vmatprep.subr.mxu0 0.0
      %502 = vmatpush2.msra.mxu0 %v298
      %503 = vmatprep.subr.mxu0 0.0
      %504 = vmatpush2.msra.mxu0 %v297
      %505 = vmatprep.subr.mxu0 0.0
      %506 = vmatpush2.msra.mxu0 %v296
      %507 = vmatprep.subr.mxu0 0.0
      %508 = vmatpush2.msra.mxu0 %v295
      %509 = vmatprep.subr.mxu0 0.0
      %510 = vmatpush2.msra.mxu0 %v294
      %511 = vmatprep.subr.mxu0 0.0
      %512 = vmatpush2.msra.mxu0 %v293
      %513 = vmatprep.subr.mxu0 0.0
      %514 = vmatpush2.msra.mxu0 %v292
      %515 = vmatprep.subr.mxu0 0.0
      %516 = vmatpush2.msra.mxu0 %v291
      %517 = vmatprep.subr.mxu0 0.0
      %518 = vmatpush2.msra.mxu0 %v290
      %519 = vmatprep.subr.mxu0 0.0
      %520 = vmatpush2.msra.mxu0 %v289
      %521 = vmatprep.mubr.f32.mxu0 %v180
      %522 = vmatmul.mubr.f32.gmra.mxu0 %v179
      %v523 = vpop.f32.mrf.mxu0
      %v524 = vadd.f32 %v379, %v523
      %v525 = vpop.f32.mrf.mxu0
      %526 = vmatprep.mubr.f32.mxu0 %v184
      %527 = vmatmul.mubr.f32.gmra.mxu0 %v183
      %v528 = vpop.f32.mrf.mxu0
      %v529 = vadd.f32 %v384, %v528
      %v530 = vpop.f32.mrf.mxu0
      %531 = vmatprep.mubr.f32.mxu0 %v188
      %532 = vmatmul.mubr.f32.gmra.mxu0 %v187
      %v533 = vpop.f32.mrf.mxu0
      %v534 = vadd.f32 %v389, %v533
      %v535 = vpop.f32.mrf.mxu0
      %536 = vmatprep.mubr.f32.mxu0 %v192
      %537 = vmatmul.mubr.f32.gmra.mxu0 %v191
      %v538 = vpop.f32.mrf.mxu0
      %v539 = vadd.f32 %v394, %v538
      %v540 = vpop.f32.mrf.mxu0
      %541 = vmatprep.mubr.f32.mxu0 %v196
      %542 = vmatmul.mubr.f32.gmra.mxu0 %v195
      %v543 = vpop.f32.mrf.mxu0
      %v544 = vadd.f32 %v399, %v543
      %v545 = vpop.f32.mrf.mxu0
      %546 = vmatprep.mubr.f32.mxu0 %v200
      %547 = vmatmul.mubr.f32.gmra.mxu0 %v199
      %v548 = vpop.f32.mrf.mxu0
      %v549 = vadd.f32 %v404, %v548
      %v550 = vpop.f32.mrf.mxu0
      %551 = vmatprep.mubr.f32.mxu0 %v204
      %552 = vmatmul.mubr.f32.gmra.mxu0 %v203
      %v553 = vpop.f32.mrf.mxu0
      %v554 = vadd.f32 %v409, %v553
      %v555 = vpop.f32.mrf.mxu0
      %556 = vmatprep.mubr.f32.mxu0 %v208
      %557 = vmatmul.mubr.f32.gmra.mxu0 %v207
      %v558 = vpop.f32.mrf.mxu0
      %v559 = vadd.f32 %v414, %v558
      %v560 = vpop.f32.mrf.mxu0
      %561 = vmatprep.mubr.f32.mxu0 %v212
      %562 = vmatmul.mubr.f32.gmra.mxu0 %v211
      %v563 = vpop.f32.mrf.mxu0
      %v564 = vadd.f32 %v419, %v563
      %v565 = vpop.f32.mrf.mxu0
      %566 = vmatprep.mubr.f32.mxu0 %v216
      %567 = vmatmul.mubr.f32.gmra.mxu0 %v215
      %v568 = vpop.f32.mrf.mxu0
      %v569 = vadd.f32 %v424, %v568
      %v570 = vpop.f32.mrf.mxu0
      %571 = vmatprep.mubr.f32.mxu0 %v220
      %572 = vmatmul.mubr.f32.gmra.mxu0 %v219
      %v573 = vpop.f32.mrf.mxu0
      %v574 = vadd.f32 %v429, %v573
      %v575 = vpop.f32.mrf.mxu0
      %576 = vmatprep.mubr.f32.mxu0 %v224
      %577 = vmatmul.mubr.f32.gmra.mxu0 %v223
      %v578 = vpop.f32.mrf.mxu0
      %v579 = vadd.f32 %v434, %v578
      %v580 = vpop.f32.mrf.mxu0
      %581 = vmatprep.mubr.f32.mxu0 %v228
      %582 = vmatmul.mubr.f32.gmra.mxu0 %v227
      %v583 = vpop.f32.mrf.mxu0
      %v584 = vadd.f32 %v439, %v583
      %v585 = vpop.f32.mrf.mxu0
      %586 = vmatprep.mubr.f32.mxu0 %v232
      %587 = vmatmul.mubr.f32.gmra.mxu0 %v231
      %v588 = vpop.f32.mrf.mxu0
      %v589 = vadd.f32 %v444, %v588
      %v590 = vpop.f32.mrf.mxu0
      %591 = vmatprep.mubr.f32.mxu0 %v236
      %592 = vmatmul.mubr.f32.gmra.mxu0 %v235
      %v593 = vpop.f32.mrf.mxu0
      %v594 = vadd.f32 %v449, %v593
      %v595 = vpop.f32.mrf.mxu0
      %596 = vmatprep.mubr.f32.mxu0 %v240
      %597 = vmatmul.mubr.f32.gmra.mxu0 %v239
      %v598 = vpop.f32.mrf.mxu0
      %v599 = vadd.f32 %v454, %v598
      %v600 = vpop.f32.mrf.mxu0
      %601 = vdwg.mxu0
      %v602 = vmax.f32 %v524, 0.0
      %v603 = vmax.f32 %v529, 0.0
      %v604 = vmax.f32 %v534, 0.0
      %v605 = vmax.f32 %v539, 0.0
      %v606 = vmax.f32 %v544, 0.0
      %v607 = vmax.f32 %v549, 0.0
      %v608 = vmax.f32 %v554, 0.0
      %v609 = vmax.f32 %v559, 0.0
      %v610 = vmax.f32 %v564, 0.0
      %v611 = vmax.f32 %v569, 0.0
      %v612 = vmax.f32 %v574, 0.0
      %v613 = vmax.f32 %v579, 0.0
      %v614 = vmax.f32 %v584, 0.0
      %v615 = vmax.f32 %v589, 0.0
      %v616 = vmax.f32 %v594, 0.0
      %v617 = vmax.f32 %v599, 0.0
      %vm618 = vcmask 523264
      %619 = vst.msk [vmem:[%s175] sm:$0xff] %vm618, %v602
      %620 = vst.msk [vmem:[%s175 + $0x8] sm:$0xff] %vm618, %v603
      %621 = vst.msk [vmem:[%s175 + $0x10] sm:$0xff] %vm618, %v604
      %622 = vst.msk [vmem:[%s175 + $0x18] sm:$0xff] %vm618, %v605
      %623 = vst.msk [vmem:[%s175 + $0x20] sm:$0xff] %vm618, %v606
      %624 = vst.msk [vmem:[%s175 + $0x28] sm:$0xff] %vm618, %v607
      %625 = vst.msk [vmem:[%s175 + $0x30] sm:$0xff] %vm618, %v608
      %626 = vst.msk [vmem:[%s175 + $0x38] sm:$0xff] %vm618, %v609
      %627 = vst.msk [vmem:[%s175 + $0x40] sm:$0xff] %vm618, %v610
      %628 = vst.msk [vmem:[%s175 + $0x48] sm:$0xff] %vm618, %v611
      %629 = vst.msk [vmem:[%s175 + $0x50] sm:$0xff] %vm618, %v612
      %630 = vst.msk [vmem:[%s175 + $0x58] sm:$0xff] %vm618, %v613
      %631 = vst.msk [vmem:[%s175 + $0x60] sm:$0xff] %vm618, %v614
      %632 = vst.msk [vmem:[%s175 + $0x68] sm:$0xff] %vm618, %v615
      %633 = vst.msk [vmem:[%s175 + $0x70] sm:$0xff] %vm618, %v616
      %634 = vst.msk [vmem:[%s175 + $0x78] sm:$0xff] %vm618, %v617
      %s635 = smul.u32 16, %s14
      %p636 = scmp.lt.s32.totalorder %s635, 31
      %s637 = scalar_select %p636, %s635, 31
      %s638 = smul.addr %s637, 8
      %s639 = scalar_lea.vmem %s3, %s638
      // Predicated region
      $region33: #{airl_reward_forward.5} parent=31 // pred_check
        %p640 = pneg %p100
      $region34: #{airl_reward_forward.5} parent=31 // pred_check_branch
        %642 = sbr.rel (%p640) target = $region36
      $region35: #{airl_reward_forward.5} parent=31 // pred_region
        %s643 = smul.u32 16, %s14
      $region36: #{airl_reward_forward.5} parent=31 // pred_fallthru
        _
    $region32: #{airl_reward_forward.5} parent=5 // pred_fallthru
      _
    %p644 = scmp.le.s32.totalorder 2, %s9
    // Predicated region
    $region37: #{airl_reward_forward.5} parent=5 // pred_check
      %p645 = pneg %p644
    $region38: #{airl_reward_forward.5} parent=5 // pred_check_branch
      %647 = sbr.rel (%p645) target = $region40
    $region39: #{airl_reward_forward.5} parent=5 // pred_region
      %s648 = ssub.s32 %s9, 2
      // Predicated region
      $region41: #{airl_reward_forward.5} parent=39 // pred_check
        %p649 = pneg %p106
      $region42: #{airl_reward_forward.5} parent=39 // pred_check_branch
        %651 = sbr.rel (%p649) target = $region44
      $region43: #{airl_reward_forward.5} parent=39 // pred_region
        %s652 = smul.u32 16, %s15
        %p653 = scmp.lt.s32.totalorder %s652, 31
        %s654 = scalar_select %p653, %s652, 31
        %s655 = smul.addr %s654, 8
        %s656 = scalar_lea.vmem %s3, %s655
      $region44: #{airl_reward_forward.5} parent=39 // pred_fallthru
        _
    $region40: #{airl_reward_forward.5} parent=5 // pred_fallthru
      _
  $region6: #{airl_reward_forward.5} parent=0 // loop_footer
    %s13 = sadd.s32 1, %s9
  $region7: #{airl_reward_forward.5} parent=0 // loop_footer_branch
    %8 = sbr.rel target = $region3
  $region8: #{airl_reward_forward.5} parent=0 // loop_exit
    _

// kernel: airl_reward_forward.6
$region0: #{airl_reward_forward.6}
  #allocation0 [shape = 'u32[]', space=smem, size = 0x4, offset = 0x4, fixed_abs, tag = 'smem constant byte address 0x4 - core index']
  #allocation1 [shape = 'u32[144,128]{1,0:T(1,128)}', space=vmem, size = 0x12000, scoped, tag = 'internal scratch']
  %s0 = inlined_call_operand.vmem [shape: f32[128,640], index: 0, kind: input, shape index: {}]
  %s1 = inlined_call_operand.vmem [shape: f32[640,64], index: 1, kind: input, shape index: {}]
  %s2 = inlined_call_operand.vmem [shape: f32[1,64], index: 2, kind: input, shape index: {}]
  %s3 = inlined_call_operand.vmem [shape: f32[128,64], index: 3, kind: output, shape index: {}]
  %s4 = sld [smem:[#allocation0]]
  $region22: #{airl_reward_forward.6} parent=0
    _
  %s6 = ssub.s32 1, %s4
  %s7 = scalar_select 0, %s6, %s4
  // Predicated region
  $region2: #{airl_reward_forward.6} parent=0 // pred_check
    _
  $region3: #{airl_reward_forward.6} parent=0 // pred_check_branch
    %9 = sbr.rel (0) target = $region5
  $region4: #{airl_reward_forward.6} parent=0 // pred_region
    _
  $region5: #{airl_reward_forward.6} parent=0 // pred_fallthru
    _
  // Predicated region
  $region6: #{airl_reward_forward.6} parent=0 // pred_check
    _
  $region7: #{airl_reward_forward.6} parent=0 // pred_check_branch
    %11 = sbr.rel (0) target = $region9
  $region8: #{airl_reward_forward.6} parent=0 // pred_region
    _
  $region9: #{airl_reward_forward.6} parent=0 // pred_fallthru
    _
  // Predicated region
  $region10: #{airl_reward_forward.6} parent=0 // pred_check
    _
  $region11: #{airl_reward_forward.6} parent=0 // pred_check_branch
    %13 = sbr.rel (0) target = $region13
  $region12: #{airl_reward_forward.6} parent=0 // pred_region
    _
  $region13: #{airl_reward_forward.6} parent=0 // pred_fallthru
    _
  %v14 = vld [vmem:[%s0] sm:$0xff]
  %v15 = vld [vmem:[%s0 + $0x8] sm:$0xff]
  %v16 = vld [vmem:[%s0 + $0x10] sm:$0xff]
  %v17 = vld [vmem:[%s0 + $0x18] sm:$0xff]
  %v18 = vld [vmem:[%s0 + $0x20] sm:$0xff]
  %v19 = vld [vmem:[%s0 + $0x28] sm:$0xff]
  %v20 = vld [vmem:[%s0 + $0x30] sm:$0xff]
  %v21 = vld [vmem:[%s0 + $0x38] sm:$0xff]
  %v22 = vld [vmem:[%s0 + $0x40] sm:$0xff]
  %v23 = vld [vmem:[%s0 + $0x48] sm:$0xff]
  %v24 = vld [vmem:[%s0 + $0x50] sm:$0xff]
  %v25 = vld [vmem:[%s0 + $0x58] sm:$0xff]
  %v26 = vld [vmem:[%s0 + $0x60] sm:$0xff]
  %v27 = vld [vmem:[%s0 + $0x68] sm:$0xff]
  %v28 = vld [vmem:[%s0 + $0x70] sm:$0xff]
  %v29 = vld [vmem:[%s0 + $0x78] sm:$0xff]
  %v30 = vld [vmem:[%s0 + $0x80] sm:$0xff]
  %v31 = vld [vmem:[%s0 + $0x88] sm:$0xff]
  %v32 = vld [vmem:[%s0 + $0x90] sm:$0xff]
  %v33 = vld [vmem:[%s0 + $0x98] sm:$0xff]
  %v34 = vld [vmem:[%s0 + $0xa0] sm:$0xff]
  %v35 = vld [vmem:[%s0 + $0xa8] sm:$0xff]
  %v36 = vld [vmem:[%s0 + $0xb0] sm:$0xff]
  %v37 = vld [vmem:[%s0 + $0xb8] sm:$0xff]
  %v38 = vld [vmem:[%s0 + $0xc0] sm:$0xff]
  %v39 = vld [vmem:[%s0 + $0xc8] sm:$0xff]
  %v40 = vld [vmem:[%s0 + $0xd0] sm:$0xff]
  %v41 = vld [vmem:[%s0 + $0xd8] sm:$0xff]
  %v42 = vld [vmem:[%s0 + $0xe0] sm:$0xff]
  %v43 = vld [vmem:[%s0 + $0xe8] sm:$0xff]
  %v44 = vld [vmem:[%s0 + $0xf0] sm:$0xff]
  %v45 = vld [vmem:[%s0 + $0xf8] sm:$0xff]
  %v46 = vld [vmem:[%s0 + $0x100] sm:$0xff]
  %v47 = vld [vmem:[%s0 + $0x108] sm:$0xff]
  %v48 = vld [vmem:[%s0 + $0x110] sm:$0xff]
  %v49 = vld [vmem:[%s0 + $0x118] sm:$0xff]
  %v50 = vld [vmem:[%s0 + $0x120] sm:$0xff]
  %v51 = vld [vmem:[%s0 + $0x128] sm:$0xff]
  %v52 = vld [vmem:[%s0 + $0x130] sm:$0xff]
  %v53 = vld [vmem:[%s0 + $0x138] sm:$0xff]
  %v54 = vld [vmem:[%s0 + $0x140] sm:$0xff]
  %v55 = vld [vmem:[%s0 + $0x148] sm:$0xff]
  %v56 = vld [vmem:[%s0 + $0x150] sm:$0xff]
  %v57 = vld [vmem:[%s0 + $0x158] sm:$0xff]
  %v58 = vld [vmem:[%s0 + $0x160] sm:$0xff]
  %v59 = vld [vmem:[%s0 + $0x168] sm:$0xff]
  %v60 = vld [vmem:[%s0 + $0x170] sm:$0xff]
  %v61 = vld [vmem:[%s0 + $0x178] sm:$0xff]
  %v62 = vld [vmem:[%s0 + $0x180] sm:$0xff]
  %v63 = vld [vmem:[%s0 + $0x188] sm:$0xff]
  %v64 = vld [vmem:[%s0 + $0x190] sm:$0xff]
  %v65 = vld [vmem:[%s0 + $0x198] sm:$0xff]
  %v66 = vld [vmem:[%s0 + $0x1a0] sm:$0xff]
  %v67 = vld [vmem:[%s0 + $0x1a8] sm:$0xff]
  %v68 = vld [vmem:[%s0 + $0x1b0] sm:$0xff]
  %v69 = vld [vmem:[%s0 + $0x1b8] sm:$0xff]
  %v70 = vld [vmem:[%s0 + $0x1c0] sm:$0xff]
  %v71 = vld [vmem:[%s0 + $0x1c8] sm:$0xff]
  %v72 = vld [vmem:[%s0 + $0x1d0] sm:$0xff]
  %v73 = vld [vmem:[%s0 + $0x1d8] sm:$0xff]
  %v74 = vld [vmem:[%s0 + $0x1e0] sm:$0xff]
  %v75 = vld [vmem:[%s0 + $0x1e8] sm:$0xff]
  %v76 = vld [vmem:[%s0 + $0x1f0] sm:$0xff]
  %v77 = vld [vmem:[%s0 + $0x1f8] sm:$0xff]
  %v78 = vld [vmem:[%s0 + $0x200] sm:$0xff]
  %v79 = vld [vmem:[%s0 + $0x208] sm:$0xff]
  %v80 = vld [vmem:[%s0 + $0x210] sm:$0xff]
  %v81 = vld [vmem:[%s0 + $0x218] sm:$0xff]
  %v82 = vld [vmem:[%s0 + $0x220] sm:$0xff]
  %v83 = vld [vmem:[%s0 + $0x228] sm:$0xff]
  %v84 = vld [vmem:[%s0 + $0x230] sm:$0xff]
  %v85 = vld [vmem:[%s0 + $0x238] sm:$0xff]
  %v86 = vld [vmem:[%s0 + $0x240] sm:$0xff]
  %v87 = vld [vmem:[%s0 + $0x248] sm:$0xff]
  %v88 = vld [vmem:[%s0 + $0x250] sm:$0xff]
  %v89 = vld [vmem:[%s0 + $0x258] sm:$0xff]
  %v90 = vld [vmem:[%s0 + $0x260] sm:$0xff]
  %v91 = vld [vmem:[%s0 + $0x268] sm:$0xff]
  %v92 = vld [vmem:[%s0 + $0x270] sm:$0xff]
  %v93 = vld [vmem:[%s0 + $0x278] sm:$0xff]
  %v94 = vld [vmem:[%s1] sm:$0xff]
  %v95 = vld [vmem:[%s1 + $0x8] sm:$0xff]
  %v96 = vld [vmem:[%s1 + $0x10] sm:$0xff]
  %v97 = vld [vmem:[%s1 + $0x18] sm:$0xff]
  %v98 = vld [vmem:[%s1 + $0x20] sm:$0xff]
  %v99 = vld [vmem:[%s1 + $0x28] sm:$0xff]
  %v100 = vld [vmem:[%s1 + $0x30] sm:$0xff]
  %v101 = vld [vmem:[%s1 + $0x38] sm:$0xff]
  %v102 = vld [vmem:[%s1 + $0x40] sm:$0xff]
  %v103 = vld [vmem:[%s1 + $0x48] sm:$0xff]
  %v104 = vld [vmem:[%s1 + $0x50] sm:$0xff]
  %v105 = vld [vmem:[%s1 + $0x58] sm:$0xff]
  %v106 = vld [vmem:[%s1 + $0x60] sm:$0xff]
  %v107 = vld [vmem:[%s1 + $0x68] sm:$0xff]
  %v108 = vld [vmem:[%s1 + $0x70] sm:$0xff]
  %v109 = vld [vmem:[%s1 + $0x78] sm:$0xff]
  %v110 = vld [vmem:[%s1 + $0x80] sm:$0xff]
  %v111 = vld [vmem:[%s1 + $0x88] sm:$0xff]
  %v112 = vld [vmem:[%s1 + $0x90] sm:$0xff]
  %v113 = vld [vmem:[%s1 + $0x98] sm:$0xff]
  %v114 = vld [vmem:[%s1 + $0xa0] sm:$0xff]
  %v115 = vld [vmem:[%s1 + $0xa8] sm:$0xff]
  %v116 = vld [vmem:[%s1 + $0xb0] sm:$0xff]
  %v117 = vld [vmem:[%s1 + $0xb8] sm:$0xff]
  %v118 = vld [vmem:[%s1 + $0xc0] sm:$0xff]
  %v119 = vld [vmem:[%s1 + $0xc8] sm:$0xff]
  %v120 = vld [vmem:[%s1 + $0xd0] sm:$0xff]
  %v121 = vld [vmem:[%s1 + $0xd8] sm:$0xff]
  %v122 = vld [vmem:[%s1 + $0xe0] sm:$0xff]
  %v123 = vld [vmem:[%s1 + $0xe8] sm:$0xff]
  %v124 = vld [vmem:[%s1 + $0xf0] sm:$0xff]
  %v125 = vld [vmem:[%s1 + $0xf8] sm:$0xff]
  %v126 = vld [vmem:[%s1 + $0x100] sm:$0xff]
  %v127 = vld [vmem:[%s1 + $0x108] sm:$0xff]
  %v128 = vld [vmem:[%s1 + $0x110] sm:$0xff]
  %v129 = vld [vmem:[%s1 + $0x118] sm:$0xff]
  %v130 = vld [vmem:[%s1 + $0x120] sm:$0xff]
  %v131 = vld [vmem:[%s1 + $0x128] sm:$0xff]
  %v132 = vld [vmem:[%s1 + $0x130] sm:$0xff]
  %v133 = vld [vmem:[%s1 + $0x138] sm:$0xff]
  %v134 = vld [vmem:[%s1 + $0x140] sm:$0xff]
  %v135 = vld [vmem:[%s1 + $0x148] sm:$0xff]
  %v136 = vld [vmem:[%s1 + $0x150] sm:$0xff]
  %v137 = vld [vmem:[%s1 + $0x158] sm:$0xff]
  %v138 = vld [vmem:[%s1 + $0x160] sm:$0xff]
  %v139 = vld [vmem:[%s1 + $0x168] sm:$0xff]
  %v140 = vld [vmem:[%s1 + $0x170] sm:$0xff]
  %v141 = vld [vmem:[%s1 + $0x178] sm:$0xff]
  %v142 = vld [vmem:[%s1 + $0x180] sm:$0xff]
  %v143 = vld [vmem:[%s1 + $0x188] sm:$0xff]
  %v144 = vld [vmem:[%s1 + $0x190] sm:$0xff]
  %v145 = vld [vmem:[%s1 + $0x198] sm:$0xff]
  %v146 = vld [vmem:[%s1 + $0x1a0] sm:$0xff]
  %v147 = vld [vmem:[%s1 + $0x1a8] sm:$0xff]
  %v148 = vld [vmem:[%s1 + $0x1b0] sm:$0xff]
  %v149 = vld [vmem:[%s1 + $0x1b8] sm:$0xff]
  %v150 = vld [vmem:[%s1 + $0x1c0] sm:$0xff]
  %v151 = vld [vmem:[%s1 + $0x1c8] sm:$0xff]
  %v152 = vld [vmem:[%s1 + $0x1d0] sm:$0xff]
  %v153 = vld [vmem:[%s1 + $0x1d8] sm:$0xff]
  %v154 = vld [vmem:[%s1 + $0x1e0] sm:$0xff]
  %v155 = vld [vmem:[%s1 + $0x1e8] sm:$0xff]
  %v156 = vld [vmem:[%s1 + $0x1f0] sm:$0xff]
  %v157 = vld [vmem:[%s1 + $0x1f8] sm:$0xff]
  %v158 = vld [vmem:[%s1 + $0x200] sm:$0xff]
  %v159 = vld [vmem:[%s1 + $0x208] sm:$0xff]
  %v160 = vld [vmem:[%s1 + $0x210] sm:$0xff]
  %v161 = vld [vmem:[%s1 + $0x218] sm:$0xff]
  %v162 = vld [vmem:[%s1 + $0x220] sm:$0xff]
  %v163 = vld [vmem:[%s1 + $0x228] sm:$0xff]
  %v164 = vld [vmem:[%s1 + $0x230] sm:$0xff]
  %v165 = vld [vmem:[%s1 + $0x238] sm:$0xff]
  %v166 = vld [vmem:[%s1 + $0x240] sm:$0xff]
  %v167 = vld [vmem:[%s1 + $0x248] sm:$0xff]
  %v168 = vld [vmem:[%s1 + $0x250] sm:$0xff]
  %v169 = vld [vmem:[%s1 + $0x258] sm:$0xff]
  %v170 = vld [vmem:[%s1 + $0x260] sm:$0xff]
  %v171 = vld [vmem:[%s1 + $0x268] sm:$0xff]
  %v172 = vld [vmem:[%s1 + $0x270] sm:$0xff]
  %v173 = vld [vmem:[%s1 + $0x278] sm:$0xff]
  %v174 = vld [vmem:[%s2] sm:$0x1]
  %v176 = vlaneseq
  %v177 = vshrl.u32 %v176, 7
  %v178 = vsub.s32 0, %v177
  %v179 = vrot.slane %v174, %v178
  %181 = vmatprep.subr.mxu0 0.0
  %182 = vmatpush1.msra.mxu0 %v109
  %183 = vmatprep.subr.mxu0 0.0
  %184 = vmatpush1.msra.mxu0 %v108
  %185 = vmatprep.subr.mxu0 0.0
  %186 = vmatpush1.msra.mxu0 %v107
  %187 = vmatprep.subr.mxu0 0.0
  %188 = vmatpush1.msra.mxu0 %v106
  %189 = vmatprep.subr.mxu0 0.0
  %190 = vmatpush1.msra.mxu0 %v105
  %191 = vmatprep.subr.mxu0 0.0
  %192 = vmatpush1.msra.mxu0 %v104
  %193 = vmatprep.subr.mxu0 0.0
  %194 = vmatpush1.msra.mxu0 %v103
  %195 = vmatprep.subr.mxu0 0.0
  %196 = vmatpush1.msra.mxu0 %v102
  %197 = vmatprep.subr.mxu0 0.0
  %198 = vmatpush1.msra.mxu0 %v101
  %199 = vmatprep.subr.mxu0 0.0
  %200 = vmatpush1.msra.mxu0 %v100
  %201 = vmatprep.subr.mxu0 0.0
  %202 = vmatpush1.msra.mxu0 %v99
  %203 = vmatprep.subr.mxu0 0.0
  %204 = vmatpush1.msra.mxu0 %v98
  %205 = vmatprep.subr.mxu0 0.0
  %206 = vmatpush1.msra.mxu0 %v97
  %207 = vmatprep.subr.mxu0 0.0
  %208 = vmatpush1.msra.mxu0 %v96
  %209 = vmatprep.subr.mxu0 0.0
  %210 = vmatpush1.msra.mxu0 %v95
  %211 = vmatprep.subr.mxu0 0.0
  %212 = vmatpush1.msra.mxu0 %v94
  %213 = vmatprep.subr.mxu0 0.0
  %214 = vmatpush2.msra.mxu0 %v125
  %215 = vmatprep.subr.mxu0 0.0
  %216 = vmatpush2.msra.mxu0 %v124
  %217 = vmatprep.subr.mxu0 0.0
  %218 = vmatpush2.msra.mxu0 %v123
  %219 = vmatprep.subr.mxu0 0.0
  %220 = vmatpush2.msra.mxu0 %v122
  %221 = vmatprep.subr.mxu0 0.0
  %222 = vmatpush2.msra.mxu0 %v121
  %223 = vmatprep.subr.mxu0 0.0
  %224 = vmatpush2.msra.mxu0 %v120
  %225 = vmatprep.subr.mxu0 0.0
  %226 = vmatpush2.msra.mxu0 %v119
  %227 = vmatprep.subr.mxu0 0.0
  %228 = vmatpush2.msra.mxu0 %v118
  %229 = vmatprep.subr.mxu0 0.0
  %230 = vmatpush2.msra.mxu0 %v117
  %231 = vmatprep.subr.mxu0 0.0
  %232 = vmatpush2.msra.mxu0 %v116
  %233 = vmatprep.subr.mxu0 0.0
  %234 = vmatpush2.msra.mxu0 %v115
  %235 = vmatprep.subr.mxu0 0.0
  %236 = vmatpush2.msra.mxu0 %v114
  %237 = vmatprep.subr.mxu0 0.0
  %238 = vmatpush2.msra.mxu0 %v113
  %239 = vmatprep.subr.mxu0 0.0
  %240 = vmatpush2.msra.mxu0 %v112
  %241 = vmatprep.subr.mxu0 0.0
  %242 = vmatpush2.msra.mxu0 %v111
  %243 = vmatprep.subr.mxu0 0.0
  %244 = vmatpush2.msra.mxu0 %v110
  %245 = vmatprep.mubr.f32.mxu0 %v15
  %246 = vmatmul.mubr.f32.gmra.mxu0 %v14
  %v247 = vpop.f32.mrf.mxu0
  %v248 = vadd.f32 %v179, %v247
  %v249 = vpop.f32.mrf.mxu0
  %250 = vmatprep.mubr.f32.mxu0 %v20
  %251 = vmatmul.mubr.f32.gmra.mxu0 %v19
  %v252 = vpop.f32.mrf.mxu0
  %v253 = vadd.f32 %v179, %v252
  %v254 = vpop.f32.mrf.mxu0
  %255 = vmatprep.mubr.f32.mxu0 %v25
  %256 = vmatmul.mubr.f32.gmra.mxu0 %v24
  %v257 = vpop.f32.mrf.mxu0
  %v258 = vadd.f32 %v179, %v257
  %v259 = vpop.f32.mrf.mxu0
  %260 = vmatprep.mubr.f32.mxu0 %v30
  %261 = vmatmul.mubr.f32.gmra.mxu0 %v29
  %v262 = vpop.f32.mrf.mxu0
  %v263 = vadd.f32 %v179, %v262
  %v264 = vpop.f32.mrf.mxu0
  %265 = vmatprep.mubr.f32.mxu0 %v35
  %266 = vmatmul.mubr.f32.gmra.mxu0 %v34
  %v267 = vpop.f32.mrf.mxu0
  %v268 = vadd.f32 %v179, %v267
  %v269 = vpop.f32.mrf.mxu0
  %270 = vmatprep.mubr.f32.mxu0 %v40
  %271 = vmatmul.mubr.f32.gmra.mxu0 %v39
  %v272 = vpop.f32.mrf.mxu0
  %v273 = vadd.f32 %v179, %v272
  %v274 = vpop.f32.mrf.mxu0
  %275 = vmatprep.mubr.f32.mxu0 %v45
  %276 = vmatmul.mubr.f32.gmra.mxu0 %v44
  %v277 = vpop.f32.mrf.mxu0
  %v278 = vadd.f32 %v179, %v277
  %v279 = vpop.f32.mrf.mxu0
  %280 = vmatprep.mubr.f32.mxu0 %v50
  %281 = vmatmul.mubr.f32.gmra.mxu0 %v49
  %v282 = vpop.f32.mrf.mxu0
  %v283 = vadd.f32 %v179, %v282
  %v284 = vpop.f32.mrf.mxu0
  %285 = vmatprep.mubr.f32.mxu0 %v55
  %286 = vmatmul.mubr.f32.gmra.mxu0 %v54
  %v287 = vpop.f32.mrf.mxu0
  %v288 = vadd.f32 %v179, %v287
  %v289 = vpop.f32.mrf.mxu0
  %290 = vmatprep.mubr.f32.mxu0 %v60
  %291 = vmatmul.mubr.f32.gmra.mxu0 %v59
  %v292 = vpop.f32.mrf.mxu0
  %v293 = vadd.f32 %v179, %v292
  %v294 = vpop.f32.mrf.mxu0
  %295 = vmatprep.mubr.f32.mxu0 %v65
  %296 = vmatmul.mubr.f32.gmra.mxu0 %v64
  %v297 = vpop.f32.mrf.mxu0
  %v298 = vadd.f32 %v179, %v297
  %v299 = vpop.f32.mrf.mxu0
  %300 = vmatprep.mubr.f32.mxu0 %v70
  %301 = vmatmul.mubr.f32.gmra.mxu0 %v69
  %v302 = vpop.f32.mrf.mxu0
  %v303 = vadd.f32 %v179, %v302
  %v304 = vpop.f32.mrf.mxu0
  %305 = vmatprep.mubr.f32.mxu0 %v75
  %306 = vmatmul.mubr.f32.gmra.mxu0 %v74
  %v307 = vpop.f32.mrf.mxu0
  %v308 = vadd.f32 %v179, %v307
  %v309 = vpop.f32.mrf.mxu0
  %310 = vmatprep.mubr.f32.mxu0 %v80
  %311 = vmatmul.mubr.f32.gmra.mxu0 %v79
  %v312 = vpop.f32.mrf.mxu0
  %v313 = vadd.f32 %v179, %v312
  %v314 = vpop.f32.mrf.mxu0
  %315 = vmatprep.mubr.f32.mxu0 %v85
  %316 = vmatmul.mubr.f32.gmra.mxu0 %v84
  %v317 = vpop.f32.mrf.mxu0
  %v318 = vadd.f32 %v179, %v317
  %v319 = vpop.f32.mrf.mxu0
  %320 = vmatprep.mubr.f32.mxu0 %v90
  %321 = vmatmul.mubr.f32.gmra.mxu0 %v89
  %v322 = vpop.f32.mrf.mxu0
  %v323 = vadd.f32 %v179, %v322
  %v324 = vpop.f32.mrf.mxu0
  %325 = vdwg.mxu0
  %326 = vmatprep.subr.mxu0 0.0
  %327 = vmatpush1.msra.mxu0 %v141
  %328 = vmatprep.subr.mxu0 0.0
  %329 = vmatpush1.msra.mxu0 %v140
  %330 = vmatprep.subr.mxu0 0.0
  %331 = vmatpush1.msra.mxu0 %v139
  %332 = vmatprep.subr.mxu0 0.0
  %333 = vmatpush1.msra.mxu0 %v138
  %334 = vmatprep.subr.mxu0 0.0
  %335 = vmatpush1.msra.mxu0 %v137
  %336 = vmatprep.subr.mxu0 0.0
  %337 = vmatpush1.msra.mxu0 %v136
  %338 = vmatprep.subr.mxu0 0.0
  %339 = vmatpush1.msra.mxu0 %v135
  %340 = vmatprep.subr.mxu0 0.0
  %341 = vmatpush1.msra.mxu0 %v134
  %342 = vmatprep.subr.mxu0 0.0
  %343 = vmatpush1.msra.mxu0 %v133
  %344 = vmatprep.subr.mxu0 0.0
  %345 = vmatpush1.msra.mxu0 %v132
  %346 = vmatprep.subr.mxu0 0.0
  %347 = vmatpush1.msra.mxu0 %v131
  %348 = vmatprep.subr.mxu0 0.0
  %349 = vmatpush1.msra.mxu0 %v130
  %350 = vmatprep.subr.mxu0 0.0
  %351 = vmatpush1.msra.mxu0 %v129
  %352 = vmatprep.subr.mxu0 0.0
  %353 = vmatpush1.msra.mxu0 %v128
  %354 = vmatprep.subr.mxu0 0.0
  %355 = vmatpush1.msra.mxu0 %v127
  %356 = vmatprep.subr.mxu0 0.0
  %357 = vmatpush1.msra.mxu0 %v126
  %358 = vmatprep.subr.mxu0 0.0
  %359 = vmatpush2.msra.mxu0 %v157
  %360 = vmatprep.subr.mxu0 0.0
  %361 = vmatpush2.msra.mxu0 %v156
  %362 = vmatprep.subr.mxu0 0.0
  %363 = vmatpush2.msra.mxu0 %v155
  %364 = vmatprep.subr.mxu0 0.0
  %365 = vmatpush2.msra.mxu0 %v154
  %366 = vmatprep.subr.mxu0 0.0
  %367 = vmatpush2.msra.mxu0 %v153
  %368 = vmatprep.subr.mxu0 0.0
  %369 = vmatpush2.msra.mxu0 %v152
  %370 = vmatprep.subr.mxu0 0.0
  %371 = vmatpush2.msra.mxu0 %v151
  %372 = vmatprep.subr.mxu0 0.0
  %373 = vmatpush2.msra.mxu0 %v150
  %374 = vmatprep.subr.mxu0 0.0
  %375 = vmatpush2.msra.mxu0 %v149
  %376 = vmatprep.subr.mxu0 0.0
  %377 = vmatpush2.msra.mxu0 %v148
  %378 = vmatprep.subr.mxu0 0.0
  %379 = vmatpush2.msra.mxu0 %v147
  %380 = vmatprep.subr.mxu0 0.0
  %381 = vmatpush2.msra.mxu0 %v146
  %382 = vmatprep.subr.mxu0 0.0
  %383 = vmatpush2.msra.mxu0 %v145
  %384 = vmatprep.subr.mxu0 0.0
  %385 = vmatpush2.msra.mxu0 %v144
  %386 = vmatprep.subr.mxu0 0.0
  %387 = vmatpush2.msra.mxu0 %v143
  %388 = vmatprep.subr.mxu0 0.0
  %389 = vmatpush2.msra.mxu0 %v142
  %390 = vmatprep.mubr.f32.mxu0 %v17
  %391 = vmatmul.mubr.f32.gmra.mxu0 %v16
  %v392 = vpop.f32.mrf.mxu0
  %v393 = vadd.f32 %v248, %v392
  %v394 = vpop.f32.mrf.mxu0
  %395 = vmatprep.mubr.f32.mxu0 %v22
  %396 = vmatmul.mubr.f32.gmra.mxu0 %v21
  %v397 = vpop.f32.mrf.mxu0
  %v398 = vadd.f32 %v253, %v397
  %v399 = vpop.f32.mrf.mxu0
  %400 = vmatprep.mubr.f32.mxu0 %v27
  %401 = vmatmul.mubr.f32.gmra.mxu0 %v26
  %v402 = vpop.f32.mrf.mxu0
  %v403 = vadd.f32 %v258, %v402
  %v404 = vpop.f32.mrf.mxu0
  %405 = vmatprep.mubr.f32.mxu0 %v32
  %406 = vmatmul.mubr.f32.gmra.mxu0 %v31
  %v407 = vpop.f32.mrf.mxu0
  %v408 = vadd.f32 %v263, %v407
  %v409 = vpop.f32.mrf.mxu0
  %410 = vmatprep.mubr.f32.mxu0 %v37
  %411 = vmatmul.mubr.f32.gmra.mxu0 %v36
  %v412 = vpop.f32.mrf.mxu0
  %v413 = vadd.f32 %v268, %v412
  %v414 = vpop.f32.mrf.mxu0
  %415 = vmatprep.mubr.f32.mxu0 %v42
  %416 = vmatmul.mubr.f32.gmra.mxu0 %v41
  %v417 = vpop.f32.mrf.mxu0
  %v418 = vadd.f32 %v273, %v417
  %v419 = vpop.f32.mrf.mxu0
  %420 = vmatprep.mubr.f32.mxu0 %v47
  %421 = vmatmul.mubr.f32.gmra.mxu0 %v46
  %v422 = vpop.f32.mrf.mxu0
  %v423 = vadd.f32 %v278, %v422
  %v424 = vpop.f32.mrf.mxu0
  %425 = vmatprep.mubr.f32.mxu0 %v52
  %426 = vmatmul.mubr.f32.gmra.mxu0 %v51
  %v427 = vpop.f32.mrf.mxu0
  %v428 = vadd.f32 %v283, %v427
  %v429 = vpop.f32.mrf.mxu0
  %430 = vmatprep.mubr.f32.mxu0 %v57
  %431 = vmatmul.mubr.f32.gmra.mxu0 %v56
  %v432 = vpop.f32.mrf.mxu0
  %v433 = vadd.f32 %v288, %v432
  %v434 = vpop.f32.mrf.mxu0
  %435 = vmatprep.mubr.f32.mxu0 %v62
  %436 = vmatmul.mubr.f32.gmra.mxu0 %v61
  %v437 = vpop.f32.mrf.mxu0
  %v438 = vadd.f32 %v293, %v437
  %v439 = vpop.f32.mrf.mxu0
  %440 = vmatprep.mubr.f32.mxu0 %v67
  %441 = vmatmul.mubr.f32.gmra.mxu0 %v66
  %v442 = vpop.f32.mrf.mxu0
  %v443 = vadd.f32 %v298, %v442
  %v444 = vpop.f32.mrf.mxu0
  %445 = vmatprep.mubr.f32.mxu0 %v72
  %446 = vmatmul.mubr.f32.gmra.mxu0 %v71
  %v447 = vpop.f32.mrf.mxu0
  %v448 = vadd.f32 %v303, %v447
  %v449 = vpop.f32.mrf.mxu0
  %450 = vmatprep.mubr.f32.mxu0 %v77
  %451 = vmatmul.mubr.f32.gmra.mxu0 %v76
  %v452 = vpop.f32.mrf.mxu0
  %v453 = vadd.f32 %v308, %v452
  %v454 = vpop.f32.mrf.mxu0
  %455 = vmatprep.mubr.f32.mxu0 %v82
  %456 = vmatmul.mubr.f32.gmra.mxu0 %v81
  %v457 = vpop.f32.mrf.mxu0
  %v458 = vadd.f32 %v313, %v457
  %v459 = vpop.f32.mrf.mxu0
  %460 = vmatprep.mubr.f32.mxu0 %v87
  %461 = vmatmul.mubr.f32.gmra.mxu0 %v86
  %v462 = vpop.f32.mrf.mxu0
  %v463 = vadd.f32 %v318, %v462
  %v464 = vpop.f32.mrf.mxu0
  %465 = vmatprep.mubr.f32.mxu0 %v92
  %466 = vmatmul.mubr.f32.gmra.mxu0 %v91
  %v467 = vpop.f32.mrf.mxu0
  %v468 = vadd.f32 %v323, %v467
  %v469 = vpop.f32.mrf.mxu0
  %470 = vdwg.mxu0
  %471 = vmatprep.subr.mxu0 0.0
  %472 = vmatpush1.msra.mxu0 %v173
  %473 = vmatprep.subr.mxu0 0.0
  %474 = vmatpush1.msra.mxu0 %v172
  %475 = vmatprep.subr.mxu0 0.0
  %476 = vmatpush1.msra.mxu0 %v171
  %477 = vmatprep.subr.mxu0 0.0
  %478 = vmatpush1.msra.mxu0 %v170
  %479 = vmatprep.subr.mxu0 0.0
  %480 = vmatpush1.msra.mxu0 %v169
  %481 = vmatprep.subr.mxu0 0.0
  %482 = vmatpush1.msra.mxu0 %v168
  %483 = vmatprep.subr.mxu0 0.0
  %484 = vmatpush1.msra.mxu0 %v167
  %485 = vmatprep.subr.mxu0 0.0
  %486 = vmatpush1.msra.mxu0 %v166
  %487 = vmatprep.subr.mxu0 0.0
  %488 = vmatpush1.msra.mxu0 %v165
  %489 = vmatprep.subr.mxu0 0.0
  %490 = vmatpush1.msra.mxu0 %v164
  %491 = vmatprep.subr.mxu0 0.0
  %492 = vmatpush1.msra.mxu0 %v163
  %493 = vmatprep.subr.mxu0 0.0
  %494 = vmatpush1.msra.mxu0 %v162
  %495 = vmatprep.subr.mxu0 0.0
  %496 = vmatpush1.msra.mxu0 %v161
  %497 = vmatprep.subr.mxu0 0.0
  %498 = vmatpush1.msra.mxu0 %v160
  %499 = vmatprep.subr.mxu0 0.0
  %500 = vmatpush1.msra.mxu0 %v159
  %501 = vmatprep.subr.mxu0 0.0
  %502 = vmatpush1.msra.mxu0 %v158
  %503 = vmatprep.subr.mxu0 0.0
  %504 = vmatpush2.msra.mxu0 0.0
  %505 = vmatprep.subr.mxu0 0.0
  %506 = vmatpush2.msra.mxu0 0.0
  %507 = vmatprep.subr.mxu0 0.0
  %508 = vmatpush2.msra.mxu0 0.0
  %509 = vmatprep.subr.mxu0 0.0
  %510 = vmatpush2.msra.mxu0 0.0
  %511 = vmatprep.subr.mxu0 0.0
  %512 = vmatpush2.msra.mxu0 0.0
  %513 = vmatprep.subr.mxu0 0.0
  %514 = vmatpush2.msra.mxu0 0.0
  %515 = vmatprep.subr.mxu0 0.0
  %516 = vmatpush2.msra.mxu0 0.0
  %517 = vmatprep.subr.mxu0 0.0
  %518 = vmatpush2.msra.mxu0 0.0
  %519 = vmatprep.subr.mxu0 0.0
  %520 = vmatpush2.msra.mxu0 0.0
  %521 = vmatprep.subr.mxu0 0.0
  %522 = vmatpush2.msra.mxu0 0.0
  %523 = vmatprep.subr.mxu0 0.0
  %524 = vmatpush2.msra.mxu0 0.0
  %525 = vmatprep.subr.mxu0 0.0
  %526 = vmatpush2.msra.mxu0 0.0
  %527 = vmatprep.subr.mxu0 0.0
  %528 = vmatpush2.msra.mxu0 0.0
  %529 = vmatprep.subr.mxu0 0.0
  %530 = vmatpush2.msra.mxu0 0.0
  %531 = vmatprep.subr.mxu0 0.0
  %532 = vmatpush2.msra.mxu0 0.0
  %533 = vmatprep.subr.mxu0 0.0
  %534 = vmatpush2.msra.mxu0 0.0
  %535 = vmatprep.mubr.f32.mxu0 0.0
  %536 = vmatmul.mubr.f32.gmra.mxu0 %v18
  %v537 = vpop.f32.mrf.mxu0
  %v538 = vadd.f32 %v393, %v537
  %v539 = vpop.f32.mrf.mxu0
  %540 = vmatprep.mubr.f32.mxu0 0.0
  %541 = vmatmul.mubr.f32.gmra.mxu0 %v23
  %v542 = vpop.f32.mrf.mxu0
  %v543 = vadd.f32 %v398, %v542
  %v544 = vpop.f32.mrf.mxu0
  %545 = vmatprep.mubr.f32.mxu0 0.0
  %546 = vmatmul.mubr.f32.gmra.mxu0 %v28
  %v547 = vpop.f32.mrf.mxu0
  %v548 = vadd.f32 %v403, %v547
  %v549 = vpop.f32.mrf.mxu0
  %550 = vmatprep.mubr.f32.mxu0 0.0
  %551 = vmatmul.mubr.f32.gmra.mxu0 %v33
  %v552 = vpop.f32.mrf.mxu0
  %v553 = vadd.f32 %v408, %v552
  %v554 = vpop.f32.mrf.mxu0
  %555 = vmatprep.mubr.f32.mxu0 0.0
  %556 = vmatmul.mubr.f32.gmra.mxu0 %v38
  %v557 = vpop.f32.mrf.mxu0
  %v558 = vadd.f32 %v413, %v557
  %v559 = vpop.f32.mrf.mxu0
  %560 = vmatprep.mubr.f32.mxu0 0.0
  %561 = vmatmul.mubr.f32.gmra.mxu0 %v43
  %v562 = vpop.f32.mrf.mxu0
  %v563 = vadd.f32 %v418, %v562
  %v564 = vpop.f32.mrf.mxu0
  %565 = vmatprep.mubr.f32.mxu0 0.0
  %566 = vmatmul.mubr.f32.gmra.mxu0 %v48
  %v567 = vpop.f32.mrf.mxu0
  %v568 = vadd.f32 %v423, %v567
  %v569 = vpop.f32.mrf.mxu0
  %570 = vmatprep.mubr.f32.mxu0 0.0
  %571 = vmatmul.mubr.f32.gmra.mxu0 %v53
  %v572 = vpop.f32.mrf.mxu0
  %v573 = vadd.f32 %v428, %v572
  %v574 = vpop.f32.mrf.mxu0
  %575 = vmatprep.mubr.f32.mxu0 0.0
  %576 = vmatmul.mubr.f32.gmra.mxu0 %v58
  %v577 = vpop.f32.mrf.mxu0
  %v578 = vadd.f32 %v433, %v577
  %v579 = vpop.f32.mrf.mxu0
  %580 = vmatprep.mubr.f32.mxu0 0.0
  %581 = vmatmul.mubr.f32.gmra.mxu0 %v63
  %v582 = vpop.f32.mrf.mxu0
  %v583 = vadd.f32 %v438, %v582
  %v584 = vpop.f32.mrf.mxu0
  %585 = vmatprep.mubr.f32.mxu0 0.0
  %586 = vmatmul.mubr.f32.gmra.mxu0 %v68
  %v587 = vpop.f32.mrf.mxu0
  %v588 = vadd.f32 %v443, %v587
  %v589 = vpop.f32.mrf.mxu0
  %590 = vmatprep.mubr.f32.mxu0 0.0
  %591 = vmatmul.mubr.f32.gmra.mxu0 %v73
  %v592 = vpop.f32.mrf.mxu0
  %v593 = vadd.f32 %v448, %v592
  %v594 = vpop.f32.mrf.mxu0
  %595 = vmatprep.mubr.f32.mxu0 0.0
  %596 = vmatmul.mubr.f32.gmra.mxu0 %v78
  %v597 = vpop.f32.mrf.mxu0
  %v598 = vadd.f32 %v453, %v597
  %v599 = vpop.f32.mrf.mxu0
  %600 = vmatprep.mubr.f32.mxu0 0.0
  %601 = vmatmul.mubr.f32.gmra.mxu0 %v83
  %v602 = vpop.f32.mrf.mxu0
  %v603 = vadd.f32 %v458, %v602
  %v604 = vpop.f32.mrf.mxu0
  %605 = vmatprep.mubr.f32.mxu0 0.0
  %606 = vmatmul.mubr.f32.gmra.mxu0 %v88
  %v607 = vpop.f32.mrf.mxu0
  %v608 = vadd.f32 %v463, %v607
  %v609 = vpop.f32.mrf.mxu0
  %610 = vmatprep.mubr.f32.mxu0 0.0
  %611 = vmatmul.mubr.f32.gmra.mxu0 %v93
  %v612 = vpop.f32.mrf.mxu0
  %v613 = vadd.f32 %v468, %v612
  %v614 = vpop.f32.mrf.mxu0
  %615 = vdwg.mxu0
  %v616 = vmax.f32 %v538, 0.0
  %v617 = vmax.f32 %v543, 0.0
  %v618 = vmax.f32 %v548, 0.0
  %v619 = vmax.f32 %v553, 0.0
  %v620 = vmax.f32 %v558, 0.0
  %v621 = vmax.f32 %v563, 0.0
  %v622 = vmax.f32 %v568, 0.0
  %v623 = vmax.f32 %v573, 0.0
  %v624 = vmax.f32 %v578, 0.0
  %v625 = vmax.f32 %v583, 0.0
  %v626 = vmax.f32 %v588, 0.0
  %v627 = vmax.f32 %v593, 0.0
  %v628 = vmax.f32 %v598, 0.0
  %v629 = vmax.f32 %v603, 0.0
  %v630 = vmax.f32 %v608, 0.0
  %v631 = vmax.f32 %v613, 0.0
  %vm632 = vcmask 523264
  %633 = vst.msk [vmem:[%s3] sm:$0xff] %vm632, %v616
  %634 = vst.msk [vmem:[%s3 + $0x8] sm:$0xff] %vm632, %v617
  %635 = vst.msk [vmem:[%s3 + $0x10] sm:$0xff] %vm632, %v618
  %636 = vst.msk [vmem:[%s3 + $0x18] sm:$0xff] %vm632, %v619
  %637 = vst.msk [vmem:[%s3 + $0x20] sm:$0xff] %vm632, %v620
  %638 = vst.msk [vmem:[%s3 + $0x28] sm:$0xff] %vm632, %v621
  %639 = vst.msk [vmem:[%s3 + $0x30] sm:$0xff] %vm632, %v622
  %640 = vst.msk [vmem:[%s3 + $0x38] sm:$0xff] %vm632, %v623
  %641 = vst.msk [vmem:[%s3 + $0x40] sm:$0xff] %vm632, %v624
  %642 = vst.msk [vmem:[%s3 + $0x48] sm:$0xff] %vm632, %v625
  %643 = vst.msk [vmem:[%s3 + $0x50] sm:$0xff] %vm632, %v626
  %644 = vst.msk [vmem:[%s3 + $0x58] sm:$0xff] %vm632, %v627
  %645 = vst.msk [vmem:[%s3 + $0x60] sm:$0xff] %vm632, %v628
  %646 = vst.msk [vmem:[%s3 + $0x68] sm:$0xff] %vm632, %v629
  %647 = vst.msk [vmem:[%s3 + $0x70] sm:$0xff] %vm632, %v630
  %648 = vst.msk [vmem:[%s3 + $0x78] sm:$0xff] %vm632, %v631
  // Predicated region
  $region14: #{airl_reward_forward.6} parent=0 // pred_check
    _
  $region15: #{airl_reward_forward.6} parent=0 // pred_check_branch
    %650 = sbr.rel (0) target = $region17
  $region16: #{airl_reward_forward.6} parent=0 // pred_region
    _
  $region17: #{airl_reward_forward.6} parent=0 // pred_fallthru
    _
  // Predicated region
  $region18: #{airl_reward_forward.6} parent=0 // pred_check
    _
  $region19: #{airl_reward_forward.6} parent=0 // pred_check_branch
    %652 = sbr.rel (0) target = $region21
  $region20: #{airl_reward_forward.6} parent=0 // pred_region
    _
  $region21: #{airl_reward_forward.6} parent=0 // pred_fallthru
    _

// kernel: airl_reward_forward.7
$region0: #{airl_reward_forward.7}
  #allocation0 [shape = 'u32[]', space=smem, size = 0x4, offset = 0x4, fixed_abs, tag = 'smem constant byte address 0x4 - core index']
  #allocation1 [shape = 'u32[144,128]{1,0:T(1,128)}', space=vmem, size = 0x12000, scoped, tag = 'internal scratch']
  %s0 = inlined_call_operand.vmem [shape: f32[2,4096], index: 0, kind: input, shape index: {}]
  %s1 = inlined_call_operand.vmem [shape: f32[2,128], index: 1, kind: input, shape index: {}]
  %s2 = inlined_call_operand.vmem [shape: f32[128,128], index: 2, kind: input, shape index: {}]
  %s3 = inlined_call_operand.vmem [shape: f32[1,128], index: 3, kind: input, shape index: {}]
  %s4 = inlined_call_operand.vmem [shape: f32[4096,512], index: 4, kind: input, shape index: {}]
  %s5 = inlined_call_operand.vmem [shape: f32[128,512], index: 5, kind: input, shape index: {}]
  %s6 = inlined_call_operand.vmem [shape: f32[1,512], index: 6, kind: input, shape index: {}]
  %s7 = inlined_call_operand.vmem [shape: f32[512,256], index: 7, kind: input, shape index: {}]
  %s8 = inlined_call_operand.vmem [shape: f32[1,256], index: 8, kind: input, shape index: {}]
  %s9 = inlined_call_operand.vmem [shape: f32[256,128], index: 9, kind: input, shape index: {}]
  %s10 = inlined_call_operand.vmem [shape: f32[1,128], index: 10, kind: input, shape index: {}]
  %s11 = inlined_call_operand.vmem [shape: f32[2,128], index: 11, kind: output, shape index: {}]
  %s12 = sld [smem:[#allocation0]]
  $region54: #{airl_reward_forward.7} parent=0
    _
  %s14 = ssub.s32 1, %s12
  %s15 = scalar_select 0, %s14, %s12
  // Predicated region
  $region2: #{airl_reward_forward.7} parent=0 // pred_check
    _
  $region3: #{airl_reward_forward.7} parent=0 // pred_check_branch
    %17 = sbr.rel (0) target = $region5
  $region4: #{airl_reward_forward.7} parent=0 // pred_region
    _
  $region5: #{airl_reward_forward.7} parent=0 // pred_fallthru
    _
  // Predicated region
  $region6: #{airl_reward_forward.7} parent=0 // pred_check
    _
  $region7: #{airl_reward_forward.7} parent=0 // pred_check_branch
    %19 = sbr.rel (0) target = $region9
  $region8: #{airl_reward_forward.7} parent=0 // pred_region
    _
  $region9: #{airl_reward_forward.7} parent=0 // pred_fallthru
    _
  // Predicated region
  $region10: #{airl_reward_forward.7} parent=0 // pred_check
    _
  $region11: #{airl_reward_forward.7} parent=0 // pred_check_branch
    %21 = sbr.rel (0) target = $region13
  $region12: #{airl_reward_forward.7} parent=0 // pred_region
    _
  $region13: #{airl_reward_forward.7} parent=0 // pred_fallthru
    _
  // Predicated region
  $region14: #{airl_reward_forward.7} parent=0 // pred_check
    _
  $region15: #{airl_reward_forward.7} parent=0 // pred_check_branch
    %23 = sbr.rel (0) target = $region17
  $region16: #{airl_reward_forward.7} parent=0 // pred_region
    _
  $region17: #{airl_reward_forward.7} parent=0 // pred_fallthru
    _
  // Predicated region
  $region18: #{airl_reward_forward.7} parent=0 // pred_check
    _
  $region19: #{airl_reward_forward.7} parent=0 // pred_check_branch
    %25 = sbr.rel (0) target = $region21
  $region20: #{airl_reward_forward.7} parent=0 // pred_region
    _
  $region21: #{airl_reward_forward.7} parent=0 // pred_fallthru
    _
  // Predicated region
  $region22: #{airl_reward_forward.7} parent=0 // pred_check
    _
  $region23: #{airl_reward_forward.7} parent=0 // pred_check_branch
    %27 = sbr.rel (0) target = $region25
  $region24: #{airl_reward_forward.7} parent=0 // pred_region
    _
  $region25: #{airl_reward_forward.7} parent=0 // pred_fallthru
    _
  // Predicated region
  $region26: #{airl_reward_forward.7} parent=0 // pred_check
    _
  $region27: #{airl_reward_forward.7} parent=0 // pred_check_branch
    %29 = sbr.rel (0) target = $region29
  $region28: #{airl_reward_forward.7} parent=0 // pred_region
    _
  $region29: #{airl_reward_forward.7} parent=0 // pred_fallthru
    _
  // Predicated region
  $region30: #{airl_reward_forward.7} parent=0 // pred_check
    _
  $region31: #{airl_reward_forward.7} parent=0 // pred_check_branch
    %31 = sbr.rel (0) target = $region33
  $region32: #{airl_reward_forward.7} parent=0 // pred_region
    _
  $region33: #{airl_reward_forward.7} parent=0 // pred_fallthru
    _
  // Predicated region
  $region34: #{airl_reward_forward.7} parent=0 // pred_check
    _
  $region35: #{airl_reward_forward.7} parent=0 // pred_check_branch
    %33 = sbr.rel (0) target = $region37
  $region36: #{airl_reward_forward.7} parent=0 // pred_region
    _
  $region37: #{airl_reward_forward.7} parent=0 // pred_fallthru
    _
  // Predicated region
  $region38: #{airl_reward_forward.7} parent=0 // pred_check
    _
  $region39: #{airl_reward_forward.7} parent=0 // pred_check_branch
    %35 = sbr.rel (0) target = $region41
  $region40: #{airl_reward_forward.7} parent=0 // pred_region
    _
  $region41: #{airl_reward_forward.7} parent=0 // pred_fallthru
    _
  // Predicated region
  $region42: #{airl_reward_forward.7} parent=0 // pred_check
    _
  $region43: #{airl_reward_forward.7} parent=0 // pred_check_branch
    %37 = sbr.rel (0) target = $region45
  $region44: #{airl_reward_forward.7} parent=0 // pred_region
    _
  $region45: #{airl_reward_forward.7} parent=0 // pred_fallthru
    _
  %v38 = vld [vmem:[%s1] sm:$0x3]
  %v39 = vld [vmem:[%s2] sm:$0xff]
  %v40 = vld [vmem:[%s2 + $0x8] sm:$0xff]
  %v41 = vld [vmem:[%s2 + $0x10] sm:$0xff]
  %v42 = vld [vmem:[%s2 + $0x18] sm:$0xff]
  %v43 = vld [vmem:[%s2 + $0x20] sm:$0xff]
  %v44 = vld [vmem:[%s2 + $0x28] sm:$0xff]
  %v45 = vld [vmem:[%s2 + $0x30] sm:$0xff]
  %v46 = vld [vmem:[%s2 + $0x38] sm:$0xff]
  %v47 = vld [vmem:[%s2 + $0x40] sm:$0xff]
  %v48 = vld [vmem:[%s2 + $0x48] sm:$0xff]
  %v49 = vld [vmem:[%s2 + $0x50] sm:$0xff]
  %v50 = vld [vmem:[%s2 + $0x58] sm:$0xff]
  %v51 = vld [vmem:[%s2 + $0x60] sm:$0xff]
  %v52 = vld [vmem:[%s2 + $0x68] sm:$0xff]
  %v53 = vld [vmem:[%s2 + $0x70] sm:$0xff]
  %v54 = vld [vmem:[%s2 + $0x78] sm:$0xff]
  %v55 = vld [vmem:[%s3] sm:$0x1]
  %v57 = vlaneseq
  %v58 = vshrl.u32 %v57, 7
  %v59 = vsub.s32 0, %v58
  %v60 = vrot.slane %v55, %v59
  %62 = vmatprep.subr.mxu0 0.0
  %63 = vmatpush1.msra.mxu0 %v54
  %64 = vmatprep.subr.mxu0 0.0
  %65 = vmatpush1.msra.mxu0 %v53
  %66 = vmatprep.subr.mxu0 0.0
  %67 = vmatpush1.msra.mxu0 %v52
  %68 = vmatprep.subr.mxu0 0.0
  %69 = vmatpush1.msra.mxu0 %v51
  %70 = vmatprep.subr.mxu0 0.0
  %71 = vmatpush1.msra.mxu0 %v50
  %72 = vmatprep.subr.mxu0 0.0
  %73 = vmatpush1.msra.mxu0 %v49
  %74 = vmatprep.subr.mxu0 0.0
  %75 = vmatpush1.msra.mxu0 %v48
  %76 = vmatprep.subr.mxu0 0.0
  %77 = vmatpush1.msra.mxu0 %v47
  %78 = vmatprep.subr.mxu0 0.0
  %79 = vmatpush1.msra.mxu0 %v46
  %80 = vmatprep.subr.mxu0 0.0
  %81 = vmatpush1.msra.mxu0 %v45
  %82 = vmatprep.subr.mxu0 0.0
  %83 = vmatpush1.msra.mxu0 %v44
  %84 = vmatprep.subr.mxu0 0.0
  %85 = vmatpush1.msra.mxu0 %v43
  %86 = vmatprep.subr.mxu0 0.0
  %87 = vmatpush1.msra.mxu0 %v42
  %88 = vmatprep.subr.mxu0 0.0
  %89 = vmatpush1.msra.mxu0 %v41
  %90 = vmatprep.subr.mxu0 0.0
  %91 = vmatpush1.msra.mxu0 %v40
  %92 = vmatprep.subr.mxu0 0.0
  %93 = vmatpush1.msra.mxu0 %v39
  %94 = vmatprep.subr.mxu0 0.0
  %95 = vmatpush2.msra.mxu0 0.0
  %96 = vmatprep.subr.mxu0 0.0
  %97 = vmatpush2.msra.mxu0 0.0
  %98 = vmatprep.subr.mxu0 0.0
  %99 = vmatpush2.msra.mxu0 0.0
  %100 = vmatprep.subr.mxu0 0.0
  %101 = vmatpush2.msra.mxu0 0.0
  %102 = vmatprep.subr.mxu0 0.0
  %103 = vmatpush2.msra.mxu0 0.0
  %104 = vmatprep.subr.mxu0 0.0
  %105 = vmatpush2.msra.mxu0 0.0
  %106 = vmatprep.subr.mxu0 0.0
  %107 = vmatpush2.msra.mxu0 0.0
  %108 = vmatprep.subr.mxu0 0.0
  %109 = vmatpush2.msra.mxu0 0.0
  %110 = vmatprep.subr.mxu0 0.0
  %111 = vmatpush2.msra.mxu0 0.0
  %112 = vmatprep.subr.mxu0 0.0
  %113 = vmatpush2.msra.mxu0 0.0
  %114 = vmatprep.subr.mxu0 0.0
  %115 = vmatpush2.msra.mxu0 0.0
  %116 = vmatprep.subr.mxu0 0.0
  %117 = vmatpush2.msra.mxu0 0.0
  %118 = vmatprep.subr.mxu0 0.0
  %119 = vmatpush2.msra.mxu0 0.0
  %120 = vmatprep.subr.mxu0 0.0
  %121 = vmatpush2.msra.mxu0 0.0
  %122 = vmatprep.subr.mxu0 0.0
  %123 = vmatpush2.msra.mxu0 0.0
  %124 = vmatprep.subr.mxu0 0.0
  %125 = vmatpush2.msra.mxu0 0.0
  %126 = vmatprep.mubr.f32.mxu0 0.0
  %127 = vmatmul.mubr.f32.gmra.mxu0 %v38
  %v128 = vpop.f32.mrf.mxu0
  %v129 = vadd.f32 %v60, %v128
  %v130 = vpop.f32.mrf.mxu0
  %131 = vdwg.mxu0
  %v132 = vmax.f32 %v129, 0.0
  %v133 = vld [vmem:[%s0] sm:$0xff]
  %v134 = vld [vmem:[%s0 + $0x8] sm:$0xff]
  %v135 = vld [vmem:[%s0 + $0x10] sm:$0xff]
  %v136 = vld [vmem:[%s0 + $0x18] sm:$0xff]
  %v137 = vld [vmem:[%s0 + $0x20] sm:$0xff]
  %v138 = vld [vmem:[%s0 + $0x28] sm:$0xff]
  %v139 = vld [vmem:[%s0 + $0x30] sm:$0xff]
  %v140 = vld [vmem:[%s0 + $0x38] sm:$0xff]
  %v141 = vld [vmem:[%s4] sm:$0xff]
  %v142 = vld [vmem:[%s4 + $0x8] sm:$0xff]
  %v143 = vld [vmem:[%s4 + $0x10] sm:$0xff]
  %v144 = vld [vmem:[%s4 + $0x18] sm:$0xff]
  %v145 = vld [vmem:[%s4 + $0x20] sm:$0xff]
  %v146 = vld [vmem:[%s4 + $0x28] sm:$0xff]
  %v147 = vld [vmem:[%s4 + $0x30] sm:$0xff]
  %v148 = vld [vmem:[%s4 + $0x38] sm:$0xff]
  %v149 = vld [vmem:[%s4 + $0x40] sm:$0xff]
  %v150 = vld [vmem:[%s4 + $0x48] sm:$0xff]
  %v151 = vld [vmem:[%s4 + $0x50] sm:$0xff]
  %v152 = vld [vmem:[%s4 + $0x58] sm:$0xff]
  %v153 = vld [vmem:[%s4 + $0x60] sm:$0xff]
  %v154 = vld [vmem:[%s4 + $0x68] sm:$0xff]
  %v155 = vld [vmem:[%s4 + $0x70] sm:$0xff]
  %v156 = vld [vmem:[%s4 + $0x78] sm:$0xff]
  %v157 = vld [vmem:[%s4 + $0x80] sm:$0xff]
  %v158 = vld [vmem:[%s4 + $0x88] sm:$0xff]
  %v159 = vld [vmem:[%s4 + $0x90] sm:$0xff]
  %v160 = vld [vmem:[%s4 + $0x98] sm:$0xff]
  %v161 = vld [vmem:[%s4 + $0xa0] sm:$0xff]
  %v162 = vld [vmem:[%s4 + $0xa8] sm:$0xff]
  %v163 = vld [vmem:[%s4 + $0xb0] sm:$0xff]
  %v164 = vld [vmem:[%s4 + $0xb8] sm:$0xff]
  %v165 = vld [vmem:[%s4 + $0xc0] sm:$0xff]
  %v166 = vld [vmem:[%s4 + $0xc8] sm:$0xff]
  %v167 = vld [vmem:[%s4 + $0xd0] sm:$0xff]
  %v168 = vld [vmem:[%s4 + $0xd8] sm:$0xff]
  %v169 = vld [vmem:[%s4 + $0xe0] sm:$0xff]
  %v170 = vld [vmem:[%s4 + $0xe8] sm:$0xff]
  %v171 = vld [vmem:[%s4 + $0xf0] sm:$0xff]
  %v172 = vld [vmem:[%s4 + $0xf8] sm:$0xff]
  %v173 = vld [vmem:[%s4 + $0x100] sm:$0xff]
  %v174 = vld [vmem:[%s4 + $0x108] sm:$0xff]
  %v175 = vld [vmem:[%s4 + $0x110] sm:$0xff]
  %v176 = vld [vmem:[%s4 + $0x118] sm:$0xff]
  %v177 = vld [vmem:[%s4 + $0x120] sm:$0xff]
  %v178 = vld [vmem:[%s4 + $0x128] sm:$0xff]
  %v179 = vld [vmem:[%s4 + $0x130] sm:$0xff]
  %v180 = vld [vmem:[%s4 + $0x138] sm:$0xff]
  %v181 = vld [vmem:[%s4 + $0x140] sm:$0xff]
  %v182 = vld [vmem:[%s4 + $0x148] sm:$0xff]
  %v183 = vld [vmem:[%s4 + $0x150] sm:$0xff]
  %v184 = vld [vmem:[%s4 + $0x158] sm:$0xff]
  %v185 = vld [vmem:[%s4 + $0x160] sm:$0xff]
  %v186 = vld [vmem:[%s4 + $0x168] sm:$0xff]
  %v187 = vld [vmem:[%s4 + $0x170] sm:$0xff]
  %v188 = vld [vmem:[%s4 + $0x178] sm:$0xff]
  %v189 = vld [vmem:[%s4 + $0x180] sm:$0xff]
  %v190 = vld [vmem:[%s4 + $0x188] sm:$0xff]
  %v191 = vld [vmem:[%s4 + $0x190] sm:$0xff]
  %v192 = vld [vmem:[%s4 + $0x198] sm:$0xff]
  %v193 = vld [vmem:[%s4 + $0x1a0] sm:$0xff]
  %v194 = vld [vmem:[%s4 + $0x1a8] sm:$0xff]
  %v195 = vld [vmem:[%s4 + $0x1b0] sm:$0xff]
  %v196 = vld [vmem:[%s4 + $0x1b8] sm:$0xff]
  %v197 = vld [vmem:[%s4 + $0x1c0] sm:$0xff]
  %v198 = vld [vmem:[%s4 + $0x1c8] sm:$0xff]
  %v199 = vld [vmem:[%s4 + $0x1d0] sm:$0xff]
  %v200 = vld [vmem:[%s4 + $0x1d8] sm:$0xff]
  %v201 = vld [vmem:[%s4 + $0x1e0] sm:$0xff]
  %v202 = vld [vmem:[%s4 + $0x1e8] sm:$0xff]
  %v203 = vld [vmem:[%s4 + $0x1f0] sm:$0xff]
  %v204 = vld [vmem:[%s4 + $0x1f8] sm:$0xff]
  %v205 = vld [vmem:[%s4 + $0x200] sm:$0xff]
  %v206 = vld [vmem:[%s4 + $0x208] sm:$0xff]
  %v207 = vld [vmem:[%s4 + $0x210] sm:$0xff]
  %v208 = vld [vmem:[%s4 + $0x218] sm:$0xff]
  %v209 = vld [vmem:[%s4 + $0x220] sm:$0xff]
  %v210 = vld [vmem:[%s4 + $0x228] sm:$0xff]
  %v211 = vld [vmem:[%s4 + $0x230] sm:$0xff]
  %v212 = vld [vmem:[%s4 + $0x238] sm:$0xff]
  %v213 = vld [vmem:[%s4 + $0x240] sm:$0xff]
  %v214 = vld [vmem:[%s4 + $0x248] sm:$0xff]
  %v215 = vld [vmem:[%s4 + $0x250] sm:$0xff]
  %v216 = vld [vmem:[%s4 + $0x258] sm:$0xff]
  %v217 = vld [vmem:[%s4 + $0x260] sm:$0xff]
  %v218 = vld [vmem:[%s4 + $0x268] sm:$0xff]
  %v219 = vld [vmem:[%s4 + $0x270] sm:$0xff]
  %v220 = vld [vmem:[%s4 + $0x278] sm:$0xff]
  %v221 = vld [vmem:[%s4 + $0x280] sm:$0xff]
  %v222 = vld [vmem:[%s4 + $0x288] sm:$0xff]
  %v223 = vld [vmem:[%s4 + $0x290] sm:$0xff]
  %v224 = vld [vmem:[%s4 + $0x298] sm:$0xff]
  %v225 = vld [vmem:[%s4 + $0x2a0] sm:$0xff]
  %v226 = vld [vmem:[%s4 + $0x2a8] sm:$0xff]
  %v227 = vld [vmem:[%s4 + $0x2b0] sm:$0xff]
  %v228 = vld [vmem:[%s4 + $0x2b8] sm:$0xff]
  %v229 = vld [vmem:[%s4 + $0x2c0] sm:$0xff]
  %v230 = vld [vmem:[%s4 + $0x2c8] sm:$0xff]
  %v231 = vld [vmem:[%s4 + $0x2d0] sm:$0xff]
  %v232 = vld [vmem:[%s4 + $0x2d8] sm:$0xff]
  %v233 = vld [vmem:[%s4 + $0x2e0] sm:$0xff]
  %v234 = vld [vmem:[%s4 + $0x2e8] sm:$0xff]
  %v235 = vld [vmem:[%s4 + $0x2f0] sm:$0xff]
  %v236 = vld [vmem:[%s4 + $0x2f8] sm:$0xff]
  %v237 = vld [vmem:[%s4 + $0x300] sm:$0xff]
  %v238 = vld [vmem:[%s4 + $0x308] sm:$0xff]
  %v239 = vld [vmem:[%s4 + $0x310] sm:$0xff]
  %v240 = vld [vmem:[%s4 + $0x318] sm:$0xff]
  %v241 = vld [vmem:[%s4 + $0x320] sm:$0xff]
  %v242 = vld [vmem:[%s4 + $0x328] sm:$0xff]
  %v243 = vld [vmem:[%s4 + $0x330] sm:$0xff]
  %v244 = vld [vmem:[%s4 + $0x338] sm:$0xff]
  %v245 = vld [vmem:[%s4 + $0x340] sm:$0xff]
  %v246 = vld [vmem:[%s4 + $0x348] sm:$0xff]
  %v247 = vld [vmem:[%s4 + $0x350] sm:$0xff]
  %v248 = vld [vmem:[%s4 + $0x358] sm:$0xff]
  %v249 = vld [vmem:[%s4 + $0x360] sm:$0xff]
  %v250 = vld [vmem:[%s4 + $0x368] sm:$0xff]
  %v251 = vld [vmem:[%s4 + $0x370] sm:$0xff]
  %v252 = vld [vmem:[%s4 + $0x378] sm:$0xff]
  %v253 = vld [vmem:[%s4 + $0x380] sm:$0xff]
  %v254 = vld [vmem:[%s4 + $0x388] sm:$0xff]
  %v255 = vld [vmem:[%s4 + $0x390] sm:$0xff]
  %v256 = vld [vmem:[%s4 + $0x398] sm:$0xff]
  %v257 = vld [vmem:[%s4 + $0x3a0] sm:$0xff]
  %v258 = vld [vmem:[%s4 + $0x3a8] sm:$0xff]
  %v259 = vld [vmem:[%s4 + $0x3b0] sm:$0xff]
  %v260 = vld [vmem:[%s4 + $0x3b8] sm:$0xff]
  %v261 = vld [vmem:[%s4 + $0x3c0] sm:$0xff]
  %v262 = vld [vmem:[%s4 + $0x3c8] sm:$0xff]
  %v263 = vld [vmem:[%s4 + $0x3d0] sm:$0xff]
  %v264 = vld [vmem:[%s4 + $0x3d8] sm:$0xff]
  %v265 = vld [vmem:[%s4 + $0x3e0] sm:$0xff]
  %v266 = vld [vmem:[%s4 + $0x3e8] sm:$0xff]
  %v267 = vld [vmem:[%s4 + $0x3f0] sm:$0xff]
  %v268 = vld [vmem:[%s4 + $0x3f8] sm:$0xff]
  %v269 = vld [vmem:[%s4 + $0x400] sm:$0xff]
  %v270 = vld [vmem:[%s4 + $0x408] sm:$0xff]
  %v271 = vld [vmem:[%s4 + $0x410] sm:$0xff]
  %v272 = vld [vmem:[%s4 + $0x418] sm:$0xff]
  %v273 = vld [vmem:[%s4 + $0x420] sm:$0xff]
  %v274 = vld [vmem:[%s4 + $0x428] sm:$0xff]
  %v275 = vld [vmem:[%s4 + $0x430] sm:$0xff]
  %v276 = vld [vmem:[%s4 + $0x438] sm:$0xff]
  %v277 = vld [vmem:[%s4 + $0x440] sm:$0xff]
  %v278 = vld [vmem:[%s4 + $0x448] sm:$0xff]
  %v279 = vld [vmem:[%s4 + $0x450] sm:$0xff]
  %v280 = vld [vmem:[%s4 + $0x458] sm:$0xff]
  %v281 = vld [vmem:[%s4 + $0x460] sm:$0xff]
  %v282 = vld [vmem:[%s4 + $0x468] sm:$0xff]
  %v283 = vld [vmem:[%s4 + $0x470] sm:$0xff]
  %v284 = vld [vmem:[%s4 + $0x478] sm:$0xff]
  %v285 = vld [vmem:[%s4 + $0x480] sm:$0xff]
  %v286 = vld [vmem:[%s4 + $0x488] sm:$0xff]
  %v287 = vld [vmem:[%s4 + $0x490] sm:$0xff]
  %v288 = vld [vmem:[%s4 + $0x498] sm:$0xff]
  %v289 = vld [vmem:[%s4 + $0x4a0] sm:$0xff]
  %v290 = vld [vmem:[%s4 + $0x4a8] sm:$0xff]
  %v291 = vld [vmem:[%s4 + $0x4b0] sm:$0xff]
  %v292 = vld [vmem:[%s4 + $0x4b8] sm:$0xff]
  %v293 = vld [vmem:[%s4 + $0x4c0] sm:$0xff]
  %v294 = vld [vmem:[%s4 + $0x4c8] sm:$0xff]
  %v295 = vld [vmem:[%s4 + $0x4d0] sm:$0xff]
  %v296 = vld [vmem:[%s4 + $0x4d8] sm:$0xff]
  %v297 = vld [vmem:[%s4 + $0x4e0] sm:$0xff]
  %v298 = vld [vmem:[%s4 + $0x4e8] sm:$0xff]
  %v299 = vld [vmem:[%s4 + $0x4f0] sm:$0xff]
  %v300 = vld [vmem:[%s4 + $0x4f8] sm:$0xff]
  %v301 = vld [vmem:[%s4 + $0x500] sm:$0xff]
  %v302 = vld [vmem:[%s4 + $0x508] sm:$0xff]
  %v303 = vld [vmem:[%s4 + $0x510] sm:$0xff]
  %v304 = vld [vmem:[%s4 + $0x518] sm:$0xff]
  %v305 = vld [vmem:[%s4 + $0x520] sm:$0xff]
  %v306 = vld [vmem:[%s4 + $0x528] sm:$0xff]
  %v307 = vld [vmem:[%s4 + $0x530] sm:$0xff]
  %v308 = vld [vmem:[%s4 + $0x538] sm:$0xff]
  %v309 = vld [vmem:[%s4 + $0x540] sm:$0xff]
  %v310 = vld [vmem:[%s4 + $0x548] sm:$0xff]
  %v311 = vld [vmem:[%s4 + $0x550] sm:$0xff]
  %v312 = vld [vmem:[%s4 + $0x558] sm:$0xff]
  %v313 = vld [vmem:[%s4 + $0x560] sm:$0xff]
  %v314 = vld [vmem:[%s4 + $0x568] sm:$0xff]
  %v315 = vld [vmem:[%s4 + $0x570] sm:$0xff]
  %v316 = vld [vmem:[%s4 + $0x578] sm:$0xff]
  %v317 = vld [vmem:[%s4 + $0x580] sm:$0xff]
  %v318 = vld [vmem:[%s4 + $0x588] sm:$0xff]
  %v319 = vld [vmem:[%s4 + $0x590] sm:$0xff]
  %v320 = vld [vmem:[%s4 + $0x598] sm:$0xff]
  %v321 = vld [vmem:[%s4 + $0x5a0] sm:$0xff]
  %v322 = vld [vmem:[%s4 + $0x5a8] sm:$0xff]
  %v323 = vld [vmem:[%s4 + $0x5b0] sm:$0xff]
  %v324 = vld [vmem:[%s4 + $0x5b8] sm:$0xff]
  %v325 = vld [vmem:[%s4 + $0x5c0] sm:$0xff]
  %v326 = vld [vmem:[%s4 + $0x5c8] sm:$0xff]
  %v327 = vld [vmem:[%s4 + $0x5d0] sm:$0xff]
  %v328 = vld [vmem:[%s4 + $0x5d8] sm:$0xff]
  %v329 = vld [vmem:[%s4 + $0x5e0] sm:$0xff]
  %v330 = vld [vmem:[%s4 + $0x5e8] sm:$0xff]
  %v331 = vld [vmem:[%s4 + $0x5f0] sm:$0xff]
  %v332 = vld [vmem:[%s4 + $0x5f8] sm:$0xff]
  %v333 = vld [vmem:[%s4 + $0x600] sm:$0xff]
  %v334 = vld [vmem:[%s4 + $0x608] sm:$0xff]
  %v335 = vld [vmem:[%s4 + $0x610] sm:$0xff]
  %v336 = vld [vmem:[%s4 + $0x618] sm:$0xff]
  %v337 = vld [vmem:[%s4 + $0x620] sm:$0xff]
  %v338 = vld [vmem:[%s4 + $0x628] sm:$0xff]
  %v339 = vld [vmem:[%s4 + $0x630] sm:$0xff]
  %v340 = vld [vmem:[%s4 + $0x638] sm:$0xff]
  %v341 = vld [vmem:[%s4 + $0x640] sm:$0xff]
  %v342 = vld [vmem:[%s4 + $0x648] sm:$0xff]
  %v343 = vld [vmem:[%s4 + $0x650] sm:$0xff]
  %v344 = vld [vmem:[%s4 + $0x658] sm:$0xff]
  %v345 = vld [vmem:[%s4 + $0x660] sm:$0xff]
  %v346 = vld [vmem:[%s4 + $0x668] sm:$0xff]
  %v347 = vld [vmem:[%s4 + $0x670] sm:$0xff]
  %v348 = vld [vmem:[%s4 + $0x678] sm:$0xff]
  %v349 = vld [vmem:[%s4 + $0x680] sm:$0xff]
  %v350 = vld [vmem:[%s4 + $0x688] sm:$0xff]
  %v351 = vld [vmem:[%s4 + $0x690] sm:$0xff]
  %v352 = vld [vmem:[%s4 + $0x698] sm:$0xff]
  %v353 = vld [vmem:[%s4 + $0x6a0] sm:$0xff]
  %v354 = vld [vmem:[%s4 + $0x6a8] sm:$0xff]
  %v355 = vld [vmem:[%s4 + $0x6b0] sm:$0xff]
  %v356 = vld [vmem:[%s4 + $0x6b8] sm:$0xff]
  %v357 = vld [vmem:[%s4 + $0x6c0] sm:$0xff]
  %v358 = vld [vmem:[%s4 + $0x6c8] sm:$0xff]
  %v359 = vld [vmem:[%s4 + $0x6d0] sm:$0xff]
  %v360 = vld [vmem:[%s4 + $0x6d8] sm:$0xff]
  %v361 = vld [vmem:[%s4 + $0x6e0] sm:$0xff]
  %v362 = vld [vmem:[%s4 + $0x6e8] sm:$0xff]
  %v363 = vld [vmem:[%s4 + $0x6f0] sm:$0xff]
  %v364 = vld [vmem:[%s4 + $0x6f8] sm:$0xff]
  %v365 = vld [vmem:[%s4 + $0x700] sm:$0xff]
  %v366 = vld [vmem:[%s4 + $0x708] sm:$0xff]
  %v367 = vld [vmem:[%s4 + $0x710] sm:$0xff]
  %v368 = vld [vmem:[%s4 + $0x718] sm:$0xff]
  %v369 = vld [vmem:[%s4 + $0x720] sm:$0xff]
  %v370 = vld [vmem:[%s4 + $0x728] sm:$0xff]
  %v371 = vld [vmem:[%s4 + $0x730] sm:$0xff]
  %v372 = vld [vmem:[%s4 + $0x738] sm:$0xff]
  %v373 = vld [vmem:[%s4 + $0x740] sm:$0xff]
  %v374 = vld [vmem:[%s4 + $0x748] sm:$0xff]
  %v375 = vld [vmem:[%s4 + $0x750] sm:$0xff]
  %v376 = vld [vmem:[%s4 + $0x758] sm:$0xff]
  %v377 = vld [vmem:[%s4 + $0x760] sm:$0xff]
  %v378 = vld [vmem:[%s4 + $0x768] sm:$0xff]
  %v379 = vld [vmem:[%s4 + $0x770] sm:$0xff]
  %v380 = vld [vmem:[%s4 + $0x778] sm:$0xff]
  %v381 = vld [vmem:[%s4 + $0x780] sm:$0xff]
  %v382 = vld [vmem:[%s4 + $0x788] sm:$0xff]
  %v383 = vld [vmem:[%s4 + $0x790] sm:$0xff]
  %v384 = vld [vmem:[%s4 + $0x798] sm:$0xff]
  %v385 = vld [vmem:[%s4 + $0x7a0] sm:$0xff]
  %v386 = vld [vmem:[%s4 + $0x7a8] sm:$0xff]
  %v387 = vld [vmem:[%s4 + $0x7b0] sm:$0xff]
  %v388 = vld [vmem:[%s4 + $0x7b8] sm:$0xff]
  %v389 = vld [vmem:[%s4 + $0x7c0] sm:$0xff]
  %v390 = vld [vmem:[%s4 + $0x7c8] sm:$0xff]
  %v391 = vld [vmem:[%s4 + $0x7d0] sm:$0xff]
  %v392 = vld [vmem:[%s4 + $0x7d8] sm:$0xff]
  %v393 = vld [vmem:[%s4 + $0x7e0] sm:$0xff]
  %v394 = vld [vmem:[%s4 + $0x7e8] sm:$0xff]
  %v395 = vld [vmem:[%s4 + $0x7f0] sm:$0xff]
  %v396 = vld [vmem:[%s4 + $0x7f8] sm:$0xff]
  %v397 = vld [vmem:[%s4 + $0x800] sm:$0xff]
  %v398 = vld [vmem:[%s4 + $0x808] sm:$0xff]
  %v399 = vld [vmem:[%s4 + $0x810] sm:$0xff]
  %v400 = vld [vmem:[%s4 + $0x818] sm:$0xff]
  %v401 = vld [vmem:[%s4 + $0x820] sm:$0xff]
  %v402 = vld [vmem:[%s4 + $0x828] sm:$0xff]
  %v403 = vld [vmem:[%s4 + $0x830] sm:$0xff]
  %v404 = vld [vmem:[%s4 + $0x838] sm:$0xff]
  %v405 = vld [vmem:[%s4 + $0x840] sm:$0xff]
  %v406 = vld [vmem:[%s4 + $0x848] sm:$0xff]
  %v407 = vld [vmem:[%s4 + $0x850] sm:$0xff]
  %v408 = vld [vmem:[%s4 + $0x858] sm:$0xff]
  %v409 = vld [vmem:[%s4 + $0x860] sm:$0xff]
  %v410 = vld [vmem:[%s4 + $0x868] sm:$0xff]
  %v411 = vld [vmem:[%s4 + $0x870] sm:$0xff]
  %v412 = vld [vmem:[%s4 + $0x878] sm:$0xff]
  %v413 = vld [vmem:[%s4 + $0x880] sm:$0xff]
  %v414 = vld [vmem:[%s4 + $0x888] sm:$0xff]
  %v415 = vld [vmem:[%s4 + $0x890] sm:$0xff]
  %v416 = vld [vmem:[%s4 + $0x898] sm:$0xff]
  %v417 = vld [vmem:[%s4 + $0x8a0] sm:$0xff]
  %v418 = vld [vmem:[%s4 + $0x8a8] sm:$0xff]
  %v419 = vld [vmem:[%s4 + $0x8b0] sm:$0xff]
  %v420 = vld [vmem:[%s4 + $0x8b8] sm:$0xff]
  %v421 = vld [vmem:[%s4 + $0x8c0] sm:$0xff]
  %v422 = vld [vmem:[%s4 + $0x8c8] sm:$0xff]
  %v423 = vld [vmem:[%s4 + $0x8d0] sm:$0xff]
  %v424 = vld [vmem:[%s4 + $0x8d8] sm:$0xff]
  %v425 = vld [vmem:[%s4 + $0x8e0] sm:$0xff]
  %v426 = vld [vmem:[%s4 + $0x8e8] sm:$0xff]
  %v427 = vld [vmem:[%s4 + $0x8f0] sm:$0xff]
  %v428 = vld [vmem:[%s4 + $0x8f8] sm:$0xff]
  %v429 = vld [vmem:[%s4 + $0x900] sm:$0xff]
  %v430 = vld [vmem:[%s4 + $0x908] sm:$0xff]
  %v431 = vld [vmem:[%s4 + $0x910] sm:$0xff]
  %v432 = vld [vmem:[%s4 + $0x918] sm:$0xff]
  %v433 = vld [vmem:[%s4 + $0x920] sm:$0xff]
  %v434 = vld [vmem:[%s4 + $0x928] sm:$0xff]
  %v435 = vld [vmem:[%s4 + $0x930] sm:$0xff]
  %v436 = vld [vmem:[%s4 + $0x938] sm:$0xff]
  %v437 = vld [vmem:[%s4 + $0x940] sm:$0xff]
  %v438 = vld [vmem:[%s4 + $0x948] sm:$0xff]
  %v439 = vld [vmem:[%s4 + $0x950] sm:$0xff]
  %v440 = vld [vmem:[%s4 + $0x958] sm:$0xff]
  %v441 = vld [vmem:[%s4 + $0x960] sm:$0xff]
  %v442 = vld [vmem:[%s4 + $0x968] sm:$0xff]
  %v443 = vld [vmem:[%s4 + $0x970] sm:$0xff]
  %v444 = vld [vmem:[%s4 + $0x978] sm:$0xff]
  %v445 = vld [vmem:[%s4 + $0x980] sm:$0xff]
  %v446 = vld [vmem:[%s4 + $0x988] sm:$0xff]
  %v447 = vld [vmem:[%s4 + $0x990] sm:$0xff]
  %v448 = vld [vmem:[%s4 + $0x998] sm:$0xff]
  %v449 = vld [vmem:[%s4 + $0x9a0] sm:$0xff]
  %v450 = vld [vmem:[%s4 + $0x9a8] sm:$0xff]
  %v451 = vld [vmem:[%s4 + $0x9b0] sm:$0xff]
  %v452 = vld [vmem:[%s4 + $0x9b8] sm:$0xff]
  %v453 = vld [vmem:[%s4 + $0x9c0] sm:$0xff]
  %v454 = vld [vmem:[%s4 + $0x9c8] sm:$0xff]
  %v455 = vld [vmem:[%s4 + $0x9d0] sm:$0xff]
  %v456 = vld [vmem:[%s4 + $0x9d8] sm:$0xff]
  %v457 = vld [vmem:[%s4 + $0x9e0] sm:$0xff]
  %v458 = vld [vmem:[%s4 + $0x9e8] sm:$0xff]
  %v459 = vld [vmem:[%s4 + $0x9f0] sm:$0xff]
  %v460 = vld [vmem:[%s4 + $0x9f8] sm:$0xff]
  %v461 = vld [vmem:[%s4 + $0xa00] sm:$0xff]
  %v462 = vld [vmem:[%s4 + $0xa08] sm:$0xff]
  %v463 = vld [vmem:[%s4 + $0xa10] sm:$0xff]
  %v464 = vld [vmem:[%s4 + $0xa18] sm:$0xff]
  %v465 = vld [vmem:[%s4 + $0xa20] sm:$0xff]
  %v466 = vld [vmem:[%s4 + $0xa28] sm:$0xff]
  %v467 = vld [vmem:[%s4 + $0xa30] sm:$0xff]
  %v468 = vld [vmem:[%s4 + $0xa38] sm:$0xff]
  %v469 = vld [vmem:[%s4 + $0xa40] sm:$0xff]
  %v470 = vld [vmem:[%s4 + $0xa48] sm:$0xff]
  %v471 = vld [vmem:[%s4 + $0xa50] sm:$0xff]
  %v472 = vld [vmem:[%s4 + $0xa58] sm:$0xff]
  %v473 = vld [vmem:[%s4 + $0xa60] sm:$0xff]
  %v474 = vld [vmem:[%s4 + $0xa68] sm:$0xff]
  %v475 = vld [vmem:[%s4 + $0xa70] sm:$0xff]
  %v476 = vld [vmem:[%s4 + $0xa78] sm:$0xff]
  %v477 = vld [vmem:[%s4 + $0xa80] sm:$0xff]
  %v478 = vld [vmem:[%s4 + $0xa88] sm:$0xff]
  %v479 = vld [vmem:[%s4 + $0xa90] sm:$0xff]
  %v480 = vld [vmem:[%s4 + $0xa98] sm:$0xff]
  %v481 = vld [vmem:[%s4 + $0xaa0] sm:$0xff]
  %v482 = vld [vmem:[%s4 + $0xaa8] sm:$0xff]
  %v483 = vld [vmem:[%s4 + $0xab0] sm:$0xff]
  %v484 = vld [vmem:[%s4 + $0xab8] sm:$0xff]
  %v485 = vld [vmem:[%s4 + $0xac0] sm:$0xff]
  %v486 = vld [vmem:[%s4 + $0xac8] sm:$0xff]
  %v487 = vld [vmem:[%s4 + $0xad0] sm:$0xff]
  %v488 = vld [vmem:[%s4 + $0xad8] sm:$0xff]
  %v489 = vld [vmem:[%s4 + $0xae0] sm:$0xff]
  %v490 = vld [vmem:[%s4 + $0xae8] sm:$0xff]
  %v491 = vld [vmem:[%s4 + $0xaf0] sm:$0xff]
  %v492 = vld [vmem:[%s4 + $0xaf8] sm:$0xff]
  %v493 = vld [vmem:[%s4 + $0xb00] sm:$0xff]
  %v494 = vld [vmem:[%s4 + $0xb08] sm:$0xff]
  %v495 = vld [vmem:[%s4 + $0xb10] sm:$0xff]
  %v496 = vld [vmem:[%s4 + $0xb18] sm:$0xff]
  %v497 = vld [vmem:[%s4 + $0xb20] sm:$0xff]
  %v498 = vld [vmem:[%s4 + $0xb28] sm:$0xff]
  %v499 = vld [vmem:[%s4 + $0xb30] sm:$0xff]
  %v500 = vld [vmem:[%s4 + $0xb38] sm:$0xff]
  %v501 = vld [vmem:[%s4 + $0xb40] sm:$0xff]
  %v502 = vld [vmem:[%s4 + $0xb48] sm:$0xff]
  %v503 = vld [vmem:[%s4 + $0xb50] sm:$0xff]
  %v504 = vld [vmem:[%s4 + $0xb58] sm:$0xff]
  %v505 = vld [vmem:[%s4 + $0xb60] sm:$0xff]
  %v506 = vld [vmem:[%s4 + $0xb68] sm:$0xff]
  %v507 = vld [vmem:[%s4 + $0xb70] sm:$0xff]
  %v508 = vld [vmem:[%s4 + $0xb78] sm:$0xff]
  %v509 = vld [vmem:[%s4 + $0xb80] sm:$0xff]
  %v510 = vld [vmem:[%s4 + $0xb88] sm:$0xff]
  %v511 = vld [vmem:[%s4 + $0xb90] sm:$0xff]
  %v512 = vld [vmem:[%s4 + $0xb98] sm:$0xff]
  %v513 = vld [vmem:[%s4 + $0xba0] sm:$0xff]
  %v514 = vld [vmem:[%s4 + $0xba8] sm:$0xff]
  %v515 = vld [vmem:[%s4 + $0xbb0] sm:$0xff]
  %v516 = vld [vmem:[%s4 + $0xbb8] sm:$0xff]
  %v517 = vld [vmem:[%s4 + $0xbc0] sm:$0xff]
  %v518 = vld [vmem:[%s4 + $0xbc8] sm:$0xff]
  %v519 = vld [vmem:[%s4 + $0xbd0] sm:$0xff]
  %v520 = vld [vmem:[%s4 + $0xbd8] sm:$0xff]
  %v521 = vld [vmem:[%s4 + $0xbe0] sm:$0xff]
  %v522 = vld [vmem:[%s4 + $0xbe8] sm:$0xff]
  %v523 = vld [vmem:[%s4 + $0xbf0] sm:$0xff]
  %v524 = vld [vmem:[%s4 + $0xbf8] sm:$0xff]
  %v525 = vld [vmem:[%s4 + $0xc00] sm:$0xff]
  %v526 = vld [vmem:[%s4 + $0xc08] sm:$0xff]
  %v527 = vld [vmem:[%s4 + $0xc10] sm:$0xff]
  %v528 = vld [vmem:[%s4 + $0xc18] sm:$0xff]
  %v529 = vld [vmem:[%s4 + $0xc20] sm:$0xff]
  %v530 = vld [vmem:[%s4 + $0xc28] sm:$0xff]
  %v531 = vld [vmem:[%s4 + $0xc30] sm:$0xff]
  %v532 = vld [vmem:[%s4 + $0xc38] sm:$0xff]
  %v533 = vld [vmem:[%s4 + $0xc40] sm:$0xff]
  %v534 = vld [vmem:[%s4 + $0xc48] sm:$0xff]
  %v535 = vld [vmem:[%s4 + $0xc50] sm:$0xff]
  %v536 = vld [vmem:[%s4 + $0xc58] sm:$0xff]
  %v537 = vld [vmem:[%s4 + $0xc60] sm:$0xff]
  %v538 = vld [vmem:[%s4 + $0xc68] sm:$0xff]
  %v539 = vld [vmem:[%s4 + $0xc70] sm:$0xff]
  %v540 = vld [vmem:[%s4 + $0xc78] sm:$0xff]
  %v541 = vld [vmem:[%s4 + $0xc80] sm:$0xff]
  %v542 = vld [vmem:[%s4 + $0xc88] sm:$0xff]
  %v543 = vld [vmem:[%s4 + $0xc90] sm:$0xff]
  %v544 = vld [vmem:[%s4 + $0xc98] sm:$0xff]
  %v545 = vld [vmem:[%s4 + $0xca0] sm:$0xff]
  %v546 = vld [vmem:[%s4 + $0xca8] sm:$0xff]
  %v547 = vld [vmem:[%s4 + $0xcb0] sm:$0xff]
  %v548 = vld [vmem:[%s4 + $0xcb8] sm:$0xff]
  %v549 = vld [vmem:[%s4 + $0xcc0] sm:$0xff]
  %v550 = vld [vmem:[%s4 + $0xcc8] sm:$0xff]
  %v551 = vld [vmem:[%s4 + $0xcd0] sm:$0xff]
  %v552 = vld [vmem:[%s4 + $0xcd8] sm:$0xff]
  %v553 = vld [vmem:[%s4 + $0xce0] sm:$0xff]
  %v554 = vld [vmem:[%s4 + $0xce8] sm:$0xff]
  %v555 = vld [vmem:[%s4 + $0xcf0] sm:$0xff]
  %v556 = vld [vmem:[%s4 + $0xcf8] sm:$0xff]
  %v557 = vld [vmem:[%s4 + $0xd00] sm:$0xff]
  %v558 = vld [vmem:[%s4 + $0xd08] sm:$0xff]
  %v559 = vld [vmem:[%s4 + $0xd10] sm:$0xff]
  %v560 = vld [vmem:[%s4 + $0xd18] sm:$0xff]
  %v561 = vld [vmem:[%s4 + $0xd20] sm:$0xff]
  %v562 = vld [vmem:[%s4 + $0xd28] sm:$0xff]
  %v563 = vld [vmem:[%s4 + $0xd30] sm:$0xff]
  %v564 = vld [vmem:[%s4 + $0xd38] sm:$0xff]
  %v565 = vld [vmem:[%s4 + $0xd40] sm:$0xff]
  %v566 = vld [vmem:[%s4 + $0xd48] sm:$0xff]
  %v567 = vld [vmem:[%s4 + $0xd50] sm:$0xff]
  %v568 = vld [vmem:[%s4 + $0xd58] sm:$0xff]
  %v569 = vld [vmem:[%s4 + $0xd60] sm:$0xff]
  %v570 = vld [vmem:[%s4 + $0xd68] sm:$0xff]
  %v571 = vld [vmem:[%s4 + $0xd70] sm:$0xff]
  %v572 = vld [vmem:[%s4 + $0xd78] sm:$0xff]
  %v573 = vld [vmem:[%s4 + $0xd80] sm:$0xff]
  %v574 = vld [vmem:[%s4 + $0xd88] sm:$0xff]
  %v575 = vld [vmem:[%s4 + $0xd90] sm:$0xff]
  %v576 = vld [vmem:[%s4 + $0xd98] sm:$0xff]
  %v577 = vld [vmem:[%s4 + $0xda0] sm:$0xff]
  %v578 = vld [vmem:[%s4 + $0xda8] sm:$0xff]
  %v579 = vld [vmem:[%s4 + $0xdb0] sm:$0xff]
  %v580 = vld [vmem:[%s4 + $0xdb8] sm:$0xff]
  %v581 = vld [vmem:[%s4 + $0xdc0] sm:$0xff]
  %v582 = vld [vmem:[%s4 + $0xdc8] sm:$0xff]
  %v583 = vld [vmem:[%s4 + $0xdd0] sm:$0xff]
  %v584 = vld [vmem:[%s4 + $0xdd8] sm:$0xff]
  %v585 = vld [vmem:[%s4 + $0xde0] sm:$0xff]
  %v586 = vld [vmem:[%s4 + $0xde8] sm:$0xff]
  %v587 = vld [vmem:[%s4 + $0xdf0] sm:$0xff]
  %v588 = vld [vmem:[%s4 + $0xdf8] sm:$0xff]
  %v589 = vld [vmem:[%s4 + $0xe00] sm:$0xff]
  %v590 = vld [vmem:[%s4 + $0xe08] sm:$0xff]
  %v591 = vld [vmem:[%s4 + $0xe10] sm:$0xff]
  %v592 = vld [vmem:[%s4 + $0xe18] sm:$0xff]
  %v593 = vld [vmem:[%s4 + $0xe20] sm:$0xff]
  %v594 = vld [vmem:[%s4 + $0xe28] sm:$0xff]
  %v595 = vld [vmem:[%s4 + $0xe30] sm:$0xff]
  %v596 = vld [vmem:[%s4 + $0xe38] sm:$0xff]
  %v597 = vld [vmem:[%s4 + $0xe40] sm:$0xff]
  %v598 = vld [vmem:[%s4 + $0xe48] sm:$0xff]
  %v599 = vld [vmem:[%s4 + $0xe50] sm:$0xff]
  %v600 = vld [vmem:[%s4 + $0xe58] sm:$0xff]
  %v601 = vld [vmem:[%s4 + $0xe60] sm:$0xff]
  %v602 = vld [vmem:[%s4 + $0xe68] sm:$0xff]
  %v603 = vld [vmem:[%s4 + $0xe70] sm:$0xff]
  %v604 = vld [vmem:[%s4 + $0xe78] sm:$0xff]
  %v605 = vld [vmem:[%s4 + $0xe80] sm:$0xff]
  %v606 = vld [vmem:[%s4 + $0xe88] sm:$0xff]
  %v607 = vld [vmem:[%s4 + $0xe90] sm:$0xff]
  %v608 = vld [vmem:[%s4 + $0xe98] sm:$0xff]
  %v609 = vld [vmem:[%s4 + $0xea0] sm:$0xff]
  %v610 = vld [vmem:[%s4 + $0xea8] sm:$0xff]
  %v611 = vld [vmem:[%s4 + $0xeb0] sm:$0xff]
  %v612 = vld [vmem:[%s4 + $0xeb8] sm:$0xff]
  %v613 = vld [vmem:[%s4 + $0xec0] sm:$0xff]
  %v614 = vld [vmem:[%s4 + $0xec8] sm:$0xff]
  %v615 = vld [vmem:[%s4 + $0xed0] sm:$0xff]
  %v616 = vld [vmem:[%s4 + $0xed8] sm:$0xff]
  %v617 = vld [vmem:[%s4 + $0xee0] sm:$0xff]
  %v618 = vld [vmem:[%s4 + $0xee8] sm:$0xff]
  %v619 = vld [vmem:[%s4 + $0xef0] sm:$0xff]
  %v620 = vld [vmem:[%s4 + $0xef8] sm:$0xff]
  %v621 = vld [vmem:[%s4 + $0xf00] sm:$0xff]
  %v622 = vld [vmem:[%s4 + $0xf08] sm:$0xff]
  %v623 = vld [vmem:[%s4 + $0xf10] sm:$0xff]
  %v624 = vld [vmem:[%s4 + $0xf18] sm:$0xff]
  %v625 = vld [vmem:[%s4 + $0xf20] sm:$0xff]
  %v626 = vld [vmem:[%s4 + $0xf28] sm:$0xff]
  %v627 = vld [vmem:[%s4 + $0xf30] sm:$0xff]
  %v628 = vld [vmem:[%s4 + $0xf38] sm:$0xff]
  %v629 = vld [vmem:[%s4 + $0xf40] sm:$0xff]
  %v630 = vld [vmem:[%s4 + $0xf48] sm:$0xff]
  %v631 = vld [vmem:[%s4 + $0xf50] sm:$0xff]
  %v632 = vld [vmem:[%s4 + $0xf58] sm:$0xff]
  %v633 = vld [vmem:[%s4 + $0xf60] sm:$0xff]
  %v634 = vld [vmem:[%s4 + $0xf68] sm:$0xff]
  %v635 = vld [vmem:[%s4 + $0xf70] sm:$0xff]
  %v636 = vld [vmem:[%s4 + $0xf78] sm:$0xff]
  %v637 = vld [vmem:[%s4 + $0xf80] sm:$0xff]
  %v638 = vld [vmem:[%s4 + $0xf88] sm:$0xff]
  %v639 = vld [vmem:[%s4 + $0xf90] sm:$0xff]
  %v640 = vld [vmem:[%s4 + $0xf98] sm:$0xff]
  %v641 = vld [vmem:[%s4 + $0xfa0] sm:$0xff]
  %v642 = vld [vmem:[%s4 + $0xfa8] sm:$0xff]
  %v643 = vld [vmem:[%s4 + $0xfb0] sm:$0xff]
  %v644 = vld [vmem:[%s4 + $0xfb8] sm:$0xff]
  %v645 = vld [vmem:[%s4 + $0xfc0] sm:$0xff]
  %v646 = vld [vmem:[%s4 + $0xfc8] sm:$0xff]
  %v647 = vld [vmem:[%s4 + $0xfd0] sm:$0xff]
  %v648 = vld [vmem:[%s4 + $0xfd8] sm:$0xff]
  %v649 = vld [vmem:[%s4 + $0xfe0] sm:$0xff]
  %v650 = vld [vmem:[%s4 + $0xfe8] sm:$0xff]
  %v651 = vld [vmem:[%s4 + $0xff0] sm:$0xff]
  %v652 = vld [vmem:[%s4 + $0xff8] sm:$0xff]
  %v653 = vld [vmem:[%s4 + $0x1000] sm:$0xff]
  %v654 = vld [vmem:[%s4 + $0x1008] sm:$0xff]
  %v655 = vld [vmem:[%s4 + $0x1010] sm:$0xff]
  %v656 = vld [vmem:[%s4 + $0x1018] sm:$0xff]
  %v657 = vld [vmem:[%s4 + $0x1020] sm:$0xff]
  %v658 = vld [vmem:[%s4 + $0x1028] sm:$0xff]
  %v659 = vld [vmem:[%s4 + $0x1030] sm:$0xff]
  %v660 = vld [vmem:[%s4 + $0x1038] sm:$0xff]
  %v661 = vld [vmem:[%s4 + $0x1040] sm:$0xff]
  %v662 = vld [vmem:[%s4 + $0x1048] sm:$0xff]
  %v663 = vld [vmem:[%s4 + $0x1050] sm:$0xff]
  %v664 = vld [vmem:[%s4 + $0x1058] sm:$0xff]
  %v665 = vld [vmem:[%s4 + $0x1060] sm:$0xff]
  %v666 = vld [vmem:[%s4 + $0x1068] sm:$0xff]
  %v667 = vld [vmem:[%s4 + $0x1070] sm:$0xff]
  %v668 = vld [vmem:[%s4 + $0x1078] sm:$0xff]
  %v669 = vld [vmem:[%s4 + $0x1080] sm:$0xff]
  %v670 = vld [vmem:[%s4 + $0x1088] sm:$0xff]
  %v671 = vld [vmem:[%s4 + $0x1090] sm:$0xff]
  %v672 = vld [vmem:[%s4 + $0x1098] sm:$0xff]
  %v673 = vld [vmem:[%s4 + $0x10a0] sm:$0xff]
  %v674 = vld [vmem:[%s4 + $0x10a8] sm:$0xff]
  %v675 = vld [vmem:[%s4 + $0x10b0] sm:$0xff]
  %v676 = vld [vmem:[%s4 + $0x10b8] sm:$0xff]
  %v677 = vld [vmem:[%s4 + $0x10c0] sm:$0xff]
  %v678 = vld [vmem:[%s4 + $0x10c8] sm:$0xff]
  %v679 = vld [vmem:[%s4 + $0x10d0] sm:$0xff]
  %v680 = vld [vmem:[%s4 + $0x10d8] sm:$0xff]
  %v681 = vld [vmem:[%s4 + $0x10e0] sm:$0xff]
  %v682 = vld [vmem:[%s4 + $0x10e8] sm:$0xff]
  %v683 = vld [vmem:[%s4 + $0x10f0] sm:$0xff]
  %v684 = vld [vmem:[%s4 + $0x10f8] sm:$0xff]
  %v685 = vld [vmem:[%s4 + $0x1100] sm:$0xff]
  %v686 = vld [vmem:[%s4 + $0x1108] sm:$0xff]
  %v687 = vld [vmem:[%s4 + $0x1110] sm:$0xff]
  %v688 = vld [vmem:[%s4 + $0x1118] sm:$0xff]
  %v689 = vld [vmem:[%s4 + $0x1120] sm:$0xff]
  %v690 = vld [vmem:[%s4 + $0x1128] sm:$0xff]
  %v691 = vld [vmem:[%s4 + $0x1130] sm:$0xff]
  %v692 = vld [vmem:[%s4 + $0x1138] sm:$0xff]
  %v693 = vld [vmem:[%s4 + $0x1140] sm:$0xff]
  %v694 = vld [vmem:[%s4 + $0x1148] sm:$0xff]
  %v695 = vld [vmem:[%s4 + $0x1150] sm:$0xff]
  %v696 = vld [vmem:[%s4 + $0x1158] sm:$0xff]
  %v697 = vld [vmem:[%s4 + $0x1160] sm:$0xff]
  %v698 = vld [vmem:[%s4 + $0x1168] sm:$0xff]
  %v699 = vld [vmem:[%s4 + $0x1170] sm:$0xff]
  %v700 = vld [vmem:[%s4 + $0x1178] sm:$0xff]
  %v701 = vld [vmem:[%s4 + $0x1180] sm:$0xff]
  %v702 = vld [vmem:[%s4 + $0x1188] sm:$0xff]
  %v703 = vld [vmem:[%s4 + $0x1190] sm:$0xff]
  %v704 = vld [vmem:[%s4 + $0x1198] sm:$0xff]
  %v705 = vld [vmem:[%s4 + $0x11a0] sm:$0xff]
  %v706 = vld [vmem:[%s4 + $0x11a8] sm:$0xff]
  %v707 = vld [vmem:[%s4 + $0x11b0] sm:$0xff]
  %v708 = vld [vmem:[%s4 + $0x11b8] sm:$0xff]
  %v709 = vld [vmem:[%s4 + $0x11c0] sm:$0xff]
  %v710 = vld [vmem:[%s4 + $0x11c8] sm:$0xff]
  %v711 = vld [vmem:[%s4 + $0x11d0] sm:$0xff]
  %v712 = vld [vmem:[%s4 + $0x11d8] sm:$0xff]
  %v713 = vld [vmem:[%s4 + $0x11e0] sm:$0xff]
  %v714 = vld [vmem:[%s4 + $0x11e8] sm:$0xff]
  %v715 = vld [vmem:[%s4 + $0x11f0] sm:$0xff]
  %v716 = vld [vmem:[%s4 + $0x11f8] sm:$0xff]
  %v717 = vld [vmem:[%s4 + $0x1200] sm:$0xff]
  %v718 = vld [vmem:[%s4 + $0x1208] sm:$0xff]
  %v719 = vld [vmem:[%s4 + $0x1210] sm:$0xff]
  %v720 = vld [vmem:[%s4 + $0x1218] sm:$0xff]
  %v721 = vld [vmem:[%s4 + $0x1220] sm:$0xff]
  %v722 = vld [vmem:[%s4 + $0x1228] sm:$0xff]
  %v723 = vld [vmem:[%s4 + $0x1230] sm:$0xff]
  %v724 = vld [vmem:[%s4 + $0x1238] sm:$0xff]
  %v725 = vld [vmem:[%s4 + $0x1240] sm:$0xff]
  %v726 = vld [vmem:[%s4 + $0x1248] sm:$0xff]
  %v727 = vld [vmem:[%s4 + $0x1250] sm:$0xff]
  %v728 = vld [vmem:[%s4 + $0x1258] sm:$0xff]
  %v729 = vld [vmem:[%s4 + $0x1260] sm:$0xff]
  %v730 = vld [vmem:[%s4 + $0x1268] sm:$0xff]
  %v731 = vld [vmem:[%s4 + $0x1270] sm:$0xff]
  %v732 = vld [vmem:[%s4 + $0x1278] sm:$0xff]
  %v733 = vld [vmem:[%s4 + $0x1280] sm:$0xff]
  %v734 = vld [vmem:[%s4 + $0x1288] sm:$0xff]
  %v735 = vld [vmem:[%s4 + $0x1290] sm:$0xff]
  %v736 = vld [vmem:[%s4 + $0x1298] sm:$0xff]
  %v737 = vld [vmem:[%s4 + $0x12a0] sm:$0xff]
  %v738 = vld [vmem:[%s4 + $0x12a8] sm:$0xff]
  %v739 = vld [vmem:[%s4 + $0x12b0] sm:$0xff]
  %v740 = vld [vmem:[%s4 + $0x12b8] sm:$0xff]
  %v741 = vld [vmem:[%s4 + $0x12c0] sm:$0xff]
  %v742 = vld [vmem:[%s4 + $0x12c8] sm:$0xff]
  %v743 = vld [vmem:[%s4 + $0x12d0] sm:$0xff]
  %v744 = vld [vmem:[%s4 + $0x12d8] sm:$0xff]
  %v745 = vld [vmem:[%s4 + $0x12e0] sm:$0xff]
  %v746 = vld [vmem:[%s4 + $0x12e8] sm:$0xff]
  %v747 = vld [vmem:[%s4 + $0x12f0] sm:$0xff]
  %v748 = vld [vmem:[%s4 + $0x12f8] sm:$0xff]
  %v749 = vld [vmem:[%s4 + $0x1300] sm:$0xff]
  %v750 = vld [vmem:[%s4 + $0x1308] sm:$0xff]
  %v751 = vld [vmem:[%s4 + $0x1310] sm:$0xff]
  %v752 = vld [vmem:[%s4 + $0x1318] sm:$0xff]
  %v753 = vld [vmem:[%s4 + $0x1320] sm:$0xff]
  %v754 = vld [vmem:[%s4 + $0x1328] sm:$0xff]
  %v755 = vld [vmem:[%s4 + $0x1330] sm:$0xff]
  %v756 = vld [vmem:[%s4 + $0x1338] sm:$0xff]
  %v757 = vld [vmem:[%s4 + $0x1340] sm:$0xff]
  %v758 = vld [vmem:[%s4 + $0x1348] sm:$0xff]
  %v759 = vld [vmem:[%s4 + $0x1350] sm:$0xff]
  %v760 = vld [vmem:[%s4 + $0x1358] sm:$0xff]
  %v761 = vld [vmem:[%s4 + $0x1360] sm:$0xff]
  %v762 = vld [vmem:[%s4 + $0x1368] sm:$0xff]
  %v763 = vld [vmem:[%s4 + $0x1370] sm:$0xff]
  %v764 = vld [vmem:[%s4 + $0x1378] sm:$0xff]
  %v765 = vld [vmem:[%s4 + $0x1380] sm:$0xff]
  %v766 = vld [vmem:[%s4 + $0x1388] sm:$0xff]
  %v767 = vld [vmem:[%s4 + $0x1390] sm:$0xff]
  %v768 = vld [vmem:[%s4 + $0x1398] sm:$0xff]
  %v769 = vld [vmem:[%s4 + $0x13a0] sm:$0xff]
  %v770 = vld [vmem:[%s4 + $0x13a8] sm:$0xff]
  %v771 = vld [vmem:[%s4 + $0x13b0] sm:$0xff]
  %v772 = vld [vmem:[%s4 + $0x13b8] sm:$0xff]
  %v773 = vld [vmem:[%s4 + $0x13c0] sm:$0xff]
  %v774 = vld [vmem:[%s4 + $0x13c8] sm:$0xff]
  %v775 = vld [vmem:[%s4 + $0x13d0] sm:$0xff]
  %v776 = vld [vmem:[%s4 + $0x13d8] sm:$0xff]
  %v777 = vld [vmem:[%s4 + $0x13e0] sm:$0xff]
  %v778 = vld [vmem:[%s4 + $0x13e8] sm:$0xff]
  %v779 = vld [vmem:[%s4 + $0x13f0] sm:$0xff]
  %v780 = vld [vmem:[%s4 + $0x13f8] sm:$0xff]
  %v781 = vld [vmem:[%s4 + $0x1400] sm:$0xff]
  %v782 = vld [vmem:[%s4 + $0x1408] sm:$0xff]
  %v783 = vld [vmem:[%s4 + $0x1410] sm:$0xff]
  %v784 = vld [vmem:[%s4 + $0x1418] sm:$0xff]
  %v785 = vld [vmem:[%s4 + $0x1420] sm:$0xff]
  %v786 = vld [vmem:[%s4 + $0x1428] sm:$0xff]
  %v787 = vld [vmem:[%s4 + $0x1430] sm:$0xff]
  %v788 = vld [vmem:[%s4 + $0x1438] sm:$0xff]
  %v789 = vld [vmem:[%s4 + $0x1440] sm:$0xff]
  %v790 = vld [vmem:[%s4 + $0x1448] sm:$0xff]
  %v791 = vld [vmem:[%s4 + $0x1450] sm:$0xff]
  %v792 = vld [vmem:[%s4 + $0x1458] sm:$0xff]
  %v793 = vld [vmem:[%s4 + $0x1460] sm:$0xff]
  %v794 = vld [vmem:[%s4 + $0x1468] sm:$0xff]
  %v795 = vld [vmem:[%s4 + $0x1470] sm:$0xff]
  %v796 = vld [vmem:[%s4 + $0x1478] sm:$0xff]
  %v797 = vld [vmem:[%s4 + $0x1480] sm:$0xff]
  %v798 = vld [vmem:[%s4 + $0x1488] sm:$0xff]
  %v799 = vld [vmem:[%s4 + $0x1490] sm:$0xff]
  %v800 = vld [vmem:[%s4 + $0x1498] sm:$0xff]
  %v801 = vld [vmem:[%s4 + $0x14a0] sm:$0xff]
  %v802 = vld [vmem:[%s4 + $0x14a8] sm:$0xff]
  %v803 = vld [vmem:[%s4 + $0x14b0] sm:$0xff]
  %v804 = vld [vmem:[%s4 + $0x14b8] sm:$0xff]
  %v805 = vld [vmem:[%s4 + $0x14c0] sm:$0xff]
  %v806 = vld [vmem:[%s4 + $0x14c8] sm:$0xff]
  %v807 = vld [vmem:[%s4 + $0x14d0] sm:$0xff]
  %v808 = vld [vmem:[%s4 + $0x14d8] sm:$0xff]
  %v809 = vld [vmem:[%s4 + $0x14e0] sm:$0xff]
  %v810 = vld [vmem:[%s4 + $0x14e8] sm:$0xff]
  %v811 = vld [vmem:[%s4 + $0x14f0] sm:$0xff]
  %v812 = vld [vmem:[%s4 + $0x14f8] sm:$0xff]
  %v813 = vld [vmem:[%s4 + $0x1500] sm:$0xff]
  %v814 = vld [vmem:[%s4 + $0x1508] sm:$0xff]
  %v815 = vld [vmem:[%s4 + $0x1510] sm:$0xff]
  %v816 = vld [vmem:[%s4 + $0x1518] sm:$0xff]
  %v817 = vld [vmem:[%s4 + $0x1520] sm:$0xff]
  %v818 = vld [vmem:[%s4 + $0x1528] sm:$0xff]
  %v819 = vld [vmem:[%s4 + $0x1530] sm:$0xff]
  %v820 = vld [vmem:[%s4 + $0x1538] sm:$0xff]
  %v821 = vld [vmem:[%s4 + $0x1540] sm:$0xff]
  %v822 = vld [vmem:[%s4 + $0x1548] sm:$0xff]
  %v823 = vld [vmem:[%s4 + $0x1550] sm:$0xff]
  %v824 = vld [vmem:[%s4 + $0x1558] sm:$0xff]
  %v825 = vld [vmem:[%s4 + $0x1560] sm:$0xff]
  %v826 = vld [vmem:[%s4 + $0x1568] sm:$0xff]
  %v827 = vld [vmem:[%s4 + $0x1570] sm:$0xff]
  %v828 = vld [vmem:[%s4 + $0x1578] sm:$0xff]
  %v829 = vld [vmem:[%s4 + $0x1580] sm:$0xff]
  %v830 = vld [vmem:[%s4 + $0x1588] sm:$0xff]
  %v831 = vld [vmem:[%s4 + $0x1590] sm:$0xff]
  %v832 = vld [vmem:[%s4 + $0x1598] sm:$0xff]
  %v833 = vld [vmem:[%s4 + $0x15a0] sm:$0xff]
  %v834 = vld [vmem:[%s4 + $0x15a8] sm:$0xff]
  %v835 = vld [vmem:[%s4 + $0x15b0] sm:$0xff]
  %v836 = vld [vmem:[%s4 + $0x15b8] sm:$0xff]
  %v837 = vld [vmem:[%s4 + $0x15c0] sm:$0xff]
  %v838 = vld [vmem:[%s4 + $0x15c8] sm:$0xff]
  %v839 = vld [vmem:[%s4 + $0x15d0] sm:$0xff]
  %v840 = vld [vmem:[%s4 + $0x15d8] sm:$0xff]
  %v841 = vld [vmem:[%s4 + $0x15e0] sm:$0xff]
  %v842 = vld [vmem:[%s4 + $0x15e8] sm:$0xff]
  %v843 = vld [vmem:[%s4 + $0x15f0] sm:$0xff]
  %v844 = vld [vmem:[%s4 + $0x15f8] sm:$0xff]
  %v845 = vld [vmem:[%s4 + $0x1600] sm:$0xff]
  %v846 = vld [vmem:[%s4 + $0x1608] sm:$0xff]
  %v847 = vld [vmem:[%s4 + $0x1610] sm:$0xff]
  %v848 = vld [vmem:[%s4 + $0x1618] sm:$0xff]
  %v849 = vld [vmem:[%s4 + $0x1620] sm:$0xff]
  %v850 = vld [vmem:[%s4 + $0x1628] sm:$0xff]
  %v851 = vld [vmem:[%s4 + $0x1630] sm:$0xff]
  %v852 = vld [vmem:[%s4 + $0x1638] sm:$0xff]
  %v853 = vld [vmem:[%s4 + $0x1640] sm:$0xff]
  %v854 = vld [vmem:[%s4 + $0x1648] sm:$0xff]
  %v855 = vld [vmem:[%s4 + $0x1650] sm:$0xff]
  %v856 = vld [vmem:[%s4 + $0x1658] sm:$0xff]
  %v857 = vld [vmem:[%s4 + $0x1660] sm:$0xff]
  %v858 = vld [vmem:[%s4 + $0x1668] sm:$0xff]
  %v859 = vld [vmem:[%s4 + $0x1670] sm:$0xff]
  %v860 = vld [vmem:[%s4 + $0x1678] sm:$0xff]
  %v861 = vld [vmem:[%s4 + $0x1680] sm:$0xff]
  %v862 = vld [vmem:[%s4 + $0x1688] sm:$0xff]
  %v863 = vld [vmem:[%s4 + $0x1690] sm:$0xff]
  %v864 = vld [vmem:[%s4 + $0x1698] sm:$0xff]
  %v865 = vld [vmem:[%s4 + $0x16a0] sm:$0xff]
  %v866 = vld [vmem:[%s4 + $0x16a8] sm:$0xff]
  %v867 = vld [vmem:[%s4 + $0x16b0] sm:$0xff]
  %v868 = vld [vmem:[%s4 + $0x16b8] sm:$0xff]
  %v869 = vld [vmem:[%s4 + $0x16c0] sm:$0xff]
  %v870 = vld [vmem:[%s4 + $0x16c8] sm:$0xff]
  %v871 = vld [vmem:[%s4 + $0x16d0] sm:$0xff]
  %v872 = vld [vmem:[%s4 + $0x16d8] sm:$0xff]
  %v873 = vld [vmem:[%s4 + $0x16e0] sm:$0xff]
  %v874 = vld [vmem:[%s4 + $0x16e8] sm:$0xff]
  %v875 = vld [vmem:[%s4 + $0x16f0] sm:$0xff]
  %v876 = vld [vmem:[%s4 + $0x16f8] sm:$0xff]
  %v877 = vld [vmem:[%s4 + $0x1700] sm:$0xff]
  %v878 = vld [vmem:[%s4 + $0x1708] sm:$0xff]
  %v879 = vld [vmem:[%s4 + $0x1710] sm:$0xff]
  %v880 = vld [vmem:[%s4 + $0x1718] sm:$0xff]
  %v881 = vld [vmem:[%s4 + $0x1720] sm:$0xff]
  %v882 = vld [vmem:[%s4 + $0x1728] sm:$0xff]
  %v883 = vld [vmem:[%s4 + $0x1730] sm:$0xff]
  %v884 = vld [vmem:[%s4 + $0x1738] sm:$0xff]
  %v885 = vld [vmem:[%s4 + $0x1740] sm:$0xff]
  %v886 = vld [vmem:[%s4 + $0x1748] sm:$0xff]
  %v887 = vld [vmem:[%s4 + $0x1750] sm:$0xff]
  %v888 = vld [vmem:[%s4 + $0x1758] sm:$0xff]
  %v889 = vld [vmem:[%s4 + $0x1760] sm:$0xff]
  %v890 = vld [vmem:[%s4 + $0x1768] sm:$0xff]
  %v891 = vld [vmem:[%s4 + $0x1770] sm:$0xff]
  %v892 = vld [vmem:[%s4 + $0x1778] sm:$0xff]
  %v893 = vld [vmem:[%s4 + $0x1780] sm:$0xff]
  %v894 = vld [vmem:[%s4 + $0x1788] sm:$0xff]
  %v895 = vld [vmem:[%s4 + $0x1790] sm:$0xff]
  %v896 = vld [vmem:[%s4 + $0x1798] sm:$0xff]
  %v897 = vld [vmem:[%s4 + $0x17a0] sm:$0xff]
  %v898 = vld [vmem:[%s4 + $0x17a8] sm:$0xff]
  %v899 = vld [vmem:[%s4 + $0x17b0] sm:$0xff]
  %v900 = vld [vmem:[%s4 + $0x17b8] sm:$0xff]
  %v901 = vld [vmem:[%s4 + $0x17c0] sm:$0xff]
  %v902 = vld [vmem:[%s4 + $0x17c8] sm:$0xff]
  %v903 = vld [vmem:[%s4 + $0x17d0] sm:$0xff]
  %v904 = vld [vmem:[%s4 + $0x17d8] sm:$0xff]
  %v905 = vld [vmem:[%s4 + $0x17e0] sm:$0xff]
  %v906 = vld [vmem:[%s4 + $0x17e8] sm:$0xff]
  %v907 = vld [vmem:[%s4 + $0x17f0] sm:$0xff]
  %v908 = vld [vmem:[%s4 + $0x17f8] sm:$0xff]
  %v909 = vld [vmem:[%s4 + $0x1800] sm:$0xff]
  %v910 = vld [vmem:[%s4 + $0x1808] sm:$0xff]
  %v911 = vld [vmem:[%s4 + $0x1810] sm:$0xff]
  %v912 = vld [vmem:[%s4 + $0x1818] sm:$0xff]
  %v913 = vld [vmem:[%s4 + $0x1820] sm:$0xff]
  %v914 = vld [vmem:[%s4 + $0x1828] sm:$0xff]
  %v915 = vld [vmem:[%s4 + $0x1830] sm:$0xff]
  %v916 = vld [vmem:[%s4 + $0x1838] sm:$0xff]
  %v917 = vld [vmem:[%s4 + $0x1840] sm:$0xff]
  %v918 = vld [vmem:[%s4 + $0x1848] sm:$0xff]
  %v919 = vld [vmem:[%s4 + $0x1850] sm:$0xff]
  %v920 = vld [vmem:[%s4 + $0x1858] sm:$0xff]
  %v921 = vld [vmem:[%s4 + $0x1860] sm:$0xff]
  %v922 = vld [vmem:[%s4 + $0x1868] sm:$0xff]
  %v923 = vld [vmem:[%s4 + $0x1870] sm:$0xff]
  %v924 = vld [vmem:[%s4 + $0x1878] sm:$0xff]
  %v925 = vld [vmem:[%s4 + $0x1880] sm:$0xff]
  %v926 = vld [vmem:[%s4 + $0x1888] sm:$0xff]
  %v927 = vld [vmem:[%s4 + $0x1890] sm:$0xff]
  %v928 = vld [vmem:[%s4 + $0x1898] sm:$0xff]
  %v929 = vld [vmem:[%s4 + $0x18a0] sm:$0xff]
  %v930 = vld [vmem:[%s4 + $0x18a8] sm:$0xff]
  %v931 = vld [vmem:[%s4 + $0x18b0] sm:$0xff]
  %v932 = vld [vmem:[%s4 + $0x18b8] sm:$0xff]
  %v933 = vld [vmem:[%s4 + $0x18c0] sm:$0xff]
  %v934 = vld [vmem:[%s4 + $0x18c8] sm:$0xff]
  %v935 = vld [vmem:[%s4 + $0x18d0] sm:$0xff]
  %v936 = vld [vmem:[%s4 + $0x18d8] sm:$0xff]
  %v937 = vld [vmem:[%s4 + $0x18e0] sm:$0xff]
  %v938 = vld [vmem:[%s4 + $0x18e8] sm:$0xff]
  %v939 = vld [vmem:[%s4 + $0x18f0] sm:$0xff]
  %v940 = vld [vmem:[%s4 + $0x18f8] sm:$0xff]
  %v941 = vld [vmem:[%s4 + $0x1900] sm:$0xff]
  %v942 = vld [vmem:[%s4 + $0x1908] sm:$0xff]
  %v943 = vld [vmem:[%s4 + $0x1910] sm:$0xff]
  %v944 = vld [vmem:[%s4 + $0x1918] sm:$0xff]
  %v945 = vld [vmem:[%s4 + $0x1920] sm:$0xff]
  %v946 = vld [vmem:[%s4 + $0x1928] sm:$0xff]
  %v947 = vld [vmem:[%s4 + $0x1930] sm:$0xff]
  %v948 = vld [vmem:[%s4 + $0x1938] sm:$0xff]
  %v949 = vld [vmem:[%s4 + $0x1940] sm:$0xff]
  %v950 = vld [vmem:[%s4 + $0x1948] sm:$0xff]
  %v951 = vld [vmem:[%s4 + $0x1950] sm:$0xff]
  %v952 = vld [vmem:[%s4 + $0x1958] sm:$0xff]
  %v953 = vld [vmem:[%s4 + $0x1960] sm:$0xff]
  %v954 = vld [vmem:[%s4 + $0x1968] sm:$0xff]
  %v955 = vld [vmem:[%s4 + $0x1970] sm:$0xff]
  %v956 = vld [vmem:[%s4 + $0x1978] sm:$0xff]
  %v957 = vld [vmem:[%s4 + $0x1980] sm:$0xff]
  %v958 = vld [vmem:[%s4 + $0x1988] sm:$0xff]
  %v959 = vld [vmem:[%s4 + $0x1990] sm:$0xff]
  %v960 = vld [vmem:[%s4 + $0x1998] sm:$0xff]
  %v961 = vld [vmem:[%s4 + $0x19a0] sm:$0xff]
  %v962 = vld [vmem:[%s4 + $0x19a8] sm:$0xff]
  %v963 = vld [vmem:[%s4 + $0x19b0] sm:$0xff]
  %v964 = vld [vmem:[%s4 + $0x19b8] sm:$0xff]
  %v965 = vld [vmem:[%s4 + $0x19c0] sm:$0xff]
  %v966 = vld [vmem:[%s4 + $0x19c8] sm:$0xff]
  %v967 = vld [vmem:[%s4 + $0x19d0] sm:$0xff]
  %v968 = vld [vmem:[%s4 + $0x19d8] sm:$0xff]
  %v969 = vld [vmem:[%s4 + $0x19e0] sm:$0xff]
  %v970 = vld [vmem:[%s4 + $0x19e8] sm:$0xff]
  %v971 = vld [vmem:[%s4 + $0x19f0] sm:$0xff]
  %v972 = vld [vmem:[%s4 + $0x19f8] sm:$0xff]
  %v973 = vld [vmem:[%s4 + $0x1a00] sm:$0xff]
  %v974 = vld [vmem:[%s4 + $0x1a08] sm:$0xff]
  %v975 = vld [vmem:[%s4 + $0x1a10] sm:$0xff]
  %v976 = vld [vmem:[%s4 + $0x1a18] sm:$0xff]
  %v977 = vld [vmem:[%s4 + $0x1a20] sm:$0xff]
  %v978 = vld [vmem:[%s4 + $0x1a28] sm:$0xff]
  %v979 = vld [vmem:[%s4 + $0x1a30] sm:$0xff]
  %v980 = vld [vmem:[%s4 + $0x1a38] sm:$0xff]
  %v981 = vld [vmem:[%s4 + $0x1a40] sm:$0xff]
  %v982 = vld [vmem:[%s4 + $0x1a48] sm:$0xff]
  %v983 = vld [vmem:[%s4 + $0x1a50] sm:$0xff]
  %v984 = vld [vmem:[%s4 + $0x1a58] sm:$0xff]
  %v985 = vld [vmem:[%s4 + $0x1a60] sm:$0xff]
  %v986 = vld [vmem:[%s4 + $0x1a68] sm:$0xff]
  %v987 = vld [vmem:[%s4 + $0x1a70] sm:$0xff]
  %v988 = vld [vmem:[%s4 + $0x1a78] sm:$0xff]
  %v989 = vld [vmem:[%s4 + $0x1a80] sm:$0xff]
  %v990 = vld [vmem:[%s4 + $0x1a88] sm:$0xff]
  %v991 = vld [vmem:[%s4 + $0x1a90] sm:$0xff]
  %v992 = vld [vmem:[%s4 + $0x1a98] sm:$0xff]
  %v993 = vld [vmem:[%s4 + $0x1aa0] sm:$0xff]
  %v994 = vld [vmem:[%s4 + $0x1aa8] sm:$0xff]
  %v995 = vld [vmem:[%s4 + $0x1ab0] sm:$0xff]
  %v996 = vld [vmem:[%s4 + $0x1ab8] sm:$0xff]
  %v997 = vld [vmem:[%s4 + $0x1ac0] sm:$0xff]
  %v998 = vld [vmem:[%s4 + $0x1ac8] sm:$0xff]
  %v999 = vld [vmem:[%s4 + $0x1ad0] sm:$0xff]
  %v1000 = vld [vmem:[%s4 + $0x1ad8] sm:$0xff]
  %v1001 = vld [vmem:[%s4 + $0x1ae0] sm:$0xff]
  %v1002 = vld [vmem:[%s4 + $0x1ae8] sm:$0xff]
  %v1003 = vld [vmem:[%s4 + $0x1af0] sm:$0xff]
  %v1004 = vld [vmem:[%s4 + $0x1af8] sm:$0xff]
  %v1005 = vld [vmem:[%s4 + $0x1b00] sm:$0xff]
  %v1006 = vld [vmem:[%s4 + $0x1b08] sm:$0xff]
  %v1007 = vld [vmem:[%s4 + $0x1b10] sm:$0xff]
  %v1008 = vld [vmem:[%s4 + $0x1b18] sm:$0xff]
  %v1009 = vld [vmem:[%s4 + $0x1b20] sm:$0xff]
  %v1010 = vld [vmem:[%s4 + $0x1b28] sm:$0xff]
  %v1011 = vld [vmem:[%s4 + $0x1b30] sm:$0xff]
  %v1012 = vld [vmem:[%s4 + $0x1b38] sm:$0xff]
  %v1013 = vld [vmem:[%s4 + $0x1b40] sm:$0xff]
  %v1014 = vld [vmem:[%s4 + $0x1b48] sm:$0xff]
  %v1015 = vld [vmem:[%s4 + $0x1b50] sm:$0xff]
  %v1016 = vld [vmem:[%s4 + $0x1b58] sm:$0xff]
  %v1017 = vld [vmem:[%s4 + $0x1b60] sm:$0xff]
  %v1018 = vld [vmem:[%s4 + $0x1b68] sm:$0xff]
  %v1019 = vld [vmem:[%s4 + $0x1b70] sm:$0xff]
  %v1020 = vld [vmem:[%s4 + $0x1b78] sm:$0xff]
  %v1021 = vld [vmem:[%s4 + $0x1b80] sm:$0xff]
  %v1022 = vld [vmem:[%s4 + $0x1b88] sm:$0xff]
  %v1023 = vld [vmem:[%s4 + $0x1b90] sm:$0xff]
  %v1024 = vld [vmem:[%s4 + $0x1b98] sm:$0xff]
  %v1025 = vld [vmem:[%s4 + $0x1ba0] sm:$0xff]
  %v1026 = vld [vmem:[%s4 + $0x1ba8] sm:$0xff]
  %v1027 = vld [vmem:[%s4 + $0x1bb0] sm:$0xff]
  %v1028 = vld [vmem:[%s4 + $0x1bb8] sm:$0xff]
  %v1029 = vld [vmem:[%s4 + $0x1bc0] sm:$0xff]
  %v1030 = vld [vmem:[%s4 + $0x1bc8] sm:$0xff]
  %v1031 = vld [vmem:[%s4 + $0x1bd0] sm:$0xff]
  %v1032 = vld [vmem:[%s4 + $0x1bd8] sm:$0xff]
  %v1033 = vld [vmem:[%s4 + $0x1be0] sm:$0xff]
  %v1034 = vld [vmem:[%s4 + $0x1be8] sm:$0xff]
  %v1035 = vld [vmem:[%s4 + $0x1bf0] sm:$0xff]
  %v1036 = vld [vmem:[%s4 + $0x1bf8] sm:$0xff]
  %v1037 = vld [vmem:[%s4 + $0x1c00] sm:$0xff]
  %v1038 = vld [vmem:[%s4 + $0x1c08] sm:$0xff]
  %v1039 = vld [vmem:[%s4 + $0x1c10] sm:$0xff]
  %v1040 = vld [vmem:[%s4 + $0x1c18] sm:$0xff]
  %v1041 = vld [vmem:[%s4 + $0x1c20] sm:$0xff]
  %v1042 = vld [vmem:[%s4 + $0x1c28] sm:$0xff]
  %v1043 = vld [vmem:[%s4 + $0x1c30] sm:$0xff]
  %v1044 = vld [vmem:[%s4 + $0x1c38] sm:$0xff]
  %v1045 = vld [vmem:[%s4 + $0x1c40] sm:$0xff]
  %v1046 = vld [vmem:[%s4 + $0x1c48] sm:$0xff]
  %v1047 = vld [vmem:[%s4 + $0x1c50] sm:$0xff]
  %v1048 = vld [vmem:[%s4 + $0x1c58] sm:$0xff]
  %v1049 = vld [vmem:[%s4 + $0x1c60] sm:$0xff]
  %v1050 = vld [vmem:[%s4 + $0x1c68] sm:$0xff]
  %v1051 = vld [vmem:[%s4 + $0x1c70] sm:$0xff]
  %v1052 = vld [vmem:[%s4 + $0x1c78] sm:$0xff]
  %v1053 = vld [vmem:[%s4 + $0x1c80] sm:$0xff]
  %v1054 = vld [vmem:[%s4 + $0x1c88] sm:$0xff]
  %v1055 = vld [vmem:[%s4 + $0x1c90] sm:$0xff]
  %v1056 = vld [vmem:[%s4 + $0x1c98] sm:$0xff]
  %v1057 = vld [vmem:[%s4 + $0x1ca0] sm:$0xff]
  %v1058 = vld [vmem:[%s4 + $0x1ca8] sm:$0xff]
  %v1059 = vld [vmem:[%s4 + $0x1cb0] sm:$0xff]
  %v1060 = vld [vmem:[%s4 + $0x1cb8] sm:$0xff]
  %v1061 = vld [vmem:[%s4 + $0x1cc0] sm:$0xff]
  %v1062 = vld [vmem:[%s4 + $0x1cc8] sm:$0xff]
  %v1063 = vld [vmem:[%s4 + $0x1cd0] sm:$0xff]
  %v1064 = vld [vmem:[%s4 + $0x1cd8] sm:$0xff]
  %v1065 = vld [vmem:[%s4 + $0x1ce0] sm:$0xff]
  %v1066 = vld [vmem:[%s4 + $0x1ce8] sm:$0xff]
  %v1067 = vld [vmem:[%s4 + $0x1cf0] sm:$0xff]
  %v1068 = vld [vmem:[%s4 + $0x1cf8] sm:$0xff]
  %v1069 = vld [vmem:[%s4 + $0x1d00] sm:$0xff]
  %v1070 = vld [vmem:[%s4 + $0x1d08] sm:$0xff]
  %v1071 = vld [vmem:[%s4 + $0x1d10] sm:$0xff]
  %v1072 = vld [vmem:[%s4 + $0x1d18] sm:$0xff]
  %v1073 = vld [vmem:[%s4 + $0x1d20] sm:$0xff]
  %v1074 = vld [vmem:[%s4 + $0x1d28] sm:$0xff]
  %v1075 = vld [vmem:[%s4 + $0x1d30] sm:$0xff]
  %v1076 = vld [vmem:[%s4 + $0x1d38] sm:$0xff]
  %v1077 = vld [vmem:[%s4 + $0x1d40] sm:$0xff]
  %v1078 = vld [vmem:[%s4 + $0x1d48] sm:$0xff]
  %v1079 = vld [vmem:[%s4 + $0x1d50] sm:$0xff]
  %v1080 = vld [vmem:[%s4 + $0x1d58] sm:$0xff]
  %v1081 = vld [vmem:[%s4 + $0x1d60] sm:$0xff]
  %v1082 = vld [vmem:[%s4 + $0x1d68] sm:$0xff]
  %v1083 = vld [vmem:[%s4 + $0x1d70] sm:$0xff]
  %v1084 = vld [vmem:[%s4 + $0x1d78] sm:$0xff]
  %v1085 = vld [vmem:[%s4 + $0x1d80] sm:$0xff]
  %v1086 = vld [vmem:[%s4 + $0x1d88] sm:$0xff]
  %v1087 = vld [vmem:[%s4 + $0x1d90] sm:$0xff]
  %v1088 = vld [vmem:[%s4 + $0x1d98] sm:$0xff]
  %v1089 = vld [vmem:[%s4 + $0x1da0] sm:$0xff]
  %v1090 = vld [vmem:[%s4 + $0x1da8] sm:$0xff]
  %v1091 = vld [vmem:[%s4 + $0x1db0] sm:$0xff]
  %v1092 = vld [vmem:[%s4 + $0x1db8] sm:$0xff]
  %v1093 = vld [vmem:[%s4 + $0x1dc0] sm:$0xff]
  %v1094 = vld [vmem:[%s4 + $0x1dc8] sm:$0xff]
  %v1095 = vld [vmem:[%s4 + $0x1dd0] sm:$0xff]
  %v1096 = vld [vmem:[%s4 + $0x1dd8] sm:$0xff]
  %v1097 = vld [vmem:[%s4 + $0x1de0] sm:$0xff]
  %v1098 = vld [vmem:[%s4 + $0x1de8] sm:$0xff]
  %v1099 = vld [vmem:[%s4 + $0x1df0] sm:$0xff]
  %v1100 = vld [vmem:[%s4 + $0x1df8] sm:$0xff]
  %v1101 = vld [vmem:[%s4 + $0x1e00] sm:$0xff]
  %v1102 = vld [vmem:[%s4 + $0x1e08] sm:$0xff]
  %v1103 = vld [vmem:[%s4 + $0x1e10] sm:$0xff]
  %v1104 = vld [vmem:[%s4 + $0x1e18] sm:$0xff]
  %v1105 = vld [vmem:[%s4 + $0x1e20] sm:$0xff]
  %v1106 = vld [vmem:[%s4 + $0x1e28] sm:$0xff]
  %v1107 = vld [vmem:[%s4 + $0x1e30] sm:$0xff]
  %v1108 = vld [vmem:[%s4 + $0x1e38] sm:$0xff]
  %v1109 = vld [vmem:[%s4 + $0x1e40] sm:$0xff]
  %v1110 = vld [vmem:[%s4 + $0x1e48] sm:$0xff]
  %v1111 = vld [vmem:[%s4 + $0x1e50] sm:$0xff]
  %v1112 = vld [vmem:[%s4 + $0x1e58] sm:$0xff]
  %v1113 = vld [vmem:[%s4 + $0x1e60] sm:$0xff]
  %v1114 = vld [vmem:[%s4 + $0x1e68] sm:$0xff]
  %v1115 = vld [vmem:[%s4 + $0x1e70] sm:$0xff]
  %v1116 = vld [vmem:[%s4 + $0x1e78] sm:$0xff]
  %v1117 = vld [vmem:[%s4 + $0x1e80] sm:$0xff]
  %v1118 = vld [vmem:[%s4 + $0x1e88] sm:$0xff]
  %v1119 = vld [vmem:[%s4 + $0x1e90] sm:$0xff]
  %v1120 = vld [vmem:[%s4 + $0x1e98] sm:$0xff]
  %v1121 = vld [vmem:[%s4 + $0x1ea0] sm:$0xff]
  %v1122 = vld [vmem:[%s4 + $0x1ea8] sm:$0xff]
  %v1123 = vld [vmem:[%s4 + $0x1eb0] sm:$0xff]
  %v1124 = vld [vmem:[%s4 + $0x1eb8] sm:$0xff]
  %v1125 = vld [vmem:[%s4 + $0x1ec0] sm:$0xff]
  %v1126 = vld [vmem:[%s4 + $0x1ec8] sm:$0xff]
  %v1127 = vld [vmem:[%s4 + $0x1ed0] sm:$0xff]
  %v1128 = vld [vmem:[%s4 + $0x1ed8] sm:$0xff]
  %v1129 = vld [vmem:[%s4 + $0x1ee0] sm:$0xff]
  %v1130 = vld [vmem:[%s4 + $0x1ee8] sm:$0xff]
  %v1131 = vld [vmem:[%s4 + $0x1ef0] sm:$0xff]
  %v1132 = vld [vmem:[%s4 + $0x1ef8] sm:$0xff]
  %v1133 = vld [vmem:[%s4 + $0x1f00] sm:$0xff]
  %v1134 = vld [vmem:[%s4 + $0x1f08] sm:$0xff]
  %v1135 = vld [vmem:[%s4 + $0x1f10] sm:$0xff]
  %v1136 = vld [vmem:[%s4 + $0x1f18] sm:$0xff]
  %v1137 = vld [vmem:[%s4 + $0x1f20] sm:$0xff]
  %v1138 = vld [vmem:[%s4 + $0x1f28] sm:$0xff]
  %v1139 = vld [vmem:[%s4 + $0x1f30] sm:$0xff]
  %v1140 = vld [vmem:[%s4 + $0x1f38] sm:$0xff]
  %v1141 = vld [vmem:[%s4 + $0x1f40] sm:$0xff]
  %v1142 = vld [vmem:[%s4 + $0x1f48] sm:$0xff]
  %v1143 = vld [vmem:[%s4 + $0x1f50] sm:$0xff]
  %v1144 = vld [vmem:[%s4 + $0x1f58] sm:$0xff]
  %v1145 = vld [vmem:[%s4 + $0x1f60] sm:$0xff]
  %v1146 = vld [vmem:[%s4 + $0x1f68] sm:$0xff]
  %v1147 = vld [vmem:[%s4 + $0x1f70] sm:$0xff]
  %v1148 = vld [vmem:[%s4 + $0x1f78] sm:$0xff]
  %v1149 = vld [vmem:[%s4 + $0x1f80] sm:$0xff]
  %v1150 = vld [vmem:[%s4 + $0x1f88] sm:$0xff]
  %v1151 = vld [vmem:[%s4 + $0x1f90] sm:$0xff]
  %v1152 = vld [vmem:[%s4 + $0x1f98] sm:$0xff]
  %v1153 = vld [vmem:[%s4 + $0x1fa0] sm:$0xff]
  %v1154 = vld [vmem:[%s4 + $0x1fa8] sm:$0xff]
  %v1155 = vld [vmem:[%s4 + $0x1fb0] sm:$0xff]
  %v1156 = vld [vmem:[%s4 + $0x1fb8] sm:$0xff]
  %v1157 = vld [vmem:[%s4 + $0x1fc0] sm:$0xff]
  %v1158 = vld [vmem:[%s4 + $0x1fc8] sm:$0xff]
  %v1159 = vld [vmem:[%s4 + $0x1fd0] sm:$0xff]
  %v1160 = vld [vmem:[%s4 + $0x1fd8] sm:$0xff]
  %v1161 = vld [vmem:[%s4 + $0x1fe0] sm:$0xff]
  %v1162 = vld [vmem:[%s4 + $0x1fe8] sm:$0xff]
  %v1163 = vld [vmem:[%s4 + $0x1ff0] sm:$0xff]
  %v1164 = vld [vmem:[%s4 + $0x1ff8] sm:$0xff]
  %v1165 = vld [vmem:[%s4 + $0x2000] sm:$0xff]
  %v1166 = vld [vmem:[%s4 + $0x2008] sm:$0xff]
  %v1167 = vld [vmem:[%s4 + $0x2010] sm:$0xff]
  %v1168 = vld [vmem:[%s4 + $0x2018] sm:$0xff]
  %v1169 = vld [vmem:[%s4 + $0x2020] sm:$0xff]
  %v1170 = vld [vmem:[%s4 + $0x2028] sm:$0xff]
  %v1171 = vld [vmem:[%s4 + $0x2030] sm:$0xff]
  %v1172 = vld [vmem:[%s4 + $0x2038] sm:$0xff]
  %v1173 = vld [vmem:[%s4 + $0x2040] sm:$0xff]
  %v1174 = vld [vmem:[%s4 + $0x2048] sm:$0xff]
  %v1175 = vld [vmem:[%s4 + $0x2050] sm:$0xff]
  %v1176 = vld [vmem:[%s4 + $0x2058] sm:$0xff]
  %v1177 = vld [vmem:[%s4 + $0x2060] sm:$0xff]
  %v1178 = vld [vmem:[%s4 + $0x2068] sm:$0xff]
  %v1179 = vld [vmem:[%s4 + $0x2070] sm:$0xff]
  %v1180 = vld [vmem:[%s4 + $0x2078] sm:$0xff]
  %v1181 = vld [vmem:[%s4 + $0x2080] sm:$0xff]
  %v1182 = vld [vmem:[%s4 + $0x2088] sm:$0xff]
  %v1183 = vld [vmem:[%s4 + $0x2090] sm:$0xff]
  %v1184 = vld [vmem:[%s4 + $0x2098] sm:$0xff]
  %v1185 = vld [vmem:[%s4 + $0x20a0] sm:$0xff]
  %v1186 = vld [vmem:[%s4 + $0x20a8] sm:$0xff]
  %v1187 = vld [vmem:[%s4 + $0x20b0] sm:$0xff]
  %v1188 = vld [vmem:[%s4 + $0x20b8] sm:$0xff]
  %v1189 = vld [vmem:[%s4 + $0x20c0] sm:$0xff]
  %v1190 = vld [vmem:[%s4 + $0x20c8] sm:$0xff]
  %v1191 = vld [vmem:[%s4 + $0x20d0] sm:$0xff]
  %v1192 = vld [vmem:[%s4 + $0x20d8] sm:$0xff]
  %v1193 = vld [vmem:[%s4 + $0x20e0] sm:$0xff]
  %v1194 = vld [vmem:[%s4 + $0x20e8] sm:$0xff]
  %v1195 = vld [vmem:[%s4 + $0x20f0] sm:$0xff]
  %v1196 = vld [vmem:[%s4 + $0x20f8] sm:$0xff]
  %v1197 = vld [vmem:[%s4 + $0x2100] sm:$0xff]
  %v1198 = vld [vmem:[%s4 + $0x2108] sm:$0xff]
  %v1199 = vld [vmem:[%s4 + $0x2110] sm:$0xff]
  %v1200 = vld [vmem:[%s4 + $0x2118] sm:$0xff]
  %v1201 = vld [vmem:[%s4 + $0x2120] sm:$0xff]
  %v1202 = vld [vmem:[%s4 + $0x2128] sm:$0xff]
  %v1203 = vld [vmem:[%s4 + $0x2130] sm:$0xff]
  %v1204 = vld [vmem:[%s4 + $0x2138] sm:$0xff]
  %v1205 = vld [vmem:[%s4 + $0x2140] sm:$0xff]
  %v1206 = vld [vmem:[%s4 + $0x2148] sm:$0xff]
  %v1207 = vld [vmem:[%s4 + $0x2150] sm:$0xff]
  %v1208 = vld [vmem:[%s4 + $0x2158] sm:$0xff]
  %v1209 = vld [vmem:[%s4 + $0x2160] sm:$0xff]
  %v1210 = vld [vmem:[%s4 + $0x2168] sm:$0xff]
  %v1211 = vld [vmem:[%s4 + $0x2170] sm:$0xff]
  %v1212 = vld [vmem:[%s4 + $0x2178] sm:$0xff]
  %v1213 = vld [vmem:[%s4 + $0x2180] sm:$0xff]
  %v1214 = vld [vmem:[%s4 + $0x2188] sm:$0xff]
  %v1215 = vld [vmem:[%s4 + $0x2190] sm:$0xff]
  %v1216 = vld [vmem:[%s4 + $0x2198] sm:$0xff]
  %v1217 = vld [vmem:[%s4 + $0x21a0] sm:$0xff]
  %v1218 = vld [vmem:[%s4 + $0x21a8] sm:$0xff]
  %v1219 = vld [vmem:[%s4 + $0x21b0] sm:$0xff]
  %v1220 = vld [vmem:[%s4 + $0x21b8] sm:$0xff]
  %v1221 = vld [vmem:[%s4 + $0x21c0] sm:$0xff]
  %v1222 = vld [vmem:[%s4 + $0x21c8] sm:$0xff]
  %v1223 = vld [vmem:[%s4 + $0x21d0] sm:$0xff]
  %v1224 = vld [vmem:[%s4 + $0x21d8] sm:$0xff]
  %v1225 = vld [vmem:[%s4 + $0x21e0] sm:$0xff]
  %v1226 = vld [vmem:[%s4 + $0x21e8] sm:$0xff]
  %v1227 = vld [vmem:[%s4 + $0x21f0] sm:$0xff]
  %v1228 = vld [vmem:[%s4 + $0x21f8] sm:$0xff]
  %v1229 = vld [vmem:[%s4 + $0x2200] sm:$0xff]
  %v1230 = vld [vmem:[%s4 + $0x2208] sm:$0xff]
  %v1231 = vld [vmem:[%s4 + $0x2210] sm:$0xff]
  %v1232 = vld [vmem:[%s4 + $0x2218] sm:$0xff]
  %v1233 = vld [vmem:[%s4 + $0x2220] sm:$0xff]
  %v1234 = vld [vmem:[%s4 + $0x2228] sm:$0xff]
  %v1235 = vld [vmem:[%s4 + $0x2230] sm:$0xff]
  %v1236 = vld [vmem:[%s4 + $0x2238] sm:$0xff]
  %v1237 = vld [vmem:[%s4 + $0x2240] sm:$0xff]
  %v1238 = vld [vmem:[%s4 + $0x2248] sm:$0xff]
  %v1239 = vld [vmem:[%s4 + $0x2250] sm:$0xff]
  %v1240 = vld [vmem:[%s4 + $0x2258] sm:$0xff]
  %v1241 = vld [vmem:[%s4 + $0x2260] sm:$0xff]
  %v1242 = vld [vmem:[%s4 + $0x2268] sm:$0xff]
  %v1243 = vld [vmem:[%s4 + $0x2270] sm:$0xff]
  %v1244 = vld [vmem:[%s4 + $0x2278] sm:$0xff]
  %v1245 = vld [vmem:[%s4 + $0x2280] sm:$0xff]
  %v1246 = vld [vmem:[%s4 + $0x2288] sm:$0xff]
  %v1247 = vld [vmem:[%s4 + $0x2290] sm:$0xff]
  %v1248 = vld [vmem:[%s4 + $0x2298] sm:$0xff]
  %v1249 = vld [vmem:[%s4 + $0x22a0] sm:$0xff]
  %v1250 = vld [vmem:[%s4 + $0x22a8] sm:$0xff]
  %v1251 = vld [vmem:[%s4 + $0x22b0] sm:$0xff]
  %v1252 = vld [vmem:[%s4 + $0x22b8] sm:$0xff]
  %v1253 = vld [vmem:[%s4 + $0x22c0] sm:$0xff]
  %v1254 = vld [vmem:[%s4 + $0x22c8] sm:$0xff]
  %v1255 = vld [vmem:[%s4 + $0x22d0] sm:$0xff]
  %v1256 = vld [vmem:[%s4 + $0x22d8] sm:$0xff]
  %v1257 = vld [vmem:[%s4 + $0x22e0] sm:$0xff]
  %v1258 = vld [vmem:[%s4 + $0x22e8] sm:$0xff]
  %v1259 = vld [vmem:[%s4 + $0x22f0] sm:$0xff]
  %v1260 = vld [vmem:[%s4 + $0x22f8] sm:$0xff]
  %v1261 = vld [vmem:[%s4 + $0x2300] sm:$0xff]
  %v1262 = vld [vmem:[%s4 + $0x2308] sm:$0xff]
  %v1263 = vld [vmem:[%s4 + $0x2310] sm:$0xff]
  %v1264 = vld [vmem:[%s4 + $0x2318] sm:$0xff]
  %v1265 = vld [vmem:[%s4 + $0x2320] sm:$0xff]
  %v1266 = vld [vmem:[%s4 + $0x2328] sm:$0xff]
  %v1267 = vld [vmem:[%s4 + $0x2330] sm:$0xff]
  %v1268 = vld [vmem:[%s4 + $0x2338] sm:$0xff]
  %v1269 = vld [vmem:[%s4 + $0x2340] sm:$0xff]
  %v1270 = vld [vmem:[%s4 + $0x2348] sm:$0xff]
  %v1271 = vld [vmem:[%s4 + $0x2350] sm:$0xff]
  %v1272 = vld [vmem:[%s4 + $0x2358] sm:$0xff]
  %v1273 = vld [vmem:[%s4 + $0x2360] sm:$0xff]
  %v1274 = vld [vmem:[%s4 + $0x2368] sm:$0xff]
  %v1275 = vld [vmem:[%s4 + $0x2370] sm:$0xff]
  %v1276 = vld [vmem:[%s4 + $0x2378] sm:$0xff]
  %v1277 = vld [vmem:[%s4 + $0x2380] sm:$0xff]
  %v1278 = vld [vmem:[%s4 + $0x2388] sm:$0xff]
  %v1279 = vld [vmem:[%s4 + $0x2390] sm:$0xff]
  %v1280 = vld [vmem:[%s4 + $0x2398] sm:$0xff]
  %v1281 = vld [vmem:[%s4 + $0x23a0] sm:$0xff]
  %v1282 = vld [vmem:[%s4 + $0x23a8] sm:$0xff]
  %v1283 = vld [vmem:[%s4 + $0x23b0] sm:$0xff]
  %v1284 = vld [vmem:[%s4 + $0x23b8] sm:$0xff]
  %v1285 = vld [vmem:[%s4 + $0x23c0] sm:$0xff]
  %v1286 = vld [vmem:[%s4 + $0x23c8] sm:$0xff]
  %v1287 = vld [vmem:[%s4 + $0x23d0] sm:$0xff]
  %v1288 = vld [vmem:[%s4 + $0x23d8] sm:$0xff]
  %v1289 = vld [vmem:[%s4 + $0x23e0] sm:$0xff]
  %v1290 = vld [vmem:[%s4 + $0x23e8] sm:$0xff]
  %v1291 = vld [vmem:[%s4 + $0x23f0] sm:$0xff]
  %v1292 = vld [vmem:[%s4 + $0x23f8] sm:$0xff]
  %v1293 = vld [vmem:[%s4 + $0x2400] sm:$0xff]
  %v1294 = vld [vmem:[%s4 + $0x2408] sm:$0xff]
  %v1295 = vld [vmem:[%s4 + $0x2410] sm:$0xff]
  %v1296 = vld [vmem:[%s4 + $0x2418] sm:$0xff]
  %v1297 = vld [vmem:[%s4 + $0x2420] sm:$0xff]
  %v1298 = vld [vmem:[%s4 + $0x2428] sm:$0xff]
  %v1299 = vld [vmem:[%s4 + $0x2430] sm:$0xff]
  %v1300 = vld [vmem:[%s4 + $0x2438] sm:$0xff]
  %v1301 = vld [vmem:[%s4 + $0x2440] sm:$0xff]
  %v1302 = vld [vmem:[%s4 + $0x2448] sm:$0xff]
  %v1303 = vld [vmem:[%s4 + $0x2450] sm:$0xff]
  %v1304 = vld [vmem:[%s4 + $0x2458] sm:$0xff]
  %v1305 = vld [vmem:[%s4 + $0x2460] sm:$0xff]
  %v1306 = vld [vmem:[%s4 + $0x2468] sm:$0xff]
  %v1307 = vld [vmem:[%s4 + $0x2470] sm:$0xff]
  %v1308 = vld [vmem:[%s4 + $0x2478] sm:$0xff]
  %v1309 = vld [vmem:[%s4 + $0x2480] sm:$0xff]
  %v1310 = vld [vmem:[%s4 + $0x2488] sm:$0xff]
  %v1311 = vld [vmem:[%s4 + $0x2490] sm:$0xff]
  %v1312 = vld [vmem:[%s4 + $0x2498] sm:$0xff]
  %v1313 = vld [vmem:[%s4 + $0x24a0] sm:$0xff]
  %v1314 = vld [vmem:[%s4 + $0x24a8] sm:$0xff]
  %v1315 = vld [vmem:[%s4 + $0x24b0] sm:$0xff]
  %v1316 = vld [vmem:[%s4 + $0x24b8] sm:$0xff]
  %v1317 = vld [vmem:[%s4 + $0x24c0] sm:$0xff]
  %v1318 = vld [vmem:[%s4 + $0x24c8] sm:$0xff]
  %v1319 = vld [vmem:[%s4 + $0x24d0] sm:$0xff]
  %v1320 = vld [vmem:[%s4 + $0x24d8] sm:$0xff]
  %v1321 = vld [vmem:[%s4 + $0x24e0] sm:$0xff]
  %v1322 = vld [vmem:[%s4 + $0x24e8] sm:$0xff]
  %v1323 = vld [vmem:[%s4 + $0x24f0] sm:$0xff]
  %v1324 = vld [vmem:[%s4 + $0x24f8] sm:$0xff]
  %v1325 = vld [vmem:[%s4 + $0x2500] sm:$0xff]
  %v1326 = vld [vmem:[%s4 + $0x2508] sm:$0xff]
  %v1327 = vld [vmem:[%s4 + $0x2510] sm:$0xff]
  %v1328 = vld [vmem:[%s4 + $0x2518] sm:$0xff]
  %v1329 = vld [vmem:[%s4 + $0x2520] sm:$0xff]
  %v1330 = vld [vmem:[%s4 + $0x2528] sm:$0xff]
  %v1331 = vld [vmem:[%s4 + $0x2530] sm:$0xff]
  %v1332 = vld [vmem:[%s4 + $0x2538] sm:$0xff]
  %v1333 = vld [vmem:[%s4 + $0x2540] sm:$0xff]
  %v1334 = vld [vmem:[%s4 + $0x2548] sm:$0xff]
  %v1335 = vld [vmem:[%s4 + $0x2550] sm:$0xff]
  %v1336 = vld [vmem:[%s4 + $0x2558] sm:$0xff]
  %v1337 = vld [vmem:[%s4 + $0x2560] sm:$0xff]
  %v1338 = vld [vmem:[%s4 + $0x2568] sm:$0xff]
  %v1339 = vld [vmem:[%s4 + $0x2570] sm:$0xff]
  %v1340 = vld [vmem:[%s4 + $0x2578] sm:$0xff]
  %v1341 = vld [vmem:[%s4 + $0x2580] sm:$0xff]
  %v1342 = vld [vmem:[%s4 + $0x2588] sm:$0xff]
  %v1343 = vld [vmem:[%s4 + $0x2590] sm:$0xff]
  %v1344 = vld [vmem:[%s4 + $0x2598] sm:$0xff]
  %v1345 = vld [vmem:[%s4 + $0x25a0] sm:$0xff]
  %v1346 = vld [vmem:[%s4 + $0x25a8] sm:$0xff]
  %v1347 = vld [vmem:[%s4 + $0x25b0] sm:$0xff]
  %v1348 = vld [vmem:[%s4 + $0x25b8] sm:$0xff]
  %v1349 = vld [vmem:[%s4 + $0x25c0] sm:$0xff]
  %v1350 = vld [vmem:[%s4 + $0x25c8] sm:$0xff]
  %v1351 = vld [vmem:[%s4 + $0x25d0] sm:$0xff]
  %v1352 = vld [vmem:[%s4 + $0x25d8] sm:$0xff]
  %v1353 = vld [vmem:[%s4 + $0x25e0] sm:$0xff]
  %v1354 = vld [vmem:[%s4 + $0x25e8] sm:$0xff]
  %v1355 = vld [vmem:[%s4 + $0x25f0] sm:$0xff]
  %v1356 = vld [vmem:[%s4 + $0x25f8] sm:$0xff]
  %v1357 = vld [vmem:[%s4 + $0x2600] sm:$0xff]
  %v1358 = vld [vmem:[%s4 + $0x2608] sm:$0xff]
  %v1359 = vld [vmem:[%s4 + $0x2610] sm:$0xff]
  %v1360 = vld [vmem:[%s4 + $0x2618] sm:$0xff]
  %v1361 = vld [vmem:[%s4 + $0x2620] sm:$0xff]
  %v1362 = vld [vmem:[%s4 + $0x2628] sm:$0xff]
  %v1363 = vld [vmem:[%s4 + $0x2630] sm:$0xff]
  %v1364 = vld [vmem:[%s4 + $0x2638] sm:$0xff]
  %v1365 = vld [vmem:[%s4 + $0x2640] sm:$0xff]
  %v1366 = vld [vmem:[%s4 + $0x2648] sm:$0xff]
  %v1367 = vld [vmem:[%s4 + $0x2650] sm:$0xff]
  %v1368 = vld [vmem:[%s4 + $0x2658] sm:$0xff]
  %v1369 = vld [vmem:[%s4 + $0x2660] sm:$0xff]
  %v1370 = vld [vmem:[%s4 + $0x2668] sm:$0xff]
  %v1371 = vld [vmem:[%s4 + $0x2670] sm:$0xff]
  %v1372 = vld [vmem:[%s4 + $0x2678] sm:$0xff]
  %v1373 = vld [vmem:[%s4 + $0x2680] sm:$0xff]
  %v1374 = vld [vmem:[%s4 + $0x2688] sm:$0xff]
  %v1375 = vld [vmem:[%s4 + $0x2690] sm:$0xff]
  %v1376 = vld [vmem:[%s4 + $0x2698] sm:$0xff]
  %v1377 = vld [vmem:[%s4 + $0x26a0] sm:$0xff]
  %v1378 = vld [vmem:[%s4 + $0x26a8] sm:$0xff]
  %v1379 = vld [vmem:[%s4 + $0x26b0] sm:$0xff]
  %v1380 = vld [vmem:[%s4 + $0x26b8] sm:$0xff]
  %v1381 = vld [vmem:[%s4 + $0x26c0] sm:$0xff]
  %v1382 = vld [vmem:[%s4 + $0x26c8] sm:$0xff]
  %v1383 = vld [vmem:[%s4 + $0x26d0] sm:$0xff]
  %v1384 = vld [vmem:[%s4 + $0x26d8] sm:$0xff]
  %v1385 = vld [vmem:[%s4 + $0x26e0] sm:$0xff]
  %v1386 = vld [vmem:[%s4 + $0x26e8] sm:$0xff]
  %v1387 = vld [vmem:[%s4 + $0x26f0] sm:$0xff]
  %v1388 = vld [vmem:[%s4 + $0x26f8] sm:$0xff]
  %v1389 = vld [vmem:[%s4 + $0x2700] sm:$0xff]
  %v1390 = vld [vmem:[%s4 + $0x2708] sm:$0xff]
  %v1391 = vld [vmem:[%s4 + $0x2710] sm:$0xff]
  %v1392 = vld [vmem:[%s4 + $0x2718] sm:$0xff]
  %v1393 = vld [vmem:[%s4 + $0x2720] sm:$0xff]
  %v1394 = vld [vmem:[%s4 + $0x2728] sm:$0xff]
  %v1395 = vld [vmem:[%s4 + $0x2730] sm:$0xff]
  %v1396 = vld [vmem:[%s4 + $0x2738] sm:$0xff]
  %v1397 = vld [vmem:[%s4 + $0x2740] sm:$0xff]
  %v1398 = vld [vmem:[%s4 + $0x2748] sm:$0xff]
  %v1399 = vld [vmem:[%s4 + $0x2750] sm:$0xff]
  %v1400 = vld [vmem:[%s4 + $0x2758] sm:$0xff]
  %v1401 = vld [vmem:[%s4 + $0x2760] sm:$0xff]
  %v1402 = vld [vmem:[%s4 + $0x2768] sm:$0xff]
  %v1403 = vld [vmem:[%s4 + $0x2770] sm:$0xff]
  %v1404 = vld [vmem:[%s4 + $0x2778] sm:$0xff]
  %v1405 = vld [vmem:[%s4 + $0x2780] sm:$0xff]
  %v1406 = vld [vmem:[%s4 + $0x2788] sm:$0xff]
  %v1407 = vld [vmem:[%s4 + $0x2790] sm:$0xff]
  %v1408 = vld [vmem:[%s4 + $0x2798] sm:$0xff]
  %v1409 = vld [vmem:[%s4 + $0x27a0] sm:$0xff]
  %v1410 = vld [vmem:[%s4 + $0x27a8] sm:$0xff]
  %v1411 = vld [vmem:[%s4 + $0x27b0] sm:$0xff]
  %v1412 = vld [vmem:[%s4 + $0x27b8] sm:$0xff]
  %v1413 = vld [vmem:[%s4 + $0x27c0] sm:$0xff]
  %v1414 = vld [vmem:[%s4 + $0x27c8] sm:$0xff]
  %v1415 = vld [vmem:[%s4 + $0x27d0] sm:$0xff]
  %v1416 = vld [vmem:[%s4 + $0x27d8] sm:$0xff]
  %v1417 = vld [vmem:[%s4 + $0x27e0] sm:$0xff]
  %v1418 = vld [vmem:[%s4 + $0x27e8] sm:$0xff]
  %v1419 = vld [vmem:[%s4 + $0x27f0] sm:$0xff]
  %v1420 = vld [vmem:[%s4 + $0x27f8] sm:$0xff]
  %v1421 = vld [vmem:[%s4 + $0x2800] sm:$0xff]
  %v1422 = vld [vmem:[%s4 + $0x2808] sm:$0xff]
  %v1423 = vld [vmem:[%s4 + $0x2810] sm:$0xff]
  %v1424 = vld [vmem:[%s4 + $0x2818] sm:$0xff]
  %v1425 = vld [vmem:[%s4 + $0x2820] sm:$0xff]
  %v1426 = vld [vmem:[%s4 + $0x2828] sm:$0xff]
  %v1427 = vld [vmem:[%s4 + $0x2830] sm:$0xff]
  %v1428 = vld [vmem:[%s4 + $0x2838] sm:$0xff]
  %v1429 = vld [vmem:[%s4 + $0x2840] sm:$0xff]
  %v1430 = vld [vmem:[%s4 + $0x2848] sm:$0xff]
  %v1431 = vld [vmem:[%s4 + $0x2850] sm:$0xff]
  %v1432 = vld [vmem:[%s4 + $0x2858] sm:$0xff]
  %v1433 = vld [vmem:[%s4 + $0x2860] sm:$0xff]
  %v1434 = vld [vmem:[%s4 + $0x2868] sm:$0xff]
  %v1435 = vld [vmem:[%s4 + $0x2870] sm:$0xff]
  %v1436 = vld [vmem:[%s4 + $0x2878] sm:$0xff]
  %v1437 = vld [vmem:[%s4 + $0x2880] sm:$0xff]
  %v1438 = vld [vmem:[%s4 + $0x2888] sm:$0xff]
  %v1439 = vld [vmem:[%s4 + $0x2890] sm:$0xff]
  %v1440 = vld [vmem:[%s4 + $0x2898] sm:$0xff]
  %v1441 = vld [vmem:[%s4 + $0x28a0] sm:$0xff]
  %v1442 = vld [vmem:[%s4 + $0x28a8] sm:$0xff]
  %v1443 = vld [vmem:[%s4 + $0x28b0] sm:$0xff]
  %v1444 = vld [vmem:[%s4 + $0x28b8] sm:$0xff]
  %v1445 = vld [vmem:[%s4 + $0x28c0] sm:$0xff]
  %v1446 = vld [vmem:[%s4 + $0x28c8] sm:$0xff]
  %v1447 = vld [vmem:[%s4 + $0x28d0] sm:$0xff]
  %v1448 = vld [vmem:[%s4 + $0x28d8] sm:$0xff]
  %v1449 = vld [vmem:[%s4 + $0x28e0] sm:$0xff]
  %v1450 = vld [vmem:[%s4 + $0x28e8] sm:$0xff]
  %v1451 = vld [vmem:[%s4 + $0x28f0] sm:$0xff]
  %v1452 = vld [vmem:[%s4 + $0x28f8] sm:$0xff]
  %v1453 = vld [vmem:[%s4 + $0x2900] sm:$0xff]
  %v1454 = vld [vmem:[%s4 + $0x2908] sm:$0xff]
  %v1455 = vld [vmem:[%s4 + $0x2910] sm:$0xff]
  %v1456 = vld [vmem:[%s4 + $0x2918] sm:$0xff]
  %v1457 = vld [vmem:[%s4 + $0x2920] sm:$0xff]
  %v1458 = vld [vmem:[%s4 + $0x2928] sm:$0xff]
  %v1459 = vld [vmem:[%s4 + $0x2930] sm:$0xff]
  %v1460 = vld [vmem:[%s4 + $0x2938] sm:$0xff]
  %v1461 = vld [vmem:[%s4 + $0x2940] sm:$0xff]
  %v1462 = vld [vmem:[%s4 + $0x2948] sm:$0xff]
  %v1463 = vld [vmem:[%s4 + $0x2950] sm:$0xff]
  %v1464 = vld [vmem:[%s4 + $0x2958] sm:$0xff]
  %v1465 = vld [vmem:[%s4 + $0x2960] sm:$0xff]
  %v1466 = vld [vmem:[%s4 + $0x2968] sm:$0xff]
  %v1467 = vld [vmem:[%s4 + $0x2970] sm:$0xff]
  %v1468 = vld [vmem:[%s4 + $0x2978] sm:$0xff]
  %v1469 = vld [vmem:[%s4 + $0x2980] sm:$0xff]
  %v1470 = vld [vmem:[%s4 + $0x2988] sm:$0xff]
  %v1471 = vld [vmem:[%s4 + $0x2990] sm:$0xff]
  %v1472 = vld [vmem:[%s4 + $0x2998] sm:$0xff]
  %v1473 = vld [vmem:[%s4 + $0x29a0] sm:$0xff]
  %v1474 = vld [vmem:[%s4 + $0x29a8] sm:$0xff]
  %v1475 = vld [vmem:[%s4 + $0x29b0] sm:$0xff]
  %v1476 = vld [vmem:[%s4 + $0x29b8] sm:$0xff]
  %v1477 = vld [vmem:[%s4 + $0x29c0] sm:$0xff]
  %v1478 = vld [vmem:[%s4 + $0x29c8] sm:$0xff]
  %v1479 = vld [vmem:[%s4 + $0x29d0] sm:$0xff]
  %v1480 = vld [vmem:[%s4 + $0x29d8] sm:$0xff]
  %v1481 = vld [vmem:[%s4 + $0x29e0] sm:$0xff]
  %v1482 = vld [vmem:[%s4 + $0x29e8] sm:$0xff]
  %v1483 = vld [vmem:[%s4 + $0x29f0] sm:$0xff]
  %v1484 = vld [vmem:[%s4 + $0x29f8] sm:$0xff]
  %v1485 = vld [vmem:[%s4 + $0x2a00] sm:$0xff]
  %v1486 = vld [vmem:[%s4 + $0x2a08] sm:$0xff]
  %v1487 = vld [vmem:[%s4 + $0x2a10] sm:$0xff]
  %v1488 = vld [vmem:[%s4 + $0x2a18] sm:$0xff]
  %v1489 = vld [vmem:[%s4 + $0x2a20] sm:$0xff]
  %v1490 = vld [vmem:[%s4 + $0x2a28] sm:$0xff]
  %v1491 = vld [vmem:[%s4 + $0x2a30] sm:$0xff]
  %v1492 = vld [vmem:[%s4 + $0x2a38] sm:$0xff]
  %v1493 = vld [vmem:[%s4 + $0x2a40] sm:$0xff]
  %v1494 = vld [vmem:[%s4 + $0x2a48] sm:$0xff]
  %v1495 = vld [vmem:[%s4 + $0x2a50] sm:$0xff]
  %v1496 = vld [vmem:[%s4 + $0x2a58] sm:$0xff]
  %v1497 = vld [vmem:[%s4 + $0x2a60] sm:$0xff]
  %v1498 = vld [vmem:[%s4 + $0x2a68] sm:$0xff]
  %v1499 = vld [vmem:[%s4 + $0x2a70] sm:$0xff]
  %v1500 = vld [vmem:[%s4 + $0x2a78] sm:$0xff]
  %v1501 = vld [vmem:[%s4 + $0x2a80] sm:$0xff]
  %v1502 = vld [vmem:[%s4 + $0x2a88] sm:$0xff]
  %v1503 = vld [vmem:[%s4 + $0x2a90] sm:$0xff]
  %v1504 = vld [vmem:[%s4 + $0x2a98] sm:$0xff]
  %v1505 = vld [vmem:[%s4 + $0x2aa0] sm:$0xff]
  %v1506 = vld [vmem:[%s4 + $0x2aa8] sm:$0xff]
  %v1507 = vld [vmem:[%s4 + $0x2ab0] sm:$0xff]
  %v1508 = vld [vmem:[%s4 + $0x2ab8] sm:$0xff]
  %v1509 = vld [vmem:[%s4 + $0x2ac0] sm:$0xff]
  %v1510 = vld [vmem:[%s4 + $0x2ac8] sm:$0xff]
  %v1511 = vld [vmem:[%s4 + $0x2ad0] sm:$0xff]
  %v1512 = vld [vmem:[%s4 + $0x2ad8] sm:$0xff]
  %v1513 = vld [vmem:[%s4 + $0x2ae0] sm:$0xff]
  %v1514 = vld [vmem:[%s4 + $0x2ae8] sm:$0xff]
  %v1515 = vld [vmem:[%s4 + $0x2af0] sm:$0xff]
  %v1516 = vld [vmem:[%s4 + $0x2af8] sm:$0xff]
  %v1517 = vld [vmem:[%s4 + $0x2b00] sm:$0xff]
  %v1518 = vld [vmem:[%s4 + $0x2b08] sm:$0xff]
  %v1519 = vld [vmem:[%s4 + $0x2b10] sm:$0xff]
  %v1520 = vld [vmem:[%s4 + $0x2b18] sm:$0xff]
  %v1521 = vld [vmem:[%s4 + $0x2b20] sm:$0xff]
  %v1522 = vld [vmem:[%s4 + $0x2b28] sm:$0xff]
  %v1523 = vld [vmem:[%s4 + $0x2b30] sm:$0xff]
  %v1524 = vld [vmem:[%s4 + $0x2b38] sm:$0xff]
  %v1525 = vld [vmem:[%s4 + $0x2b40] sm:$0xff]
  %v1526 = vld [vmem:[%s4 + $0x2b48] sm:$0xff]
  %v1527 = vld [vmem:[%s4 + $0x2b50] sm:$0xff]
  %v1528 = vld [vmem:[%s4 + $0x2b58] sm:$0xff]
  %v1529 = vld [vmem:[%s4 + $0x2b60] sm:$0xff]
  %v1530 = vld [vmem:[%s4 + $0x2b68] sm:$0xff]
  %v1531 = vld [vmem:[%s4 + $0x2b70] sm:$0xff]
  %v1532 = vld [vmem:[%s4 + $0x2b78] sm:$0xff]
  %v1533 = vld [vmem:[%s4 + $0x2b80] sm:$0xff]
  %v1534 = vld [vmem:[%s4 + $0x2b88] sm:$0xff]
  %v1535 = vld [vmem:[%s4 + $0x2b90] sm:$0xff]
  %v1536 = vld [vmem:[%s4 + $0x2b98] sm:$0xff]
  %v1537 = vld [vmem:[%s4 + $0x2ba0] sm:$0xff]
  %v1538 = vld [vmem:[%s4 + $0x2ba8] sm:$0xff]
  %v1539 = vld [vmem:[%s4 + $0x2bb0] sm:$0xff]
  %v1540 = vld [vmem:[%s4 + $0x2bb8] sm:$0xff]
  %v1541 = vld [vmem:[%s4 + $0x2bc0] sm:$0xff]
  %v1542 = vld [vmem:[%s4 + $0x2bc8] sm:$0xff]
  %v1543 = vld [vmem:[%s4 + $0x2bd0] sm:$0xff]
  %v1544 = vld [vmem:[%s4 + $0x2bd8] sm:$0xff]
  %v1545 = vld [vmem:[%s4 + $0x2be0] sm:$0xff]
  %v1546 = vld [vmem:[%s4 + $0x2be8] sm:$0xff]
  %v1547 = vld [vmem:[%s4 + $0x2bf0] sm:$0xff]
  %v1548 = vld [vmem:[%s4 + $0x2bf8] sm:$0xff]
  %v1549 = vld [vmem:[%s4 + $0x2c00] sm:$0xff]
  %v1550 = vld [vmem:[%s4 + $0x2c08] sm:$0xff]
  %v1551 = vld [vmem:[%s4 + $0x2c10] sm:$0xff]
  %v1552 = vld [vmem:[%s4 + $0x2c18] sm:$0xff]
  %v1553 = vld [vmem:[%s4 + $0x2c20] sm:$0xff]
  %v1554 = vld [vmem:[%s4 + $0x2c28] sm:$0xff]
  %v1555 = vld [vmem:[%s4 + $0x2c30] sm:$0xff]
  %v1556 = vld [vmem:[%s4 + $0x2c38] sm:$0xff]
  %v1557 = vld [vmem:[%s4 + $0x2c40] sm:$0xff]
  %v1558 = vld [vmem:[%s4 + $0x2c48] sm:$0xff]
  %v1559 = vld [vmem:[%s4 + $0x2c50] sm:$0xff]
  %v1560 = vld [vmem:[%s4 + $0x2c58] sm:$0xff]
  %v1561 = vld [vmem:[%s4 + $0x2c60] sm:$0xff]
  %v1562 = vld [vmem:[%s4 + $0x2c68] sm:$0xff]
  %v1563 = vld [vmem:[%s4 + $0x2c70] sm:$0xff]
  %v1564 = vld [vmem:[%s4 + $0x2c78] sm:$0xff]
  %v1565 = vld [vmem:[%s4 + $0x2c80] sm:$0xff]
  %v1566 = vld [vmem:[%s4 + $0x2c88] sm:$0xff]
  %v1567 = vld [vmem:[%s4 + $0x2c90] sm:$0xff]
  %v1568 = vld [vmem:[%s4 + $0x2c98] sm:$0xff]
  %v1569 = vld [vmem:[%s4 + $0x2ca0] sm:$0xff]
  %v1570 = vld [vmem:[%s4 + $0x2ca8] sm:$0xff]
  %v1571 = vld [vmem:[%s4 + $0x2cb0] sm:$0xff]
  %v1572 = vld [vmem:[%s4 + $0x2cb8] sm:$0xff]
  %v1573 = vld [vmem:[%s4 + $0x2cc0] sm:$0xff]
  %v1574 = vld [vmem:[%s4 + $0x2cc8] sm:$0xff]
  %v1575 = vld [vmem:[%s4 + $0x2cd0] sm:$0xff]
  %v1576 = vld [vmem:[%s4 + $0x2cd8] sm:$0xff]
  %v1577 = vld [vmem:[%s4 + $0x2ce0] sm:$0xff]
  %v1578 = vld [vmem:[%s4 + $0x2ce8] sm:$0xff]
  %v1579 = vld [vmem:[%s4 + $0x2cf0] sm:$0xff]
  %v1580 = vld [vmem:[%s4 + $0x2cf8] sm:$0xff]
  %v1581 = vld [vmem:[%s4 + $0x2d00] sm:$0xff]
  %v1582 = vld [vmem:[%s4 + $0x2d08] sm:$0xff]
  %v1583 = vld [vmem:[%s4 + $0x2d10] sm:$0xff]
  %v1584 = vld [vmem:[%s4 + $0x2d18] sm:$0xff]
  %v1585 = vld [vmem:[%s4 + $0x2d20] sm:$0xff]
  %v1586 = vld [vmem:[%s4 + $0x2d28] sm:$0xff]
  %v1587 = vld [vmem:[%s4 + $0x2d30] sm:$0xff]
  %v1588 = vld [vmem:[%s4 + $0x2d38] sm:$0xff]
  %v1589 = vld [vmem:[%s4 + $0x2d40] sm:$0xff]
  %v1590 = vld [vmem:[%s4 + $0x2d48] sm:$0xff]
  %v1591 = vld [vmem:[%s4 + $0x2d50] sm:$0xff]
  %v1592 = vld [vmem:[%s4 + $0x2d58] sm:$0xff]
  %v1593 = vld [vmem:[%s4 + $0x2d60] sm:$0xff]
  %v1594 = vld [vmem:[%s4 + $0x2d68] sm:$0xff]
  %v1595 = vld [vmem:[%s4 + $0x2d70] sm:$0xff]
  %v1596 = vld [vmem:[%s4 + $0x2d78] sm:$0xff]
  %v1597 = vld [vmem:[%s4 + $0x2d80] sm:$0xff]
  %v1598 = vld [vmem:[%s4 + $0x2d88] sm:$0xff]
  %v1599 = vld [vmem:[%s4 + $0x2d90] sm:$0xff]
  %v1600 = vld [vmem:[%s4 + $0x2d98] sm:$0xff]
  %v1601 = vld [vmem:[%s4 + $0x2da0] sm:$0xff]
  %v1602 = vld [vmem:[%s4 + $0x2da8] sm:$0xff]
  %v1603 = vld [vmem:[%s4 + $0x2db0] sm:$0xff]
  %v1604 = vld [vmem:[%s4 + $0x2db8] sm:$0xff]
  %v1605 = vld [vmem:[%s4 + $0x2dc0] sm:$0xff]
  %v1606 = vld [vmem:[%s4 + $0x2dc8] sm:$0xff]
  %v1607 = vld [vmem:[%s4 + $0x2dd0] sm:$0xff]
  %v1608 = vld [vmem:[%s4 + $0x2dd8] sm:$0xff]
  %v1609 = vld [vmem:[%s4 + $0x2de0] sm:$0xff]
  %v1610 = vld [vmem:[%s4 + $0x2de8] sm:$0xff]
  %v1611 = vld [vmem:[%s4 + $0x2df0] sm:$0xff]
  %v1612 = vld [vmem:[%s4 + $0x2df8] sm:$0xff]
  %v1613 = vld [vmem:[%s4 + $0x2e00] sm:$0xff]
  %v1614 = vld [vmem:[%s4 + $0x2e08] sm:$0xff]
  %v1615 = vld [vmem:[%s4 + $0x2e10] sm:$0xff]
  %v1616 = vld [vmem:[%s4 + $0x2e18] sm:$0xff]
  %v1617 = vld [vmem:[%s4 + $0x2e20] sm:$0xff]
  %v1618 = vld [vmem:[%s4 + $0x2e28] sm:$0xff]
  %v1619 = vld [vmem:[%s4 + $0x2e30] sm:$0xff]
  %v1620 = vld [vmem:[%s4 + $0x2e38] sm:$0xff]
  %v1621 = vld [vmem:[%s4 + $0x2e40] sm:$0xff]
  %v1622 = vld [vmem:[%s4 + $0x2e48] sm:$0xff]
  %v1623 = vld [vmem:[%s4 + $0x2e50] sm:$0xff]
  %v1624 = vld [vmem:[%s4 + $0x2e58] sm:$0xff]
  %v1625 = vld [vmem:[%s4 + $0x2e60] sm:$0xff]
  %v1626 = vld [vmem:[%s4 + $0x2e68] sm:$0xff]
  %v1627 = vld [vmem:[%s4 + $0x2e70] sm:$0xff]
  %v1628 = vld [vmem:[%s4 + $0x2e78] sm:$0xff]
  %v1629 = vld [vmem:[%s4 + $0x2e80] sm:$0xff]
  %v1630 = vld [vmem:[%s4 + $0x2e88] sm:$0xff]
  %v1631 = vld [vmem:[%s4 + $0x2e90] sm:$0xff]
  %v1632 = vld [vmem:[%s4 + $0x2e98] sm:$0xff]
  %v1633 = vld [vmem:[%s4 + $0x2ea0] sm:$0xff]
  %v1634 = vld [vmem:[%s4 + $0x2ea8] sm:$0xff]
  %v1635 = vld [vmem:[%s4 + $0x2eb0] sm:$0xff]
  %v1636 = vld [vmem:[%s4 + $0x2eb8] sm:$0xff]
  %v1637 = vld [vmem:[%s4 + $0x2ec0] sm:$0xff]
  %v1638 = vld [vmem:[%s4 + $0x2ec8] sm:$0xff]
  %v1639 = vld [vmem:[%s4 + $0x2ed0] sm:$0xff]
  %v1640 = vld [vmem:[%s4 + $0x2ed8] sm:$0xff]
  %v1641 = vld [vmem:[%s4 + $0x2ee0] sm:$0xff]
  %v1642 = vld [vmem:[%s4 + $0x2ee8] sm:$0xff]
  %v1643 = vld [vmem:[%s4 + $0x2ef0] sm:$0xff]
  %v1644 = vld [vmem:[%s4 + $0x2ef8] sm:$0xff]
  %v1645 = vld [vmem:[%s4 + $0x2f00] sm:$0xff]
  %v1646 = vld [vmem:[%s4 + $0x2f08] sm:$0xff]
  %v1647 = vld [vmem:[%s4 + $0x2f10] sm:$0xff]
  %v1648 = vld [vmem:[%s4 + $0x2f18] sm:$0xff]
  %v1649 = vld [vmem:[%s4 + $0x2f20] sm:$0xff]
  %v1650 = vld [vmem:[%s4 + $0x2f28] sm:$0xff]
  %v1651 = vld [vmem:[%s4 + $0x2f30] sm:$0xff]
  %v1652 = vld [vmem:[%s4 + $0x2f38] sm:$0xff]
  %v1653 = vld [vmem:[%s4 + $0x2f40] sm:$0xff]
  %v1654 = vld [vmem:[%s4 + $0x2f48] sm:$0xff]
  %v1655 = vld [vmem:[%s4 + $0x2f50] sm:$0xff]
  %v1656 = vld [vmem:[%s4 + $0x2f58] sm:$0xff]
  %v1657 = vld [vmem:[%s4 + $0x2f60] sm:$0xff]
  %v1658 = vld [vmem:[%s4 + $0x2f68] sm:$0xff]
  %v1659 = vld [vmem:[%s4 + $0x2f70] sm:$0xff]
  %v1660 = vld [vmem:[%s4 + $0x2f78] sm:$0xff]
  %v1661 = vld [vmem:[%s4 + $0x2f80] sm:$0xff]
  %v1662 = vld [vmem:[%s4 + $0x2f88] sm:$0xff]
  %v1663 = vld [vmem:[%s4 + $0x2f90] sm:$0xff]
  %v1664 = vld [vmem:[%s4 + $0x2f98] sm:$0xff]
  %v1665 = vld [vmem:[%s4 + $0x2fa0] sm:$0xff]
  %v1666 = vld [vmem:[%s4 + $0x2fa8] sm:$0xff]
  %v1667 = vld [vmem:[%s4 + $0x2fb0] sm:$0xff]
  %v1668 = vld [vmem:[%s4 + $0x2fb8] sm:$0xff]
  %v1669 = vld [vmem:[%s4 + $0x2fc0] sm:$0xff]
  %v1670 = vld [vmem:[%s4 + $0x2fc8] sm:$0xff]
  %v1671 = vld [vmem:[%s4 + $0x2fd0] sm:$0xff]
  %v1672 = vld [vmem:[%s4 + $0x2fd8] sm:$0xff]
  %v1673 = vld [vmem:[%s4 + $0x2fe0] sm:$0xff]
  %v1674 = vld [vmem:[%s4 + $0x2fe8] sm:$0xff]
  %v1675 = vld [vmem:[%s4 + $0x2ff0] sm:$0xff]
  %v1676 = vld [vmem:[%s4 + $0x2ff8] sm:$0xff]
  %v1677 = vld [vmem:[%s4 + $0x3000] sm:$0xff]
  %v1678 = vld [vmem:[%s4 + $0x3008] sm:$0xff]
  %v1679 = vld [vmem:[%s4 + $0x3010] sm:$0xff]
  %v1680 = vld [vmem:[%s4 + $0x3018] sm:$0xff]
  %v1681 = vld [vmem:[%s4 + $0x3020] sm:$0xff]
  %v1682 = vld [vmem:[%s4 + $0x3028] sm:$0xff]
  %v1683 = vld [vmem:[%s4 + $0x3030] sm:$0xff]
  %v1684 = vld [vmem:[%s4 + $0x3038] sm:$0xff]
  %v1685 = vld [vmem:[%s4 + $0x3040] sm:$0xff]
  %v1686 = vld [vmem:[%s4 + $0x3048] sm:$0xff]
  %v1687 = vld [vmem:[%s4 + $0x3050] sm:$0xff]
  %v1688 = vld [vmem:[%s4 + $0x3058] sm:$0xff]
  %v1689 = vld [vmem:[%s4 + $0x3060] sm:$0xff]
  %v1690 = vld [vmem:[%s4 + $0x3068] sm:$0xff]
  %v1691 = vld [vmem:[%s4 + $0x3070] sm:$0xff]
  %v1692 = vld [vmem:[%s4 + $0x3078] sm:$0xff]
  %v1693 = vld [vmem:[%s4 + $0x3080] sm:$0xff]
  %v1694 = vld [vmem:[%s4 + $0x3088] sm:$0xff]
  %v1695 = vld [vmem:[%s4 + $0x3090] sm:$0xff]
  %v1696 = vld [vmem:[%s4 + $0x3098] sm:$0xff]
  %v1697 = vld [vmem:[%s4 + $0x30a0] sm:$0xff]
  %v1698 = vld [vmem:[%s4 + $0x30a8] sm:$0xff]
  %v1699 = vld [vmem:[%s4 + $0x30b0] sm:$0xff]
  %v1700 = vld [vmem:[%s4 + $0x30b8] sm:$0xff]
  %v1701 = vld [vmem:[%s4 + $0x30c0] sm:$0xff]
  %v1702 = vld [vmem:[%s4 + $0x30c8] sm:$0xff]
  %v1703 = vld [vmem:[%s4 + $0x30d0] sm:$0xff]
  %v1704 = vld [vmem:[%s4 + $0x30d8] sm:$0xff]
  %v1705 = vld [vmem:[%s4 + $0x30e0] sm:$0xff]
  %v1706 = vld [vmem:[%s4 + $0x30e8] sm:$0xff]
  %v1707 = vld [vmem:[%s4 + $0x30f0] sm:$0xff]
  %v1708 = vld [vmem:[%s4 + $0x30f8] sm:$0xff]
  %v1709 = vld [vmem:[%s4 + $0x3100] sm:$0xff]
  %v1710 = vld [vmem:[%s4 + $0x3108] sm:$0xff]
  %v1711 = vld [vmem:[%s4 + $0x3110] sm:$0xff]
  %v1712 = vld [vmem:[%s4 + $0x3118] sm:$0xff]
  %v1713 = vld [vmem:[%s4 + $0x3120] sm:$0xff]
  %v1714 = vld [vmem:[%s4 + $0x3128] sm:$0xff]
  %v1715 = vld [vmem:[%s4 + $0x3130] sm:$0xff]
  %v1716 = vld [vmem:[%s4 + $0x3138] sm:$0xff]
  %v1717 = vld [vmem:[%s4 + $0x3140] sm:$0xff]
  %v1718 = vld [vmem:[%s4 + $0x3148] sm:$0xff]
  %v1719 = vld [vmem:[%s4 + $0x3150] sm:$0xff]
  %v1720 = vld [vmem:[%s4 + $0x3158] sm:$0xff]
  %v1721 = vld [vmem:[%s4 + $0x3160] sm:$0xff]
  %v1722 = vld [vmem:[%s4 + $0x3168] sm:$0xff]
  %v1723 = vld [vmem:[%s4 + $0x3170] sm:$0xff]
  %v1724 = vld [vmem:[%s4 + $0x3178] sm:$0xff]
  %v1725 = vld [vmem:[%s4 + $0x3180] sm:$0xff]
  %v1726 = vld [vmem:[%s4 + $0x3188] sm:$0xff]
  %v1727 = vld [vmem:[%s4 + $0x3190] sm:$0xff]
  %v1728 = vld [vmem:[%s4 + $0x3198] sm:$0xff]
  %v1729 = vld [vmem:[%s4 + $0x31a0] sm:$0xff]
  %v1730 = vld [vmem:[%s4 + $0x31a8] sm:$0xff]
  %v1731 = vld [vmem:[%s4 + $0x31b0] sm:$0xff]
  %v1732 = vld [vmem:[%s4 + $0x31b8] sm:$0xff]
  %v1733 = vld [vmem:[%s4 + $0x31c0] sm:$0xff]
  %v1734 = vld [vmem:[%s4 + $0x31c8] sm:$0xff]
  %v1735 = vld [vmem:[%s4 + $0x31d0] sm:$0xff]
  %v1736 = vld [vmem:[%s4 + $0x31d8] sm:$0xff]
  %v1737 = vld [vmem:[%s4 + $0x31e0] sm:$0xff]
  %v1738 = vld [vmem:[%s4 + $0x31e8] sm:$0xff]
  %v1739 = vld [vmem:[%s4 + $0x31f0] sm:$0xff]
  %v1740 = vld [vmem:[%s4 + $0x31f8] sm:$0xff]
  %v1741 = vld [vmem:[%s4 + $0x3200] sm:$0xff]
  %v1742 = vld [vmem:[%s4 + $0x3208] sm:$0xff]
  %v1743 = vld [vmem:[%s4 + $0x3210] sm:$0xff]
  %v1744 = vld [vmem:[%s4 + $0x3218] sm:$0xff]
  %v1745 = vld [vmem:[%s4 + $0x3220] sm:$0xff]
  %v1746 = vld [vmem:[%s4 + $0x3228] sm:$0xff]
  %v1747 = vld [vmem:[%s4 + $0x3230] sm:$0xff]
  %v1748 = vld [vmem:[%s4 + $0x3238] sm:$0xff]
  %v1749 = vld [vmem:[%s4 + $0x3240] sm:$0xff]
  %v1750 = vld [vmem:[%s4 + $0x3248] sm:$0xff]
  %v1751 = vld [vmem:[%s4 + $0x3250] sm:$0xff]
  %v1752 = vld [vmem:[%s4 + $0x3258] sm:$0xff]
  %v1753 = vld [vmem:[%s4 + $0x3260] sm:$0xff]
  %v1754 = vld [vmem:[%s4 + $0x3268] sm:$0xff]
  %v1755 = vld [vmem:[%s4 + $0x3270] sm:$0xff]
  %v1756 = vld [vmem:[%s4 + $0x3278] sm:$0xff]
  %v1757 = vld [vmem:[%s4 + $0x3280] sm:$0xff]
  %v1758 = vld [vmem:[%s4 + $0x3288] sm:$0xff]
  %v1759 = vld [vmem:[%s4 + $0x3290] sm:$0xff]
  %v1760 = vld [vmem:[%s4 + $0x3298] sm:$0xff]
  %v1761 = vld [vmem:[%s4 + $0x32a0] sm:$0xff]
  %v1762 = vld [vmem:[%s4 + $0x32a8] sm:$0xff]
  %v1763 = vld [vmem:[%s4 + $0x32b0] sm:$0xff]
  %v1764 = vld [vmem:[%s4 + $0x32b8] sm:$0xff]
  %v1765 = vld [vmem:[%s4 + $0x32c0] sm:$0xff]
  %v1766 = vld [vmem:[%s4 + $0x32c8] sm:$0xff]
  %v1767 = vld [vmem:[%s4 + $0x32d0] sm:$0xff]
  %v1768 = vld [vmem:[%s4 + $0x32d8] sm:$0xff]
  %v1769 = vld [vmem:[%s4 + $0x32e0] sm:$0xff]
  %v1770 = vld [vmem:[%s4 + $0x32e8] sm:$0xff]
  %v1771 = vld [vmem:[%s4 + $0x32f0] sm:$0xff]
  %v1772 = vld [vmem:[%s4 + $0x32f8] sm:$0xff]
  %v1773 = vld [vmem:[%s4 + $0x3300] sm:$0xff]
  %v1774 = vld [vmem:[%s4 + $0x3308] sm:$0xff]
  %v1775 = vld [vmem:[%s4 + $0x3310] sm:$0xff]
  %v1776 = vld [vmem:[%s4 + $0x3318] sm:$0xff]
  %v1777 = vld [vmem:[%s4 + $0x3320] sm:$0xff]
  %v1778 = vld [vmem:[%s4 + $0x3328] sm:$0xff]
  %v1779 = vld [vmem:[%s4 + $0x3330] sm:$0xff]
  %v1780 = vld [vmem:[%s4 + $0x3338] sm:$0xff]
  %v1781 = vld [vmem:[%s4 + $0x3340] sm:$0xff]
  %v1782 = vld [vmem:[%s4 + $0x3348] sm:$0xff]
  %v1783 = vld [vmem:[%s4 + $0x3350] sm:$0xff]
  %v1784 = vld [vmem:[%s4 + $0x3358] sm:$0xff]
  %v1785 = vld [vmem:[%s4 + $0x3360] sm:$0xff]
  %v1786 = vld [vmem:[%s4 + $0x3368] sm:$0xff]
  %v1787 = vld [vmem:[%s4 + $0x3370] sm:$0xff]
  %v1788 = vld [vmem:[%s4 + $0x3378] sm:$0xff]
  %v1789 = vld [vmem:[%s4 + $0x3380] sm:$0xff]
  %v1790 = vld [vmem:[%s4 + $0x3388] sm:$0xff]
  %v1791 = vld [vmem:[%s4 + $0x3390] sm:$0xff]
  %v1792 = vld [vmem:[%s4 + $0x3398] sm:$0xff]
  %v1793 = vld [vmem:[%s4 + $0x33a0] sm:$0xff]
  %v1794 = vld [vmem:[%s4 + $0x33a8] sm:$0xff]
  %v1795 = vld [vmem:[%s4 + $0x33b0] sm:$0xff]
  %v1796 = vld [vmem:[%s4 + $0x33b8] sm:$0xff]
  %v1797 = vld [vmem:[%s4 + $0x33c0] sm:$0xff]
  %v1798 = vld [vmem:[%s4 + $0x33c8] sm:$0xff]
  %v1799 = vld [vmem:[%s4 + $0x33d0] sm:$0xff]
  %v1800 = vld [vmem:[%s4 + $0x33d8] sm:$0xff]
  %v1801 = vld [vmem:[%s4 + $0x33e0] sm:$0xff]
  %v1802 = vld [vmem:[%s4 + $0x33e8] sm:$0xff]
  %v1803 = vld [vmem:[%s4 + $0x33f0] sm:$0xff]
  %v1804 = vld [vmem:[%s4 + $0x33f8] sm:$0xff]
  %v1805 = vld [vmem:[%s4 + $0x3400] sm:$0xff]
  %v1806 = vld [vmem:[%s4 + $0x3408] sm:$0xff]
  %v1807 = vld [vmem:[%s4 + $0x3410] sm:$0xff]
  %v1808 = vld [vmem:[%s4 + $0x3418] sm:$0xff]
  %v1809 = vld [vmem:[%s4 + $0x3420] sm:$0xff]
  %v1810 = vld [vmem:[%s4 + $0x3428] sm:$0xff]
  %v1811 = vld [vmem:[%s4 + $0x3430] sm:$0xff]
  %v1812 = vld [vmem:[%s4 + $0x3438] sm:$0xff]
  %v1813 = vld [vmem:[%s4 + $0x3440] sm:$0xff]
  %v1814 = vld [vmem:[%s4 + $0x3448] sm:$0xff]
  %v1815 = vld [vmem:[%s4 + $0x3450] sm:$0xff]
  %v1816 = vld [vmem:[%s4 + $0x3458] sm:$0xff]
  %v1817 = vld [vmem:[%s4 + $0x3460] sm:$0xff]
  %v1818 = vld [vmem:[%s4 + $0x3468] sm:$0xff]
  %v1819 = vld [vmem:[%s4 + $0x3470] sm:$0xff]
  %v1820 = vld [vmem:[%s4 + $0x3478] sm:$0xff]
  %v1821 = vld [vmem:[%s4 + $0x3480] sm:$0xff]
  %v1822 = vld [vmem:[%s4 + $0x3488] sm:$0xff]
  %v1823 = vld [vmem:[%s4 + $0x3490] sm:$0xff]
  %v1824 = vld [vmem:[%s4 + $0x3498] sm:$0xff]
  %v1825 = vld [vmem:[%s4 + $0x34a0] sm:$0xff]
  %v1826 = vld [vmem:[%s4 + $0x34a8] sm:$0xff]
  %v1827 = vld [vmem:[%s4 + $0x34b0] sm:$0xff]
  %v1828 = vld [vmem:[%s4 + $0x34b8] sm:$0xff]
  %v1829 = vld [vmem:[%s4 + $0x34c0] sm:$0xff]
  %v1830 = vld [vmem:[%s4 + $0x34c8] sm:$0xff]
  %v1831 = vld [vmem:[%s4 + $0x34d0] sm:$0xff]
  %v1832 = vld [vmem:[%s4 + $0x34d8] sm:$0xff]
  %v1833 = vld [vmem:[%s4 + $0x34e0] sm:$0xff]
  %v1834 = vld [vmem:[%s4 + $0x34e8] sm:$0xff]
  %v1835 = vld [vmem:[%s4 + $0x34f0] sm:$0xff]
  %v1836 = vld [vmem:[%s4 + $0x34f8] sm:$0xff]
  %v1837 = vld [vmem:[%s4 + $0x3500] sm:$0xff]
  %v1838 = vld [vmem:[%s4 + $0x3508] sm:$0xff]
  %v1839 = vld [vmem:[%s4 + $0x3510] sm:$0xff]
  %v1840 = vld [vmem:[%s4 + $0x3518] sm:$0xff]
  %v1841 = vld [vmem:[%s4 + $0x3520] sm:$0xff]
  %v1842 = vld [vmem:[%s4 + $0x3528] sm:$0xff]
  %v1843 = vld [vmem:[%s4 + $0x3530] sm:$0xff]
  %v1844 = vld [vmem:[%s4 + $0x3538] sm:$0xff]
  %v1845 = vld [vmem:[%s4 + $0x3540] sm:$0xff]
  %v1846 = vld [vmem:[%s4 + $0x3548] sm:$0xff]
  %v1847 = vld [vmem:[%s4 + $0x3550] sm:$0xff]
  %v1848 = vld [vmem:[%s4 + $0x3558] sm:$0xff]
  %v1849 = vld [vmem:[%s4 + $0x3560] sm:$0xff]
  %v1850 = vld [vmem:[%s4 + $0x3568] sm:$0xff]
  %v1851 = vld [vmem:[%s4 + $0x3570] sm:$0xff]
  %v1852 = vld [vmem:[%s4 + $0x3578] sm:$0xff]
  %v1853 = vld [vmem:[%s4 + $0x3580] sm:$0xff]
  %v1854 = vld [vmem:[%s4 + $0x3588] sm:$0xff]
  %v1855 = vld [vmem:[%s4 + $0x3590] sm:$0xff]
  %v1856 = vld [vmem:[%s4 + $0x3598] sm:$0xff]
  %v1857 = vld [vmem:[%s4 + $0x35a0] sm:$0xff]
  %v1858 = vld [vmem:[%s4 + $0x35a8] sm:$0xff]
  %v1859 = vld [vmem:[%s4 + $0x35b0] sm:$0xff]
  %v1860 = vld [vmem:[%s4 + $0x35b8] sm:$0xff]
  %v1861 = vld [vmem:[%s4 + $0x35c0] sm:$0xff]
  %v1862 = vld [vmem:[%s4 + $0x35c8] sm:$0xff]
  %v1863 = vld [vmem:[%s4 + $0x35d0] sm:$0xff]
  %v1864 = vld [vmem:[%s4 + $0x35d8] sm:$0xff]
  %v1865 = vld [vmem:[%s4 + $0x35e0] sm:$0xff]
  %v1866 = vld [vmem:[%s4 + $0x35e8] sm:$0xff]
  %v1867 = vld [vmem:[%s4 + $0x35f0] sm:$0xff]
  %v1868 = vld [vmem:[%s4 + $0x35f8] sm:$0xff]
  %v1869 = vld [vmem:[%s4 + $0x3600] sm:$0xff]
  %v1870 = vld [vmem:[%s4 + $0x3608] sm:$0xff]
  %v1871 = vld [vmem:[%s4 + $0x3610] sm:$0xff]
  %v1872 = vld [vmem:[%s4 + $0x3618] sm:$0xff]
  %v1873 = vld [vmem:[%s4 + $0x3620] sm:$0xff]
  %v1874 = vld [vmem:[%s4 + $0x3628] sm:$0xff]
  %v1875 = vld [vmem:[%s4 + $0x3630] sm:$0xff]
  %v1876 = vld [vmem:[%s4 + $0x3638] sm:$0xff]
  %v1877 = vld [vmem:[%s4 + $0x3640] sm:$0xff]
  %v1878 = vld [vmem:[%s4 + $0x3648] sm:$0xff]
  %v1879 = vld [vmem:[%s4 + $0x3650] sm:$0xff]
  %v1880 = vld [vmem:[%s4 + $0x3658] sm:$0xff]
  %v1881 = vld [vmem:[%s4 + $0x3660] sm:$0xff]
  %v1882 = vld [vmem:[%s4 + $0x3668] sm:$0xff]
  %v1883 = vld [vmem:[%s4 + $0x3670] sm:$0xff]
  %v1884 = vld [vmem:[%s4 + $0x3678] sm:$0xff]
  %v1885 = vld [vmem:[%s4 + $0x3680] sm:$0xff]
  %v1886 = vld [vmem:[%s4 + $0x3688] sm:$0xff]
  %v1887 = vld [vmem:[%s4 + $0x3690] sm:$0xff]
  %v1888 = vld [vmem:[%s4 + $0x3698] sm:$0xff]
  %v1889 = vld [vmem:[%s4 + $0x36a0] sm:$0xff]
  %v1890 = vld [vmem:[%s4 + $0x36a8] sm:$0xff]
  %v1891 = vld [vmem:[%s4 + $0x36b0] sm:$0xff]
  %v1892 = vld [vmem:[%s4 + $0x36b8] sm:$0xff]
  %v1893 = vld [vmem:[%s4 + $0x36c0] sm:$0xff]
  %v1894 = vld [vmem:[%s4 + $0x36c8] sm:$0xff]
  %v1895 = vld [vmem:[%s4 + $0x36d0] sm:$0xff]
  %v1896 = vld [vmem:[%s4 + $0x36d8] sm:$0xff]
  %v1897 = vld [vmem:[%s4 + $0x36e0] sm:$0xff]
  %v1898 = vld [vmem:[%s4 + $0x36e8] sm:$0xff]
  %v1899 = vld [vmem:[%s4 + $0x36f0] sm:$0xff]
  %v1900 = vld [vmem:[%s4 + $0x36f8] sm:$0xff]
  %v1901 = vld [vmem:[%s4 + $0x3700] sm:$0xff]
  %v1902 = vld [vmem:[%s4 + $0x3708] sm:$0xff]
  %v1903 = vld [vmem:[%s4 + $0x3710] sm:$0xff]
  %v1904 = vld [vmem:[%s4 + $0x3718] sm:$0xff]
  %v1905 = vld [vmem:[%s4 + $0x3720] sm:$0xff]
  %v1906 = vld [vmem:[%s4 + $0x3728] sm:$0xff]
  %v1907 = vld [vmem:[%s4 + $0x3730] sm:$0xff]
  %v1908 = vld [vmem:[%s4 + $0x3738] sm:$0xff]
  %v1909 = vld [vmem:[%s4 + $0x3740] sm:$0xff]
  %v1910 = vld [vmem:[%s4 + $0x3748] sm:$0xff]
  %v1911 = vld [vmem:[%s4 + $0x3750] sm:$0xff]
  %v1912 = vld [vmem:[%s4 + $0x3758] sm:$0xff]
  %v1913 = vld [vmem:[%s4 + $0x3760] sm:$0xff]
  %v1914 = vld [vmem:[%s4 + $0x3768] sm:$0xff]
  %v1915 = vld [vmem:[%s4 + $0x3770] sm:$0xff]
  %v1916 = vld [vmem:[%s4 + $0x3778] sm:$0xff]
  %v1917 = vld [vmem:[%s4 + $0x3780] sm:$0xff]
  %v1918 = vld [vmem:[%s4 + $0x3788] sm:$0xff]
  %v1919 = vld [vmem:[%s4 + $0x3790] sm:$0xff]
  %v1920 = vld [vmem:[%s4 + $0x3798] sm:$0xff]
  %v1921 = vld [vmem:[%s4 + $0x37a0] sm:$0xff]
  %v1922 = vld [vmem:[%s4 + $0x37a8] sm:$0xff]
  %v1923 = vld [vmem:[%s4 + $0x37b0] sm:$0xff]
  %v1924 = vld [vmem:[%s4 + $0x37b8] sm:$0xff]
  %v1925 = vld [vmem:[%s4 + $0x37c0] sm:$0xff]
  %v1926 = vld [vmem:[%s4 + $0x37c8] sm:$0xff]
  %v1927 = vld [vmem:[%s4 + $0x37d0] sm:$0xff]
  %v1928 = vld [vmem:[%s4 + $0x37d8] sm:$0xff]
  %v1929 = vld [vmem:[%s4 + $0x37e0] sm:$0xff]
  %v1930 = vld [vmem:[%s4 + $0x37e8] sm:$0xff]
  %v1931 = vld [vmem:[%s4 + $0x37f0] sm:$0xff]
  %v1932 = vld [vmem:[%s4 + $0x37f8] sm:$0xff]
  %v1933 = vld [vmem:[%s4 + $0x3800] sm:$0xff]
  %v1934 = vld [vmem:[%s4 + $0x3808] sm:$0xff]
  %v1935 = vld [vmem:[%s4 + $0x3810] sm:$0xff]
  %v1936 = vld [vmem:[%s4 + $0x3818] sm:$0xff]
  %v1937 = vld [vmem:[%s4 + $0x3820] sm:$0xff]
  %v1938 = vld [vmem:[%s4 + $0x3828] sm:$0xff]
  %v1939 = vld [vmem:[%s4 + $0x3830] sm:$0xff]
  %v1940 = vld [vmem:[%s4 + $0x3838] sm:$0xff]
  %v1941 = vld [vmem:[%s4 + $0x3840] sm:$0xff]
  %v1942 = vld [vmem:[%s4 + $0x3848] sm:$0xff]
  %v1943 = vld [vmem:[%s4 + $0x3850] sm:$0xff]
  %v1944 = vld [vmem:[%s4 + $0x3858] sm:$0xff]
  %v1945 = vld [vmem:[%s4 + $0x3860] sm:$0xff]
  %v1946 = vld [vmem:[%s4 + $0x3868] sm:$0xff]
  %v1947 = vld [vmem:[%s4 + $0x3870] sm:$0xff]
  %v1948 = vld [vmem:[%s4 + $0x3878] sm:$0xff]
  %v1949 = vld [vmem:[%s4 + $0x3880] sm:$0xff]
  %v1950 = vld [vmem:[%s4 + $0x3888] sm:$0xff]
  %v1951 = vld [vmem:[%s4 + $0x3890] sm:$0xff]
  %v1952 = vld [vmem:[%s4 + $0x3898] sm:$0xff]
  %v1953 = vld [vmem:[%s4 + $0x38a0] sm:$0xff]
  %v1954 = vld [vmem:[%s4 + $0x38a8] sm:$0xff]
  %v1955 = vld [vmem:[%s4 + $0x38b0] sm:$0xff]
  %v1956 = vld [vmem:[%s4 + $0x38b8] sm:$0xff]
  %v1957 = vld [vmem:[%s4 + $0x38c0] sm:$0xff]
  %v1958 = vld [vmem:[%s4 + $0x38c8] sm:$0xff]
  %v1959 = vld [vmem:[%s4 + $0x38d0] sm:$0xff]
  %v1960 = vld [vmem:[%s4 + $0x38d8] sm:$0xff]
  %v1961 = vld [vmem:[%s4 + $0x38e0] sm:$0xff]
  %v1962 = vld [vmem:[%s4 + $0x38e8] sm:$0xff]
  %v1963 = vld [vmem:[%s4 + $0x38f0] sm:$0xff]
  %v1964 = vld [vmem:[%s4 + $0x38f8] sm:$0xff]
  %v1965 = vld [vmem:[%s4 + $0x3900] sm:$0xff]
  %v1966 = vld [vmem:[%s4 + $0x3908] sm:$0xff]
  %v1967 = vld [vmem:[%s4 + $0x3910] sm:$0xff]
  %v1968 = vld [vmem:[%s4 + $0x3918] sm:$0xff]
  %v1969 = vld [vmem:[%s4 + $0x3920] sm:$0xff]
  %v1970 = vld [vmem:[%s4 + $0x3928] sm:$0xff]
  %v1971 = vld [vmem:[%s4 + $0x3930] sm:$0xff]
  %v1972 = vld [vmem:[%s4 + $0x3938] sm:$0xff]
  %v1973 = vld [vmem:[%s4 + $0x3940] sm:$0xff]
  %v1974 = vld [vmem:[%s4 + $0x3948] sm:$0xff]
  %v1975 = vld [vmem:[%s4 + $0x3950] sm:$0xff]
  %v1976 = vld [vmem:[%s4 + $0x3958] sm:$0xff]
  %v1977 = vld [vmem:[%s4 + $0x3960] sm:$0xff]
  %v1978 = vld [vmem:[%s4 + $0x3968] sm:$0xff]
  %v1979 = vld [vmem:[%s4 + $0x3970] sm:$0xff]
  %v1980 = vld [vmem:[%s4 + $0x3978] sm:$0xff]
  %v1981 = vld [vmem:[%s4 + $0x3980] sm:$0xff]
  %v1982 = vld [vmem:[%s4 + $0x3988] sm:$0xff]
  %v1983 = vld [vmem:[%s4 + $0x3990] sm:$0xff]
  %v1984 = vld [vmem:[%s4 + $0x3998] sm:$0xff]
  %v1985 = vld [vmem:[%s4 + $0x39a0] sm:$0xff]
  %v1986 = vld [vmem:[%s4 + $0x39a8] sm:$0xff]
  %v1987 = vld [vmem:[%s4 + $0x39b0] sm:$0xff]
  %v1988 = vld [vmem:[%s4 + $0x39b8] sm:$0xff]
  %v1989 = vld [vmem:[%s4 + $0x39c0] sm:$0xff]
  %v1990 = vld [vmem:[%s4 + $0x39c8] sm:$0xff]
  %v1991 = vld [vmem:[%s4 + $0x39d0] sm:$0xff]
  %v1992 = vld [vmem:[%s4 + $0x39d8] sm:$0xff]
  %v1993 = vld [vmem:[%s4 + $0x39e0] sm:$0xff]
  %v1994 = vld [vmem:[%s4 + $0x39e8] sm:$0xff]
  %v1995 = vld [vmem:[%s4 + $0x39f0] sm:$0xff]
  %v1996 = vld [vmem:[%s4 + $0x39f8] sm:$0xff]
  %v1997 = vld [vmem:[%s4 + $0x3a00] sm:$0xff]
  %v1998 = vld [vmem:[%s4 + $0x3a08] sm:$0xff]
  %v1999 = vld [vmem:[%s4 + $0x3a10] sm:$0xff]
  %v2000 = vld [vmem:[%s4 + $0x3a18] sm:$0xff]
  %v2001 = vld [vmem:[%s4 + $0x3a20] sm:$0xff]
  %v2002 = vld [vmem:[%s4 + $0x3a28] sm:$0xff]
  %v2003 = vld [vmem:[%s4 + $0x3a30] sm:$0xff]
  %v2004 = vld [vmem:[%s4 + $0x3a38] sm:$0xff]
  %v2005 = vld [vmem:[%s4 + $0x3a40] sm:$0xff]
  %v2006 = vld [vmem:[%s4 + $0x3a48] sm:$0xff]
  %v2007 = vld [vmem:[%s4 + $0x3a50] sm:$0xff]
  %v2008 = vld [vmem:[%s4 + $0x3a58] sm:$0xff]
  %v2009 = vld [vmem:[%s4 + $0x3a60] sm:$0xff]
  %v2010 = vld [vmem:[%s4 + $0x3a68] sm:$0xff]
  %v2011 = vld [vmem:[%s4 + $0x3a70] sm:$0xff]
  %v2012 = vld [vmem:[%s4 + $0x3a78] sm:$0xff]
  %v2013 = vld [vmem:[%s4 + $0x3a80] sm:$0xff]
  %v2014 = vld [vmem:[%s4 + $0x3a88] sm:$0xff]
  %v2015 = vld [vmem:[%s4 + $0x3a90] sm:$0xff]
  %v2016 = vld [vmem:[%s4 + $0x3a98] sm:$0xff]
  %v2017 = vld [vmem:[%s4 + $0x3aa0] sm:$0xff]
  %v2018 = vld [vmem:[%s4 + $0x3aa8] sm:$0xff]
  %v2019 = vld [vmem:[%s4 + $0x3ab0] sm:$0xff]
  %v2020 = vld [vmem:[%s4 + $0x3ab8] sm:$0xff]
  %v2021 = vld [vmem:[%s4 + $0x3ac0] sm:$0xff]
  %v2022 = vld [vmem:[%s4 + $0x3ac8] sm:$0xff]
  %v2023 = vld [vmem:[%s4 + $0x3ad0] sm:$0xff]
  %v2024 = vld [vmem:[%s4 + $0x3ad8] sm:$0xff]
  %v2025 = vld [vmem:[%s4 + $0x3ae0] sm:$0xff]
  %v2026 = vld [vmem:[%s4 + $0x3ae8] sm:$0xff]
  %v2027 = vld [vmem:[%s4 + $0x3af0] sm:$0xff]
  %v2028 = vld [vmem:[%s4 + $0x3af8] sm:$0xff]
  %v2029 = vld [vmem:[%s4 + $0x3b00] sm:$0xff]
  %v2030 = vld [vmem:[%s4 + $0x3b08] sm:$0xff]
  %v2031 = vld [vmem:[%s4 + $0x3b10] sm:$0xff]
  %v2032 = vld [vmem:[%s4 + $0x3b18] sm:$0xff]
  %v2033 = vld [vmem:[%s4 + $0x3b20] sm:$0xff]
  %v2034 = vld [vmem:[%s4 + $0x3b28] sm:$0xff]
  %v2035 = vld [vmem:[%s4 + $0x3b30] sm:$0xff]
  %v2036 = vld [vmem:[%s4 + $0x3b38] sm:$0xff]
  %v2037 = vld [vmem:[%s4 + $0x3b40] sm:$0xff]
  %v2038 = vld [vmem:[%s4 + $0x3b48] sm:$0xff]
  %v2039 = vld [vmem:[%s4 + $0x3b50] sm:$0xff]
  %v2040 = vld [vmem:[%s4 + $0x3b58] sm:$0xff]
  %v2041 = vld [vmem:[%s4 + $0x3b60] sm:$0xff]
  %v2042 = vld [vmem:[%s4 + $0x3b68] sm:$0xff]
  %v2043 = vld [vmem:[%s4 + $0x3b70] sm:$0xff]
  %v2044 = vld [vmem:[%s4 + $0x3b78] sm:$0xff]
  %v2045 = vld [vmem:[%s4 + $0x3b80] sm:$0xff]
  %v2046 = vld [vmem:[%s4 + $0x3b88] sm:$0xff]
  %v2047 = vld [vmem:[%s4 + $0x3b90] sm:$0xff]
  %v2048 = vld [vmem:[%s4 + $0x3b98] sm:$0xff]
  %v2049 = vld [vmem:[%s4 + $0x3ba0] sm:$0xff]
  %v2050 = vld [vmem:[%s4 + $0x3ba8] sm:$0xff]
  %v2051 = vld [vmem:[%s4 + $0x3bb0] sm:$0xff]
  %v2052 = vld [vmem:[%s4 + $0x3bb8] sm:$0xff]
  %v2053 = vld [vmem:[%s4 + $0x3bc0] sm:$0xff]
  %v2054 = vld [vmem:[%s4 + $0x3bc8] sm:$0xff]
  %v2055 = vld [vmem:[%s4 + $0x3bd0] sm:$0xff]
  %v2056 = vld [vmem:[%s4 + $0x3bd8] sm:$0xff]
  %v2057 = vld [vmem:[%s4 + $0x3be0] sm:$0xff]
  %v2058 = vld [vmem:[%s4 + $0x3be8] sm:$0xff]
  %v2059 = vld [vmem:[%s4 + $0x3bf0] sm:$0xff]
  %v2060 = vld [vmem:[%s4 + $0x3bf8] sm:$0xff]
  %v2061 = vld [vmem:[%s4 + $0x3c00] sm:$0xff]
  %v2062 = vld [vmem:[%s4 + $0x3c08] sm:$0xff]
  %v2063 = vld [vmem:[%s4 + $0x3c10] sm:$0xff]
  %v2064 = vld [vmem:[%s4 + $0x3c18] sm:$0xff]
  %v2065 = vld [vmem:[%s4 + $0x3c20] sm:$0xff]
  %v2066 = vld [vmem:[%s4 + $0x3c28] sm:$0xff]
  %v2067 = vld [vmem:[%s4 + $0x3c30] sm:$0xff]
  %v2068 = vld [vmem:[%s4 + $0x3c38] sm:$0xff]
  %v2069 = vld [vmem:[%s4 + $0x3c40] sm:$0xff]
  %v2070 = vld [vmem:[%s4 + $0x3c48] sm:$0xff]
  %v2071 = vld [vmem:[%s4 + $0x3c50] sm:$0xff]
  %v2072 = vld [vmem:[%s4 + $0x3c58] sm:$0xff]
  %v2073 = vld [vmem:[%s4 + $0x3c60] sm:$0xff]
  %v2074 = vld [vmem:[%s4 + $0x3c68] sm:$0xff]
  %v2075 = vld [vmem:[%s4 + $0x3c70] sm:$0xff]
  %v2076 = vld [vmem:[%s4 + $0x3c78] sm:$0xff]
  %v2077 = vld [vmem:[%s4 + $0x3c80] sm:$0xff]
  %v2078 = vld [vmem:[%s4 + $0x3c88] sm:$0xff]
  %v2079 = vld [vmem:[%s4 + $0x3c90] sm:$0xff]
  %v2080 = vld [vmem:[%s4 + $0x3c98] sm:$0xff]
  %v2081 = vld [vmem:[%s4 + $0x3ca0] sm:$0xff]
  %v2082 = vld [vmem:[%s4 + $0x3ca8] sm:$0xff]
  %v2083 = vld [vmem:[%s4 + $0x3cb0] sm:$0xff]
  %v2084 = vld [vmem:[%s4 + $0x3cb8] sm:$0xff]
  %v2085 = vld [vmem:[%s4 + $0x3cc0] sm:$0xff]
  %v2086 = vld [vmem:[%s4 + $0x3cc8] sm:$0xff]
  %v2087 = vld [vmem:[%s4 + $0x3cd0] sm:$0xff]
  %v2088 = vld [vmem:[%s4 + $0x3cd8] sm:$0xff]
  %v2089 = vld [vmem:[%s4 + $0x3ce0] sm:$0xff]
  %v2090 = vld [vmem:[%s4 + $0x3ce8] sm:$0xff]
  %v2091 = vld [vmem:[%s4 + $0x3cf0] sm:$0xff]
  %v2092 = vld [vmem:[%s4 + $0x3cf8] sm:$0xff]
  %v2093 = vld [vmem:[%s4 + $0x3d00] sm:$0xff]
  %v2094 = vld [vmem:[%s4 + $0x3d08] sm:$0xff]
  %v2095 = vld [vmem:[%s4 + $0x3d10] sm:$0xff]
  %v2096 = vld [vmem:[%s4 + $0x3d18] sm:$0xff]
  %v2097 = vld [vmem:[%s4 + $0x3d20] sm:$0xff]
  %v2098 = vld [vmem:[%s4 + $0x3d28] sm:$0xff]
  %v2099 = vld [vmem:[%s4 + $0x3d30] sm:$0xff]
  %v2100 = vld [vmem:[%s4 + $0x3d38] sm:$0xff]
  %v2101 = vld [vmem:[%s4 + $0x3d40] sm:$0xff]
  %v2102 = vld [vmem:[%s4 + $0x3d48] sm:$0xff]
  %v2103 = vld [vmem:[%s4 + $0x3d50] sm:$0xff]
  %v2104 = vld [vmem:[%s4 + $0x3d58] sm:$0xff]
  %v2105 = vld [vmem:[%s4 + $0x3d60] sm:$0xff]
  %v2106 = vld [vmem:[%s4 + $0x3d68] sm:$0xff]
  %v2107 = vld [vmem:[%s4 + $0x3d70] sm:$0xff]
  %v2108 = vld [vmem:[%s4 + $0x3d78] sm:$0xff]
  %v2109 = vld [vmem:[%s4 + $0x3d80] sm:$0xff]
  %v2110 = vld [vmem:[%s4 + $0x3d88] sm:$0xff]
  %v2111 = vld [vmem:[%s4 + $0x3d90] sm:$0xff]
  %v2112 = vld [vmem:[%s4 + $0x3d98] sm:$0xff]
  %v2113 = vld [vmem:[%s4 + $0x3da0] sm:$0xff]
  %v2114 = vld [vmem:[%s4 + $0x3da8] sm:$0xff]
  %v2115 = vld [vmem:[%s4 + $0x3db0] sm:$0xff]
  %v2116 = vld [vmem:[%s4 + $0x3db8] sm:$0xff]
  %v2117 = vld [vmem:[%s4 + $0x3dc0] sm:$0xff]
  %v2118 = vld [vmem:[%s4 + $0x3dc8] sm:$0xff]
  %v2119 = vld [vmem:[%s4 + $0x3dd0] sm:$0xff]
  %v2120 = vld [vmem:[%s4 + $0x3dd8] sm:$0xff]
  %v2121 = vld [vmem:[%s4 + $0x3de0] sm:$0xff]
  %v2122 = vld [vmem:[%s4 + $0x3de8] sm:$0xff]
  %v2123 = vld [vmem:[%s4 + $0x3df0] sm:$0xff]
  %v2124 = vld [vmem:[%s4 + $0x3df8] sm:$0xff]
  %v2125 = vld [vmem:[%s4 + $0x3e00] sm:$0xff]
  %v2126 = vld [vmem:[%s4 + $0x3e08] sm:$0xff]
  %v2127 = vld [vmem:[%s4 + $0x3e10] sm:$0xff]
  %v2128 = vld [vmem:[%s4 + $0x3e18] sm:$0xff]
  %v2129 = vld [vmem:[%s4 + $0x3e20] sm:$0xff]
  %v2130 = vld [vmem:[%s4 + $0x3e28] sm:$0xff]
  %v2131 = vld [vmem:[%s4 + $0x3e30] sm:$0xff]
  %v2132 = vld [vmem:[%s4 + $0x3e38] sm:$0xff]
  %v2133 = vld [vmem:[%s4 + $0x3e40] sm:$0xff]
  %v2134 = vld [vmem:[%s4 + $0x3e48] sm:$0xff]
  %v2135 = vld [vmem:[%s4 + $0x3e50] sm:$0xff]
  %v2136 = vld [vmem:[%s4 + $0x3e58] sm:$0xff]
  %v2137 = vld [vmem:[%s4 + $0x3e60] sm:$0xff]
  %v2138 = vld [vmem:[%s4 + $0x3e68] sm:$0xff]
  %v2139 = vld [vmem:[%s4 + $0x3e70] sm:$0xff]
  %v2140 = vld [vmem:[%s4 + $0x3e78] sm:$0xff]
  %v2141 = vld [vmem:[%s4 + $0x3e80] sm:$0xff]
  %v2142 = vld [vmem:[%s4 + $0x3e88] sm:$0xff]
  %v2143 = vld [vmem:[%s4 + $0x3e90] sm:$0xff]
  %v2144 = vld [vmem:[%s4 + $0x3e98] sm:$0xff]
  %v2145 = vld [vmem:[%s4 + $0x3ea0] sm:$0xff]
  %v2146 = vld [vmem:[%s4 + $0x3ea8] sm:$0xff]
  %v2147 = vld [vmem:[%s4 + $0x3eb0] sm:$0xff]
  %v2148 = vld [vmem:[%s4 + $0x3eb8] sm:$0xff]
  %v2149 = vld [vmem:[%s4 + $0x3ec0] sm:$0xff]
  %v2150 = vld [vmem:[%s4 + $0x3ec8] sm:$0xff]
  %v2151 = vld [vmem:[%s4 + $0x3ed0] sm:$0xff]
  %v2152 = vld [vmem:[%s4 + $0x3ed8] sm:$0xff]
  %v2153 = vld [vmem:[%s4 + $0x3ee0] sm:$0xff]
  %v2154 = vld [vmem:[%s4 + $0x3ee8] sm:$0xff]
  %v2155 = vld [vmem:[%s4 + $0x3ef0] sm:$0xff]
  %v2156 = vld [vmem:[%s4 + $0x3ef8] sm:$0xff]
  %v2157 = vld [vmem:[%s4 + $0x3f00] sm:$0xff]
  %v2158 = vld [vmem:[%s4 + $0x3f08] sm:$0xff]
  %v2159 = vld [vmem:[%s4 + $0x3f10] sm:$0xff]
  %v2160 = vld [vmem:[%s4 + $0x3f18] sm:$0xff]
  %v2161 = vld [vmem:[%s4 + $0x3f20] sm:$0xff]
  %v2162 = vld [vmem:[%s4 + $0x3f28] sm:$0xff]
  %v2163 = vld [vmem:[%s4 + $0x3f30] sm:$0xff]
  %v2164 = vld [vmem:[%s4 + $0x3f38] sm:$0xff]
  %v2165 = vld [vmem:[%s4 + $0x3f40] sm:$0xff]
  %v2166 = vld [vmem:[%s4 + $0x3f48] sm:$0xff]
  %v2167 = vld [vmem:[%s4 + $0x3f50] sm:$0xff]
  %v2168 = vld [vmem:[%s4 + $0x3f58] sm:$0xff]
  %v2169 = vld [vmem:[%s4 + $0x3f60] sm:$0xff]
  %v2170 = vld [vmem:[%s4 + $0x3f68] sm:$0xff]
  %v2171 = vld [vmem:[%s4 + $0x3f70] sm:$0xff]
  %v2172 = vld [vmem:[%s4 + $0x3f78] sm:$0xff]
  %v2173 = vld [vmem:[%s4 + $0x3f80] sm:$0xff]
  %v2174 = vld [vmem:[%s4 + $0x3f88] sm:$0xff]
  %v2175 = vld [vmem:[%s4 + $0x3f90] sm:$0xff]
  %v2176 = vld [vmem:[%s4 + $0x3f98] sm:$0xff]
  %v2177 = vld [vmem:[%s4 + $0x3fa0] sm:$0xff]
  %v2178 = vld [vmem:[%s4 + $0x3fa8] sm:$0xff]
  %v2179 = vld [vmem:[%s4 + $0x3fb0] sm:$0xff]
  %v2180 = vld [vmem:[%s4 + $0x3fb8] sm:$0xff]
  %v2181 = vld [vmem:[%s4 + $0x3fc0] sm:$0xff]
  %v2182 = vld [vmem:[%s4 + $0x3fc8] sm:$0xff]
  %v2183 = vld [vmem:[%s4 + $0x3fd0] sm:$0xff]
  %v2184 = vld [vmem:[%s4 + $0x3fd8] sm:$0xff]
  %v2185 = vld [vmem:[%s4 + $0x3fe0] sm:$0xff]
  %v2186 = vld [vmem:[%s4 + $0x3fe8] sm:$0xff]
  %v2187 = vld [vmem:[%s4 + $0x3ff0] sm:$0xff]
  %v2188 = vld [vmem:[%s4 + $0x3ff8] sm:$0xff]
  %v2189 = vld [vmem:[%s5] sm:$0xff]
  %v2190 = vld [vmem:[%s5 + $0x8] sm:$0xff]
  %v2191 = vld [vmem:[%s5 + $0x10] sm:$0xff]
  %v2192 = vld [vmem:[%s5 + $0x18] sm:$0xff]
  %v2193 = vld [vmem:[%s5 + $0x20] sm:$0xff]
  %v2194 = vld [vmem:[%s5 + $0x28] sm:$0xff]
  %v2195 = vld [vmem:[%s5 + $0x30] sm:$0xff]
  %v2196 = vld [vmem:[%s5 + $0x38] sm:$0xff]
  %v2197 = vld [vmem:[%s5 + $0x40] sm:$0xff]
  %v2198 = vld [vmem:[%s5 + $0x48] sm:$0xff]
  %v2199 = vld [vmem:[%s5 + $0x50] sm:$0xff]
  %v2200 = vld [vmem:[%s5 + $0x58] sm:$0xff]
  %v2201 = vld [vmem:[%s5 + $0x60] sm:$0xff]
  %v2202 = vld [vmem:[%s5 + $0x68] sm:$0xff]
  %v2203 = vld [vmem:[%s5 + $0x70] sm:$0xff]
  %v2204 = vld [vmem:[%s5 + $0x78] sm:$0xff]
  %v2205 = vld [vmem:[%s5 + $0x80] sm:$0xff]
  %v2206 = vld [vmem:[%s5 + $0x88] sm:$0xff]
  %v2207 = vld [vmem:[%s5 + $0x90] sm:$0xff]
  %v2208 = vld [vmem:[%s5 + $0x98] sm:$0xff]
  %v2209 = vld [vmem:[%s5 + $0xa0] sm:$0xff]
  %v2210 = vld [vmem:[%s5 + $0xa8] sm:$0xff]
  %v2211 = vld [vmem:[%s5 + $0xb0] sm:$0xff]
  %v2212 = vld [vmem:[%s5 + $0xb8] sm:$0xff]
  %v2213 = vld [vmem:[%s5 + $0xc0] sm:$0xff]
  %v2214 = vld [vmem:[%s5 + $0xc8] sm:$0xff]
  %v2215 = vld [vmem:[%s5 + $0xd0] sm:$0xff]
  %v2216 = vld [vmem:[%s5 + $0xd8] sm:$0xff]
  %v2217 = vld [vmem:[%s5 + $0xe0] sm:$0xff]
  %v2218 = vld [vmem:[%s5 + $0xe8] sm:$0xff]
  %v2219 = vld [vmem:[%s5 + $0xf0] sm:$0xff]
  %v2220 = vld [vmem:[%s5 + $0xf8] sm:$0xff]
  %v2221 = vld [vmem:[%s5 + $0x100] sm:$0xff]
  %v2222 = vld [vmem:[%s5 + $0x108] sm:$0xff]
  %v2223 = vld [vmem:[%s5 + $0x110] sm:$0xff]
  %v2224 = vld [vmem:[%s5 + $0x118] sm:$0xff]
  %v2225 = vld [vmem:[%s5 + $0x120] sm:$0xff]
  %v2226 = vld [vmem:[%s5 + $0x128] sm:$0xff]
  %v2227 = vld [vmem:[%s5 + $0x130] sm:$0xff]
  %v2228 = vld [vmem:[%s5 + $0x138] sm:$0xff]
  %v2229 = vld [vmem:[%s5 + $0x140] sm:$0xff]
  %v2230 = vld [vmem:[%s5 + $0x148] sm:$0xff]
  %v2231 = vld [vmem:[%s5 + $0x150] sm:$0xff]
  %v2232 = vld [vmem:[%s5 + $0x158] sm:$0xff]
  %v2233 = vld [vmem:[%s5 + $0x160] sm:$0xff]
  %v2234 = vld [vmem:[%s5 + $0x168] sm:$0xff]
  %v2235 = vld [vmem:[%s5 + $0x170] sm:$0xff]
  %v2236 = vld [vmem:[%s5 + $0x178] sm:$0xff]
  %v2237 = vld [vmem:[%s5 + $0x180] sm:$0xff]
  %v2238 = vld [vmem:[%s5 + $0x188] sm:$0xff]
  %v2239 = vld [vmem:[%s5 + $0x190] sm:$0xff]
  %v2240 = vld [vmem:[%s5 + $0x198] sm:$0xff]
  %v2241 = vld [vmem:[%s5 + $0x1a0] sm:$0xff]
  %v2242 = vld [vmem:[%s5 + $0x1a8] sm:$0xff]
  %v2243 = vld [vmem:[%s5 + $0x1b0] sm:$0xff]
  %v2244 = vld [vmem:[%s5 + $0x1b8] sm:$0xff]
  %v2245 = vld [vmem:[%s5 + $0x1c0] sm:$0xff]
  %v2246 = vld [vmem:[%s5 + $0x1c8] sm:$0xff]
  %v2247 = vld [vmem:[%s5 + $0x1d0] sm:$0xff]
  %v2248 = vld [vmem:[%s5 + $0x1d8] sm:$0xff]
  %v2249 = vld [vmem:[%s5 + $0x1e0] sm:$0xff]
  %v2250 = vld [vmem:[%s5 + $0x1e8] sm:$0xff]
  %v2251 = vld [vmem:[%s5 + $0x1f0] sm:$0xff]
  %v2252 = vld [vmem:[%s5 + $0x1f8] sm:$0xff]
  %2253 = vmatprep.subr.mxu0 %v2250
  %2254 = vmatpush1.msra.mxu0 %v2249
  %2255 = vmatprep.subr.mxu0 %v2246
  %2256 = vmatpush1.msra.mxu0 %v2245
  %2257 = vmatprep.subr.mxu0 %v2242
  %2258 = vmatpush1.msra.mxu0 %v2241
  %2259 = vmatprep.subr.mxu0 %v2238
  %2260 = vmatpush1.msra.mxu0 %v2237
  %2261 = vmatprep.subr.mxu0 %v2234
  %2262 = vmatpush1.msra.mxu0 %v2233
  %2263 = vmatprep.subr.mxu0 %v2230
  %2264 = vmatpush1.msra.mxu0 %v2229
  %2265 = vmatprep.subr.mxu0 %v2226
  %2266 = vmatpush1.msra.mxu0 %v2225
  %2267 = vmatprep.subr.mxu0 %v2222
  %2268 = vmatpush1.msra.mxu0 %v2221
  %2269 = vmatprep.subr.mxu0 %v2218
  %2270 = vmatpush1.msra.mxu0 %v2217
  %2271 = vmatprep.subr.mxu0 %v2214
  %2272 = vmatpush1.msra.mxu0 %v2213
  %2273 = vmatprep.subr.mxu0 %v2210
  %2274 = vmatpush1.msra.mxu0 %v2209
  %2275 = vmatprep.subr.mxu0 %v2206
  %2276 = vmatpush1.msra.mxu0 %v2205
  %2277 = vmatprep.subr.mxu0 %v2202
  %2278 = vmatpush1.msra.mxu0 %v2201
  %2279 = vmatprep.subr.mxu0 %v2198
  %2280 = vmatpush1.msra.mxu0 %v2197
  %2281 = vmatprep.subr.mxu0 %v2194
  %2282 = vmatpush1.msra.mxu0 %v2193
  %2283 = vmatprep.subr.mxu0 %v2190
  %2284 = vmatpush1.msra.mxu0 %v2189
  %2285 = vmatprep.subr.mxu0 0.0
  %2286 = vmatpush2.msra.mxu0 0.0
  %2287 = vmatprep.subr.mxu0 0.0
  %2288 = vmatpush2.msra.mxu0 0.0
  %2289 = vmatprep.subr.mxu0 0.0
  %2290 = vmatpush2.msra.mxu0 0.0
  %2291 = vmatprep.subr.mxu0 0.0
  %2292 = vmatpush2.msra.mxu0 0.0
  %2293 = vmatprep.subr.mxu0 0.0
  %2294 = vmatpush2.msra.mxu0 0.0
  %2295 = vmatprep.subr.mxu0 0.0
  %2296 = vmatpush2.msra.mxu0 0.0
  %2297 = vmatprep.subr.mxu0 0.0
  %2298 = vmatpush2.msra.mxu0 0.0
  %2299 = vmatprep.subr.mxu0 0.0
  %2300 = vmatpush2.msra.mxu0 0.0
  %2301 = vmatprep.subr.mxu0 0.0
  %2302 = vmatpush2.msra.mxu0 0.0
  %2303 = vmatprep.subr.mxu0 0.0
  %2304 = vmatpush2.msra.mxu0 0.0
  %2305 = vmatprep.subr.mxu0 0.0
  %2306 = vmatpush2.msra.mxu0 0.0
  %2307 = vmatprep.subr.mxu0 0.0
  %2308 = vmatpush2.msra.mxu0 0.0
  %2309 = vmatprep.subr.mxu0 0.0
  %2310 = vmatpush2.msra.mxu0 0.0
  %2311 = vmatprep.subr.mxu0 0.0
  %2312 = vmatpush2.msra.mxu0 0.0
  %2313 = vmatprep.subr.mxu0 0.0
  %2314 = vmatpush2.msra.mxu0 0.0
  %2315 = vmatprep.subr.mxu0 0.0
  %2316 = vmatpush2.msra.mxu0 0.0
  %2317 = vmatprep.mubr.f32.mxu0 0.0
  %2318 = vmatmul.mubr.f32.gmra.mxu0 %v132
  %v2319 = vpop.f32.mrf.mxu0
  %v2320 = vadd.f32 0.0, %v2319
  %v2321 = vpop.f32.mrf.mxu0
  %v2322 = vadd.f32 0.0, %v2321
  %2323 = vdwg.mxu0
  %2324 = vmatprep.subr.mxu0 %v2252
  %2325 = vmatpush1.msra.mxu0 %v2251
  %2326 = vmatprep.subr.mxu0 %v2248
  %2327 = vmatpush1.msra.mxu0 %v2247
  %2328 = vmatprep.subr.mxu0 %v2244
  %2329 = vmatpush1.msra.mxu0 %v2243
  %2330 = vmatprep.subr.mxu0 %v2240
  %2331 = vmatpush1.msra.mxu0 %v2239
  %2332 = vmatprep.subr.mxu0 %v2236
  %2333 = vmatpush1.msra.mxu0 %v2235
  %2334 = vmatprep.subr.mxu0 %v2232
  %2335 = vmatpush1.msra.mxu0 %v2231
  %2336 = vmatprep.subr.mxu0 %v2228
  %2337 = vmatpush1.msra.mxu0 %v2227
  %2338 = vmatprep.subr.mxu0 %v2224
  %2339 = vmatpush1.msra.mxu0 %v2223
  %2340 = vmatprep.subr.mxu0 %v2220
  %2341 = vmatpush1.msra.mxu0 %v2219
  %2342 = vmatprep.subr.mxu0 %v2216
  %2343 = vmatpush1.msra.mxu0 %v2215
  %2344 = vmatprep.subr.mxu0 %v2212
  %2345 = vmatpush1.msra.mxu0 %v2211
  %2346 = vmatprep.subr.mxu0 %v2208
  %2347 = vmatpush1.msra.mxu0 %v2207
  %2348 = vmatprep.subr.mxu0 %v2204
  %2349 = vmatpush1.msra.mxu0 %v2203
  %2350 = vmatprep.subr.mxu0 %v2200
  %2351 = vmatpush1.msra.mxu0 %v2199
  %2352 = vmatprep.subr.mxu0 %v2196
  %2353 = vmatpush1.msra.mxu0 %v2195
  %2354 = vmatprep.subr.mxu0 %v2192
  %2355 = vmatpush1.msra.mxu0 %v2191
  %2356 = vmatprep.subr.mxu0 0.0
  %2357 = vmatpush2.msra.mxu0 0.0
  %2358 = vmatprep.subr.mxu0 0.0
  %2359 = vmatpush2.msra.mxu0 0.0
  %2360 = vmatprep.subr.mxu0 0.0
  %2361 = vmatpush2.msra.mxu0 0.0
  %2362 = vmatprep.subr.mxu0 0.0
  %2363 = vmatpush2.msra.mxu0 0.0
  %2364 = vmatprep.subr.mxu0 0.0
  %2365 = vmatpush2.msra.mxu0 0.0
  %2366 = vmatprep.subr.mxu0 0.0
  %2367 = vmatpush2.msra.mxu0 0.0
  %2368 = vmatprep.subr.mxu0 0.0
  %2369 = vmatpush2.msra.mxu0 0.0
  %2370 = vmatprep.subr.mxu0 0.0
  %2371 = vmatpush2.msra.mxu0 0.0
  %2372 = vmatprep.subr.mxu0 0.0
  %2373 = vmatpush2.msra.mxu0 0.0
  %2374 = vmatprep.subr.mxu0 0.0
  %2375 = vmatpush2.msra.mxu0 0.0
  %2376 = vmatprep.subr.mxu0 0.0
  %2377 = vmatpush2.msra.mxu0 0.0
  %2378 = vmatprep.subr.mxu0 0.0
  %2379 = vmatpush2.msra.mxu0 0.0
  %2380 = vmatprep.subr.mxu0 0.0
  %2381 = vmatpush2.msra.mxu0 0.0
  %2382 = vmatprep.subr.mxu0 0.0
  %2383 = vmatpush2.msra.mxu0 0.0
  %2384 = vmatprep.subr.mxu0 0.0
  %2385 = vmatpush2.msra.mxu0 0.0
  %2386 = vmatprep.subr.mxu0 0.0
  %2387 = vmatpush2.msra.mxu0 0.0
  %2388 = vmatprep.mubr.f32.mxu0 0.0
  %2389 = vmatmul.mubr.f32.gmra.mxu0 %v132
  %v2390 = vpop.f32.mrf.mxu0
  %v2391 = vadd.f32 0.0, %v2390
  %v2392 = vpop.f32.mrf.mxu0
  %v2393 = vadd.f32 0.0, %v2392
  %2394 = vdwg.mxu0
  %v2403 = vcombine.high %v133, %v133
  %v2405 = vunpack.c.l.s4 1983009808
  %v2406 = vunpack.c.0.s8 %v2405
  %v2407 = vlaneseq
  %v2408 = vshrl.u32 %v2407, 7
  %v2409 = vsub.s32 %v2406, %v2408
  %v2410 = vrot.slane %v133, %v2409
  %v2412 = vunpack.c.l.s4 1983009808
  %v2413 = vunpack.c.0.s8 %v2412
  %v2414 = vlaneseq
  %v2415 = vshrl.u32 %v2414, 7
  %v2416 = vsub.s32 %v2413, %v2415
  %v2417 = vrot.slane %v2403, %v2416
  %v2418 = vcombine.high %v2410, %v2410
  %v2419 = vcombine.high %v2417, %v2417
  %v2420 = vcombine.high %v134, %v134
  %v2422 = vunpack.c.l.s4 1983009808
  %v2423 = vunpack.c.0.s8 %v2422
  %v2424 = vlaneseq
  %v2425 = vshrl.u32 %v2424, 7
  %v2426 = vsub.s32 %v2423, %v2425
  %v2427 = vrot.slane %v134, %v2426
  %v2429 = vunpack.c.l.s4 1983009808
  %v2430 = vunpack.c.0.s8 %v2429
  %v2431 = vlaneseq
  %v2432 = vshrl.u32 %v2431, 7
  %v2433 = vsub.s32 %v2430, %v2432
  %v2434 = vrot.slane %v2420, %v2433
  %v2435 = vcombine.high %v2427, %v2427
  %v2436 = vcombine.high %v2434, %v2434
  %v2437 = vcombine.high %v135, %v135
  %v2439 = vunpack.c.l.s4 1983009808
  %v2440 = vunpack.c.0.s8 %v2439
  %v2441 = vlaneseq
  %v2442 = vshrl.u32 %v2441, 7
  %v2443 = vsub.s32 %v2440, %v2442
  %v2444 = vrot.slane %v135, %v2443
  %v2446 = vunpack.c.l.s4 1983009808
  %v2447 = vunpack.c.0.s8 %v2446
  %v2448 = vlaneseq
  %v2449 = vshrl.u32 %v2448, 7
  %v2450 = vsub.s32 %v2447, %v2449
  %v2451 = vrot.slane %v2437, %v2450
  %v2452 = vcombine.high %v2444, %v2444
  %v2453 = vcombine.high %v2451, %v2451
  %v2454 = vcombine.high %v136, %v136
  %v2456 = vunpack.c.l.s4 1983009808
  %v2457 = vunpack.c.0.s8 %v2456
  %v2458 = vlaneseq
  %v2459 = vshrl.u32 %v2458, 7
  %v2460 = vsub.s32 %v2457, %v2459
  %v2461 = vrot.slane %v136, %v2460
  %v2463 = vunpack.c.l.s4 1983009808
  %v2464 = vunpack.c.0.s8 %v2463
  %v2465 = vlaneseq
  %v2466 = vshrl.u32 %v2465, 7
  %v2467 = vsub.s32 %v2464, %v2466
  %v2468 = vrot.slane %v2454, %v2467
  %v2469 = vcombine.high %v2461, %v2461
  %v2470 = vcombine.high %v2468, %v2468
  %v2471 = vcombine.high %v137, %v137
  %v2473 = vunpack.c.l.s4 1983009808
  %v2474 = vunpack.c.0.s8 %v2473
  %v2475 = vlaneseq
  %v2476 = vshrl.u32 %v2475, 7
  %v2477 = vsub.s32 %v2474, %v2476
  %v2478 = vrot.slane %v137, %v2477
  %v2480 = vunpack.c.l.s4 1983009808
  %v2481 = vunpack.c.0.s8 %v2480
  %v2482 = vlaneseq
  %v2483 = vshrl.u32 %v2482, 7
  %v2484 = vsub.s32 %v2481, %v2483
  %v2485 = vrot.slane %v2471, %v2484
  %v2486 = vcombine.high %v2478, %v2478
  %v2487 = vcombine.high %v2485, %v2485
  %v2488 = vcombine.high %v138, %v138
  %v2490 = vunpack.c.l.s4 1983009808
  %v2491 = vunpack.c.0.s8 %v2490
  %v2492 = vlaneseq
  %v2493 = vshrl.u32 %v2492, 7
  %v2494 = vsub.s32 %v2491, %v2493
  %v2495 = vrot.slane %v138, %v2494
  %v2497 = vunpack.c.l.s4 1983009808
  %v2498 = vunpack.c.0.s8 %v2497
  %v2499 = vlaneseq
  %v2500 = vshrl.u32 %v2499, 7
  %v2501 = vsub.s32 %v2498, %v2500
  %v2502 = vrot.slane %v2488, %v2501
  %v2503 = vcombine.high %v2495, %v2495
  %v2504 = vcombine.high %v2502, %v2502
  %v2505 = vcombine.high %v139, %v139
  %v2507 = vunpack.c.l.s4 1983009808
  %v2508 = vunpack.c.0.s8 %v2507
  %v2509 = vlaneseq
  %v2510 = vshrl.u32 %v2509, 7
  %v2511 = vsub.s32 %v2508, %v2510
  %v2512 = vrot.slane %v139, %v2511
  %v2514 = vunpack.c.l.s4 1983009808
  %v2515 = vunpack.c.0.s8 %v2514
  %v2516 = vlaneseq
  %v2517 = vshrl.u32 %v2516, 7
  %v2518 = vsub.s32 %v2515, %v2517
  %v2519 = vrot.slane %v2505, %v2518
  %v2520 = vcombine.high %v2512, %v2512
  %v2521 = vcombine.high %v2519, %v2519
  %v2522 = vcombine.high %v140, %v140
  %v2524 = vunpack.c.l.s4 1983009808
  %v2525 = vunpack.c.0.s8 %v2524
  %v2526 = vlaneseq
  %v2527 = vshrl.u32 %v2526, 7
  %v2528 = vsub.s32 %v2525, %v2527
  %v2529 = vrot.slane %v140, %v2528
  %v2531 = vunpack.c.l.s4 1983009808
  %v2532 = vunpack.c.0.s8 %v2531
  %v2533 = vlaneseq
  %v2534 = vshrl.u32 %v2533, 7
  %v2535 = vsub.s32 %v2532, %v2534
  %v2536 = vrot.slane %v2522, %v2535
  %v2537 = vcombine.high %v2529, %v2529
  %v2538 = vcombine.high %v2536, %v2536
  %2571 = vmatprep.subr.mxu0 %v202
  %2572 = vmatpush1.msra.mxu0 %v201
  %2573 = vmatprep.subr.mxu0 %v198
  %2574 = vmatpush1.msra.mxu0 %v197
  %2575 = vmatprep.subr.mxu0 %v194
  %2576 = vmatpush1.msra.mxu0 %v193
  %2577 = vmatprep.subr.mxu0 %v190
  %2578 = vmatpush1.msra.mxu0 %v189
  %2579 = vmatprep.subr.mxu0 %v186
  %2580 = vmatpush1.msra.mxu0 %v185
  %2581 = vmatprep.subr.mxu0 %v182
  %2582 = vmatpush1.msra.mxu0 %v181
  %2583 = vmatprep.subr.mxu0 %v178
  %2584 = vmatpush1.msra.mxu0 %v177
  %2585 = vmatprep.subr.mxu0 %v174
  %2586 = vmatpush1.msra.mxu0 %v173
  %2587 = vmatprep.subr.mxu0 %v170
  %2588 = vmatpush1.msra.mxu0 %v169
  %2589 = vmatprep.subr.mxu0 %v166
  %2590 = vmatpush1.msra.mxu0 %v165
  %2591 = vmatprep.subr.mxu0 %v162
  %2592 = vmatpush1.msra.mxu0 %v161
  %2593 = vmatprep.subr.mxu0 %v158
  %2594 = vmatpush1.msra.mxu0 %v157
  %2595 = vmatprep.subr.mxu0 %v154
  %2596 = vmatpush1.msra.mxu0 %v153
  %2597 = vmatprep.subr.mxu0 %v150
  %2598 = vmatpush1.msra.mxu0 %v149
  %2599 = vmatprep.subr.mxu0 %v146
  %2600 = vmatpush1.msra.mxu0 %v145
  %2601 = vmatprep.subr.mxu0 %v142
  %2602 = vmatpush1.msra.mxu0 %v141
  %2603 = vmatprep.subr.mxu0 %v266
  %2604 = vmatpush2.msra.mxu0 %v265
  %2605 = vmatprep.subr.mxu0 %v262
  %2606 = vmatpush2.msra.mxu0 %v261
  %2607 = vmatprep.subr.mxu0 %v258
  %2608 = vmatpush2.msra.mxu0 %v257
  %2609 = vmatprep.subr.mxu0 %v254
  %2610 = vmatpush2.msra.mxu0 %v253
  %2611 = vmatprep.subr.mxu0 %v250
  %2612 = vmatpush2.msra.mxu0 %v249
  %2613 = vmatprep.subr.mxu0 %v246
  %2614 = vmatpush2.msra.mxu0 %v245
  %2615 = vmatprep.subr.mxu0 %v242
  %2616 = vmatpush2.msra.mxu0 %v241
  %2617 = vmatprep.subr.mxu0 %v238
  %2618 = vmatpush2.msra.mxu0 %v237
  %2619 = vmatprep.subr.mxu0 %v234
  %2620 = vmatpush2.msra.mxu0 %v233
  %2621 = vmatprep.subr.mxu0 %v230
  %2622 = vmatpush2.msra.mxu0 %v229
  %2623 = vmatprep.subr.mxu0 %v226
  %2624 = vmatpush2.msra.mxu0 %v225
  %2625 = vmatprep.subr.mxu0 %v222
  %2626 = vmatpush2.msra.mxu0 %v221
  %2627 = vmatprep.subr.mxu0 %v218
  %2628 = vmatpush2.msra.mxu0 %v217
  %2629 = vmatprep.subr.mxu0 %v214
  %2630 = vmatpush2.msra.mxu0 %v213
  %2631 = vmatprep.subr.mxu0 %v210
  %2632 = vmatpush2.msra.mxu0 %v209
  %2633 = vmatprep.subr.mxu0 %v206
  %2634 = vmatpush2.msra.mxu0 %v205
  %2635 = vmatprep.mubr.f32.mxu0 %v2418
  %2636 = vmatmul.mubr.f32.gmra.mxu0 %v2410
  %v2637 = vpop.f32.mrf.mxu0
  %v2638 = vadd.f32 %v2320, %v2637
  %v2639 = vpop.f32.mrf.mxu0
  %v2640 = vadd.f32 %v2322, %v2639
  %2641 = vdwg.mxu0
  %2642 = vmatprep.subr.mxu0 %v330
  %2643 = vmatpush1.msra.mxu0 %v329
  %2644 = vmatprep.subr.mxu0 %v326
  %2645 = vmatpush1.msra.mxu0 %v325
  %2646 = vmatprep.subr.mxu0 %v322
  %2647 = vmatpush1.msra.mxu0 %v321
  %2648 = vmatprep.subr.mxu0 %v318
  %2649 = vmatpush1.msra.mxu0 %v317
  %2650 = vmatprep.subr.mxu0 %v314
  %2651 = vmatpush1.msra.mxu0 %v313
  %2652 = vmatprep.subr.mxu0 %v310
  %2653 = vmatpush1.msra.mxu0 %v309
  %2654 = vmatprep.subr.mxu0 %v306
  %2655 = vmatpush1.msra.mxu0 %v305
  %2656 = vmatprep.subr.mxu0 %v302
  %2657 = vmatpush1.msra.mxu0 %v301
  %2658 = vmatprep.subr.mxu0 %v298
  %2659 = vmatpush1.msra.mxu0 %v297
  %2660 = vmatprep.subr.mxu0 %v294
  %2661 = vmatpush1.msra.mxu0 %v293
  %2662 = vmatprep.subr.mxu0 %v290
  %2663 = vmatpush1.msra.mxu0 %v289
  %2664 = vmatprep.subr.mxu0 %v286
  %2665 = vmatpush1.msra.mxu0 %v285
  %2666 = vmatprep.subr.mxu0 %v282
  %2667 = vmatpush1.msra.mxu0 %v281
  %2668 = vmatprep.subr.mxu0 %v278
  %2669 = vmatpush1.msra.mxu0 %v277
  %2670 = vmatprep.subr.mxu0 %v274
  %2671 = vmatpush1.msra.mxu0 %v273
  %2672 = vmatprep.subr.mxu0 %v270
  %2673 = vmatpush1.msra.mxu0 %v269
  %2674 = vmatprep.subr.mxu0 %v394
  %2675 = vmatpush2.msra.mxu0 %v393
  %2676 = vmatprep.subr.mxu0 %v390
  %2677 = vmatpush2.msra.mxu0 %v389
  %2678 = vmatprep.subr.mxu0 %v386
  %2679 = vmatpush2.msra.mxu0 %v385
  %2680 = vmatprep.subr.mxu0 %v382
  %2681 = vmatpush2.msra.mxu0 %v381
  %2682 = vmatprep.subr.mxu0 %v378
  %2683 = vmatpush2.msra.mxu0 %v377
  %2684 = vmatprep.subr.mxu0 %v374
  %2685 = vmatpush2.msra.mxu0 %v373
  %2686 = vmatprep.subr.mxu0 %v370
  %2687 = vmatpush2.msra.mxu0 %v369
  %2688 = vmatprep.subr.mxu0 %v366
  %2689 = vmatpush2.msra.mxu0 %v365
  %2690 = vmatprep.subr.mxu0 %v362
  %2691 = vmatpush2.msra.mxu0 %v361
  %2692 = vmatprep.subr.mxu0 %v358
  %2693 = vmatpush2.msra.mxu0 %v357
  %2694 = vmatprep.subr.mxu0 %v354
  %2695 = vmatpush2.msra.mxu0 %v353
  %2696 = vmatprep.subr.mxu0 %v350
  %2697 = vmatpush2.msra.mxu0 %v349
  %2698 = vmatprep.subr.mxu0 %v346
  %2699 = vmatpush2.msra.mxu0 %v345
  %2700 = vmatprep.subr.mxu0 %v342
  %2701 = vmatpush2.msra.mxu0 %v341
  %2702 = vmatprep.subr.mxu0 %v338
  %2703 = vmatpush2.msra.mxu0 %v337
  %2704 = vmatprep.subr.mxu0 %v334
  %2705 = vmatpush2.msra.mxu0 %v333
  %2706 = vmatprep.mubr.f32.mxu0 %v2419
  %2707 = vmatmul.mubr.f32.gmra.mxu0 %v2417
  %v2708 = vpop.f32.mrf.mxu0
  %v2709 = vadd.f32 %v2638, %v2708
  %v2710 = vpop.f32.mrf.mxu0
  %v2711 = vadd.f32 %v2640, %v2710
  %2712 = vdwg.mxu0
  %2713 = vmatprep.subr.mxu0 %v458
  %2714 = vmatpush1.msra.mxu0 %v457
  %2715 = vmatprep.subr.mxu0 %v454
  %2716 = vmatpush1.msra.mxu0 %v453
  %2717 = vmatprep.subr.mxu0 %v450
  %2718 = vmatpush1.msra.mxu0 %v449
  %2719 = vmatprep.subr.mxu0 %v446
  %2720 = vmatpush1.msra.mxu0 %v445
  %2721 = vmatprep.subr.mxu0 %v442
  %2722 = vmatpush1.msra.mxu0 %v441
  %2723 = vmatprep.subr.mxu0 %v438
  %2724 = vmatpush1.msra.mxu0 %v437
  %2725 = vmatprep.subr.mxu0 %v434
  %2726 = vmatpush1.msra.mxu0 %v433
  %2727 = vmatprep.subr.mxu0 %v430
  %2728 = vmatpush1.msra.mxu0 %v429
  %2729 = vmatprep.subr.mxu0 %v426
  %2730 = vmatpush1.msra.mxu0 %v425
  %2731 = vmatprep.subr.mxu0 %v422
  %2732 = vmatpush1.msra.mxu0 %v421
  %2733 = vmatprep.subr.mxu0 %v418
  %2734 = vmatpush1.msra.mxu0 %v417
  %2735 = vmatprep.subr.mxu0 %v414
  %2736 = vmatpush1.msra.mxu0 %v413
  %2737 = vmatprep.subr.mxu0 %v410
  %2738 = vmatpush1.msra.mxu0 %v409
  %2739 = vmatprep.subr.mxu0 %v406
  %2740 = vmatpush1.msra.mxu0 %v405
  %2741 = vmatprep.subr.mxu0 %v402
  %2742 = vmatpush1.msra.mxu0 %v401
  %2743 = vmatprep.subr.mxu0 %v398
  %2744 = vmatpush1.msra.mxu0 %v397
  %2745 = vmatprep.subr.mxu0 %v522
  %2746 = vmatpush2.msra.mxu0 %v521
  %2747 = vmatprep.subr.mxu0 %v518
  %2748 = vmatpush2.msra.mxu0 %v517
  %2749 = vmatprep.subr.mxu0 %v514
  %2750 = vmatpush2.msra.mxu0 %v513
  %2751 = vmatprep.subr.mxu0 %v510
  %2752 = vmatpush2.msra.mxu0 %v509
  %2753 = vmatprep.subr.mxu0 %v506
  %2754 = vmatpush2.msra.mxu0 %v505
  %2755 = vmatprep.subr.mxu0 %v502
  %2756 = vmatpush2.msra.mxu0 %v501
  %2757 = vmatprep.subr.mxu0 %v498
  %2758 = vmatpush2.msra.mxu0 %v497
  %2759 = vmatprep.subr.mxu0 %v494
  %2760 = vmatpush2.msra.mxu0 %v493
  %2761 = vmatprep.subr.mxu0 %v490
  %2762 = vmatpush2.msra.mxu0 %v489
  %2763 = vmatprep.subr.mxu0 %v486
  %2764 = vmatpush2.msra.mxu0 %v485
  %2765 = vmatprep.subr.mxu0 %v482
  %2766 = vmatpush2.msra.mxu0 %v481
  %2767 = vmatprep.subr.mxu0 %v478
  %2768 = vmatpush2.msra.mxu0 %v477
  %2769 = vmatprep.subr.mxu0 %v474
  %2770 = vmatpush2.msra.mxu0 %v473
  %2771 = vmatprep.subr.mxu0 %v470
  %2772 = vmatpush2.msra.mxu0 %v469
  %2773 = vmatprep.subr.mxu0 %v466
  %2774 = vmatpush2.msra.mxu0 %v465
  %2775 = vmatprep.subr.mxu0 %v462
  %2776 = vmatpush2.msra.mxu0 %v461
  %2777 = vmatprep.mubr.f32.mxu0 %v2435
  %2778 = vmatmul.mubr.f32.gmra.mxu0 %v2427
  %v2779 = vpop.f32.mrf.mxu0
  %v2780 = vadd.f32 %v2709, %v2779
  %v2781 = vpop.f32.mrf.mxu0
  %v2782 = vadd.f32 %v2711, %v2781
  %2783 = vdwg.mxu0
  %2784 = vmatprep.subr.mxu0 %v586
  %2785 = vmatpush1.msra.mxu0 %v585
  %2786 = vmatprep.subr.mxu0 %v582
  %2787 = vmatpush1.msra.mxu0 %v581
  %2788 = vmatprep.subr.mxu0 %v578
  %2789 = vmatpush1.msra.mxu0 %v577
  %2790 = vmatprep.subr.mxu0 %v574
  %2791 = vmatpush1.msra.mxu0 %v573
  %2792 = vmatprep.subr.mxu0 %v570
  %2793 = vmatpush1.msra.mxu0 %v569
  %2794 = vmatprep.subr.mxu0 %v566
  %2795 = vmatpush1.msra.mxu0 %v565
  %2796 = vmatprep.subr.mxu0 %v562
  %2797 = vmatpush1.msra.mxu0 %v561
  %2798 = vmatprep.subr.mxu0 %v558
  %2799 = vmatpush1.msra.mxu0 %v557
  %2800 = vmatprep.subr.mxu0 %v554
  %2801 = vmatpush1.msra.mxu0 %v553
  %2802 = vmatprep.subr.mxu0 %v550
  %2803 = vmatpush1.msra.mxu0 %v549
  %2804 = vmatprep.subr.mxu0 %v546
  %2805 = vmatpush1.msra.mxu0 %v545
  %2806 = vmatprep.subr.mxu0 %v542
  %2807 = vmatpush1.msra.mxu0 %v541
  %2808 = vmatprep.subr.mxu0 %v538
  %2809 = vmatpush1.msra.mxu0 %v537
  %2810 = vmatprep.subr.mxu0 %v534
  %2811 = vmatpush1.msra.mxu0 %v533
  %2812 = vmatprep.subr.mxu0 %v530
  %2813 = vmatpush1.msra.mxu0 %v529
  %2814 = vmatprep.subr.mxu0 %v526
  %2815 = vmatpush1.msra.mxu0 %v525
  %2816 = vmatprep.subr.mxu0 %v650
  %2817 = vmatpush2.msra.mxu0 %v649
  %2818 = vmatprep.subr.mxu0 %v646
  %2819 = vmatpush2.msra.mxu0 %v645
  %2820 = vmatprep.subr.mxu0 %v642
  %2821 = vmatpush2.msra.mxu0 %v641
  %2822 = vmatprep.subr.mxu0 %v638
  %2823 = vmatpush2.msra.mxu0 %v637
  %2824 = vmatprep.subr.mxu0 %v634
  %2825 = vmatpush2.msra.mxu0 %v633
  %2826 = vmatprep.subr.mxu0 %v630
  %2827 = vmatpush2.msra.mxu0 %v629
  %2828 = vmatprep.subr.mxu0 %v626
  %2829 = vmatpush2.msra.mxu0 %v625
  %2830 = vmatprep.subr.mxu0 %v622
  %2831 = vmatpush2.msra.mxu0 %v621
  %2832 = vmatprep.subr.mxu0 %v618
  %2833 = vmatpush2.msra.mxu0 %v617
  %2834 = vmatprep.subr.mxu0 %v614
  %2835 = vmatpush2.msra.mxu0 %v613
  %2836 = vmatprep.subr.mxu0 %v610
  %2837 = vmatpush2.msra.mxu0 %v609
  %2838 = vmatprep.subr.mxu0 %v606
  %2839 = vmatpush2.msra.mxu0 %v605
  %2840 = vmatprep.subr.mxu0 %v602
  %2841 = vmatpush2.msra.mxu0 %v601
  %2842 = vmatprep.subr.mxu0 %v598
  %2843 = vmatpush2.msra.mxu0 %v597
  %2844 = vmatprep.subr.mxu0 %v594
  %2845 = vmatpush2.msra.mxu0 %v593
  %2846 = vmatprep.subr.mxu0 %v590
  %2847 = vmatpush2.msra.mxu0 %v589
  %2848 = vmatprep.mubr.f32.mxu0 %v2436
  %2849 = vmatmul.mubr.f32.gmra.mxu0 %v2434
  %v2850 = vpop.f32.mrf.mxu0
  %v2851 = vadd.f32 %v2780, %v2850
  %v2852 = vpop.f32.mrf.mxu0
  %v2853 = vadd.f32 %v2782, %v2852
  %2854 = vdwg.mxu0
  %2855 = vmatprep.subr.mxu0 %v714
  %2856 = vmatpush1.msra.mxu0 %v713
  %2857 = vmatprep.subr.mxu0 %v710
  %2858 = vmatpush1.msra.mxu0 %v709
  %2859 = vmatprep.subr.mxu0 %v706
  %2860 = vmatpush1.msra.mxu0 %v705
  %2861 = vmatprep.subr.mxu0 %v702
  %2862 = vmatpush1.msra.mxu0 %v701
  %2863 = vmatprep.subr.mxu0 %v698
  %2864 = vmatpush1.msra.mxu0 %v697
  %2865 = vmatprep.subr.mxu0 %v694
  %2866 = vmatpush1.msra.mxu0 %v693
  %2867 = vmatprep.subr.mxu0 %v690
  %2868 = vmatpush1.msra.mxu0 %v689
  %2869 = vmatprep.subr.mxu0 %v686
  %2870 = vmatpush1.msra.mxu0 %v685
  %2871 = vmatprep.subr.mxu0 %v682
  %2872 = vmatpush1.msra.mxu0 %v681
  %2873 = vmatprep.subr.mxu0 %v678
  %2874 = vmatpush1.msra.mxu0 %v677
  %2875 = vmatprep.subr.mxu0 %v674
  %2876 = vmatpush1.msra.mxu0 %v673
  %2877 = vmatprep.subr.mxu0 %v670
  %2878 = vmatpush1.msra.mxu0 %v669
  %2879 = vmatprep.subr.mxu0 %v666
  %2880 = vmatpush1.msra.mxu0 %v665
  %2881 = vmatprep.subr.mxu0 %v662
  %2882 = vmatpush1.msra.mxu0 %v661
  %2883 = vmatprep.subr.mxu0 %v658
  %2884 = vmatpush1.msra.mxu0 %v657
  %2885 = vmatprep.subr.mxu0 %v654
  %2886 = vmatpush1.msra.mxu0 %v653
  %2887 = vmatprep.subr.mxu0 %v778
  %2888 = vmatpush2.msra.mxu0 %v777
  %2889 = vmatprep.subr.mxu0 %v774
  %2890 = vmatpush2.msra.mxu0 %v773
  %2891 = vmatprep.subr.mxu0 %v770
  %2892 = vmatpush2.msra.mxu0 %v769
  %2893 = vmatprep.subr.mxu0 %v766
  %2894 = vmatpush2.msra.mxu0 %v765
  %2895 = vmatprep.subr.mxu0 %v762
  %2896 = vmatpush2.msra.mxu0 %v761
  %2897 = vmatprep.subr.mxu0 %v758
  %2898 = vmatpush2.msra.mxu0 %v757
  %2899 = vmatprep.subr.mxu0 %v754
  %2900 = vmatpush2.msra.mxu0 %v753
  %2901 = vmatprep.subr.mxu0 %v750
  %2902 = vmatpush2.msra.mxu0 %v749
  %2903 = vmatprep.subr.mxu0 %v746
  %2904 = vmatpush2.msra.mxu0 %v745
  %2905 = vmatprep.subr.mxu0 %v742
  %2906 = vmatpush2.msra.mxu0 %v741
  %2907 = vmatprep.subr.mxu0 %v738
  %2908 = vmatpush2.msra.mxu0 %v737
  %2909 = vmatprep.subr.mxu0 %v734
  %2910 = vmatpush2.msra.mxu0 %v733
  %2911 = vmatprep.subr.mxu0 %v730
  %2912 = vmatpush2.msra.mxu0 %v729
  %2913 = vmatprep.subr.mxu0 %v726
  %2914 = vmatpush2.msra.mxu0 %v725
  %2915 = vmatprep.subr.mxu0 %v722
  %2916 = vmatpush2.msra.mxu0 %v721
  %2917 = vmatprep.subr.mxu0 %v718
  %2918 = vmatpush2.msra.mxu0 %v717
  %2919 = vmatprep.mubr.f32.mxu0 %v2452
  %2920 = vmatmul.mubr.f32.gmra.mxu0 %v2444
  %v2921 = vpop.f32.mrf.mxu0
  %v2922 = vadd.f32 %v2851, %v2921
  %v2923 = vpop.f32.mrf.mxu0
  %v2924 = vadd.f32 %v2853, %v2923
  %2925 = vdwg.mxu0
  %2926 = vmatprep.subr.mxu0 %v842
  %2927 = vmatpush1.msra.mxu0 %v841
  %2928 = vmatprep.subr.mxu0 %v838
  %2929 = vmatpush1.msra.mxu0 %v837
  %2930 = vmatprep.subr.mxu0 %v834
  %2931 = vmatpush1.msra.mxu0 %v833
  %2932 = vmatprep.subr.mxu0 %v830
  %2933 = vmatpush1.msra.mxu0 %v829
  %2934 = vmatprep.subr.mxu0 %v826
  %2935 = vmatpush1.msra.mxu0 %v825
  %2936 = vmatprep.subr.mxu0 %v822
  %2937 = vmatpush1.msra.mxu0 %v821
  %2938 = vmatprep.subr.mxu0 %v818
  %2939 = vmatpush1.msra.mxu0 %v817
  %2940 = vmatprep.subr.mxu0 %v814
  %2941 = vmatpush1.msra.mxu0 %v813
  %2942 = vmatprep.subr.mxu0 %v810
  %2943 = vmatpush1.msra.mxu0 %v809
  %2944 = vmatprep.subr.mxu0 %v806
  %2945 = vmatpush1.msra.mxu0 %v805
  %2946 = vmatprep.subr.mxu0 %v802
  %2947 = vmatpush1.msra.mxu0 %v801
  %2948 = vmatprep.subr.mxu0 %v798
  %2949 = vmatpush1.msra.mxu0 %v797
  %2950 = vmatprep.subr.mxu0 %v794
  %2951 = vmatpush1.msra.mxu0 %v793
  %2952 = vmatprep.subr.mxu0 %v790
  %2953 = vmatpush1.msra.mxu0 %v789
  %2954 = vmatprep.subr.mxu0 %v786
  %2955 = vmatpush1.msra.mxu0 %v785
  %2956 = vmatprep.subr.mxu0 %v782
  %2957 = vmatpush1.msra.mxu0 %v781
  %2958 = vmatprep.subr.mxu0 %v906
  %2959 = vmatpush2.msra.mxu0 %v905
  %2960 = vmatprep.subr.mxu0 %v902
  %2961 = vmatpush2.msra.mxu0 %v901
  %2962 = vmatprep.subr.mxu0 %v898
  %2963 = vmatpush2.msra.mxu0 %v897
  %2964 = vmatprep.subr.mxu0 %v894
  %2965 = vmatpush2.msra.mxu0 %v893
  %2966 = vmatprep.subr.mxu0 %v890
  %2967 = vmatpush2.msra.mxu0 %v889
  %2968 = vmatprep.subr.mxu0 %v886
  %2969 = vmatpush2.msra.mxu0 %v885
  %2970 = vmatprep.subr.mxu0 %v882
  %2971 = vmatpush2.msra.mxu0 %v881
  %2972 = vmatprep.subr.mxu0 %v878
  %2973 = vmatpush2.msra.mxu0 %v877
  %2974 = vmatprep.subr.mxu0 %v874
  %2975 = vmatpush2.msra.mxu0 %v873
  %2976 = vmatprep.subr.mxu0 %v870
  %2977 = vmatpush2.msra.mxu0 %v869
  %2978 = vmatprep.subr.mxu0 %v866
  %2979 = vmatpush2.msra.mxu0 %v865
  %2980 = vmatprep.subr.mxu0 %v862
  %2981 = vmatpush2.msra.mxu0 %v861
  %2982 = vmatprep.subr.mxu0 %v858
  %2983 = vmatpush2.msra.mxu0 %v857
  %2984 = vmatprep.subr.mxu0 %v854
  %2985 = vmatpush2.msra.mxu0 %v853
  %2986 = vmatprep.subr.mxu0 %v850
  %2987 = vmatpush2.msra.mxu0 %v849
  %2988 = vmatprep.subr.mxu0 %v846
  %2989 = vmatpush2.msra.mxu0 %v845
  %2990 = vmatprep.mubr.f32.mxu0 %v2453
  %2991 = vmatmul.mubr.f32.gmra.mxu0 %v2451
  %v2992 = vpop.f32.mrf.mxu0
  %v2993 = vadd.f32 %v2922, %v2992
  %v2994 = vpop.f32.mrf.mxu0
  %v2995 = vadd.f32 %v2924, %v2994
  %2996 = vdwg.mxu0
  %2997 = vmatprep.subr.mxu0 %v970
  %2998 = vmatpush1.msra.mxu0 %v969
  %2999 = vmatprep.subr.mxu0 %v966
  %3000 = vmatpush1.msra.mxu0 %v965
  %3001 = vmatprep.subr.mxu0 %v962
  %3002 = vmatpush1.msra.mxu0 %v961
  %3003 = vmatprep.subr.mxu0 %v958
  %3004 = vmatpush1.msra.mxu0 %v957
  %3005 = vmatprep.subr.mxu0 %v954
  %3006 = vmatpush1.msra.mxu0 %v953
  %3007 = vmatprep.subr.mxu0 %v950
  %3008 = vmatpush1.msra.mxu0 %v949
  %3009 = vmatprep.subr.mxu0 %v946
  %3010 = vmatpush1.msra.mxu0 %v945
  %3011 = vmatprep.subr.mxu0 %v942
  %3012 = vmatpush1.msra.mxu0 %v941
  %3013 = vmatprep.subr.mxu0 %v938
  %3014 = vmatpush1.msra.mxu0 %v937
  %3015 = vmatprep.subr.mxu0 %v934
  %3016 = vmatpush1.msra.mxu0 %v933
  %3017 = vmatprep.subr.mxu0 %v930
  %3018 = vmatpush1.msra.mxu0 %v929
  %3019 = vmatprep.subr.mxu0 %v926
  %3020 = vmatpush1.msra.mxu0 %v925
  %3021 = vmatprep.subr.mxu0 %v922
  %3022 = vmatpush1.msra.mxu0 %v921
  %3023 = vmatprep.subr.mxu0 %v918
  %3024 = vmatpush1.msra.mxu0 %v917
  %3025 = vmatprep.subr.mxu0 %v914
  %3026 = vmatpush1.msra.mxu0 %v913
  %3027 = vmatprep.subr.mxu0 %v910
  %3028 = vmatpush1.msra.mxu0 %v909
  %3029 = vmatprep.subr.mxu0 %v1034
  %3030 = vmatpush2.msra.mxu0 %v1033
  %3031 = vmatprep.subr.mxu0 %v1030
  %3032 = vmatpush2.msra.mxu0 %v1029
  %3033 = vmatprep.subr.mxu0 %v1026
  %3034 = vmatpush2.msra.mxu0 %v1025
  %3035 = vmatprep.subr.mxu0 %v1022
  %3036 = vmatpush2.msra.mxu0 %v1021
  %3037 = vmatprep.subr.mxu0 %v1018
  %3038 = vmatpush2.msra.mxu0 %v1017
  %3039 = vmatprep.subr.mxu0 %v1014
  %3040 = vmatpush2.msra.mxu0 %v1013
  %3041 = vmatprep.subr.mxu0 %v1010
  %3042 = vmatpush2.msra.mxu0 %v1009
  %3043 = vmatprep.subr.mxu0 %v1006
  %3044 = vmatpush2.msra.mxu0 %v1005
  %3045 = vmatprep.subr.mxu0 %v1002
  %3046 = vmatpush2.msra.mxu0 %v1001
  %3047 = vmatprep.subr.mxu0 %v998
  %3048 = vmatpush2.msra.mxu0 %v997
  %3049 = vmatprep.subr.mxu0 %v994
  %3050 = vmatpush2.msra.mxu0 %v993
  %3051 = vmatprep.subr.mxu0 %v990
  %3052 = vmatpush2.msra.mxu0 %v989
  %3053 = vmatprep.subr.mxu0 %v986
  %3054 = vmatpush2.msra.mxu0 %v985
  %3055 = vmatprep.subr.mxu0 %v982
  %3056 = vmatpush2.msra.mxu0 %v981
  %3057 = vmatprep.subr.mxu0 %v978
  %3058 = vmatpush2.msra.mxu0 %v977
  %3059 = vmatprep.subr.mxu0 %v974
  %3060 = vmatpush2.msra.mxu0 %v973
  %3061 = vmatprep.mubr.f32.mxu0 %v2469
  %3062 = vmatmul.mubr.f32.gmra.mxu0 %v2461
  %v3063 = vpop.f32.mrf.mxu0
  %v3064 = vadd.f32 %v2993, %v3063
  %v3065 = vpop.f32.mrf.mxu0
  %v3066 = vadd.f32 %v2995, %v3065
  %3067 = vdwg.mxu0
  %3068 = vmatprep.subr.mxu0 %v1098
  %3069 = vmatpush1.msra.mxu0 %v1097
  %3070 = vmatprep.subr.mxu0 %v1094
  %3071 = vmatpush1.msra.mxu0 %v1093
  %3072 = vmatprep.subr.mxu0 %v1090
  %3073 = vmatpush1.msra.mxu0 %v1089
  %3074 = vmatprep.subr.mxu0 %v1086
  %3075 = vmatpush1.msra.mxu0 %v1085
  %3076 = vmatprep.subr.mxu0 %v1082
  %3077 = vmatpush1.msra.mxu0 %v1081
  %3078 = vmatprep.subr.mxu0 %v1078
  %3079 = vmatpush1.msra.mxu0 %v1077
  %3080 = vmatprep.subr.mxu0 %v1074
  %3081 = vmatpush1.msra.mxu0 %v1073
  %3082 = vmatprep.subr.mxu0 %v1070
  %3083 = vmatpush1.msra.mxu0 %v1069
  %3084 = vmatprep.subr.mxu0 %v1066
  %3085 = vmatpush1.msra.mxu0 %v1065
  %3086 = vmatprep.subr.mxu0 %v1062
  %3087 = vmatpush1.msra.mxu0 %v1061
  %3088 = vmatprep.subr.mxu0 %v1058
  %3089 = vmatpush1.msra.mxu0 %v1057
  %3090 = vmatprep.subr.mxu0 %v1054
  %3091 = vmatpush1.msra.mxu0 %v1053
  %3092 = vmatprep.subr.mxu0 %v1050
  %3093 = vmatpush1.msra.mxu0 %v1049
  %3094 = vmatprep.subr.mxu0 %v1046
  %3095 = vmatpush1.msra.mxu0 %v1045
  %3096 = vmatprep.subr.mxu0 %v1042
  %3097 = vmatpush1.msra.mxu0 %v1041
  %3098 = vmatprep.subr.mxu0 %v1038
  %3099 = vmatpush1.msra.mxu0 %v1037
  %3100 = vmatprep.subr.mxu0 %v1162
  %3101 = vmatpush2.msra.mxu0 %v1161
  %3102 = vmatprep.subr.mxu0 %v1158
  %3103 = vmatpush2.msra.mxu0 %v1157
  %3104 = vmatprep.subr.mxu0 %v1154
  %3105 = vmatpush2.msra.mxu0 %v1153
  %3106 = vmatprep.subr.mxu0 %v1150
  %3107 = vmatpush2.msra.mxu0 %v1149
  %3108 = vmatprep.subr.mxu0 %v1146
  %3109 = vmatpush2.msra.mxu0 %v1145
  %3110 = vmatprep.subr.mxu0 %v1142
  %3111 = vmatpush2.msra.mxu0 %v1141
  %3112 = vmatprep.subr.mxu0 %v1138
  %3113 = vmatpush2.msra.mxu0 %v1137
  %3114 = vmatprep.subr.mxu0 %v1134
  %3115 = vmatpush2.msra.mxu0 %v1133
  %3116 = vmatprep.subr.mxu0 %v1130
  %3117 = vmatpush2.msra.mxu0 %v1129
  %3118 = vmatprep.subr.mxu0 %v1126
  %3119 = vmatpush2.msra.mxu0 %v1125
  %3120 = vmatprep.subr.mxu0 %v1122
  %3121 = vmatpush2.msra.mxu0 %v1121
  %3122 = vmatprep.subr.mxu0 %v1118
  %3123 = vmatpush2.msra.mxu0 %v1117
  %3124 = vmatprep.subr.mxu0 %v1114
  %3125 = vmatpush2.msra.mxu0 %v1113
  %3126 = vmatprep.subr.mxu0 %v1110
  %3127 = vmatpush2.msra.mxu0 %v1109
  %3128 = vmatprep.subr.mxu0 %v1106
  %3129 = vmatpush2.msra.mxu0 %v1105
  %3130 = vmatprep.subr.mxu0 %v1102
  %3131 = vmatpush2.msra.mxu0 %v1101
  %3132 = vmatprep.mubr.f32.mxu0 %v2470
  %3133 = vmatmul.mubr.f32.gmra.mxu0 %v2468
  %v3134 = vpop.f32.mrf.mxu0
  %v3135 = vadd.f32 %v3064, %v3134
  %v3136 = vpop.f32.mrf.mxu0
  %v3137 = vadd.f32 %v3066, %v3136
  %3138 = vdwg.mxu0
  %3139 = vmatprep.subr.mxu0 %v1226
  %3140 = vmatpush1.msra.mxu0 %v1225
  %3141 = vmatprep.subr.mxu0 %v1222
  %3142 = vmatpush1.msra.mxu0 %v1221
  %3143 = vmatprep.subr.mxu0 %v1218
  %3144 = vmatpush1.msra.mxu0 %v1217
  %3145 = vmatprep.subr.mxu0 %v1214
  %3146 = vmatpush1.msra.mxu0 %v1213
  %3147 = vmatprep.subr.mxu0 %v1210
  %3148 = vmatpush1.msra.mxu0 %v1209
  %3149 = vmatprep.subr.mxu0 %v1206
  %3150 = vmatpush1.msra.mxu0 %v1205
  %3151 = vmatprep.subr.mxu0 %v1202
  %3152 = vmatpush1.msra.mxu0 %v1201
  %3153 = vmatprep.subr.mxu0 %v1198
  %3154 = vmatpush1.msra.mxu0 %v1197
  %3155 = vmatprep.subr.mxu0 %v1194
  %3156 = vmatpush1.msra.mxu0 %v1193
  %3157 = vmatprep.subr.mxu0 %v1190
  %3158 = vmatpush1.msra.mxu0 %v1189
  %3159 = vmatprep.subr.mxu0 %v1186
  %3160 = vmatpush1.msra.mxu0 %v1185
  %3161 = vmatprep.subr.mxu0 %v1182
  %3162 = vmatpush1.msra.mxu0 %v1181
  %3163 = vmatprep.subr.mxu0 %v1178
  %3164 = vmatpush1.msra.mxu0 %v1177
  %3165 = vmatprep.subr.mxu0 %v1174
  %3166 = vmatpush1.msra.mxu0 %v1173
  %3167 = vmatprep.subr.mxu0 %v1170
  %3168 = vmatpush1.msra.mxu0 %v1169
  %3169 = vmatprep.subr.mxu0 %v1166
  %3170 = vmatpush1.msra.mxu0 %v1165
  %3171 = vmatprep.subr.mxu0 %v1290
  %3172 = vmatpush2.msra.mxu0 %v1289
  %3173 = vmatprep.subr.mxu0 %v1286
  %3174 = vmatpush2.msra.mxu0 %v1285
  %3175 = vmatprep.subr.mxu0 %v1282
  %3176 = vmatpush2.msra.mxu0 %v1281
  %3177 = vmatprep.subr.mxu0 %v1278
  %3178 = vmatpush2.msra.mxu0 %v1277
  %3179 = vmatprep.subr.mxu0 %v1274
  %3180 = vmatpush2.msra.mxu0 %v1273
  %3181 = vmatprep.subr.mxu0 %v1270
  %3182 = vmatpush2.msra.mxu0 %v1269
  %3183 = vmatprep.subr.mxu0 %v1266
  %3184 = vmatpush2.msra.mxu0 %v1265
  %3185 = vmatprep.subr.mxu0 %v1262
  %3186 = vmatpush2.msra.mxu0 %v1261
  %3187 = vmatprep.subr.mxu0 %v1258
  %3188 = vmatpush2.msra.mxu0 %v1257
  %3189 = vmatprep.subr.mxu0 %v1254
  %3190 = vmatpush2.msra.mxu0 %v1253
  %3191 = vmatprep.subr.mxu0 %v1250
  %3192 = vmatpush2.msra.mxu0 %v1249
  %3193 = vmatprep.subr.mxu0 %v1246
  %3194 = vmatpush2.msra.mxu0 %v1245
  %3195 = vmatprep.subr.mxu0 %v1242
  %3196 = vmatpush2.msra.mxu0 %v1241
  %3197 = vmatprep.subr.mxu0 %v1238
  %3198 = vmatpush2.msra.mxu0 %v1237
  %3199 = vmatprep.subr.mxu0 %v1234
  %3200 = vmatpush2.msra.mxu0 %v1233
  %3201 = vmatprep.subr.mxu0 %v1230
  %3202 = vmatpush2.msra.mxu0 %v1229
  %3203 = vmatprep.mubr.f32.mxu0 %v2486
  %3204 = vmatmul.mubr.f32.gmra.mxu0 %v2478
  %v3205 = vpop.f32.mrf.mxu0
  %v3206 = vadd.f32 %v3135, %v3205
  %v3207 = vpop.f32.mrf.mxu0
  %v3208 = vadd.f32 %v3137, %v3207
  %3209 = vdwg.mxu0
  %3210 = vmatprep.subr.mxu0 %v1354
  %3211 = vmatpush1.msra.mxu0 %v1353
  %3212 = vmatprep.subr.mxu0 %v1350
  %3213 = vmatpush1.msra.mxu0 %v1349
  %3214 = vmatprep.subr.mxu0 %v1346
  %3215 = vmatpush1.msra.mxu0 %v1345
  %3216 = vmatprep.subr.mxu0 %v1342
  %3217 = vmatpush1.msra.mxu0 %v1341
  %3218 = vmatprep.subr.mxu0 %v1338
  %3219 = vmatpush1.msra.mxu0 %v1337
  %3220 = vmatprep.subr.mxu0 %v1334
  %3221 = vmatpush1.msra.mxu0 %v1333
  %3222 = vmatprep.subr.mxu0 %v1330
  %3223 = vmatpush1.msra.mxu0 %v1329
  %3224 = vmatprep.subr.mxu0 %v1326
  %3225 = vmatpush1.msra.mxu0 %v1325
  %3226 = vmatprep.subr.mxu0 %v1322
  %3227 = vmatpush1.msra.mxu0 %v1321
  %3228 = vmatprep.subr.mxu0 %v1318
  %3229 = vmatpush1.msra.mxu0 %v1317
  %3230 = vmatprep.subr.mxu0 %v1314
  %3231 = vmatpush1.msra.mxu0 %v1313
  %3232 = vmatprep.subr.mxu0 %v1310
  %3233 = vmatpush1.msra.mxu0 %v1309
  %3234 = vmatprep.subr.mxu0 %v1306
  %3235 = vmatpush1.msra.mxu0 %v1305
  %3236 = vmatprep.subr.mxu0 %v1302
  %3237 = vmatpush1.msra.mxu0 %v1301
  %3238 = vmatprep.subr.mxu0 %v1298
  %3239 = vmatpush1.msra.mxu0 %v1297
  %3240 = vmatprep.subr.mxu0 %v1294
  %3241 = vmatpush1.msra.mxu0 %v1293
  %3242 = vmatprep.subr.mxu0 %v1418
  %3243 = vmatpush2.msra.mxu0 %v1417
  %3244 = vmatprep.subr.mxu0 %v1414
  %3245 = vmatpush2.msra.mxu0 %v1413
  %3246 = vmatprep.subr.mxu0 %v1410
  %3247 = vmatpush2.msra.mxu0 %v1409
  %3248 = vmatprep.subr.mxu0 %v1406
  %3249 = vmatpush2.msra.mxu0 %v1405
  %3250 = vmatprep.subr.mxu0 %v1402
  %3251 = vmatpush2.msra.mxu0 %v1401
  %3252 = vmatprep.subr.mxu0 %v1398
  %3253 = vmatpush2.msra.mxu0 %v1397
  %3254 = vmatprep.subr.mxu0 %v1394
  %3255 = vmatpush2.msra.mxu0 %v1393
  %3256 = vmatprep.subr.mxu0 %v1390
  %3257 = vmatpush2.msra.mxu0 %v1389
  %3258 = vmatprep.subr.mxu0 %v1386
  %3259 = vmatpush2.msra.mxu0 %v1385
  %3260 = vmatprep.subr.mxu0 %v1382
  %3261 = vmatpush2.msra.mxu0 %v1381
  %3262 = vmatprep.subr.mxu0 %v1378
  %3263 = vmatpush2.msra.mxu0 %v1377
  %3264 = vmatprep.subr.mxu0 %v1374
  %3265 = vmatpush2.msra.mxu0 %v1373
  %3266 = vmatprep.subr.mxu0 %v1370
  %3267 = vmatpush2.msra.mxu0 %v1369
  %3268 = vmatprep.subr.mxu0 %v1366
  %3269 = vmatpush2.msra.mxu0 %v1365
  %3270 = vmatprep.subr.mxu0 %v1362
  %3271 = vmatpush2.msra.mxu0 %v1361
  %3272 = vmatprep.subr.mxu0 %v1358
  %3273 = vmatpush2.msra.mxu0 %v1357
  %3274 = vmatprep.mubr.f32.mxu0 %v2487
  %3275 = vmatmul.mubr.f32.gmra.mxu0 %v2485
  %v3276 = vpop.f32.mrf.mxu0
  %v3277 = vadd.f32 %v3206, %v3276
  %v3278 = vpop.f32.mrf.mxu0
  %v3279 = vadd.f32 %v3208, %v3278
  %3280 = vdwg.mxu0
  %3281 = vmatprep.subr.mxu0 %v1482
  %3282 = vmatpush1.msra.mxu0 %v1481
  %3283 = vmatprep.subr.mxu0 %v1478
  %3284 = vmatpush1.msra.mxu0 %v1477
  %3285 = vmatprep.subr.mxu0 %v1474
  %3286 = vmatpush1.msra.mxu0 %v1473
  %3287 = vmatprep.subr.mxu0 %v1470
  %3288 = vmatpush1.msra.mxu0 %v1469
  %3289 = vmatprep.subr.mxu0 %v1466
  %3290 = vmatpush1.msra.mxu0 %v1465
  %3291 = vmatprep.subr.mxu0 %v1462
  %3292 = vmatpush1.msra.mxu0 %v1461
  %3293 = vmatprep.subr.mxu0 %v1458
  %3294 = vmatpush1.msra.mxu0 %v1457
  %3295 = vmatprep.subr.mxu0 %v1454
  %3296 = vmatpush1.msra.mxu0 %v1453
  %3297 = vmatprep.subr.mxu0 %v1450
  %3298 = vmatpush1.msra.mxu0 %v1449
  %3299 = vmatprep.subr.mxu0 %v1446
  %3300 = vmatpush1.msra.mxu0 %v1445
  %3301 = vmatprep.subr.mxu0 %v1442
  %3302 = vmatpush1.msra.mxu0 %v1441
  %3303 = vmatprep.subr.mxu0 %v1438
  %3304 = vmatpush1.msra.mxu0 %v1437
  %3305 = vmatprep.subr.mxu0 %v1434
  %3306 = vmatpush1.msra.mxu0 %v1433
  %3307 = vmatprep.subr.mxu0 %v1430
  %3308 = vmatpush1.msra.mxu0 %v1429
  %3309 = vmatprep.subr.mxu0 %v1426
  %3310 = vmatpush1.msra.mxu0 %v1425
  %3311 = vmatprep.subr.mxu0 %v1422
  %3312 = vmatpush1.msra.mxu0 %v1421
  %3313 = vmatprep.subr.mxu0 %v1546
  %3314 = vmatpush2.msra.mxu0 %v1545
  %3315 = vmatprep.subr.mxu0 %v1542
  %3316 = vmatpush2.msra.mxu0 %v1541
  %3317 = vmatprep.subr.mxu0 %v1538
  %3318 = vmatpush2.msra.mxu0 %v1537
  %3319 = vmatprep.subr.mxu0 %v1534
  %3320 = vmatpush2.msra.mxu0 %v1533
  %3321 = vmatprep.subr.mxu0 %v1530
  %3322 = vmatpush2.msra.mxu0 %v1529
  %3323 = vmatprep.subr.mxu0 %v1526
  %3324 = vmatpush2.msra.mxu0 %v1525
  %3325 = vmatprep.subr.mxu0 %v1522
  %3326 = vmatpush2.msra.mxu0 %v1521
  %3327 = vmatprep.subr.mxu0 %v1518
  %3328 = vmatpush2.msra.mxu0 %v1517
  %3329 = vmatprep.subr.mxu0 %v1514
  %3330 = vmatpush2.msra.mxu0 %v1513
  %3331 = vmatprep.subr.mxu0 %v1510
  %3332 = vmatpush2.msra.mxu0 %v1509
  %3333 = vmatprep.subr.mxu0 %v1506
  %3334 = vmatpush2.msra.mxu0 %v1505
  %3335 = vmatprep.subr.mxu0 %v1502
  %3336 = vmatpush2.msra.mxu0 %v1501
  %3337 = vmatprep.subr.mxu0 %v1498
  %3338 = vmatpush2.msra.mxu0 %v1497
  %3339 = vmatprep.subr.mxu0 %v1494
  %3340 = vmatpush2.msra.mxu0 %v1493
  %3341 = vmatprep.subr.mxu0 %v1490
  %3342 = vmatpush2.msra.mxu0 %v1489
  %3343 = vmatprep.subr.mxu0 %v1486
  %3344 = vmatpush2.msra.mxu0 %v1485
  %3345 = vmatprep.mubr.f32.mxu0 %v2503
  %3346 = vmatmul.mubr.f32.gmra.mxu0 %v2495
  %v3347 = vpop.f32.mrf.mxu0
  %v3348 = vadd.f32 %v3277, %v3347
  %v3349 = vpop.f32.mrf.mxu0
  %v3350 = vadd.f32 %v3279, %v3349
  %3351 = vdwg.mxu0
  %3352 = vmatprep.subr.mxu0 %v1610
  %3353 = vmatpush1.msra.mxu0 %v1609
  %3354 = vmatprep.subr.mxu0 %v1606
  %3355 = vmatpush1.msra.mxu0 %v1605
  %3356 = vmatprep.subr.mxu0 %v1602
  %3357 = vmatpush1.msra.mxu0 %v1601
  %3358 = vmatprep.subr.mxu0 %v1598
  %3359 = vmatpush1.msra.mxu0 %v1597
  %3360 = vmatprep.subr.mxu0 %v1594
  %3361 = vmatpush1.msra.mxu0 %v1593
  %3362 = vmatprep.subr.mxu0 %v1590
  %3363 = vmatpush1.msra.mxu0 %v1589
  %3364 = vmatprep.subr.mxu0 %v1586
  %3365 = vmatpush1.msra.mxu0 %v1585
  %3366 = vmatprep.subr.mxu0 %v1582
  %3367 = vmatpush1.msra.mxu0 %v1581
  %3368 = vmatprep.subr.mxu0 %v1578
  %3369 = vmatpush1.msra.mxu0 %v1577
  %3370 = vmatprep.subr.mxu0 %v1574
  %3371 = vmatpush1.msra.mxu0 %v1573
  %3372 = vmatprep.subr.mxu0 %v1570
  %3373 = vmatpush1.msra.mxu0 %v1569
  %3374 = vmatprep.subr.mxu0 %v1566
  %3375 = vmatpush1.msra.mxu0 %v1565
  %3376 = vmatprep.subr.mxu0 %v1562
  %3377 = vmatpush1.msra.mxu0 %v1561
  %3378 = vmatprep.subr.mxu0 %v1558
  %3379 = vmatpush1.msra.mxu0 %v1557
  %3380 = vmatprep.subr.mxu0 %v1554
  %3381 = vmatpush1.msra.mxu0 %v1553
  %3382 = vmatprep.subr.mxu0 %v1550
  %3383 = vmatpush1.msra.mxu0 %v1549
  %3384 = vmatprep.subr.mxu0 %v1674
  %3385 = vmatpush2.msra.mxu0 %v1673
  %3386 = vmatprep.subr.mxu0 %v1670
  %3387 = vmatpush2.msra.mxu0 %v1669
  %3388 = vmatprep.subr.mxu0 %v1666
  %3389 = vmatpush2.msra.mxu0 %v1665
  %3390 = vmatprep.subr.mxu0 %v1662
  %3391 = vmatpush2.msra.mxu0 %v1661
  %3392 = vmatprep.subr.mxu0 %v1658
  %3393 = vmatpush2.msra.mxu0 %v1657
  %3394 = vmatprep.subr.mxu0 %v1654
  %3395 = vmatpush2.msra.mxu0 %v1653
  %3396 = vmatprep.subr.mxu0 %v1650
  %3397 = vmatpush2.msra.mxu0 %v1649
  %3398 = vmatprep.subr.mxu0 %v1646
  %3399 = vmatpush2.msra.mxu0 %v1645
  %3400 = vmatprep.subr.mxu0 %v1642
  %3401 = vmatpush2.msra.mxu0 %v1641
  %3402 = vmatprep.subr.mxu0 %v1638
  %3403 = vmatpush2.msra.mxu0 %v1637
  %3404 = vmatprep.subr.mxu0 %v1634
  %3405 = vmatpush2.msra.mxu0 %v1633
  %3406 = vmatprep.subr.mxu0 %v1630
  %3407 = vmatpush2.msra.mxu0 %v1629
  %3408 = vmatprep.subr.mxu0 %v1626
  %3409 = vmatpush2.msra.mxu0 %v1625
  %3410 = vmatprep.subr.mxu0 %v1622
  %3411 = vmatpush2.msra.mxu0 %v1621
  %3412 = vmatprep.subr.mxu0 %v1618
  %3413 = vmatpush2.msra.mxu0 %v1617
  %3414 = vmatprep.subr.mxu0 %v1614
  %3415 = vmatpush2.msra.mxu0 %v1613
  %3416 = vmatprep.mubr.f32.mxu0 %v2504
  %3417 = vmatmul.mubr.f32.gmra.mxu0 %v2502
  %v3418 = vpop.f32.mrf.mxu0
  %v3419 = vadd.f32 %v3348, %v3418
  %v3420 = vpop.f32.mrf.mxu0
  %v3421 = vadd.f32 %v3350, %v3420
  %3422 = vdwg.mxu0
  %3423 = vmatprep.subr.mxu0 %v1738
  %3424 = vmatpush1.msra.mxu0 %v1737
  %3425 = vmatprep.subr.mxu0 %v1734
  %3426 = vmatpush1.msra.mxu0 %v1733
  %3427 = vmatprep.subr.mxu0 %v1730
  %3428 = vmatpush1.msra.mxu0 %v1729
  %3429 = vmatprep.subr.mxu0 %v1726
  %3430 = vmatpush1.msra.mxu0 %v1725
  %3431 = vmatprep.subr.mxu0 %v1722
  %3432 = vmatpush1.msra.mxu0 %v1721
  %3433 = vmatprep.subr.mxu0 %v1718
  %3434 = vmatpush1.msra.mxu0 %v1717
  %3435 = vmatprep.subr.mxu0 %v1714
  %3436 = vmatpush1.msra.mxu0 %v1713
  %3437 = vmatprep.subr.mxu0 %v1710
  %3438 = vmatpush1.msra.mxu0 %v1709
  %3439 = vmatprep.subr.mxu0 %v1706
  %3440 = vmatpush1.msra.mxu0 %v1705
  %3441 = vmatprep.subr.mxu0 %v1702
  %3442 = vmatpush1.msra.mxu0 %v1701
  %3443 = vmatprep.subr.mxu0 %v1698
  %3444 = vmatpush1.msra.mxu0 %v1697
  %3445 = vmatprep.subr.mxu0 %v1694
  %3446 = vmatpush1.msra.mxu0 %v1693
  %3447 = vmatprep.subr.mxu0 %v1690
  %3448 = vmatpush1.msra.mxu0 %v1689
  %3449 = vmatprep.subr.mxu0 %v1686
  %3450 = vmatpush1.msra.mxu0 %v1685
  %3451 = vmatprep.subr.mxu0 %v1682
  %3452 = vmatpush1.msra.mxu0 %v1681
  %3453 = vmatprep.subr.mxu0 %v1678
  %3454 = vmatpush1.msra.mxu0 %v1677
  %3455 = vmatprep.subr.mxu0 %v1802
  %3456 = vmatpush2.msra.mxu0 %v1801
  %3457 = vmatprep.subr.mxu0 %v1798
  %3458 = vmatpush2.msra.mxu0 %v1797
  %3459 = vmatprep.subr.mxu0 %v1794
  %3460 = vmatpush2.msra.mxu0 %v1793
  %3461 = vmatprep.subr.mxu0 %v1790
  %3462 = vmatpush2.msra.mxu0 %v1789
  %3463 = vmatprep.subr.mxu0 %v1786
  %3464 = vmatpush2.msra.mxu0 %v1785
  %3465 = vmatprep.subr.mxu0 %v1782
  %3466 = vmatpush2.msra.mxu0 %v1781
  %3467 = vmatprep.subr.mxu0 %v1778
  %3468 = vmatpush2.msra.mxu0 %v1777
  %3469 = vmatprep.subr.mxu0 %v1774
  %3470 = vmatpush2.msra.mxu0 %v1773
  %3471 = vmatprep.subr.mxu0 %v1770
  %3472 = vmatpush2.msra.mxu0 %v1769
  %3473 = vmatprep.subr.mxu0 %v1766
  %3474 = vmatpush2.msra.mxu0 %v1765
  %3475 = vmatprep.subr.mxu0 %v1762
  %3476 = vmatpush2.msra.mxu0 %v1761
  %3477 = vmatprep.subr.mxu0 %v1758
  %3478 = vmatpush2.msra.mxu0 %v1757
  %3479 = vmatprep.subr.mxu0 %v1754
  %3480 = vmatpush2.msra.mxu0 %v1753
  %3481 = vmatprep.subr.mxu0 %v1750
  %3482 = vmatpush2.msra.mxu0 %v1749
  %3483 = vmatprep.subr.mxu0 %v1746
  %3484 = vmatpush2.msra.mxu0 %v1745
  %3485 = vmatprep.subr.mxu0 %v1742
  %3486 = vmatpush2.msra.mxu0 %v1741
  %3487 = vmatprep.mubr.f32.mxu0 %v2520
  %3488 = vmatmul.mubr.f32.gmra.mxu0 %v2512
  %v3489 = vpop.f32.mrf.mxu0
  %v3490 = vadd.f32 %v3419, %v3489
  %v3491 = vpop.f32.mrf.mxu0
  %v3492 = vadd.f32 %v3421, %v3491
  %3493 = vdwg.mxu0
  %3494 = vmatprep.subr.mxu0 %v1866
  %3495 = vmatpush1.msra.mxu0 %v1865
  %3496 = vmatprep.subr.mxu0 %v1862
  %3497 = vmatpush1.msra.mxu0 %v1861
  %3498 = vmatprep.subr.mxu0 %v1858
  %3499 = vmatpush1.msra.mxu0 %v1857
  %3500 = vmatprep.subr.mxu0 %v1854
  %3501 = vmatpush1.msra.mxu0 %v1853
  %3502 = vmatprep.subr.mxu0 %v1850
  %3503 = vmatpush1.msra.mxu0 %v1849
  %3504 = vmatprep.subr.mxu0 %v1846
  %3505 = vmatpush1.msra.mxu0 %v1845
  %3506 = vmatprep.subr.mxu0 %v1842
  %3507 = vmatpush1.msra.mxu0 %v1841
  %3508 = vmatprep.subr.mxu0 %v1838
  %3509 = vmatpush1.msra.mxu0 %v1837
  %3510 = vmatprep.subr.mxu0 %v1834
  %3511 = vmatpush1.msra.mxu0 %v1833
  %3512 = vmatprep.subr.mxu0 %v1830
  %3513 = vmatpush1.msra.mxu0 %v1829
  %3514 = vmatprep.subr.mxu0 %v1826
  %3515 = vmatpush1.msra.mxu0 %v1825
  %3516 = vmatprep.subr.mxu0 %v1822
  %3517 = vmatpush1.msra.mxu0 %v1821
  %3518 = vmatprep.subr.mxu0 %v1818
  %3519 = vmatpush1.msra.mxu0 %v1817
  %3520 = vmatprep.subr.mxu0 %v1814
  %3521 = vmatpush1.msra.mxu0 %v1813
  %3522 = vmatprep.subr.mxu0 %v1810
  %3523 = vmatpush1.msra.mxu0 %v1809
  %3524 = vmatprep.subr.mxu0 %v1806
  %3525 = vmatpush1.msra.mxu0 %v1805
  %3526 = vmatprep.subr.mxu0 %v1930
  %3527 = vmatpush2.msra.mxu0 %v1929
  %3528 = vmatprep.subr.mxu0 %v1926
  %3529 = vmatpush2.msra.mxu0 %v1925
  %3530 = vmatprep.subr.mxu0 %v1922
  %3531 = vmatpush2.msra.mxu0 %v1921
  %3532 = vmatprep.subr.mxu0 %v1918
  %3533 = vmatpush2.msra.mxu0 %v1917
  %3534 = vmatprep.subr.mxu0 %v1914
  %3535 = vmatpush2.msra.mxu0 %v1913
  %3536 = vmatprep.subr.mxu0 %v1910
  %3537 = vmatpush2.msra.mxu0 %v1909
  %3538 = vmatprep.subr.mxu0 %v1906
  %3539 = vmatpush2.msra.mxu0 %v1905
  %3540 = vmatprep.subr.mxu0 %v1902
  %3541 = vmatpush2.msra.mxu0 %v1901
  %3542 = vmatprep.subr.mxu0 %v1898
  %3543 = vmatpush2.msra.mxu0 %v1897
  %3544 = vmatprep.subr.mxu0 %v1894
  %3545 = vmatpush2.msra.mxu0 %v1893
  %3546 = vmatprep.subr.mxu0 %v1890
  %3547 = vmatpush2.msra.mxu0 %v1889
  %3548 = vmatprep.subr.mxu0 %v1886
  %3549 = vmatpush2.msra.mxu0 %v1885
  %3550 = vmatprep.subr.mxu0 %v1882
  %3551 = vmatpush2.msra.mxu0 %v1881
  %3552 = vmatprep.subr.mxu0 %v1878
  %3553 = vmatpush2.msra.mxu0 %v1877
  %3554 = vmatprep.subr.mxu0 %v1874
  %3555 = vmatpush2.msra.mxu0 %v1873
  %3556 = vmatprep.subr.mxu0 %v1870
  %3557 = vmatpush2.msra.mxu0 %v1869
  %3558 = vmatprep.mubr.f32.mxu0 %v2521
  %3559 = vmatmul.mubr.f32.gmra.mxu0 %v2519
  %v3560 = vpop.f32.mrf.mxu0
  %v3561 = vadd.f32 %v3490, %v3560
  %v3562 = vpop.f32.mrf.mxu0
  %v3563 = vadd.f32 %v3492, %v3562
  %3564 = vdwg.mxu0
  %3565 = vmatprep.subr.mxu0 %v1994
  %3566 = vmatpush1.msra.mxu0 %v1993
  %3567 = vmatprep.subr.mxu0 %v1990
  %3568 = vmatpush1.msra.mxu0 %v1989
  %3569 = vmatprep.subr.mxu0 %v1986
  %3570 = vmatpush1.msra.mxu0 %v1985
  %3571 = vmatprep.subr.mxu0 %v1982
  %3572 = vmatpush1.msra.mxu0 %v1981
  %3573 = vmatprep.subr.mxu0 %v1978
  %3574 = vmatpush1.msra.mxu0 %v1977
  %3575 = vmatprep.subr.mxu0 %v1974
  %3576 = vmatpush1.msra.mxu0 %v1973
  %3577 = vmatprep.subr.mxu0 %v1970
  %3578 = vmatpush1.msra.mxu0 %v1969
  %3579 = vmatprep.subr.mxu0 %v1966
  %3580 = vmatpush1.msra.mxu0 %v1965
  %3581 = vmatprep.subr.mxu0 %v1962
  %3582 = vmatpush1.msra.mxu0 %v1961
  %3583 = vmatprep.subr.mxu0 %v1958
  %3584 = vmatpush1.msra.mxu0 %v1957
  %3585 = vmatprep.subr.mxu0 %v1954
  %3586 = vmatpush1.msra.mxu0 %v1953
  %3587 = vmatprep.subr.mxu0 %v1950
  %3588 = vmatpush1.msra.mxu0 %v1949
  %3589 = vmatprep.subr.mxu0 %v1946
  %3590 = vmatpush1.msra.mxu0 %v1945
  %3591 = vmatprep.subr.mxu0 %v1942
  %3592 = vmatpush1.msra.mxu0 %v1941
  %3593 = vmatprep.subr.mxu0 %v1938
  %3594 = vmatpush1.msra.mxu0 %v1937
  %3595 = vmatprep.subr.mxu0 %v1934
  %3596 = vmatpush1.msra.mxu0 %v1933
  %3597 = vmatprep.subr.mxu0 %v2058
  %3598 = vmatpush2.msra.mxu0 %v2057
  %3599 = vmatprep.subr.mxu0 %v2054
  %3600 = vmatpush2.msra.mxu0 %v2053
  %3601 = vmatprep.subr.mxu0 %v2050
  %3602 = vmatpush2.msra.mxu0 %v2049
  %3603 = vmatprep.subr.mxu0 %v2046
  %3604 = vmatpush2.msra.mxu0 %v2045
  %3605 = vmatprep.subr.mxu0 %v2042
  %3606 = vmatpush2.msra.mxu0 %v2041
  %3607 = vmatprep.subr.mxu0 %v2038
  %3608 = vmatpush2.msra.mxu0 %v2037
  %3609 = vmatprep.subr.mxu0 %v2034
  %3610 = vmatpush2.msra.mxu0 %v2033
  %3611 = vmatprep.subr.mxu0 %v2030
  %3612 = vmatpush2.msra.mxu0 %v2029
  %3613 = vmatprep.subr.mxu0 %v2026
  %3614 = vmatpush2.msra.mxu0 %v2025
  %3615 = vmatprep.subr.mxu0 %v2022
  %3616 = vmatpush2.msra.mxu0 %v2021
  %3617 = vmatprep.subr.mxu0 %v2018
  %3618 = vmatpush2.msra.mxu0 %v2017
  %3619 = vmatprep.subr.mxu0 %v2014
  %3620 = vmatpush2.msra.mxu0 %v2013
  %3621 = vmatprep.subr.mxu0 %v2010
  %3622 = vmatpush2.msra.mxu0 %v2009
  %3623 = vmatprep.subr.mxu0 %v2006
  %3624 = vmatpush2.msra.mxu0 %v2005
  %3625 = vmatprep.subr.mxu0 %v2002
  %3626 = vmatpush2.msra.mxu0 %v2001
  %3627 = vmatprep.subr.mxu0 %v1998
  %3628 = vmatpush2.msra.mxu0 %v1997
  %3629 = vmatprep.mubr.f32.mxu0 %v2537
  %3630 = vmatmul.mubr.f32.gmra.mxu0 %v2529
  %v3631 = vpop.f32.mrf.mxu0
  %v3632 = vadd.f32 %v3561, %v3631
  %v3633 = vpop.f32.mrf.mxu0
  %v3634 = vadd.f32 %v3563, %v3633
  %3635 = vdwg.mxu0
  %3636 = vmatprep.subr.mxu0 %v2122
  %3637 = vmatpush1.msra.mxu0 %v2121
  %3638 = vmatprep.subr.mxu0 %v2118
  %3639 = vmatpush1.msra.mxu0 %v2117
  %3640 = vmatprep.subr.mxu0 %v2114
  %3641 = vmatpush1.msra.mxu0 %v2113
  %3642 = vmatprep.subr.mxu0 %v2110
  %3643 = vmatpush1.msra.mxu0 %v2109
  %3644 = vmatprep.subr.mxu0 %v2106
  %3645 = vmatpush1.msra.mxu0 %v2105
  %3646 = vmatprep.subr.mxu0 %v2102
  %3647 = vmatpush1.msra.mxu0 %v2101
  %3648 = vmatprep.subr.mxu0 %v2098
  %3649 = vmatpush1.msra.mxu0 %v2097
  %3650 = vmatprep.subr.mxu0 %v2094
  %3651 = vmatpush1.msra.mxu0 %v2093
  %3652 = vmatprep.subr.mxu0 %v2090
  %3653 = vmatpush1.msra.mxu0 %v2089
  %3654 = vmatprep.subr.mxu0 %v2086
  %3655 = vmatpush1.msra.mxu0 %v2085
  %3656 = vmatprep.subr.mxu0 %v2082
  %3657 = vmatpush1.msra.mxu0 %v2081
  %3658 = vmatprep.subr.mxu0 %v2078
  %3659 = vmatpush1.msra.mxu0 %v2077
  %3660 = vmatprep.subr.mxu0 %v2074
  %3661 = vmatpush1.msra.mxu0 %v2073
  %3662 = vmatprep.subr.mxu0 %v2070
  %3663 = vmatpush1.msra.mxu0 %v2069
  %3664 = vmatprep.subr.mxu0 %v2066
  %3665 = vmatpush1.msra.mxu0 %v2065
  %3666 = vmatprep.subr.mxu0 %v2062
  %3667 = vmatpush1.msra.mxu0 %v2061
  %3668 = vmatprep.subr.mxu0 %v2186
  %3669 = vmatpush2.msra.mxu0 %v2185
  %3670 = vmatprep.subr.mxu0 %v2182
  %3671 = vmatpush2.msra.mxu0 %v2181
  %3672 = vmatprep.subr.mxu0 %v2178
  %3673 = vmatpush2.msra.mxu0 %v2177
  %3674 = vmatprep.subr.mxu0 %v2174
  %3675 = vmatpush2.msra.mxu0 %v2173
  %3676 = vmatprep.subr.mxu0 %v2170
  %3677 = vmatpush2.msra.mxu0 %v2169
  %3678 = vmatprep.subr.mxu0 %v2166
  %3679 = vmatpush2.msra.mxu0 %v2165
  %3680 = vmatprep.subr.mxu0 %v2162
  %3681 = vmatpush2.msra.mxu0 %v2161
  %3682 = vmatprep.subr.mxu0 %v2158
  %3683 = vmatpush2.msra.mxu0 %v2157
  %3684 = vmatprep.subr.mxu0 %v2154
  %3685 = vmatpush2.msra.mxu0 %v2153
  %3686 = vmatprep.subr.mxu0 %v2150
  %3687 = vmatpush2.msra.mxu0 %v2149
  %3688 = vmatprep.subr.mxu0 %v2146
  %3689 = vmatpush2.msra.mxu0 %v2145
  %3690 = vmatprep.subr.mxu0 %v2142
  %3691 = vmatpush2.msra.mxu0 %v2141
  %3692 = vmatprep.subr.mxu0 %v2138
  %3693 = vmatpush2.msra.mxu0 %v2137
  %3694 = vmatprep.subr.mxu0 %v2134
  %3695 = vmatpush2.msra.mxu0 %v2133
  %3696 = vmatprep.subr.mxu0 %v2130
  %3697 = vmatpush2.msra.mxu0 %v2129
  %3698 = vmatprep.subr.mxu0 %v2126
  %3699 = vmatpush2.msra.mxu0 %v2125
  %3700 = vmatprep.mubr.f32.mxu0 %v2538
  %3701 = vmatmul.mubr.f32.gmra.mxu0 %v2536
  %v3702 = vpop.f32.mrf.mxu0
  %v3703 = vadd.f32 %v3632, %v3702
  %v3704 = vpop.f32.mrf.mxu0
  %v3705 = vadd.f32 %v3634, %v3704
  %3706 = vdwg.mxu0
  %3707 = vmatprep.subr.mxu0 %v204
  %3708 = vmatpush1.msra.mxu0 %v203
  %3709 = vmatprep.subr.mxu0 %v200
  %3710 = vmatpush1.msra.mxu0 %v199
  %3711 = vmatprep.subr.mxu0 %v196
  %3712 = vmatpush1.msra.mxu0 %v195
  %3713 = vmatprep.subr.mxu0 %v192
  %3714 = vmatpush1.msra.mxu0 %v191
  %3715 = vmatprep.subr.mxu0 %v188
  %3716 = vmatpush1.msra.mxu0 %v187
  %3717 = vmatprep.subr.mxu0 %v184
  %3718 = vmatpush1.msra.mxu0 %v183
  %3719 = vmatprep.subr.mxu0 %v180
  %3720 = vmatpush1.msra.mxu0 %v179
  %3721 = vmatprep.subr.mxu0 %v176
  %3722 = vmatpush1.msra.mxu0 %v175
  %3723 = vmatprep.subr.mxu0 %v172
  %3724 = vmatpush1.msra.mxu0 %v171
  %3725 = vmatprep.subr.mxu0 %v168
  %3726 = vmatpush1.msra.mxu0 %v167
  %3727 = vmatprep.subr.mxu0 %v164
  %3728 = vmatpush1.msra.mxu0 %v163
  %3729 = vmatprep.subr.mxu0 %v160
  %3730 = vmatpush1.msra.mxu0 %v159
  %3731 = vmatprep.subr.mxu0 %v156
  %3732 = vmatpush1.msra.mxu0 %v155
  %3733 = vmatprep.subr.mxu0 %v152
  %3734 = vmatpush1.msra.mxu0 %v151
  %3735 = vmatprep.subr.mxu0 %v148
  %3736 = vmatpush1.msra.mxu0 %v147
  %3737 = vmatprep.subr.mxu0 %v144
  %3738 = vmatpush1.msra.mxu0 %v143
  %3739 = vmatprep.subr.mxu0 %v268
  %3740 = vmatpush2.msra.mxu0 %v267
  %3741 = vmatprep.subr.mxu0 %v264
  %3742 = vmatpush2.msra.mxu0 %v263
  %3743 = vmatprep.subr.mxu0 %v260
  %3744 = vmatpush2.msra.mxu0 %v259
  %3745 = vmatprep.subr.mxu0 %v256
  %3746 = vmatpush2.msra.mxu0 %v255
  %3747 = vmatprep.subr.mxu0 %v252
  %3748 = vmatpush2.msra.mxu0 %v251
  %3749 = vmatprep.subr.mxu0 %v248
  %3750 = vmatpush2.msra.mxu0 %v247
  %3751 = vmatprep.subr.mxu0 %v244
  %3752 = vmatpush2.msra.mxu0 %v243
  %3753 = vmatprep.subr.mxu0 %v240
  %3754 = vmatpush2.msra.mxu0 %v239
  %3755 = vmatprep.subr.mxu0 %v236
  %3756 = vmatpush2.msra.mxu0 %v235
  %3757 = vmatprep.subr.mxu0 %v232
  %3758 = vmatpush2.msra.mxu0 %v231
  %3759 = vmatprep.subr.mxu0 %v228
  %3760 = vmatpush2.msra.mxu0 %v227
  %3761 = vmatprep.subr.mxu0 %v224
  %3762 = vmatpush2.msra.mxu0 %v223
  %3763 = vmatprep.subr.mxu0 %v220
  %3764 = vmatpush2.msra.mxu0 %v219
  %3765 = vmatprep.subr.mxu0 %v216
  %3766 = vmatpush2.msra.mxu0 %v215
  %3767 = vmatprep.subr.mxu0 %v212
  %3768 = vmatpush2.msra.mxu0 %v211
  %3769 = vmatprep.subr.mxu0 %v208
  %3770 = vmatpush2.msra.mxu0 %v207
  %3771 = vmatprep.mubr.f32.mxu0 %v2418
  %3772 = vmatmul.mubr.f32.gmra.mxu0 %v2410
  %v3773 = vpop.f32.mrf.mxu0
  %v3774 = vadd.f32 %v2391, %v3773
  %v3775 = vpop.f32.mrf.mxu0
  %v3776 = vadd.f32 %v2393, %v3775
  %3777 = vdwg.mxu0
  %3778 = vmatprep.subr.mxu0 %v332
  %3779 = vmatpush1.msra.mxu0 %v331
  %3780 = vmatprep.subr.mxu0 %v328
  %3781 = vmatpush1.msra.mxu0 %v327
  %3782 = vmatprep.subr.mxu0 %v324
  %3783 = vmatpush1.msra.mxu0 %v323
  %3784 = vmatprep.subr.mxu0 %v320
  %3785 = vmatpush1.msra.mxu0 %v319
  %3786 = vmatprep.subr.mxu0 %v316
  %3787 = vmatpush1.msra.mxu0 %v315
  %3788 = vmatprep.subr.mxu0 %v312
  %3789 = vmatpush1.msra.mxu0 %v311
  %3790 = vmatprep.subr.mxu0 %v308
  %3791 = vmatpush1.msra.mxu0 %v307
  %3792 = vmatprep.subr.mxu0 %v304
  %3793 = vmatpush1.msra.mxu0 %v303
  %3794 = vmatprep.subr.mxu0 %v300
  %3795 = vmatpush1.msra.mxu0 %v299
  %3796 = vmatprep.subr.mxu0 %v296
  %3797 = vmatpush1.msra.mxu0 %v295
  %3798 = vmatprep.subr.mxu0 %v292
  %3799 = vmatpush1.msra.mxu0 %v291
  %3800 = vmatprep.subr.mxu0 %v288
  %3801 = vmatpush1.msra.mxu0 %v287
  %3802 = vmatprep.subr.mxu0 %v284
  %3803 = vmatpush1.msra.mxu0 %v283
  %3804 = vmatprep.subr.mxu0 %v280
  %3805 = vmatpush1.msra.mxu0 %v279
  %3806 = vmatprep.subr.mxu0 %v276
  %3807 = vmatpush1.msra.mxu0 %v275
  %3808 = vmatprep.subr.mxu0 %v272
  %3809 = vmatpush1.msra.mxu0 %v271
  %3810 = vmatprep.subr.mxu0 %v396
  %3811 = vmatpush2.msra.mxu0 %v395
  %3812 = vmatprep.subr.mxu0 %v392
  %3813 = vmatpush2.msra.mxu0 %v391
  %3814 = vmatprep.subr.mxu0 %v388
  %3815 = vmatpush2.msra.mxu0 %v387
  %3816 = vmatprep.subr.mxu0 %v384
  %3817 = vmatpush2.msra.mxu0 %v383
  %3818 = vmatprep.subr.mxu0 %v380
  %3819 = vmatpush2.msra.mxu0 %v379
  %3820 = vmatprep.subr.mxu0 %v376
  %3821 = vmatpush2.msra.mxu0 %v375
  %3822 = vmatprep.subr.mxu0 %v372
  %3823 = vmatpush2.msra.mxu0 %v371
  %3824 = vmatprep.subr.mxu0 %v368
  %3825 = vmatpush2.msra.mxu0 %v367
  %3826 = vmatprep.subr.mxu0 %v364
  %3827 = vmatpush2.msra.mxu0 %v363
  %3828 = vmatprep.subr.mxu0 %v360
  %3829 = vmatpush2.msra.mxu0 %v359
  %3830 = vmatprep.subr.mxu0 %v356
  %3831 = vmatpush2.msra.mxu0 %v355
  %3832 = vmatprep.subr.mxu0 %v352
  %3833 = vmatpush2.msra.mxu0 %v351
  %3834 = vmatprep.subr.mxu0 %v348
  %3835 = vmatpush2.msra.mxu0 %v347
  %3836 = vmatprep.subr.mxu0 %v344
  %3837 = vmatpush2.msra.mxu0 %v343
  %3838 = vmatprep.subr.mxu0 %v340
  %3839 = vmatpush2.msra.mxu0 %v339
  %3840 = vmatprep.subr.mxu0 %v336
  %3841 = vmatpush2.msra.mxu0 %v335
  %3842 = vmatprep.mubr.f32.mxu0 %v2419
  %3843 = vmatmul.mubr.f32.gmra.mxu0 %v2417
  %v3844 = vpop.f32.mrf.mxu0
  %v3845 = vadd.f32 %v3774, %v3844
  %v3846 = vpop.f32.mrf.mxu0
  %v3847 = vadd.f32 %v3776, %v3846
  %3848 = vdwg.mxu0
  %3849 = vmatprep.subr.mxu0 %v460
  %3850 = vmatpush1.msra.mxu0 %v459
  %3851 = vmatprep.subr.mxu0 %v456
  %3852 = vmatpush1.msra.mxu0 %v455
  %3853 = vmatprep.subr.mxu0 %v452
  %3854 = vmatpush1.msra.mxu0 %v451
  %3855 = vmatprep.subr.mxu0 %v448
  %3856 = vmatpush1.msra.mxu0 %v447
  %3857 = vmatprep.subr.mxu0 %v444
  %3858 = vmatpush1.msra.mxu0 %v443
  %3859 = vmatprep.subr.mxu0 %v440
  %3860 = vmatpush1.msra.mxu0 %v439
  %3861 = vmatprep.subr.mxu0 %v436
  %3862 = vmatpush1.msra.mxu0 %v435
  %3863 = vmatprep.subr.mxu0 %v432
  %3864 = vmatpush1.msra.mxu0 %v431
  %3865 = vmatprep.subr.mxu0 %v428
  %3866 = vmatpush1.msra.mxu0 %v427
  %3867 = vmatprep.subr.mxu0 %v424
  %3868 = vmatpush1.msra.mxu0 %v423
  %3869 = vmatprep.subr.mxu0 %v420
  %3870 = vmatpush1.msra.mxu0 %v419
  %3871 = vmatprep.subr.mxu0 %v416
  %3872 = vmatpush1.msra.mxu0 %v415
  %3873 = vmatprep.subr.mxu0 %v412
  %3874 = vmatpush1.msra.mxu0 %v411
  %3875 = vmatprep.subr.mxu0 %v408
  %3876 = vmatpush1.msra.mxu0 %v407
  %3877 = vmatprep.subr.mxu0 %v404
  %3878 = vmatpush1.msra.mxu0 %v403
  %3879 = vmatprep.subr.mxu0 %v400
  %3880 = vmatpush1.msra.mxu0 %v399
  %3881 = vmatprep.subr.mxu0 %v524
  %3882 = vmatpush2.msra.mxu0 %v523
  %3883 = vmatprep.subr.mxu0 %v520
  %3884 = vmatpush2.msra.mxu0 %v519
  %3885 = vmatprep.subr.mxu0 %v516
  %3886 = vmatpush2.msra.mxu0 %v515
  %3887 = vmatprep.subr.mxu0 %v512
  %3888 = vmatpush2.msra.mxu0 %v511
  %3889 = vmatprep.subr.mxu0 %v508
  %3890 = vmatpush2.msra.mxu0 %v507
  %3891 = vmatprep.subr.mxu0 %v504
  %3892 = vmatpush2.msra.mxu0 %v503
  %3893 = vmatprep.subr.mxu0 %v500
  %3894 = vmatpush2.msra.mxu0 %v499
  %3895 = vmatprep.subr.mxu0 %v496
  %3896 = vmatpush2.msra.mxu0 %v495
  %3897 = vmatprep.subr.mxu0 %v492
  %3898 = vmatpush2.msra.mxu0 %v491
  %3899 = vmatprep.subr.mxu0 %v488
  %3900 = vmatpush2.msra.mxu0 %v487
  %3901 = vmatprep.subr.mxu0 %v484
  %3902 = vmatpush2.msra.mxu0 %v483
  %3903 = vmatprep.subr.mxu0 %v480
  %3904 = vmatpush2.msra.mxu0 %v479
  %3905 = vmatprep.subr.mxu0 %v476
  %3906 = vmatpush2.msra.mxu0 %v475
  %3907 = vmatprep.subr.mxu0 %v472
  %3908 = vmatpush2.msra.mxu0 %v471
  %3909 = vmatprep.subr.mxu0 %v468
  %3910 = vmatpush2.msra.mxu0 %v467
  %3911 = vmatprep.subr.mxu0 %v464
  %3912 = vmatpush2.msra.mxu0 %v463
  %3913 = vmatprep.mubr.f32.mxu0 %v2435
  %3914 = vmatmul.mubr.f32.gmra.mxu0 %v2427
  %v3915 = vpop.f32.mrf.mxu0
  %v3916 = vadd.f32 %v3845, %v3915
  %v3917 = vpop.f32.mrf.mxu0
  %v3918 = vadd.f32 %v3847, %v3917
  %3919 = vdwg.mxu0
  %3920 = vmatprep.subr.mxu0 %v588
  %3921 = vmatpush1.msra.mxu0 %v587
  %3922 = vmatprep.subr.mxu0 %v584
  %3923 = vmatpush1.msra.mxu0 %v583
  %3924 = vmatprep.subr.mxu0 %v580
  %3925 = vmatpush1.msra.mxu0 %v579
  %3926 = vmatprep.subr.mxu0 %v576
  %3927 = vmatpush1.msra.mxu0 %v575
  %3928 = vmatprep.subr.mxu0 %v572
  %3929 = vmatpush1.msra.mxu0 %v571
  %3930 = vmatprep.subr.mxu0 %v568
  %3931 = vmatpush1.msra.mxu0 %v567
  %3932 = vmatprep.subr.mxu0 %v564
  %3933 = vmatpush1.msra.mxu0 %v563
  %3934 = vmatprep.subr.mxu0 %v560
  %3935 = vmatpush1.msra.mxu0 %v559
  %3936 = vmatprep.subr.mxu0 %v556
  %3937 = vmatpush1.msra.mxu0 %v555
  %3938 = vmatprep.subr.mxu0 %v552
  %3939 = vmatpush1.msra.mxu0 %v551
  %3940 = vmatprep.subr.mxu0 %v548
  %3941 = vmatpush1.msra.mxu0 %v547
  %3942 = vmatprep.subr.mxu0 %v544
  %3943 = vmatpush1.msra.mxu0 %v543
  %3944 = vmatprep.subr.mxu0 %v540
  %3945 = vmatpush1.msra.mxu0 %v539
  %3946 = vmatprep.subr.mxu0 %v536
  %3947 = vmatpush1.msra.mxu0 %v535
  %3948 = vmatprep.subr.mxu0 %v532
  %3949 = vmatpush1.msra.mxu0 %v531
  %3950 = vmatprep.subr.mxu0 %v528
  %3951 = vmatpush1.msra.mxu0 %v527
  %3952 = vmatprep.subr.mxu0 %v652
  %3953 = vmatpush2.msra.mxu0 %v651
  %3954 = vmatprep.subr.mxu0 %v648
  %3955 = vmatpush2.msra.mxu0 %v647
  %3956 = vmatprep.subr.mxu0 %v644
  %3957 = vmatpush2.msra.mxu0 %v643
  %3958 = vmatprep.subr.mxu0 %v640
  %3959 = vmatpush2.msra.mxu0 %v639
  %3960 = vmatprep.subr.mxu0 %v636
  %3961 = vmatpush2.msra.mxu0 %v635
  %3962 = vmatprep.subr.mxu0 %v632
  %3963 = vmatpush2.msra.mxu0 %v631
  %3964 = vmatprep.subr.mxu0 %v628
  %3965 = vmatpush2.msra.mxu0 %v627
  %3966 = vmatprep.subr.mxu0 %v624
  %3967 = vmatpush2.msra.mxu0 %v623
  %3968 = vmatprep.subr.mxu0 %v620
  %3969 = vmatpush2.msra.mxu0 %v619
  %3970 = vmatprep.subr.mxu0 %v616
  %3971 = vmatpush2.msra.mxu0 %v615
  %3972 = vmatprep.subr.mxu0 %v612
  %3973 = vmatpush2.msra.mxu0 %v611
  %3974 = vmatprep.subr.mxu0 %v608
  %3975 = vmatpush2.msra.mxu0 %v607
  %3976 = vmatprep.subr.mxu0 %v604
  %3977 = vmatpush2.msra.mxu0 %v603
  %3978 = vmatprep.subr.mxu0 %v600
  %3979 = vmatpush2.msra.mxu0 %v599
  %3980 = vmatprep.subr.mxu0 %v596
  %3981 = vmatpush2.msra.mxu0 %v595
  %3982 = vmatprep.subr.mxu0 %v592
  %3983 = vmatpush2.msra.mxu0 %v591
  %3984 = vmatprep.mubr.f32.mxu0 %v2436
  %3985 = vmatmul.mubr.f32.gmra.mxu0 %v2434
  %v3986 = vpop.f32.mrf.mxu0
  %v3987 = vadd.f32 %v3916, %v3986
  %v3988 = vpop.f32.mrf.mxu0
  %v3989 = vadd.f32 %v3918, %v3988
  %3990 = vdwg.mxu0
  %3991 = vmatprep.subr.mxu0 %v716
  %3992 = vmatpush1.msra.mxu0 %v715
  %3993 = vmatprep.subr.mxu0 %v712
  %3994 = vmatpush1.msra.mxu0 %v711
  %3995 = vmatprep.subr.mxu0 %v708
  %3996 = vmatpush1.msra.mxu0 %v707
  %3997 = vmatprep.subr.mxu0 %v704
  %3998 = vmatpush1.msra.mxu0 %v703
  %3999 = vmatprep.subr.mxu0 %v700
  %4000 = vmatpush1.msra.mxu0 %v699
  %4001 = vmatprep.subr.mxu0 %v696
  %4002 = vmatpush1.msra.mxu0 %v695
  %4003 = vmatprep.subr.mxu0 %v692
  %4004 = vmatpush1.msra.mxu0 %v691
  %4005 = vmatprep.subr.mxu0 %v688
  %4006 = vmatpush1.msra.mxu0 %v687
  %4007 = vmatprep.subr.mxu0 %v684
  %4008 = vmatpush1.msra.mxu0 %v683
  %4009 = vmatprep.subr.mxu0 %v680
  %4010 = vmatpush1.msra.mxu0 %v679
  %4011 = vmatprep.subr.mxu0 %v676
  %4012 = vmatpush1.msra.mxu0 %v675
  %4013 = vmatprep.subr.mxu0 %v672
  %4014 = vmatpush1.msra.mxu0 %v671
  %4015 = vmatprep.subr.mxu0 %v668
  %4016 = vmatpush1.msra.mxu0 %v667
  %4017 = vmatprep.subr.mxu0 %v664
  %4018 = vmatpush1.msra.mxu0 %v663
  %4019 = vmatprep.subr.mxu0 %v660
  %4020 = vmatpush1.msra.mxu0 %v659
  %4021 = vmatprep.subr.mxu0 %v656
  %4022 = vmatpush1.msra.mxu0 %v655
  %4023 = vmatprep.subr.mxu0 %v780
  %4024 = vmatpush2.msra.mxu0 %v779
  %4025 = vmatprep.subr.mxu0 %v776
  %4026 = vmatpush2.msra.mxu0 %v775
  %4027 = vmatprep.subr.mxu0 %v772
  %4028 = vmatpush2.msra.mxu0 %v771
  %4029 = vmatprep.subr.mxu0 %v768
  %4030 = vmatpush2.msra.mxu0 %v767
  %4031 = vmatprep.subr.mxu0 %v764
  %4032 = vmatpush2.msra.mxu0 %v763
  %4033 = vmatprep.subr.mxu0 %v760
  %4034 = vmatpush2.msra.mxu0 %v759
  %4035 = vmatprep.subr.mxu0 %v756
  %4036 = vmatpush2.msra.mxu0 %v755
  %4037 = vmatprep.subr.mxu0 %v752
  %4038 = vmatpush2.msra.mxu0 %v751
  %4039 = vmatprep.subr.mxu0 %v748
  %4040 = vmatpush2.msra.mxu0 %v747
  %4041 = vmatprep.subr.mxu0 %v744
  %4042 = vmatpush2.msra.mxu0 %v743
  %4043 = vmatprep.subr.mxu0 %v740
  %4044 = vmatpush2.msra.mxu0 %v739
  %4045 = vmatprep.subr.mxu0 %v736
  %4046 = vmatpush2.msra.mxu0 %v735
  %4047 = vmatprep.subr.mxu0 %v732
  %4048 = vmatpush2.msra.mxu0 %v731
  %4049 = vmatprep.subr.mxu0 %v728
  %4050 = vmatpush2.msra.mxu0 %v727
  %4051 = vmatprep.subr.mxu0 %v724
  %4052 = vmatpush2.msra.mxu0 %v723
  %4053 = vmatprep.subr.mxu0 %v720
  %4054 = vmatpush2.msra.mxu0 %v719
  %4055 = vmatprep.mubr.f32.mxu0 %v2452
  %4056 = vmatmul.mubr.f32.gmra.mxu0 %v2444
  %v4057 = vpop.f32.mrf.mxu0
  %v4058 = vadd.f32 %v3987, %v4057
  %v4059 = vpop.f32.mrf.mxu0
  %v4060 = vadd.f32 %v3989, %v4059
  %4061 = vdwg.mxu0
  %4062 = vmatprep.subr.mxu0 %v844
  %4063 = vmatpush1.msra.mxu0 %v843
  %4064 = vmatprep.subr.mxu0 %v840
  %4065 = vmatpush1.msra.mxu0 %v839
  %4066 = vmatprep.subr.mxu0 %v836
  %4067 = vmatpush1.msra.mxu0 %v835
  %4068 = vmatprep.subr.mxu0 %v832
  %4069 = vmatpush1.msra.mxu0 %v831
  %4070 = vmatprep.subr.mxu0 %v828
  %4071 = vmatpush1.msra.mxu0 %v827
  %4072 = vmatprep.subr.mxu0 %v824
  %4073 = vmatpush1.msra.mxu0 %v823
  %4074 = vmatprep.subr.mxu0 %v820
  %4075 = vmatpush1.msra.mxu0 %v819
  %4076 = vmatprep.subr.mxu0 %v816
  %4077 = vmatpush1.msra.mxu0 %v815
  %4078 = vmatprep.subr.mxu0 %v812
  %4079 = vmatpush1.msra.mxu0 %v811
  %4080 = vmatprep.subr.mxu0 %v808
  %4081 = vmatpush1.msra.mxu0 %v807
  %4082 = vmatprep.subr.mxu0 %v804
  %4083 = vmatpush1.msra.mxu0 %v803
  %4084 = vmatprep.subr.mxu0 %v800
  %4085 = vmatpush1.msra.mxu0 %v799
  %4086 = vmatprep.subr.mxu0 %v796
  %4087 = vmatpush1.msra.mxu0 %v795
  %4088 = vmatprep.subr.mxu0 %v792
  %4089 = vmatpush1.msra.mxu0 %v791
  %4090 = vmatprep.subr.mxu0 %v788
  %4091 = vmatpush1.msra.mxu0 %v787
  %4092 = vmatprep.subr.mxu0 %v784
  %4093 = vmatpush1.msra.mxu0 %v783
  %4094 = vmatprep.subr.mxu0 %v908
  %4095 = vmatpush2.msra.mxu0 %v907
  %4096 = vmatprep.subr.mxu0 %v904
  %4097 = vmatpush2.msra.mxu0 %v903
  %4098 = vmatprep.subr.mxu0 %v900
  %4099 = vmatpush2.msra.mxu0 %v899
  %4100 = vmatprep.subr.mxu0 %v896
  %4101 = vmatpush2.msra.mxu0 %v895
  %4102 = vmatprep.subr.mxu0 %v892
  %4103 = vmatpush2.msra.mxu0 %v891
  %4104 = vmatprep.subr.mxu0 %v888
  %4105 = vmatpush2.msra.mxu0 %v887
  %4106 = vmatprep.subr.mxu0 %v884
  %4107 = vmatpush2.msra.mxu0 %v883
  %4108 = vmatprep.subr.mxu0 %v880
  %4109 = vmatpush2.msra.mxu0 %v879
  %4110 = vmatprep.subr.mxu0 %v876
  %4111 = vmatpush2.msra.mxu0 %v875
  %4112 = vmatprep.subr.mxu0 %v872
  %4113 = vmatpush2.msra.mxu0 %v871
  %4114 = vmatprep.subr.mxu0 %v868
  %4115 = vmatpush2.msra.mxu0 %v867
  %4116 = vmatprep.subr.mxu0 %v864
  %4117 = vmatpush2.msra.mxu0 %v863
  %4118 = vmatprep.subr.mxu0 %v860
  %4119 = vmatpush2.msra.mxu0 %v859
  %4120 = vmatprep.subr.mxu0 %v856
  %4121 = vmatpush2.msra.mxu0 %v855
  %4122 = vmatprep.subr.mxu0 %v852
  %4123 = vmatpush2.msra.mxu0 %v851
  %4124 = vmatprep.subr.mxu0 %v848
  %4125 = vmatpush2.msra.mxu0 %v847
  %4126 = vmatprep.mubr.f32.mxu0 %v2453
  %4127 = vmatmul.mubr.f32.gmra.mxu0 %v2451
  %v4128 = vpop.f32.mrf.mxu0
  %v4129 = vadd.f32 %v4058, %v4128
  %v4130 = vpop.f32.mrf.mxu0
  %v4131 = vadd.f32 %v4060, %v4130
  %4132 = vdwg.mxu0
  %4133 = vmatprep.subr.mxu0 %v972
  %4134 = vmatpush1.msra.mxu0 %v971
  %4135 = vmatprep.subr.mxu0 %v968
  %4136 = vmatpush1.msra.mxu0 %v967
  %4137 = vmatprep.subr.mxu0 %v964
  %4138 = vmatpush1.msra.mxu0 %v963
  %4139 = vmatprep.subr.mxu0 %v960
  %4140 = vmatpush1.msra.mxu0 %v959
  %4141 = vmatprep.subr.mxu0 %v956
  %4142 = vmatpush1.msra.mxu0 %v955
  %4143 = vmatprep.subr.mxu0 %v952
  %4144 = vmatpush1.msra.mxu0 %v951
  %4145 = vmatprep.subr.mxu0 %v948
  %4146 = vmatpush1.msra.mxu0 %v947
  %4147 = vmatprep.subr.mxu0 %v944
  %4148 = vmatpush1.msra.mxu0 %v943
  %4149 = vmatprep.subr.mxu0 %v940
  %4150 = vmatpush1.msra.mxu0 %v939
  %4151 = vmatprep.subr.mxu0 %v936
  %4152 = vmatpush1.msra.mxu0 %v935
  %4153 = vmatprep.subr.mxu0 %v932
  %4154 = vmatpush1.msra.mxu0 %v931
  %4155 = vmatprep.subr.mxu0 %v928
  %4156 = vmatpush1.msra.mxu0 %v927
  %4157 = vmatprep.subr.mxu0 %v924
  %4158 = vmatpush1.msra.mxu0 %v923
  %4159 = vmatprep.subr.mxu0 %v920
  %4160 = vmatpush1.msra.mxu0 %v919
  %4161 = vmatprep.subr.mxu0 %v916
  %4162 = vmatpush1.msra.mxu0 %v915
  %4163 = vmatprep.subr.mxu0 %v912
  %4164 = vmatpush1.msra.mxu0 %v911
  %4165 = vmatprep.subr.mxu0 %v1036
  %4166 = vmatpush2.msra.mxu0 %v1035
  %4167 = vmatprep.subr.mxu0 %v1032
  %4168 = vmatpush2.msra.mxu0 %v1031
  %4169 = vmatprep.subr.mxu0 %v1028
  %4170 = vmatpush2.msra.mxu0 %v1027
  %4171 = vmatprep.subr.mxu0 %v1024
  %4172 = vmatpush2.msra.mxu0 %v1023
  %4173 = vmatprep.subr.mxu0 %v1020
  %4174 = vmatpush2.msra.mxu0 %v1019
  %4175 = vmatprep.subr.mxu0 %v1016
  %4176 = vmatpush2.msra.mxu0 %v1015
  %4177 = vmatprep.subr.mxu0 %v1012
  %4178 = vmatpush2.msra.mxu0 %v1011
  %4179 = vmatprep.subr.mxu0 %v1008
  %4180 = vmatpush2.msra.mxu0 %v1007
  %4181 = vmatprep.subr.mxu0 %v1004
  %4182 = vmatpush2.msra.mxu0 %v1003
  %4183 = vmatprep.subr.mxu0 %v1000
  %4184 = vmatpush2.msra.mxu0 %v999
  %4185 = vmatprep.subr.mxu0 %v996
  %4186 = vmatpush2.msra.mxu0 %v995
  %4187 = vmatprep.subr.mxu0 %v992
  %4188 = vmatpush2.msra.mxu0 %v991
  %4189 = vmatprep.subr.mxu0 %v988
  %4190 = vmatpush2.msra.mxu0 %v987
  %4191 = vmatprep.subr.mxu0 %v984
  %4192 = vmatpush2.msra.mxu0 %v983
  %4193 = vmatprep.subr.mxu0 %v980
  %4194 = vmatpush2.msra.mxu0 %v979
  %4195 = vmatprep.subr.mxu0 %v976
  %4196 = vmatpush2.msra.mxu0 %v975
  %4197 = vmatprep.mubr.f32.mxu0 %v2469
  %4198 = vmatmul.mubr.f32.gmra.mxu0 %v2461
  %v4199 = vpop.f32.mrf.mxu0
  %v4200 = vadd.f32 %v4129, %v4199
  %v4201 = vpop.f32.mrf.mxu0
  %v4202 = vadd.f32 %v4131, %v4201
  %4203 = vdwg.mxu0
  %4204 = vmatprep.subr.mxu0 %v1100
  %4205 = vmatpush1.msra.mxu0 %v1099
  %4206 = vmatprep.subr.mxu0 %v1096
  %4207 = vmatpush1.msra.mxu0 %v1095
  %4208 = vmatprep.subr.mxu0 %v1092
  %4209 = vmatpush1.msra.mxu0 %v1091
  %4210 = vmatprep.subr.mxu0 %v1088
  %4211 = vmatpush1.msra.mxu0 %v1087
  %4212 = vmatprep.subr.mxu0 %v1084
  %4213 = vmatpush1.msra.mxu0 %v1083
  %4214 = vmatprep.subr.mxu0 %v1080
  %4215 = vmatpush1.msra.mxu0 %v1079
  %4216 = vmatprep.subr.mxu0 %v1076
  %4217 = vmatpush1.msra.mxu0 %v1075
  %4218 = vmatprep.subr.mxu0 %v1072
  %4219 = vmatpush1.msra.mxu0 %v1071
  %4220 = vmatprep.subr.mxu0 %v1068
  %4221 = vmatpush1.msra.mxu0 %v1067
  %4222 = vmatprep.subr.mxu0 %v1064
  %4223 = vmatpush1.msra.mxu0 %v1063
  %4224 = vmatprep.subr.mxu0 %v1060
  %4225 = vmatpush1.msra.mxu0 %v1059
  %4226 = vmatprep.subr.mxu0 %v1056
  %4227 = vmatpush1.msra.mxu0 %v1055
  %4228 = vmatprep.subr.mxu0 %v1052
  %4229 = vmatpush1.msra.mxu0 %v1051
  %4230 = vmatprep.subr.mxu0 %v1048
  %4231 = vmatpush1.msra.mxu0 %v1047
  %4232 = vmatprep.subr.mxu0 %v1044
  %4233 = vmatpush1.msra.mxu0 %v1043
  %4234 = vmatprep.subr.mxu0 %v1040
  %4235 = vmatpush1.msra.mxu0 %v1039
  %4236 = vmatprep.subr.mxu0 %v1164
  %4237 = vmatpush2.msra.mxu0 %v1163
  %4238 = vmatprep.subr.mxu0 %v1160
  %4239 = vmatpush2.msra.mxu0 %v1159
  %4240 = vmatprep.subr.mxu0 %v1156
  %4241 = vmatpush2.msra.mxu0 %v1155
  %4242 = vmatprep.subr.mxu0 %v1152
  %4243 = vmatpush2.msra.mxu0 %v1151
  %4244 = vmatprep.subr.mxu0 %v1148
  %4245 = vmatpush2.msra.mxu0 %v1147
  %4246 = vmatprep.subr.mxu0 %v1144
  %4247 = vmatpush2.msra.mxu0 %v1143
  %4248 = vmatprep.subr.mxu0 %v1140
  %4249 = vmatpush2.msra.mxu0 %v1139
  %4250 = vmatprep.subr.mxu0 %v1136
  %4251 = vmatpush2.msra.mxu0 %v1135
  %4252 = vmatprep.subr.mxu0 %v1132
  %4253 = vmatpush2.msra.mxu0 %v1131
  %4254 = vmatprep.subr.mxu0 %v1128
  %4255 = vmatpush2.msra.mxu0 %v1127
  %4256 = vmatprep.subr.mxu0 %v1124
  %4257 = vmatpush2.msra.mxu0 %v1123
  %4258 = vmatprep.subr.mxu0 %v1120
  %4259 = vmatpush2.msra.mxu0 %v1119
  %4260 = vmatprep.subr.mxu0 %v1116
  %4261 = vmatpush2.msra.mxu0 %v1115
  %4262 = vmatprep.subr.mxu0 %v1112
  %4263 = vmatpush2.msra.mxu0 %v1111
  %4264 = vmatprep.subr.mxu0 %v1108
  %4265 = vmatpush2.msra.mxu0 %v1107
  %4266 = vmatprep.subr.mxu0 %v1104
  %4267 = vmatpush2.msra.mxu0 %v1103
  %4268 = vmatprep.mubr.f32.mxu0 %v2470
  %4269 = vmatmul.mubr.f32.gmra.mxu0 %v2468
  %v4270 = vpop.f32.mrf.mxu0
  %v4271 = vadd.f32 %v4200, %v4270
  %v4272 = vpop.f32.mrf.mxu0
  %v4273 = vadd.f32 %v4202, %v4272
  %4274 = vdwg.mxu0
  %4275 = vmatprep.subr.mxu0 %v1228
  %4276 = vmatpush1.msra.mxu0 %v1227
  %4277 = vmatprep.subr.mxu0 %v1224
  %4278 = vmatpush1.msra.mxu0 %v1223
  %4279 = vmatprep.subr.mxu0 %v1220
  %4280 = vmatpush1.msra.mxu0 %v1219
  %4281 = vmatprep.subr.mxu0 %v1216
  %4282 = vmatpush1.msra.mxu0 %v1215
  %4283 = vmatprep.subr.mxu0 %v1212
  %4284 = vmatpush1.msra.mxu0 %v1211
  %4285 = vmatprep.subr.mxu0 %v1208
  %4286 = vmatpush1.msra.mxu0 %v1207
  %4287 = vmatprep.subr.mxu0 %v1204
  %4288 = vmatpush1.msra.mxu0 %v1203
  %4289 = vmatprep.subr.mxu0 %v1200
  %4290 = vmatpush1.msra.mxu0 %v1199
  %4291 = vmatprep.subr.mxu0 %v1196
  %4292 = vmatpush1.msra.mxu0 %v1195
  %4293 = vmatprep.subr.mxu0 %v1192
  %4294 = vmatpush1.msra.mxu0 %v1191
  %4295 = vmatprep.subr.mxu0 %v1188
  %4296 = vmatpush1.msra.mxu0 %v1187
  %4297 = vmatprep.subr.mxu0 %v1184
  %4298 = vmatpush1.msra.mxu0 %v1183
  %4299 = vmatprep.subr.mxu0 %v1180
  %4300 = vmatpush1.msra.mxu0 %v1179
  %4301 = vmatprep.subr.mxu0 %v1176
  %4302 = vmatpush1.msra.mxu0 %v1175
  %4303 = vmatprep.subr.mxu0 %v1172
  %4304 = vmatpush1.msra.mxu0 %v1171
  %4305 = vmatprep.subr.mxu0 %v1168
  %4306 = vmatpush1.msra.mxu0 %v1167
  %4307 = vmatprep.subr.mxu0 %v1292
  %4308 = vmatpush2.msra.mxu0 %v1291
  %4309 = vmatprep.subr.mxu0 %v1288
  %4310 = vmatpush2.msra.mxu0 %v1287
  %4311 = vmatprep.subr.mxu0 %v1284
  %4312 = vmatpush2.msra.mxu0 %v1283
  %4313 = vmatprep.subr.mxu0 %v1280
  %4314 = vmatpush2.msra.mxu0 %v1279
  %4315 = vmatprep.subr.mxu0 %v1276
  %4316 = vmatpush2.msra.mxu0 %v1275
  %4317 = vmatprep.subr.mxu0 %v1272
  %4318 = vmatpush2.msra.mxu0 %v1271
  %4319 = vmatprep.subr.mxu0 %v1268
  %4320 = vmatpush2.msra.mxu0 %v1267
  %4321 = vmatprep.subr.mxu0 %v1264
  %4322 = vmatpush2.msra.mxu0 %v1263
  %4323 = vmatprep.subr.mxu0 %v1260
  %4324 = vmatpush2.msra.mxu0 %v1259
  %4325 = vmatprep.subr.mxu0 %v1256
  %4326 = vmatpush2.msra.mxu0 %v1255
  %4327 = vmatprep.subr.mxu0 %v1252
  %4328 = vmatpush2.msra.mxu0 %v1251
  %4329 = vmatprep.subr.mxu0 %v1248
  %4330 = vmatpush2.msra.mxu0 %v1247
  %4331 = vmatprep.subr.mxu0 %v1244
  %4332 = vmatpush2.msra.mxu0 %v1243
  %4333 = vmatprep.subr.mxu0 %v1240
  %4334 = vmatpush2.msra.mxu0 %v1239
  %4335 = vmatprep.subr.mxu0 %v1236
  %4336 = vmatpush2.msra.mxu0 %v1235
  %4337 = vmatprep.subr.mxu0 %v1232
  %4338 = vmatpush2.msra.mxu0 %v1231
  %4339 = vmatprep.mubr.f32.mxu0 %v2486
  %4340 = vmatmul.mubr.f32.gmra.mxu0 %v2478
  %v4341 = vpop.f32.mrf.mxu0
  %v4342 = vadd.f32 %v4271, %v4341
  %v4343 = vpop.f32.mrf.mxu0
  %v4344 = vadd.f32 %v4273, %v4343
  %4345 = vdwg.mxu0
  %4346 = vmatprep.subr.mxu0 %v1356
  %4347 = vmatpush1.msra.mxu0 %v1355
  %4348 = vmatprep.subr.mxu0 %v1352
  %4349 = vmatpush1.msra.mxu0 %v1351
  %4350 = vmatprep.subr.mxu0 %v1348
  %4351 = vmatpush1.msra.mxu0 %v1347
  %4352 = vmatprep.subr.mxu0 %v1344
  %4353 = vmatpush1.msra.mxu0 %v1343
  %4354 = vmatprep.subr.mxu0 %v1340
  %4355 = vmatpush1.msra.mxu0 %v1339
  %4356 = vmatprep.subr.mxu0 %v1336
  %4357 = vmatpush1.msra.mxu0 %v1335
  %4358 = vmatprep.subr.mxu0 %v1332
  %4359 = vmatpush1.msra.mxu0 %v1331
  %4360 = vmatprep.subr.mxu0 %v1328
  %4361 = vmatpush1.msra.mxu0 %v1327
  %4362 = vmatprep.subr.mxu0 %v1324
  %4363 = vmatpush1.msra.mxu0 %v1323
  %4364 = vmatprep.subr.mxu0 %v1320
  %4365 = vmatpush1.msra.mxu0 %v1319
  %4366 = vmatprep.subr.mxu0 %v1316
  %4367 = vmatpush1.msra.mxu0 %v1315
  %4368 = vmatprep.subr.mxu0 %v1312
  %4369 = vmatpush1.msra.mxu0 %v1311
  %4370 = vmatprep.subr.mxu0 %v1308
  %4371 = vmatpush1.msra.mxu0 %v1307
  %4372 = vmatprep.subr.mxu0 %v1304
  %4373 = vmatpush1.msra.mxu0 %v1303
  %4374 = vmatprep.subr.mxu0 %v1300
  %4375 = vmatpush1.msra.mxu0 %v1299
  %4376 = vmatprep.subr.mxu0 %v1296
  %4377 = vmatpush1.msra.mxu0 %v1295
  %4378 = vmatprep.subr.mxu0 %v1420
  %4379 = vmatpush2.msra.mxu0 %v1419
  %4380 = vmatprep.subr.mxu0 %v1416
  %4381 = vmatpush2.msra.mxu0 %v1415
  %4382 = vmatprep.subr.mxu0 %v1412
  %4383 = vmatpush2.msra.mxu0 %v1411
  %4384 = vmatprep.subr.mxu0 %v1408
  %4385 = vmatpush2.msra.mxu0 %v1407
  %4386 = vmatprep.subr.mxu0 %v1404
  %4387 = vmatpush2.msra.mxu0 %v1403
  %4388 = vmatprep.subr.mxu0 %v1400
  %4389 = vmatpush2.msra.mxu0 %v1399
  %4390 = vmatprep.subr.mxu0 %v1396
  %4391 = vmatpush2.msra.mxu0 %v1395
  %4392 = vmatprep.subr.mxu0 %v1392
  %4393 = vmatpush2.msra.mxu0 %v1391
  %4394 = vmatprep.subr.mxu0 %v1388
  %4395 = vmatpush2.msra.mxu0 %v1387
  %4396 = vmatprep.subr.mxu0 %v1384
  %4397 = vmatpush2.msra.mxu0 %v1383
  %4398 = vmatprep.subr.mxu0 %v1380
  %4399 = vmatpush2.msra.mxu0 %v1379
  %4400 = vmatprep.subr.mxu0 %v1376
  %4401 = vmatpush2.msra.mxu0 %v1375
  %4402 = vmatprep.subr.mxu0 %v1372
  %4403 = vmatpush2.msra.mxu0 %v1371
  %4404 = vmatprep.subr.mxu0 %v1368
  %4405 = vmatpush2.msra.mxu0 %v1367
  %4406 = vmatprep.subr.mxu0 %v1364
  %4407 = vmatpush2.msra.mxu0 %v1363
  %4408 = vmatprep.subr.mxu0 %v1360
  %4409 = vmatpush2.msra.mxu0 %v1359
  %4410 = vmatprep.mubr.f32.mxu0 %v2487
  %4411 = vmatmul.mubr.f32.gmra.mxu0 %v2485
  %v4412 = vpop.f32.mrf.mxu0
  %v4413 = vadd.f32 %v4342, %v4412
  %v4414 = vpop.f32.mrf.mxu0
  %v4415 = vadd.f32 %v4344, %v4414
  %4416 = vdwg.mxu0
  %4417 = vmatprep.subr.mxu0 %v1484
  %4418 = vmatpush1.msra.mxu0 %v1483
  %4419 = vmatprep.subr.mxu0 %v1480
  %4420 = vmatpush1.msra.mxu0 %v1479
  %4421 = vmatprep.subr.mxu0 %v1476
  %4422 = vmatpush1.msra.mxu0 %v1475
  %4423 = vmatprep.subr.mxu0 %v1472
  %4424 = vmatpush1.msra.mxu0 %v1471
  %4425 = vmatprep.subr.mxu0 %v1468
  %4426 = vmatpush1.msra.mxu0 %v1467
  %4427 = vmatprep.subr.mxu0 %v1464
  %4428 = vmatpush1.msra.mxu0 %v1463
  %4429 = vmatprep.subr.mxu0 %v1460
  %4430 = vmatpush1.msra.mxu0 %v1459
  %4431 = vmatprep.subr.mxu0 %v1456
  %4432 = vmatpush1.msra.mxu0 %v1455
  %4433 = vmatprep.subr.mxu0 %v1452
  %4434 = vmatpush1.msra.mxu0 %v1451
  %4435 = vmatprep.subr.mxu0 %v1448
  %4436 = vmatpush1.msra.mxu0 %v1447
  %4437 = vmatprep.subr.mxu0 %v1444
  %4438 = vmatpush1.msra.mxu0 %v1443
  %4439 = vmatprep.subr.mxu0 %v1440
  %4440 = vmatpush1.msra.mxu0 %v1439
  %4441 = vmatprep.subr.mxu0 %v1436
  %4442 = vmatpush1.msra.mxu0 %v1435
  %4443 = vmatprep.subr.mxu0 %v1432
  %4444 = vmatpush1.msra.mxu0 %v1431
  %4445 = vmatprep.subr.mxu0 %v1428
  %4446 = vmatpush1.msra.mxu0 %v1427
  %4447 = vmatprep.subr.mxu0 %v1424
  %4448 = vmatpush1.msra.mxu0 %v1423
  %4449 = vmatprep.subr.mxu0 %v1548
  %4450 = vmatpush2.msra.mxu0 %v1547
  %4451 = vmatprep.subr.mxu0 %v1544
  %4452 = vmatpush2.msra.mxu0 %v1543
  %4453 = vmatprep.subr.mxu0 %v1540
  %4454 = vmatpush2.msra.mxu0 %v1539
  %4455 = vmatprep.subr.mxu0 %v1536
  %4456 = vmatpush2.msra.mxu0 %v1535
  %4457 = vmatprep.subr.mxu0 %v1532
  %4458 = vmatpush2.msra.mxu0 %v1531
  %4459 = vmatprep.subr.mxu0 %v1528
  %4460 = vmatpush2.msra.mxu0 %v1527
  %4461 = vmatprep.subr.mxu0 %v1524
  %4462 = vmatpush2.msra.mxu0 %v1523
  %4463 = vmatprep.subr.mxu0 %v1520
  %4464 = vmatpush2.msra.mxu0 %v1519
  %4465 = vmatprep.subr.mxu0 %v1516
  %4466 = vmatpush2.msra.mxu0 %v1515
  %4467 = vmatprep.subr.mxu0 %v1512
  %4468 = vmatpush2.msra.mxu0 %v1511
  %4469 = vmatprep.subr.mxu0 %v1508
  %4470 = vmatpush2.msra.mxu0 %v1507
  %4471 = vmatprep.subr.mxu0 %v1504
  %4472 = vmatpush2.msra.mxu0 %v1503
  %4473 = vmatprep.subr.mxu0 %v1500
  %4474 = vmatpush2.msra.mxu0 %v1499
  %4475 = vmatprep.subr.mxu0 %v1496
  %4476 = vmatpush2.msra.mxu0 %v1495
  %4477 = vmatprep.subr.mxu0 %v1492
  %4478 = vmatpush2.msra.mxu0 %v1491
  %4479 = vmatprep.subr.mxu0 %v1488
  %4480 = vmatpush2.msra.mxu0 %v1487
  %4481 = vmatprep.mubr.f32.mxu0 %v2503
  %4482 = vmatmul.mubr.f32.gmra.mxu0 %v2495
  %v4483 = vpop.f32.mrf.mxu0
  %v4484 = vadd.f32 %v4413, %v4483
  %v4485 = vpop.f32.mrf.mxu0
  %v4486 = vadd.f32 %v4415, %v4485
  %4487 = vdwg.mxu0
  %4488 = vmatprep.subr.mxu0 %v1612
  %4489 = vmatpush1.msra.mxu0 %v1611
  %4490 = vmatprep.subr.mxu0 %v1608
  %4491 = vmatpush1.msra.mxu0 %v1607
  %4492 = vmatprep.subr.mxu0 %v1604
  %4493 = vmatpush1.msra.mxu0 %v1603
  %4494 = vmatprep.subr.mxu0 %v1600
  %4495 = vmatpush1.msra.mxu0 %v1599
  %4496 = vmatprep.subr.mxu0 %v1596
  %4497 = vmatpush1.msra.mxu0 %v1595
  %4498 = vmatprep.subr.mxu0 %v1592
  %4499 = vmatpush1.msra.mxu0 %v1591
  %4500 = vmatprep.subr.mxu0 %v1588
  %4501 = vmatpush1.msra.mxu0 %v1587
  %4502 = vmatprep.subr.mxu0 %v1584
  %4503 = vmatpush1.msra.mxu0 %v1583
  %4504 = vmatprep.subr.mxu0 %v1580
  %4505 = vmatpush1.msra.mxu0 %v1579
  %4506 = vmatprep.subr.mxu0 %v1576
  %4507 = vmatpush1.msra.mxu0 %v1575
  %4508 = vmatprep.subr.mxu0 %v1572
  %4509 = vmatpush1.msra.mxu0 %v1571
  %4510 = vmatprep.subr.mxu0 %v1568
  %4511 = vmatpush1.msra.mxu0 %v1567
  %4512 = vmatprep.subr.mxu0 %v1564
  %4513 = vmatpush1.msra.mxu0 %v1563
  %4514 = vmatprep.subr.mxu0 %v1560
  %4515 = vmatpush1.msra.mxu0 %v1559
  %4516 = vmatprep.subr.mxu0 %v1556
  %4517 = vmatpush1.msra.mxu0 %v1555
  %4518 = vmatprep.subr.mxu0 %v1552
  %4519 = vmatpush1.msra.mxu0 %v1551
  %4520 = vmatprep.subr.mxu0 %v1676
  %4521 = vmatpush2.msra.mxu0 %v1675
  %4522 = vmatprep.subr.mxu0 %v1672
  %4523 = vmatpush2.msra.mxu0 %v1671
  %4524 = vmatprep.subr.mxu0 %v1668
  %4525 = vmatpush2.msra.mxu0 %v1667
  %4526 = vmatprep.subr.mxu0 %v1664
  %4527 = vmatpush2.msra.mxu0 %v1663
  %4528 = vmatprep.subr.mxu0 %v1660
  %4529 = vmatpush2.msra.mxu0 %v1659
  %4530 = vmatprep.subr.mxu0 %v1656
  %4531 = vmatpush2.msra.mxu0 %v1655
  %4532 = vmatprep.subr.mxu0 %v1652
  %4533 = vmatpush2.msra.mxu0 %v1651
  %4534 = vmatprep.subr.mxu0 %v1648
  %4535 = vmatpush2.msra.mxu0 %v1647
  %4536 = vmatprep.subr.mxu0 %v1644
  %4537 = vmatpush2.msra.mxu0 %v1643
  %4538 = vmatprep.subr.mxu0 %v1640
  %4539 = vmatpush2.msra.mxu0 %v1639
  %4540 = vmatprep.subr.mxu0 %v1636
  %4541 = vmatpush2.msra.mxu0 %v1635
  %4542 = vmatprep.subr.mxu0 %v1632
  %4543 = vmatpush2.msra.mxu0 %v1631
  %4544 = vmatprep.subr.mxu0 %v1628
  %4545 = vmatpush2.msra.mxu0 %v1627
  %4546 = vmatprep.subr.mxu0 %v1624
  %4547 = vmatpush2.msra.mxu0 %v1623
  %4548 = vmatprep.subr.mxu0 %v1620
  %4549 = vmatpush2.msra.mxu0 %v1619
  %4550 = vmatprep.subr.mxu0 %v1616
  %4551 = vmatpush2.msra.mxu0 %v1615
  %4552 = vmatprep.mubr.f32.mxu0 %v2504
  %4553 = vmatmul.mubr.f32.gmra.mxu0 %v2502
  %v4554 = vpop.f32.mrf.mxu0
  %v4555 = vadd.f32 %v4484, %v4554
  %v4556 = vpop.f32.mrf.mxu0
  %v4557 = vadd.f32 %v4486, %v4556
  %4558 = vdwg.mxu0
  %4559 = vmatprep.subr.mxu0 %v1740
  %4560 = vmatpush1.msra.mxu0 %v1739
  %4561 = vmatprep.subr.mxu0 %v1736
  %4562 = vmatpush1.msra.mxu0 %v1735
  %4563 = vmatprep.subr.mxu0 %v1732
  %4564 = vmatpush1.msra.mxu0 %v1731
  %4565 = vmatprep.subr.mxu0 %v1728
  %4566 = vmatpush1.msra.mxu0 %v1727
  %4567 = vmatprep.subr.mxu0 %v1724
  %4568 = vmatpush1.msra.mxu0 %v1723
  %4569 = vmatprep.subr.mxu0 %v1720
  %4570 = vmatpush1.msra.mxu0 %v1719
  %4571 = vmatprep.subr.mxu0 %v1716
  %4572 = vmatpush1.msra.mxu0 %v1715
  %4573 = vmatprep.subr.mxu0 %v1712
  %4574 = vmatpush1.msra.mxu0 %v1711
  %4575 = vmatprep.subr.mxu0 %v1708
  %4576 = vmatpush1.msra.mxu0 %v1707
  %4577 = vmatprep.subr.mxu0 %v1704
  %4578 = vmatpush1.msra.mxu0 %v1703
  %4579 = vmatprep.subr.mxu0 %v1700
  %4580 = vmatpush1.msra.mxu0 %v1699
  %4581 = vmatprep.subr.mxu0 %v1696
  %4582 = vmatpush1.msra.mxu0 %v1695
  %4583 = vmatprep.subr.mxu0 %v1692
  %4584 = vmatpush1.msra.mxu0 %v1691
  %4585 = vmatprep.subr.mxu0 %v1688
  %4586 = vmatpush1.msra.mxu0 %v1687
  %4587 = vmatprep.subr.mxu0 %v1684
  %4588 = vmatpush1.msra.mxu0 %v1683
  %4589 = vmatprep.subr.mxu0 %v1680
  %4590 = vmatpush1.msra.mxu0 %v1679
  %4591 = vmatprep.subr.mxu0 %v1804
  %4592 = vmatpush2.msra.mxu0 %v1803
  %4593 = vmatprep.subr.mxu0 %v1800
  %4594 = vmatpush2.msra.mxu0 %v1799
  %4595 = vmatprep.subr.mxu0 %v1796
  %4596 = vmatpush2.msra.mxu0 %v1795
  %4597 = vmatprep.subr.mxu0 %v1792
  %4598 = vmatpush2.msra.mxu0 %v1791
  %4599 = vmatprep.subr.mxu0 %v1788
  %4600 = vmatpush2.msra.mxu0 %v1787
  %4601 = vmatprep.subr.mxu0 %v1784
  %4602 = vmatpush2.msra.mxu0 %v1783
  %4603 = vmatprep.subr.mxu0 %v1780
  %4604 = vmatpush2.msra.mxu0 %v1779
  %4605 = vmatprep.subr.mxu0 %v1776
  %4606 = vmatpush2.msra.mxu0 %v1775
  %4607 = vmatprep.subr.mxu0 %v1772
  %4608 = vmatpush2.msra.mxu0 %v1771
  %4609 = vmatprep.subr.mxu0 %v1768
  %4610 = vmatpush2.msra.mxu0 %v1767
  %4611 = vmatprep.subr.mxu0 %v1764
  %4612 = vmatpush2.msra.mxu0 %v1763
  %4613 = vmatprep.subr.mxu0 %v1760
  %4614 = vmatpush2.msra.mxu0 %v1759
  %4615 = vmatprep.subr.mxu0 %v1756
  %4616 = vmatpush2.msra.mxu0 %v1755
  %4617 = vmatprep.subr.mxu0 %v1752
  %4618 = vmatpush2.msra.mxu0 %v1751
  %4619 = vmatprep.subr.mxu0 %v1748
  %4620 = vmatpush2.msra.mxu0 %v1747
  %4621 = vmatprep.subr.mxu0 %v1744
  %4622 = vmatpush2.msra.mxu0 %v1743
  %4623 = vmatprep.mubr.f32.mxu0 %v2520
  %4624 = vmatmul.mubr.f32.gmra.mxu0 %v2512
  %v4625 = vpop.f32.mrf.mxu0
  %v4626 = vadd.f32 %v4555, %v4625
  %v4627 = vpop.f32.mrf.mxu0
  %v4628 = vadd.f32 %v4557, %v4627
  %4629 = vdwg.mxu0
  %4630 = vmatprep.subr.mxu0 %v1868
  %4631 = vmatpush1.msra.mxu0 %v1867
  %4632 = vmatprep.subr.mxu0 %v1864
  %4633 = vmatpush1.msra.mxu0 %v1863
  %4634 = vmatprep.subr.mxu0 %v1860
  %4635 = vmatpush1.msra.mxu0 %v1859
  %4636 = vmatprep.subr.mxu0 %v1856
  %4637 = vmatpush1.msra.mxu0 %v1855
  %4638 = vmatprep.subr.mxu0 %v1852
  %4639 = vmatpush1.msra.mxu0 %v1851
  %4640 = vmatprep.subr.mxu0 %v1848
  %4641 = vmatpush1.msra.mxu0 %v1847
  %4642 = vmatprep.subr.mxu0 %v1844
  %4643 = vmatpush1.msra.mxu0 %v1843
  %4644 = vmatprep.subr.mxu0 %v1840
  %4645 = vmatpush1.msra.mxu0 %v1839
  %4646 = vmatprep.subr.mxu0 %v1836
  %4647 = vmatpush1.msra.mxu0 %v1835
  %4648 = vmatprep.subr.mxu0 %v1832
  %4649 = vmatpush1.msra.mxu0 %v1831
  %4650 = vmatprep.subr.mxu0 %v1828
  %4651 = vmatpush1.msra.mxu0 %v1827
  %4652 = vmatprep.subr.mxu0 %v1824
  %4653 = vmatpush1.msra.mxu0 %v1823
  %4654 = vmatprep.subr.mxu0 %v1820
  %4655 = vmatpush1.msra.mxu0 %v1819
  %4656 = vmatprep.subr.mxu0 %v1816
  %4657 = vmatpush1.msra.mxu0 %v1815
  %4658 = vmatprep.subr.mxu0 %v1812
  %4659 = vmatpush1.msra.mxu0 %v1811
  %4660 = vmatprep.subr.mxu0 %v1808
  %4661 = vmatpush1.msra.mxu0 %v1807
  %4662 = vmatprep.subr.mxu0 %v1932
  %4663 = vmatpush2.msra.mxu0 %v1931
  %4664 = vmatprep.subr.mxu0 %v1928
  %4665 = vmatpush2.msra.mxu0 %v1927
  %4666 = vmatprep.subr.mxu0 %v1924
  %4667 = vmatpush2.msra.mxu0 %v1923
  %4668 = vmatprep.subr.mxu0 %v1920
  %4669 = vmatpush2.msra.mxu0 %v1919
  %4670 = vmatprep.subr.mxu0 %v1916
  %4671 = vmatpush2.msra.mxu0 %v1915
  %4672 = vmatprep.subr.mxu0 %v1912
  %4673 = vmatpush2.msra.mxu0 %v1911
  %4674 = vmatprep.subr.mxu0 %v1908
  %4675 = vmatpush2.msra.mxu0 %v1907
  %4676 = vmatprep.subr.mxu0 %v1904
  %4677 = vmatpush2.msra.mxu0 %v1903
  %4678 = vmatprep.subr.mxu0 %v1900
  %4679 = vmatpush2.msra.mxu0 %v1899
  %4680 = vmatprep.subr.mxu0 %v1896
  %4681 = vmatpush2.msra.mxu0 %v1895
  %4682 = vmatprep.subr.mxu0 %v1892
  %4683 = vmatpush2.msra.mxu0 %v1891
  %4684 = vmatprep.subr.mxu0 %v1888
  %4685 = vmatpush2.msra.mxu0 %v1887
  %4686 = vmatprep.subr.mxu0 %v1884
  %4687 = vmatpush2.msra.mxu0 %v1883
  %4688 = vmatprep.subr.mxu0 %v1880
  %4689 = vmatpush2.msra.mxu0 %v1879
  %4690 = vmatprep.subr.mxu0 %v1876
  %4691 = vmatpush2.msra.mxu0 %v1875
  %4692 = vmatprep.subr.mxu0 %v1872
  %4693 = vmatpush2.msra.mxu0 %v1871
  %4694 = vmatprep.mubr.f32.mxu0 %v2521
  %4695 = vmatmul.mubr.f32.gmra.mxu0 %v2519
  %v4696 = vpop.f32.mrf.mxu0
  %v4697 = vadd.f32 %v4626, %v4696
  %v4698 = vpop.f32.mrf.mxu0
  %v4699 = vadd.f32 %v4628, %v4698
  %4700 = vdwg.mxu0
  %4701 = vmatprep.subr.mxu0 %v1996
  %4702 = vmatpush1.msra.mxu0 %v1995
  %4703 = vmatprep.subr.mxu0 %v1992
  %4704 = vmatpush1.msra.mxu0 %v1991
  %4705 = vmatprep.subr.mxu0 %v1988
  %4706 = vmatpush1.msra.mxu0 %v1987
  %4707 = vmatprep.subr.mxu0 %v1984
  %4708 = vmatpush1.msra.mxu0 %v1983
  %4709 = vmatprep.subr.mxu0 %v1980
  %4710 = vmatpush1.msra.mxu0 %v1979
  %4711 = vmatprep.subr.mxu0 %v1976
  %4712 = vmatpush1.msra.mxu0 %v1975
  %4713 = vmatprep.subr.mxu0 %v1972
  %4714 = vmatpush1.msra.mxu0 %v1971
  %4715 = vmatprep.subr.mxu0 %v1968
  %4716 = vmatpush1.msra.mxu0 %v1967
  %4717 = vmatprep.subr.mxu0 %v1964
  %4718 = vmatpush1.msra.mxu0 %v1963
  %4719 = vmatprep.subr.mxu0 %v1960
  %4720 = vmatpush1.msra.mxu0 %v1959
  %4721 = vmatprep.subr.mxu0 %v1956
  %4722 = vmatpush1.msra.mxu0 %v1955
  %4723 = vmatprep.subr.mxu0 %v1952
  %4724 = vmatpush1.msra.mxu0 %v1951
  %4725 = vmatprep.subr.mxu0 %v1948
  %4726 = vmatpush1.msra.mxu0 %v1947
  %4727 = vmatprep.subr.mxu0 %v1944
  %4728 = vmatpush1.msra.mxu0 %v1943
  %4729 = vmatprep.subr.mxu0 %v1940
  %4730 = vmatpush1.msra.mxu0 %v1939
  %4731 = vmatprep.subr.mxu0 %v1936
  %4732 = vmatpush1.msra.mxu0 %v1935
  %4733 = vmatprep.subr.mxu0 %v2060
  %4734 = vmatpush2.msra.mxu0 %v2059
  %4735 = vmatprep.subr.mxu0 %v2056
  %4736 = vmatpush2.msra.mxu0 %v2055
  %4737 = vmatprep.subr.mxu0 %v2052
  %4738 = vmatpush2.msra.mxu0 %v2051
  %4739 = vmatprep.subr.mxu0 %v2048
  %4740 = vmatpush2.msra.mxu0 %v2047
  %4741 = vmatprep.subr.mxu0 %v2044
  %4742 = vmatpush2.msra.mxu0 %v2043
  %4743 = vmatprep.subr.mxu0 %v2040
  %4744 = vmatpush2.msra.mxu0 %v2039
  %4745 = vmatprep.subr.mxu0 %v2036
  %4746 = vmatpush2.msra.mxu0 %v2035
  %4747 = vmatprep.subr.mxu0 %v2032
  %4748 = vmatpush2.msra.mxu0 %v2031
  %4749 = vmatprep.subr.mxu0 %v2028
  %4750 = vmatpush2.msra.mxu0 %v2027
  %4751 = vmatprep.subr.mxu0 %v2024
  %4752 = vmatpush2.msra.mxu0 %v2023
  %4753 = vmatprep.subr.mxu0 %v2020
  %4754 = vmatpush2.msra.mxu0 %v2019
  %4755 = vmatprep.subr.mxu0 %v2016
  %4756 = vmatpush2.msra.mxu0 %v2015
  %4757 = vmatprep.subr.mxu0 %v2012
  %4758 = vmatpush2.msra.mxu0 %v2011
  %4759 = vmatprep.subr.mxu0 %v2008
  %4760 = vmatpush2.msra.mxu0 %v2007
  %4761 = vmatprep.subr.mxu0 %v2004
  %4762 = vmatpush2.msra.mxu0 %v2003
  %4763 = vmatprep.subr.mxu0 %v2000
  %4764 = vmatpush2.msra.mxu0 %v1999
  %4765 = vmatprep.mubr.f32.mxu0 %v2537
  %4766 = vmatmul.mubr.f32.gmra.mxu0 %v2529
  %v4767 = vpop.f32.mrf.mxu0
  %v4768 = vadd.f32 %v4697, %v4767
  %v4769 = vpop.f32.mrf.mxu0
  %v4770 = vadd.f32 %v4699, %v4769
  %4771 = vdwg.mxu0
  %4772 = vmatprep.subr.mxu0 %v2124
  %4773 = vmatpush1.msra.mxu0 %v2123
  %4774 = vmatprep.subr.mxu0 %v2120
  %4775 = vmatpush1.msra.mxu0 %v2119
  %4776 = vmatprep.subr.mxu0 %v2116
  %4777 = vmatpush1.msra.mxu0 %v2115
  %4778 = vmatprep.subr.mxu0 %v2112
  %4779 = vmatpush1.msra.mxu0 %v2111
  %4780 = vmatprep.subr.mxu0 %v2108
  %4781 = vmatpush1.msra.mxu0 %v2107
  %4782 = vmatprep.subr.mxu0 %v2104
  %4783 = vmatpush1.msra.mxu0 %v2103
  %4784 = vmatprep.subr.mxu0 %v2100
  %4785 = vmatpush1.msra.mxu0 %v2099
  %4786 = vmatprep.subr.mxu0 %v2096
  %4787 = vmatpush1.msra.mxu0 %v2095
  %4788 = vmatprep.subr.mxu0 %v2092
  %4789 = vmatpush1.msra.mxu0 %v2091
  %4790 = vmatprep.subr.mxu0 %v2088
  %4791 = vmatpush1.msra.mxu0 %v2087
  %4792 = vmatprep.subr.mxu0 %v2084
  %4793 = vmatpush1.msra.mxu0 %v2083
  %4794 = vmatprep.subr.mxu0 %v2080
  %4795 = vmatpush1.msra.mxu0 %v2079
  %4796 = vmatprep.subr.mxu0 %v2076
  %4797 = vmatpush1.msra.mxu0 %v2075
  %4798 = vmatprep.subr.mxu0 %v2072
  %4799 = vmatpush1.msra.mxu0 %v2071
  %4800 = vmatprep.subr.mxu0 %v2068
  %4801 = vmatpush1.msra.mxu0 %v2067
  %4802 = vmatprep.subr.mxu0 %v2064
  %4803 = vmatpush1.msra.mxu0 %v2063
  %4804 = vmatprep.subr.mxu0 %v2188
  %4805 = vmatpush2.msra.mxu0 %v2187
  %4806 = vmatprep.subr.mxu0 %v2184
  %4807 = vmatpush2.msra.mxu0 %v2183
  %4808 = vmatprep.subr.mxu0 %v2180
  %4809 = vmatpush2.msra.mxu0 %v2179
  %4810 = vmatprep.subr.mxu0 %v2176
  %4811 = vmatpush2.msra.mxu0 %v2175
  %4812 = vmatprep.subr.mxu0 %v2172
  %4813 = vmatpush2.msra.mxu0 %v2171
  %4814 = vmatprep.subr.mxu0 %v2168
  %4815 = vmatpush2.msra.mxu0 %v2167
  %4816 = vmatprep.subr.mxu0 %v2164
  %4817 = vmatpush2.msra.mxu0 %v2163
  %4818 = vmatprep.subr.mxu0 %v2160
  %4819 = vmatpush2.msra.mxu0 %v2159
  %4820 = vmatprep.subr.mxu0 %v2156
  %4821 = vmatpush2.msra.mxu0 %v2155
  %4822 = vmatprep.subr.mxu0 %v2152
  %4823 = vmatpush2.msra.mxu0 %v2151
  %4824 = vmatprep.subr.mxu0 %v2148
  %4825 = vmatpush2.msra.mxu0 %v2147
  %4826 = vmatprep.subr.mxu0 %v2144
  %4827 = vmatpush2.msra.mxu0 %v2143
  %4828 = vmatprep.subr.mxu0 %v2140
  %4829 = vmatpush2.msra.mxu0 %v2139
  %4830 = vmatprep.subr.mxu0 %v2136
  %4831 = vmatpush2.msra.mxu0 %v2135
  %4832 = vmatprep.subr.mxu0 %v2132
  %4833 = vmatpush2.msra.mxu0 %v2131
  %4834 = vmatprep.subr.mxu0 %v2128
  %4835 = vmatpush2.msra.mxu0 %v2127
  %4836 = vmatprep.mubr.f32.mxu0 %v2538
  %4837 = vmatmul.mubr.f32.gmra.mxu0 %v2536
  %v4838 = vpop.f32.mrf.mxu0
  %v4839 = vadd.f32 %v4768, %v4838
  %v4840 = vpop.f32.mrf.mxu0
  %v4841 = vadd.f32 %v4770, %v4840
  %4842 = vdwg.mxu0
  %v4843 = vld [vmem:[%s6] sm:$0xf]
  %v4845 = vlaneseq
  %v4846 = vshrl.u32 %v4845, 7
  %v4847 = vsub.s32 0, %v4846
  %v4848 = vrot.slane %v4843, %v4847
  %v4849 = vlaneseq
  %v4850 = vshrl.u32 %v4849, 7
  %v4851 = vsub.s32 1, %v4850
  %v4852 = vrot.slane %v4843, %v4851
  %v4853 = vlaneseq
  %v4854 = vshrl.u32 %v4853, 7
  %v4855 = vsub.s32 2, %v4854
  %v4856 = vrot.slane %v4843, %v4855
  %v4857 = vlaneseq
  %v4858 = vshrl.u32 %v4857, 7
  %v4859 = vsub.s32 3, %v4858
  %v4860 = vrot.slane %v4843, %v4859
  %v4865 = vadd.f32 %v3703, %v4848
  %v4866 = vadd.f32 %v3705, %v4852
  %v4867 = vadd.f32 %v4839, %v4856
  %v4868 = vadd.f32 %v4841, %v4860
  %v4869 = vmax.f32 %v4865, 0.0
  %v4870 = vmax.f32 %v4866, 0.0
  %v4871 = vmax.f32 %v4867, 0.0
  %v4872 = vmax.f32 %v4868, 0.0
  %v4873 = vld [vmem:[%s7] sm:$0xff]
  %v4874 = vld [vmem:[%s7 + $0x8] sm:$0xff]
  %v4875 = vld [vmem:[%s7 + $0x10] sm:$0xff]
  %v4876 = vld [vmem:[%s7 + $0x18] sm:$0xff]
  %v4877 = vld [vmem:[%s7 + $0x20] sm:$0xff]
  %v4878 = vld [vmem:[%s7 + $0x28] sm:$0xff]
  %v4879 = vld [vmem:[%s7 + $0x30] sm:$0xff]
  %v4880 = vld [vmem:[%s7 + $0x38] sm:$0xff]
  %v4881 = vld [vmem:[%s7 + $0x40] sm:$0xff]
  %v4882 = vld [vmem:[%s7 + $0x48] sm:$0xff]
  %v4883 = vld [vmem:[%s7 + $0x50] sm:$0xff]
  %v4884 = vld [vmem:[%s7 + $0x58] sm:$0xff]
  %v4885 = vld [vmem:[%s7 + $0x60] sm:$0xff]
  %v4886 = vld [vmem:[%s7 + $0x68] sm:$0xff]
  %v4887 = vld [vmem:[%s7 + $0x70] sm:$0xff]
  %v4888 = vld [vmem:[%s7 + $0x78] sm:$0xff]
  %v4889 = vld [vmem:[%s7 + $0x80] sm:$0xff]
  %v4890 = vld [vmem:[%s7 + $0x88] sm:$0xff]
  %v4891 = vld [vmem:[%s7 + $0x90] sm:$0xff]
  %v4892 = vld [vmem:[%s7 + $0x98] sm:$0xff]
  %v4893 = vld [vmem:[%s7 + $0xa0] sm:$0xff]
  %v4894 = vld [vmem:[%s7 + $0xa8] sm:$0xff]
  %v4895 = vld [vmem:[%s7 + $0xb0] sm:$0xff]
  %v4896 = vld [vmem:[%s7 + $0xb8] sm:$0xff]
  %v4897 = vld [vmem:[%s7 + $0xc0] sm:$0xff]
  %v4898 = vld [vmem:[%s7 + $0xc8] sm:$0xff]
  %v4899 = vld [vmem:[%s7 + $0xd0] sm:$0xff]
  %v4900 = vld [vmem:[%s7 + $0xd8] sm:$0xff]
  %v4901 = vld [vmem:[%s7 + $0xe0] sm:$0xff]
  %v4902 = vld [vmem:[%s7 + $0xe8] sm:$0xff]
  %v4903 = vld [vmem:[%s7 + $0xf0] sm:$0xff]
  %v4904 = vld [vmem:[%s7 + $0xf8] sm:$0xff]
  %v4905 = vld [vmem:[%s7 + $0x100] sm:$0xff]
  %v4906 = vld [vmem:[%s7 + $0x108] sm:$0xff]
  %v4907 = vld [vmem:[%s7 + $0x110] sm:$0xff]
  %v4908 = vld [vmem:[%s7 + $0x118] sm:$0xff]
  %v4909 = vld [vmem:[%s7 + $0x120] sm:$0xff]
  %v4910 = vld [vmem:[%s7 + $0x128] sm:$0xff]
  %v4911 = vld [vmem:[%s7 + $0x130] sm:$0xff]
  %v4912 = vld [vmem:[%s7 + $0x138] sm:$0xff]
  %v4913 = vld [vmem:[%s7 + $0x140] sm:$0xff]
  %v4914 = vld [vmem:[%s7 + $0x148] sm:$0xff]
  %v4915 = vld [vmem:[%s7 + $0x150] sm:$0xff]
  %v4916 = vld [vmem:[%s7 + $0x158] sm:$0xff]
  %v4917 = vld [vmem:[%s7 + $0x160] sm:$0xff]
  %v4918 = vld [vmem:[%s7 + $0x168] sm:$0xff]
  %v4919 = vld [vmem:[%s7 + $0x170] sm:$0xff]
  %v4920 = vld [vmem:[%s7 + $0x178] sm:$0xff]
  %v4921 = vld [vmem:[%s7 + $0x180] sm:$0xff]
  %v4922 = vld [vmem:[%s7 + $0x188] sm:$0xff]
  %v4923 = vld [vmem:[%s7 + $0x190] sm:$0xff]
  %v4924 = vld [vmem:[%s7 + $0x198] sm:$0xff]
  %v4925 = vld [vmem:[%s7 + $0x1a0] sm:$0xff]
  %v4926 = vld [vmem:[%s7 + $0x1a8] sm:$0xff]
  %v4927 = vld [vmem:[%s7 + $0x1b0] sm:$0xff]
  %v4928 = vld [vmem:[%s7 + $0x1b8] sm:$0xff]
  %v4929 = vld [vmem:[%s7 + $0x1c0] sm:$0xff]
  %v4930 = vld [vmem:[%s7 + $0x1c8] sm:$0xff]
  %v4931 = vld [vmem:[%s7 + $0x1d0] sm:$0xff]
  %v4932 = vld [vmem:[%s7 + $0x1d8] sm:$0xff]
  %v4933 = vld [vmem:[%s7 + $0x1e0] sm:$0xff]
  %v4934 = vld [vmem:[%s7 + $0x1e8] sm:$0xff]
  %v4935 = vld [vmem:[%s7 + $0x1f0] sm:$0xff]
  %v4936 = vld [vmem:[%s7 + $0x1f8] sm:$0xff]
  %v4937 = vld [vmem:[%s7 + $0x200] sm:$0xff]
  %v4938 = vld [vmem:[%s7 + $0x208] sm:$0xff]
  %v4939 = vld [vmem:[%s7 + $0x210] sm:$0xff]
  %v4940 = vld [vmem:[%s7 + $0x218] sm:$0xff]
  %v4941 = vld [vmem:[%s7 + $0x220] sm:$0xff]
  %v4942 = vld [vmem:[%s7 + $0x228] sm:$0xff]
  %v4943 = vld [vmem:[%s7 + $0x230] sm:$0xff]
  %v4944 = vld [vmem:[%s7 + $0x238] sm:$0xff]
  %v4945 = vld [vmem:[%s7 + $0x240] sm:$0xff]
  %v4946 = vld [vmem:[%s7 + $0x248] sm:$0xff]
  %v4947 = vld [vmem:[%s7 + $0x250] sm:$0xff]
  %v4948 = vld [vmem:[%s7 + $0x258] sm:$0xff]
  %v4949 = vld [vmem:[%s7 + $0x260] sm:$0xff]
  %v4950 = vld [vmem:[%s7 + $0x268] sm:$0xff]
  %v4951 = vld [vmem:[%s7 + $0x270] sm:$0xff]
  %v4952 = vld [vmem:[%s7 + $0x278] sm:$0xff]
  %v4953 = vld [vmem:[%s7 + $0x280] sm:$0xff]
  %v4954 = vld [vmem:[%s7 + $0x288] sm:$0xff]
  %v4955 = vld [vmem:[%s7 + $0x290] sm:$0xff]
  %v4956 = vld [vmem:[%s7 + $0x298] sm:$0xff]
  %v4957 = vld [vmem:[%s7 + $0x2a0] sm:$0xff]
  %v4958 = vld [vmem:[%s7 + $0x2a8] sm:$0xff]
  %v4959 = vld [vmem:[%s7 + $0x2b0] sm:$0xff]
  %v4960 = vld [vmem:[%s7 + $0x2b8] sm:$0xff]
  %v4961 = vld [vmem:[%s7 + $0x2c0] sm:$0xff]
  %v4962 = vld [vmem:[%s7 + $0x2c8] sm:$0xff]
  %v4963 = vld [vmem:[%s7 + $0x2d0] sm:$0xff]
  %v4964 = vld [vmem:[%s7 + $0x2d8] sm:$0xff]
  %v4965 = vld [vmem:[%s7 + $0x2e0] sm:$0xff]
  %v4966 = vld [vmem:[%s7 + $0x2e8] sm:$0xff]
  %v4967 = vld [vmem:[%s7 + $0x2f0] sm:$0xff]
  %v4968 = vld [vmem:[%s7 + $0x2f8] sm:$0xff]
  %v4969 = vld [vmem:[%s7 + $0x300] sm:$0xff]
  %v4970 = vld [vmem:[%s7 + $0x308] sm:$0xff]
  %v4971 = vld [vmem:[%s7 + $0x310] sm:$0xff]
  %v4972 = vld [vmem:[%s7 + $0x318] sm:$0xff]
  %v4973 = vld [vmem:[%s7 + $0x320] sm:$0xff]
  %v4974 = vld [vmem:[%s7 + $0x328] sm:$0xff]
  %v4975 = vld [vmem:[%s7 + $0x330] sm:$0xff]
  %v4976 = vld [vmem:[%s7 + $0x338] sm:$0xff]
  %v4977 = vld [vmem:[%s7 + $0x340] sm:$0xff]
  %v4978 = vld [vmem:[%s7 + $0x348] sm:$0xff]
  %v4979 = vld [vmem:[%s7 + $0x350] sm:$0xff]
  %v4980 = vld [vmem:[%s7 + $0x358] sm:$0xff]
  %v4981 = vld [vmem:[%s7 + $0x360] sm:$0xff]
  %v4982 = vld [vmem:[%s7 + $0x368] sm:$0xff]
  %v4983 = vld [vmem:[%s7 + $0x370] sm:$0xff]
  %v4984 = vld [vmem:[%s7 + $0x378] sm:$0xff]
  %v4985 = vld [vmem:[%s7 + $0x380] sm:$0xff]
  %v4986 = vld [vmem:[%s7 + $0x388] sm:$0xff]
  %v4987 = vld [vmem:[%s7 + $0x390] sm:$0xff]
  %v4988 = vld [vmem:[%s7 + $0x398] sm:$0xff]
  %v4989 = vld [vmem:[%s7 + $0x3a0] sm:$0xff]
  %v4990 = vld [vmem:[%s7 + $0x3a8] sm:$0xff]
  %v4991 = vld [vmem:[%s7 + $0x3b0] sm:$0xff]
  %v4992 = vld [vmem:[%s7 + $0x3b8] sm:$0xff]
  %v4993 = vld [vmem:[%s7 + $0x3c0] sm:$0xff]
  %v4994 = vld [vmem:[%s7 + $0x3c8] sm:$0xff]
  %v4995 = vld [vmem:[%s7 + $0x3d0] sm:$0xff]
  %v4996 = vld [vmem:[%s7 + $0x3d8] sm:$0xff]
  %v4997 = vld [vmem:[%s7 + $0x3e0] sm:$0xff]
  %v4998 = vld [vmem:[%s7 + $0x3e8] sm:$0xff]
  %v4999 = vld [vmem:[%s7 + $0x3f0] sm:$0xff]
  %v5000 = vld [vmem:[%s7 + $0x3f8] sm:$0xff]
  %v5001 = vld [vmem:[%s8] sm:$0x3]
  %v5003 = vlaneseq
  %v5004 = vshrl.u32 %v5003, 7
  %v5005 = vsub.s32 0, %v5004
  %v5006 = vrot.slane %v5001, %v5005
  %v5007 = vlaneseq
  %v5008 = vshrl.u32 %v5007, 7
  %v5009 = vsub.s32 1, %v5008
  %v5010 = vrot.slane %v5001, %v5009
  %5013 = vmatprep.subr.mxu0 %v4904
  %5014 = vmatpush1.msra.mxu0 %v4903
  %5015 = vmatprep.subr.mxu0 %v4902
  %5016 = vmatpush1.msra.mxu0 %v4901
  %5017 = vmatprep.subr.mxu0 %v4900
  %5018 = vmatpush1.msra.mxu0 %v4899
  %5019 = vmatprep.subr.mxu0 %v4898
  %5020 = vmatpush1.msra.mxu0 %v4897
  %5021 = vmatprep.subr.mxu0 %v4896
  %5022 = vmatpush1.msra.mxu0 %v4895
  %5023 = vmatprep.subr.mxu0 %v4894
  %5024 = vmatpush1.msra.mxu0 %v4893
  %5025 = vmatprep.subr.mxu0 %v4892
  %5026 = vmatpush1.msra.mxu0 %v4891
  %5027 = vmatprep.subr.mxu0 %v4890
  %5028 = vmatpush1.msra.mxu0 %v4889
  %5029 = vmatprep.subr.mxu0 %v4888
  %5030 = vmatpush1.msra.mxu0 %v4887
  %5031 = vmatprep.subr.mxu0 %v4886
  %5032 = vmatpush1.msra.mxu0 %v4885
  %5033 = vmatprep.subr.mxu0 %v4884
  %5034 = vmatpush1.msra.mxu0 %v4883
  %5035 = vmatprep.subr.mxu0 %v4882
  %5036 = vmatpush1.msra.mxu0 %v4881
  %5037 = vmatprep.subr.mxu0 %v4880
  %5038 = vmatpush1.msra.mxu0 %v4879
  %5039 = vmatprep.subr.mxu0 %v4878
  %5040 = vmatpush1.msra.mxu0 %v4877
  %5041 = vmatprep.subr.mxu0 %v4876
  %5042 = vmatpush1.msra.mxu0 %v4875
  %5043 = vmatprep.subr.mxu0 %v4874
  %5044 = vmatpush1.msra.mxu0 %v4873
  %5045 = vmatprep.subr.mxu0 %v4936
  %5046 = vmatpush2.msra.mxu0 %v4935
  %5047 = vmatprep.subr.mxu0 %v4934
  %5048 = vmatpush2.msra.mxu0 %v4933
  %5049 = vmatprep.subr.mxu0 %v4932
  %5050 = vmatpush2.msra.mxu0 %v4931
  %5051 = vmatprep.subr.mxu0 %v4930
  %5052 = vmatpush2.msra.mxu0 %v4929
  %5053 = vmatprep.subr.mxu0 %v4928
  %5054 = vmatpush2.msra.mxu0 %v4927
  %5055 = vmatprep.subr.mxu0 %v4926
  %5056 = vmatpush2.msra.mxu0 %v4925
  %5057 = vmatprep.subr.mxu0 %v4924
  %5058 = vmatpush2.msra.mxu0 %v4923
  %5059 = vmatprep.subr.mxu0 %v4922
  %5060 = vmatpush2.msra.mxu0 %v4921
  %5061 = vmatprep.subr.mxu0 %v4920
  %5062 = vmatpush2.msra.mxu0 %v4919
  %5063 = vmatprep.subr.mxu0 %v4918
  %5064 = vmatpush2.msra.mxu0 %v4917
  %5065 = vmatprep.subr.mxu0 %v4916
  %5066 = vmatpush2.msra.mxu0 %v4915
  %5067 = vmatprep.subr.mxu0 %v4914
  %5068 = vmatpush2.msra.mxu0 %v4913
  %5069 = vmatprep.subr.mxu0 %v4912
  %5070 = vmatpush2.msra.mxu0 %v4911
  %5071 = vmatprep.subr.mxu0 %v4910
  %5072 = vmatpush2.msra.mxu0 %v4909
  %5073 = vmatprep.subr.mxu0 %v4908
  %5074 = vmatpush2.msra.mxu0 %v4907
  %5075 = vmatprep.subr.mxu0 %v4906
  %5076 = vmatpush2.msra.mxu0 %v4905
  %5077 = vmatprep.mubr.f32.mxu0 %v4870
  %5078 = vmatmul.mubr.f32.gmra.mxu0 %v4869
  %v5079 = vpop.f32.mrf.mxu0
  %v5080 = vadd.f32 %v5006, %v5079
  %v5081 = vpop.f32.mrf.mxu0
  %v5082 = vadd.f32 %v5010, %v5081
  %5083 = vdwg.mxu0
  %5084 = vmatprep.subr.mxu0 %v4968
  %5085 = vmatpush1.msra.mxu0 %v4967
  %5086 = vmatprep.subr.mxu0 %v4966
  %5087 = vmatpush1.msra.mxu0 %v4965
  %5088 = vmatprep.subr.mxu0 %v4964
  %5089 = vmatpush1.msra.mxu0 %v4963
  %5090 = vmatprep.subr.mxu0 %v4962
  %5091 = vmatpush1.msra.mxu0 %v4961
  %5092 = vmatprep.subr.mxu0 %v4960
  %5093 = vmatpush1.msra.mxu0 %v4959
  %5094 = vmatprep.subr.mxu0 %v4958
  %5095 = vmatpush1.msra.mxu0 %v4957
  %5096 = vmatprep.subr.mxu0 %v4956
  %5097 = vmatpush1.msra.mxu0 %v4955
  %5098 = vmatprep.subr.mxu0 %v4954
  %5099 = vmatpush1.msra.mxu0 %v4953
  %5100 = vmatprep.subr.mxu0 %v4952
  %5101 = vmatpush1.msra.mxu0 %v4951
  %5102 = vmatprep.subr.mxu0 %v4950
  %5103 = vmatpush1.msra.mxu0 %v4949
  %5104 = vmatprep.subr.mxu0 %v4948
  %5105 = vmatpush1.msra.mxu0 %v4947
  %5106 = vmatprep.subr.mxu0 %v4946
  %5107 = vmatpush1.msra.mxu0 %v4945
  %5108 = vmatprep.subr.mxu0 %v4944
  %5109 = vmatpush1.msra.mxu0 %v4943
  %5110 = vmatprep.subr.mxu0 %v4942
  %5111 = vmatpush1.msra.mxu0 %v4941
  %5112 = vmatprep.subr.mxu0 %v4940
  %5113 = vmatpush1.msra.mxu0 %v4939
  %5114 = vmatprep.subr.mxu0 %v4938
  %5115 = vmatpush1.msra.mxu0 %v4937
  %5116 = vmatprep.subr.mxu0 %v5000
  %5117 = vmatpush2.msra.mxu0 %v4999
  %5118 = vmatprep.subr.mxu0 %v4998
  %5119 = vmatpush2.msra.mxu0 %v4997
  %5120 = vmatprep.subr.mxu0 %v4996
  %5121 = vmatpush2.msra.mxu0 %v4995
  %5122 = vmatprep.subr.mxu0 %v4994
  %5123 = vmatpush2.msra.mxu0 %v4993
  %5124 = vmatprep.subr.mxu0 %v4992
  %5125 = vmatpush2.msra.mxu0 %v4991
  %5126 = vmatprep.subr.mxu0 %v4990
  %5127 = vmatpush2.msra.mxu0 %v4989
  %5128 = vmatprep.subr.mxu0 %v4988
  %5129 = vmatpush2.msra.mxu0 %v4987
  %5130 = vmatprep.subr.mxu0 %v4986
  %5131 = vmatpush2.msra.mxu0 %v4985
  %5132 = vmatprep.subr.mxu0 %v4984
  %5133 = vmatpush2.msra.mxu0 %v4983
  %5134 = vmatprep.subr.mxu0 %v4982
  %5135 = vmatpush2.msra.mxu0 %v4981
  %5136 = vmatprep.subr.mxu0 %v4980
  %5137 = vmatpush2.msra.mxu0 %v4979
  %5138 = vmatprep.subr.mxu0 %v4978
  %5139 = vmatpush2.msra.mxu0 %v4977
  %5140 = vmatprep.subr.mxu0 %v4976
  %5141 = vmatpush2.msra.mxu0 %v4975
  %5142 = vmatprep.subr.mxu0 %v4974
  %5143 = vmatpush2.msra.mxu0 %v4973
  %5144 = vmatprep.subr.mxu0 %v4972
  %5145 = vmatpush2.msra.mxu0 %v4971
  %5146 = vmatprep.subr.mxu0 %v4970
  %5147 = vmatpush2.msra.mxu0 %v4969
  %5148 = vmatprep.mubr.f32.mxu0 %v4872
  %5149 = vmatmul.mubr.f32.gmra.mxu0 %v4871
  %v5150 = vpop.f32.mrf.mxu0
  %v5151 = vadd.f32 %v5080, %v5150
  %v5152 = vpop.f32.mrf.mxu0
  %v5153 = vadd.f32 %v5082, %v5152
  %5154 = vdwg.mxu0
  %v5155 = vmax.f32 %v5151, 0.0
  %v5156 = vmax.f32 %v5153, 0.0
  %v5157 = vld [vmem:[%s9] sm:$0xff]
  %v5158 = vld [vmem:[%s9 + $0x8] sm:$0xff]
  %v5159 = vld [vmem:[%s9 + $0x10] sm:$0xff]
  %v5160 = vld [vmem:[%s9 + $0x18] sm:$0xff]
  %v5161 = vld [vmem:[%s9 + $0x20] sm:$0xff]
  %v5162 = vld [vmem:[%s9 + $0x28] sm:$0xff]
  %v5163 = vld [vmem:[%s9 + $0x30] sm:$0xff]
  %v5164 = vld [vmem:[%s9 + $0x38] sm:$0xff]
  %v5165 = vld [vmem:[%s9 + $0x40] sm:$0xff]
  %v5166 = vld [vmem:[%s9 + $0x48] sm:$0xff]
  %v5167 = vld [vmem:[%s9 + $0x50] sm:$0xff]
  %v5168 = vld [vmem:[%s9 + $0x58] sm:$0xff]
  %v5169 = vld [vmem:[%s9 + $0x60] sm:$0xff]
  %v5170 = vld [vmem:[%s9 + $0x68] sm:$0xff]
  %v5171 = vld [vmem:[%s9 + $0x70] sm:$0xff]
  %v5172 = vld [vmem:[%s9 + $0x78] sm:$0xff]
  %v5173 = vld [vmem:[%s9 + $0x80] sm:$0xff]
  %v5174 = vld [vmem:[%s9 + $0x88] sm:$0xff]
  %v5175 = vld [vmem:[%s9 + $0x90] sm:$0xff]
  %v5176 = vld [vmem:[%s9 + $0x98] sm:$0xff]
  %v5177 = vld [vmem:[%s9 + $0xa0] sm:$0xff]
  %v5178 = vld [vmem:[%s9 + $0xa8] sm:$0xff]
  %v5179 = vld [vmem:[%s9 + $0xb0] sm:$0xff]
  %v5180 = vld [vmem:[%s9 + $0xb8] sm:$0xff]
  %v5181 = vld [vmem:[%s9 + $0xc0] sm:$0xff]
  %v5182 = vld [vmem:[%s9 + $0xc8] sm:$0xff]
  %v5183 = vld [vmem:[%s9 + $0xd0] sm:$0xff]
  %v5184 = vld [vmem:[%s9 + $0xd8] sm:$0xff]
  %v5185 = vld [vmem:[%s9 + $0xe0] sm:$0xff]
  %v5186 = vld [vmem:[%s9 + $0xe8] sm:$0xff]
  %v5187 = vld [vmem:[%s9 + $0xf0] sm:$0xff]
  %v5188 = vld [vmem:[%s9 + $0xf8] sm:$0xff]
  %v5189 = vld [vmem:[%s10] sm:$0x1]
  %v5191 = vlaneseq
  %v5192 = vshrl.u32 %v5191, 7
  %v5193 = vsub.s32 0, %v5192
  %v5194 = vrot.slane %v5189, %v5193
  %5196 = vmatprep.subr.mxu0 0.0
  %5197 = vmatpush1.msra.mxu0 %v5172
  %5198 = vmatprep.subr.mxu0 0.0
  %5199 = vmatpush1.msra.mxu0 %v5171
  %5200 = vmatprep.subr.mxu0 0.0
  %5201 = vmatpush1.msra.mxu0 %v5170
  %5202 = vmatprep.subr.mxu0 0.0
  %5203 = vmatpush1.msra.mxu0 %v5169
  %5204 = vmatprep.subr.mxu0 0.0
  %5205 = vmatpush1.msra.mxu0 %v5168
  %5206 = vmatprep.subr.mxu0 0.0
  %5207 = vmatpush1.msra.mxu0 %v5167
  %5208 = vmatprep.subr.mxu0 0.0
  %5209 = vmatpush1.msra.mxu0 %v5166
  %5210 = vmatprep.subr.mxu0 0.0
  %5211 = vmatpush1.msra.mxu0 %v5165
  %5212 = vmatprep.subr.mxu0 0.0
  %5213 = vmatpush1.msra.mxu0 %v5164
  %5214 = vmatprep.subr.mxu0 0.0
  %5215 = vmatpush1.msra.mxu0 %v5163
  %5216 = vmatprep.subr.mxu0 0.0
  %5217 = vmatpush1.msra.mxu0 %v5162
  %5218 = vmatprep.subr.mxu0 0.0
  %5219 = vmatpush1.msra.mxu0 %v5161
  %5220 = vmatprep.subr.mxu0 0.0
  %5221 = vmatpush1.msra.mxu0 %v5160
  %5222 = vmatprep.subr.mxu0 0.0
  %5223 = vmatpush1.msra.mxu0 %v5159
  %5224 = vmatprep.subr.mxu0 0.0
  %5225 = vmatpush1.msra.mxu0 %v5158
  %5226 = vmatprep.subr.mxu0 0.0
  %5227 = vmatpush1.msra.mxu0 %v5157
  %5228 = vmatprep.subr.mxu0 0.0
  %5229 = vmatpush2.msra.mxu0 %v5188
  %5230 = vmatprep.subr.mxu0 0.0
  %5231 = vmatpush2.msra.mxu0 %v5187
  %5232 = vmatprep.subr.mxu0 0.0
  %5233 = vmatpush2.msra.mxu0 %v5186
  %5234 = vmatprep.subr.mxu0 0.0
  %5235 = vmatpush2.msra.mxu0 %v5185
  %5236 = vmatprep.subr.mxu0 0.0
  %5237 = vmatpush2.msra.mxu0 %v5184
  %5238 = vmatprep.subr.mxu0 0.0
  %5239 = vmatpush2.msra.mxu0 %v5183
  %5240 = vmatprep.subr.mxu0 0.0
  %5241 = vmatpush2.msra.mxu0 %v5182
  %5242 = vmatprep.subr.mxu0 0.0
  %5243 = vmatpush2.msra.mxu0 %v5181
  %5244 = vmatprep.subr.mxu0 0.0
  %5245 = vmatpush2.msra.mxu0 %v5180
  %5246 = vmatprep.subr.mxu0 0.0
  %5247 = vmatpush2.msra.mxu0 %v5179
  %5248 = vmatprep.subr.mxu0 0.0
  %5249 = vmatpush2.msra.mxu0 %v5178
  %5250 = vmatprep.subr.mxu0 0.0
  %5251 = vmatpush2.msra.mxu0 %v5177
  %5252 = vmatprep.subr.mxu0 0.0
  %5253 = vmatpush2.msra.mxu0 %v5176
  %5254 = vmatprep.subr.mxu0 0.0
  %5255 = vmatpush2.msra.mxu0 %v5175
  %5256 = vmatprep.subr.mxu0 0.0
  %5257 = vmatpush2.msra.mxu0 %v5174
  %5258 = vmatprep.subr.mxu0 0.0
  %5259 = vmatpush2.msra.mxu0 %v5173
  %5260 = vmatprep.mubr.f32.mxu0 %v5156
  %5261 = vmatmul.mubr.f32.gmra.mxu0 %v5155
  %v5262 = vpop.f32.mrf.mxu0
  %v5263 = vadd.f32 %v5194, %v5262
  %v5264 = vpop.f32.mrf.mxu0
  %5265 = vdwg.mxu0
  %v5266 = vmax.f32 %v5263, 0.0
  %5267 = vst [vmem:[%s11] sm:$0x3] %v5266
  // Predicated region
  $region46: #{airl_reward_forward.7} parent=0 // pred_check
    _
  $region47: #{airl_reward_forward.7} parent=0 // pred_check_branch
    %5269 = sbr.rel (0) target = $region49
  $region48: #{airl_reward_forward.7} parent=0 // pred_region
    _
  $region49: #{airl_reward_forward.7} parent=0 // pred_fallthru
    _
  // Predicated region
  $region50: #{airl_reward_forward.7} parent=0 // pred_check
    _
  $region51: #{airl_reward_forward.7} parent=0 // pred_check_branch
    %5271 = sbr.rel (0) target = $region53
  $region52: #{airl_reward_forward.7} parent=0 // pred_region
    _
  $region53: #{airl_reward_forward.7} parent=0 // pred_fallthru
    _

</llo_original>
